<compile_context>
chip_gen: v5e
topology: v5e:2x2
jax: 0.10.0
libtpu: 0.0.40
codegen_flags: <defaults>
</compile_context>

<pallas_src>
import jax
import jax.numpy as jnp
import numpy as np
from jax import lax
from jax.experimental import pallas as pl
from jax.experimental.pallas import tpu as pltpu

# ----------------------- fixed geometry (34x90 input => 6144 features) -----------------
H_IN, W_IN = 34, 90
KH, KW = 2, 7
C1, C2, C3 = 64, 128, 128
H1, W1 = 18, 43            # conv1 output
H2, W2 = 10, 20            # conv2 output
H3, W3 = 6, 8              # conv3 output (128*6*8 = 6144)
M1 = 23                    # half of the padded conv2-input width (46)
M2 = 11                    # half of the padded conv3-input width (22)
N1 = 2 * M1 * H2           # 460 polyphase rows / batch element in act1
N2 = 2 * M2 * H3           # 132 polyphase rows in the act2 scratch
FLAT = C3 * H3 * W3        # 6144
W2_CHUNK = 10              # conv2 output columns per GEMM chunk (2 chunks of 100 rows)

# act1 row (per batch element) = (q*M1 + m)*H2 + h2idx, channels = kh_pair*64 + cin,
#   where padded conv2-input col = 2*m + q and h2idx orders h2 as [1,3,5,7,9,0,2,4,6,8]
#   (odd output rows first) so the conv2->act2 scatter is two contiguous block stores.
# act2 row = (q*M2 + m)*H3 + h3, channels = kh_pair*128 + cin,
#   where padded conv3-input col = 2*m + q.


# ------------------------------------ fused kernel -------------------------------------
def _fused_kernel(act1_ref, w2_ref, b2_ref, w3_ref, b3_ref, v_ref, bl_ref,
                  out_ref, act2_ref, o3_ref, lin_ref):
    f32 = jnp.float32
    bf16 = jnp.bfloat16

    # ---- conv2 + ReLU, scattered into the (padded, height-paired, width-polyphase) conv3
    #      input scratch.  7 taps x K=128 GEMMs per 100-row chunk; bf16 in, f32 accumulate.
    act2_ref[...] = jnp.zeros_like(act2_ref)          # padding ring stays exactly zero
    b2 = b2_ref[...]
    nrows = W2_CHUNK * H2                             # 100
    for w0 in range(0, W2, W2_CHUNK):
        acc = None
        for j in range(KW):
            start = (((j % 2) * M1 + j // 2) + w0) * H2
            x = act1_ref[0, start:start + nrows, :]   # (100, 128) bf16, contiguous rows
            d = jnp.dot(x, w2_ref[j], preferred_element_type=f32)
            acc = d if acc is None else acc + d
        y = jnp.maximum(acc + b2, 0.0).astype(bf16)   # rows: (w2 - w0, h2 odd-first)
        for dw in range(W2_CHUNK):                    # scatter, 2 block stores per column
            wcol = w0 + dw
            db = (((wcol + 1) % 2) * M2 + (wcol + 1) // 2) * H3
            r0 = dw * H2
            # odd  h2 (1,3,5,7,9) -> h3 = 1..5, kh-pair slot 0
            act2_ref[db + 1:db + 1 + H2 // 2, 0:C2] = y[r0:r0 + H2 // 2, :]
            # even h2 (0,2,4,6,8) -> h3 = 0..4, kh-pair slot 1
            act2_ref[db:db + H2 // 2, C2:2 * C2] = y[r0 + H2 // 2:r0 + H2, :]

    # ---- conv3 + ReLU: 7 taps x K=256 GEMMs over contiguous polyphase slices.
    b3 = b3_ref[...]
    acc3 = None
    for j in range(KW):
        start = ((j % 2) * M2 + j // 2) * H3
        x = act2_ref[start:start + W3 * H3, :]        # (48, 256) bf16
        d = jnp.dot(x, w3_ref[j], preferred_element_type=f32)
        acc3 = d if acc3 is None else acc3 + d
    o3_ref[...] = jnp.maximum(acc3 + b3, 0.0).astype(bf16)   # (48, 128), row p = w3*H3 + h3

    # ---- flatten (lane-aligned staging) + one wide-K Linear GEMM.
    for p in range(W3 * H3):
        lin_ref[:, p * C3:(p + 1) * C3] = o3_ref[p:p + 1, :]
    yv = jnp.dot(lin_ref[...], v_ref[...], preferred_element_type=f32)   # (1, NH)
    out_ref[0] = yv + bl_ref[...]


# ------------------------------- one-time weight repacking -----------------------------
def prepare_params(params):
    bf16 = jnp.bfloat16
    f32 = jnp.float32
    nh = params["wl"].shape[0]
    # conv2/conv3: per-width-tap (2*Cin, Cout) matrices, kernel rows folded into K.
    w2p = params["w2"].transpose(3, 2, 1, 0).reshape(KW, 2 * C1, C2)
    w3p = params["w3"].transpose(3, 2, 1, 0).reshape(KW, 2 * C2, C3)
    # linear: v[(w3*H3 + h3)*128 + c, n] = WL[n, c*48 + h3*8 + w3]  (torch NCHW flatten).
    v = params["wl"].reshape(nh, C3, H3, W3).transpose(3, 2, 1, 0).reshape(FLAT, nh)
    return {
        "w1": params["w1"].astype(f32),
        "b1": params["b1"].astype(f32),
        "w2p": w2p.astype(bf16),
        "b2": params["b2"].reshape(1, C2).astype(f32),
        "w3p": w3p.astype(bf16),
        "b3": params["b3"].reshape(1, C3).astype(f32),
        "v": v.astype(bf16),
        "bl": params["bl"].reshape(1, nh).astype(f32),
    }


# ------------------------------ conv1 (XLA) + polyphase pack ---------------------------
def _conv1_polyphase(x, w1, b1):
    """conv1 + ReLU in XLA, emitted directly in the polyphase / kernel-row-paired layout
    the fused kernel consumes: (B, N1, 2*C1) bf16, lane-dense (128 channels)."""
    B = x.shape[0]
    xp = jnp.pad(x[:, 0], ((0, 0), (1, 1), (1, 1)))                  # (B, 36, 92)
    taps = [xp[:, i:i + 2 * H1:2, j:j + 2 * W1:2]
            for i in range(KH) for j in range(KW)]
    patches = jnp.stack(taps, axis=-1)                               # (B, 18, 43, 14)
    w1m = w1.reshape(C1, KH * KW).T                                  # (14, 64)
    a1 = jnp.maximum(jnp.einsum("bhwk,kc->bhwc", patches, w1m) + b1, 0.0)
    a1 = jnp.pad(a1, ((0, 0), (1, 1), (1, 2), (0, 0)))               # (B, 20, 46, 64)
    a1 = a1.reshape(B, H2, 2, M1, 2, C1)                             # (b, h2, s, m, q, c)
    a1 = jnp.concatenate([a1[:, 1::2], a1[:, 0::2]], axis=1)         # h2: odd rows first
    a1 = a1.transpose(0, 4, 3, 1, 2, 5)                              # (b, q, m, h2, s, c)
    return a1.reshape(B, N1, 2 * C1).astype(jnp.bfloat16)


# ------------------------------------- forward -----------------------------------------
def css_encoder_short_forward(x, prep):
    B = x.shape[0]
    assert x.shape[1:] == (1, H_IN, W_IN), x.shape
    nh = prep["bl"].shape[1]

    # conv1 hoisted to XLA (tiny Cin=1 GEMM) so the kernel input is lane-dense bf16.
    act1 = _conv1_polyphase(x, prep["w1"], prep["b1"])               # (B, 460, 128)

    args = (act1, prep["w2p"], prep["b2"], prep["w3p"], prep["b3"],
            prep["v"], prep["bl"])

    flops = B * 2 * (H2 * W2 * KH * KW * C1 * C2
                     + H3 * W3 * KH * KW * C2 * C3
                     + FLAT * nh)
    bytes_accessed = int(sum(a.size * a.dtype.itemsize for a in args)) + B * nh * 4

    grid_spec = pltpu.PrefetchScalarGridSpec(
        num_scalar_prefetch=0,
        grid=(B,),
        in_specs=[
            pl.BlockSpec((1, N1, 2 * C1), lambda b: (b, 0, 0)),       # act1 (per element)
            pl.BlockSpec((KW, 2 * C1, C2), lambda b: (0, 0, 0)),      # conv2 weights
            pl.BlockSpec((1, C2), lambda b: (0, 0)),                  # conv2 bias
            pl.BlockSpec((KW, 2 * C2, C3), lambda b: (0, 0, 0)),      # conv3 weights
            pl.BlockSpec((1, C3), lambda b: (0, 0)),                  # conv3 bias
            pl.BlockSpec((FLAT, nh), lambda b: (0, 0)),               # linear weights
            pl.BlockSpec((1, nh), lambda b: (0, 0)),                  # linear bias
        ],
        out_specs=pl.BlockSpec((1, 1, nh), lambda b: (b, 0, 0)),
        scratch_shapes=[
            pltpu.VMEM((N2, 2 * C2), jnp.bfloat16),   # act2: padded conv3 input, polyphase
            pltpu.VMEM((H3 * W3, C3), jnp.bfloat16),  # conv3 output
            pltpu.VMEM((1, FLAT), jnp.bfloat16),      # flattened Linear input
        ],
    )
    out = pl.pallas_call(
        _fused_kernel,
        out_shape=jax.ShapeDtypeStruct((B, 1, nh), jnp.float32),
        grid_spec=grid_spec,
        compiler_params=pltpu.CompilerParams(
            dimension_semantics=("parallel",)),
        cost_estimate=pl.CostEstimate(flops=flops, transcendentals=0,
                                      bytes_accessed=bytes_accessed),
    )(*args)
    return out.reshape(B, nh)


# --------------------------------- pure-JAX reference ----------------------------------
def css_encoder_short_ref(x, params):
    def conv(x, w, b, stride, pad):
        y = lax.conv_general_dilated(
            x, w, window_strides=(stride, stride),
            padding=[(pad, pad), (pad, pad)],
            dimension_numbers=("NCHW", "OIHW", "NCHW"))
        return y + b[None, :, None, None]

    x = jax.nn.relu(conv(x, params["w1"], params["b1"], 2, 1))
    x = jax.nn.relu(conv(x, params["w2"], params["b2"], 2, 1))
    x = jax.nn.relu(conv(x, params["w3"], params["b3"], 2, 1))
    x = x.reshape(x.shape[0], -1)
    return x @ params["wl"].T + params["bl"]


# --------------------------------------- main ------------------------------------------
if __name__ == "__main__":
    key = jax.random.PRNGKey(0)
    keys = jax.random.split(key, 9)

    # Spatial size chosen so the flattened conv3 output is exactly 6144 (= 128*6*8).
    B, Cin, H, W = 2, 1, 34, 90
    hidden_dim = 32

    def winit(k, shape, fan_in):
        return jax.random.normal(k, shape, jnp.float32) * (2.0 / fan_in) ** 0.5

    params = {
        "w1": winit(keys[0], (64, 1, 2, 7), 1 * 2 * 7),
        "b1": 0.01 * jax.random.normal(keys[1], (64,), jnp.float32),
        "w2": winit(keys[2], (128, 64, 2, 7), 64 * 2 * 7),
        "b2": 0.01 * jax.random.normal(keys[3], (128,), jnp.float32),
        "w3": winit(keys[4], (128, 128, 2, 7), 128 * 2 * 7),
        "b3": 0.01 * jax.random.normal(keys[5], (128,), jnp.float32),
        "wl": winit(keys[6], (hidden_dim, 6144), 6144),
        "bl": 0.01 * jax.random.normal(keys[7], (hidden_dim,), jnp.float32),
    }
    x = jax.random.normal(keys[8], (B, Cin, H, W), jnp.float32)

    prep = prepare_params(params)                       # weight repacking hoisted out
    fwd = jax.jit(css_encoder_short_forward)

    out = jax.block_until_ready(fwd(x, prep))
    ref = jax.block_until_ready(css_encoder_short_ref(x, params))

    assert out.shape == (B, hidden_dim), out.shape
    np.testing.assert_allclose(np.asarray(out, dtype=np.float32), np.asarray(ref),
                               atol=3e-2, rtol=3e-2)
    print("KERNEL_OK")
</pallas_src>

<mosaic_0001>
module attributes {stable_mosaic.version = 11 : i64} {
  func.func @_fused_kernel(%arg0: i32, %arg1: memref<1x460x128xbf16, #tpu.memory_space<vmem>>, %arg2: memref<7x128x128xbf16, #tpu.memory_space<vmem>>, %arg3: memref<1x128xf32, #tpu.memory_space<vmem>>, %arg4: memref<7x256x128xbf16, #tpu.memory_space<vmem>>, %arg5: memref<1x128xf32, #tpu.memory_space<vmem>>, %arg6: memref<6144x32xbf16, #tpu.memory_space<vmem>>, %arg7: memref<1x32xf32, #tpu.memory_space<vmem>>, %arg8: memref<1x1x32xf32, #tpu.memory_space<vmem>>, %arg9: memref<132x256xbf16, #tpu.memory_space<vmem>>, %arg10: memref<48x128xbf16, #tpu.memory_space<vmem>>, %arg11: memref<1x6144xbf16, #tpu.memory_space<vmem>>) attributes {dimension_semantics = [#tpu.dimension_semantics<parallel>], iteration_bounds = array<i64: 2>, scalar_prefetch = 0 : i64, scratch_operands = 3 : i64, tpu.core_type = #tpu.core_type<tc>, window_params = [{transform_indices = @transform_0, window_bounds = array<i64: 1, 460, 128>}, {pipeline_mode = #tpu.pipeline_mode<synchronous>, transform_indices = @transform_1, window_bounds = array<i64: 7, 128, 128>}, {pipeline_mode = #tpu.pipeline_mode<synchronous>, transform_indices = @transform_2, window_bounds = array<i64: 1, 128>}, {pipeline_mode = #tpu.pipeline_mode<synchronous>, transform_indices = @transform_3, window_bounds = array<i64: 7, 256, 128>}, {pipeline_mode = #tpu.pipeline_mode<synchronous>, transform_indices = @transform_4, window_bounds = array<i64: 1, 128>}, {pipeline_mode = #tpu.pipeline_mode<synchronous>, transform_indices = @transform_5, window_bounds = array<i64: 6144, 32>}, {pipeline_mode = #tpu.pipeline_mode<synchronous>, transform_indices = @transform_6, window_bounds = array<i64: 1, 32>}, {transform_indices = @transform_7, window_bounds = array<i64: 1, 1, 32>}]} {
    %cst = arith.constant 0.000000e+00 : bf16
    %0 = vector.broadcast %cst : bf16 to vector<132x256xbf16>
    %c0 = arith.constant 0 : index
    %c0_0 = arith.constant 0 : index
    %1 = vector.load %arg9[%c0, %c0_0] : memref<132x256xbf16, #tpu.memory_space<vmem>>, vector<132x256xbf16>
    tpu.vector_store %arg9[%c0, %c0_0], %0 {strides = array<i32>} : memref<132x256xbf16, #tpu.memory_space<vmem>>, vector<132x256xbf16>,
    %c0_1 = arith.constant 0 : index
    %c0_2 = arith.constant 0 : index
    %2 = vector.load %arg3[%c0_1, %c0_2] : memref<1x128xf32, #tpu.memory_space<vmem>>, vector<1x128xf32>
    %c0_3 = arith.constant 0 : index
    %c0_4 = arith.constant 0 : index
    %c0_5 = arith.constant 0 : index
    %3 = vector.load %arg1[%c0_3, %c0_4, %c0_5] : memref<1x460x128xbf16, #tpu.memory_space<vmem>>, vector<1x100x128xbf16>
    %4 = vector.shape_cast %3 : vector<1x100x128xbf16> to vector<100x128xbf16>
    %c0_6 = arith.constant 0 : index
    %c0_7 = arith.constant 0 : index
    %c0_8 = arith.constant 0 : index
    %5 = vector.load %arg2[%c0_6, %c0_7, %c0_8] : memref<7x128x128xbf16, #tpu.memory_space<vmem>>, vector<1x128x128xbf16>
    %6 = vector.shape_cast %5 : vector<1x128x128xbf16> to vector<128x128xbf16>
    %cst_9 = arith.constant dense<0.000000e+00> : vector<100x128xf32>
    %7 = tpu.matmul %4, %6, %cst_9 {dimension_numbers = #tpu.dot_dimension_numbers<[1], [0], [0], [1], [0, 0, 1, 1], [], []>} : vector<100x128xbf16>, vector<128x128xbf16>, vector<100x128xf32> -> vector<100x128xf32>
    %c0_10 = arith.constant 0 : index
    %c230 = arith.constant 230 : index
    %c0_11 = arith.constant 0 : index
    %8 = vector.load %arg1[%c0_10, %c230, %c0_11] : memref<1x460x128xbf16, #tpu.memory_space<vmem>>, vector<1x100x128xbf16>
    %9 = vector.shape_cast %8 : vector<1x100x128xbf16> to vector<100x128xbf16>
    %c1 = arith.constant 1 : index
    %c0_12 = arith.constant 0 : index
    %c0_13 = arith.constant 0 : index
    %10 = vector.load %arg2[%c1, %c0_12, %c0_13] : memref<7x128x128xbf16, #tpu.memory_space<vmem>>, vector<1x128x128xbf16>
    %11 = vector.shape_cast %10 : vector<1x128x128xbf16> to vector<128x128xbf16>
    %cst_14 = arith.constant dense<0.000000e+00> : vector<100x128xf32>
    %12 = tpu.matmul %9, %11, %cst_14 {dimension_numbers = #tpu.dot_dimension_numbers<[1], [0], [0], [1], [0, 0, 1, 1], [], []>} : vector<100x128xbf16>, vector<128x128xbf16>, vector<100x128xf32> -> vector<100x128xf32>
    %13 = arith.addf %7, %12 : vector<100x128xf32>
    %c0_15 = arith.constant 0 : index
    %c10 = arith.constant 10 : index
    %c0_16 = arith.constant 0 : index
    %14 = vector.load %arg1[%c0_15, %c10, %c0_16] : memref<1x460x128xbf16, #tpu.memory_space<vmem>>, vector<1x100x128xbf16>
    %15 = vector.shape_cast %14 : vector<1x100x128xbf16> to vector<100x128xbf16>
    %c2 = arith.constant 2 : index
    %c0_17 = arith.constant 0 : index
    %c0_18 = arith.constant 0 : index
    %16 = vector.load %arg2[%c2, %c0_17, %c0_18] : memref<7x128x128xbf16, #tpu.memory_space<vmem>>, vector<1x128x128xbf16>
    %17 = vector.shape_cast %16 : vector<1x128x128xbf16> to vector<128x128xbf16>
    %cst_19 = arith.constant dense<0.000000e+00> : vector<100x128xf32>
    %18 = tpu.matmul %15, %17, %cst_19 {dimension_numbers = #tpu.dot_dimension_numbers<[1], [0], [0], [1], [0, 0, 1, 1], [], []>} : vector<100x128xbf16>, vector<128x128xbf16>, vector<100x128xf32> -> vector<100x128xf32>
    %19 = arith.addf %13, %18 : vector<100x128xf32>
    %c0_20 = arith.constant 0 : index
    %c240 = arith.constant 240 : index
    %c0_21 = arith.constant 0 : index
    %20 = vector.load %arg1[%c0_20, %c240, %c0_21] : memref<1x460x128xbf16, #tpu.memory_space<vmem>>, vector<1x100x128xbf16>
    %21 = vector.shape_cast %20 : vector<1x100x128xbf16> to vector<100x128xbf16>
    %c3 = arith.constant 3 : index
    %c0_22 = arith.constant 0 : index
    %c0_23 = arith.constant 0 : index
    %22 = vector.load %arg2[%c3, %c0_22, %c0_23] : memref<7x128x128xbf16, #tpu.memory_space<vmem>>, vector<1x128x128xbf16>
    %23 = vector.shape_cast %22 : vector<1x128x128xbf16> to vector<128x128xbf16>
    %cst_24 = arith.constant dense<0.000000e+00> : vector<100x128xf32>
    %24 = tpu.matmul %21, %23, %cst_24 {dimension_numbers = #tpu.dot_dimension_numbers<[1], [0], [0], [1], [0, 0, 1, 1], [], []>} : vector<100x128xbf16>, vector<128x128xbf16>, vector<100x128xf32> -> vector<100x128xf32>
    %25 = arith.addf %19, %24 : vector<100x128xf32>
    %c0_25 = arith.constant 0 : index
    %c20 = arith.constant 20 : index
    %c0_26 = arith.constant 0 : index
    %26 = vector.load %arg1[%c0_25, %c20, %c0_26] : memref<1x460x128xbf16, #tpu.memory_space<vmem>>, vector<1x100x128xbf16>
    %27 = vector.shape_cast %26 : vector<1x100x128xbf16> to vector<100x128xbf16>
    %c4 = arith.constant 4 : index
    %c0_27 = arith.constant 0 : index
    %c0_28 = arith.constant 0 : index
    %28 = vector.load %arg2[%c4, %c0_27, %c0_28] : memref<7x128x128xbf16, #tpu.memory_space<vmem>>, vector<1x128x128xbf16>
    %29 = vector.shape_cast %28 : vector<1x128x128xbf16> to vector<128x128xbf16>
    %cst_29 = arith.constant dense<0.000000e+00> : vector<100x128xf32>
    %30 = tpu.matmul %27, %29, %cst_29 {dimension_numbers = #tpu.dot_dimension_numbers<[1], [0], [0], [1], [0, 0, 1, 1], [], []>} : vector<100x128xbf16>, vector<128x128xbf16>, vector<100x128xf32> -> vector<100x128xf32>
    %31 = arith.addf %25, %30 : vector<100x128xf32>
    %c0_30 = arith.constant 0 : index
    %c250 = arith.constant 250 : index
    %c0_31 = arith.constant 0 : index
    %32 = vector.load %arg1[%c0_30, %c250, %c0_31] : memref<1x460x128xbf16, #tpu.memory_space<vmem>>, vector<1x100x128xbf16>
    %33 = vector.shape_cast %32 : vector<1x100x128xbf16> to vector<100x128xbf16>
    %c5 = arith.constant 5 : index
    %c0_32 = arith.constant 0 : index
    %c0_33 = arith.constant 0 : index
    %34 = vector.load %arg2[%c5, %c0_32, %c0_33] : memref<7x128x128xbf16, #tpu.memory_space<vmem>>, vector<1x128x128xbf16>
    %35 = vector.shape_cast %34 : vector<1x128x128xbf16> to vector<128x128xbf16>
    %cst_34 = arith.constant dense<0.000000e+00> : vector<100x128xf32>
    %36 = tpu.matmul %33, %35, %cst_34 {dimension_numbers = #tpu.dot_dimension_numbers<[1], [0], [0], [1], [0, 0, 1, 1], [], []>} : vector<100x128xbf16>, vector<128x128xbf16>, vector<100x128xf32> -> vector<100x128xf32>
    %37 = arith.addf %31, %36 : vector<100x128xf32>
    %c0_35 = arith.constant 0 : index
    %c30 = arith.constant 30 : index
    %c0_36 = arith.constant 0 : index
    %38 = vector.load %arg1[%c0_35, %c30, %c0_36] : memref<1x460x128xbf16, #tpu.memory_space<vmem>>, vector<1x100x128xbf16>
    %39 = vector.shape_cast %38 : vector<1x100x128xbf16> to vector<100x128xbf16>
    %c6 = arith.constant 6 : index
    %c0_37 = arith.constant 0 : index
    %c0_38 = arith.constant 0 : index
    %40 = vector.load %arg2[%c6, %c0_37, %c0_38] : memref<7x128x128xbf16, #tpu.memory_space<vmem>>, vector<1x128x128xbf16>
    %41 = vector.shape_cast %40 : vector<1x128x128xbf16> to vector<128x128xbf16>
    %cst_39 = arith.constant dense<0.000000e+00> : vector<100x128xf32>
    %42 = tpu.matmul %39, %41, %cst_39 {dimension_numbers = #tpu.dot_dimension_numbers<[1], [0], [0], [1], [0, 0, 1, 1], [], []>} : vector<100x128xbf16>, vector<128x128xbf16>, vector<100x128xf32> -> vector<100x128xf32>
    %43 = arith.addf %37, %42 : vector<100x128xf32>
    %44 = vector.broadcast %2 : vector<1x128xf32> to vector<100x128xf32>
    %45 = arith.addf %43, %44 : vector<100x128xf32>
    %cst_40 = arith.constant 0.000000e+00 : f32
    %46 = vector.broadcast %cst_40 : f32 to vector<100x128xf32>
    %47 = arith.maximumf %45, %46 : vector<100x128xf32>
    %48 = arith.truncf %47 : vector<100x128xf32> to vector<100x128xbf16>
    %49 = vector.extract_strided_slice %48 {offsets = [0, 0], sizes = [5, 128], strides = [1, 1]} : vector<100x128xbf16> to vector<5x128xbf16>
    %c67 = arith.constant 67 : index
    %c0_41 = arith.constant 0 : index
    %50 = vector.load %arg9[%c67, %c0_41] : memref<132x256xbf16, #tpu.memory_space<vmem>>, vector<5x128xbf16>
    tpu.vector_store %arg9[%c67, %c0_41], %49 {strides = array<i32>} : memref<132x256xbf16, #tpu.memory_space<vmem>>, vector<5x128xbf16>,
    %51 = vector.extract_strided_slice %48 {offsets = [5, 0], sizes = [5, 128], strides = [1, 1]} : vector<100x128xbf16> to vector<5x128xbf16>
    %c66 = arith.constant 66 : index
    %c128 = arith.constant 128 : index
    %52 = vector.load %arg9[%c66, %c128] : memref<132x256xbf16, #tpu.memory_space<vmem>>, vector<5x128xbf16>
    tpu.vector_store %arg9[%c66, %c128], %51 {strides = array<i32>} : memref<132x256xbf16, #tpu.memory_space<vmem>>, vector<5x128xbf16>,
    %53 = vector.extract_strided_slice %48 {offsets = [10, 0], sizes = [5, 128], strides = [1, 1]} : vector<100x128xbf16> to vector<5x128xbf16>
    %c7 = arith.constant 7 : index
    %c0_42 = arith.constant 0 : index
    %54 = vector.load %arg9[%c7, %c0_42] : memref<132x256xbf16, #tpu.memory_space<vmem>>, vector<5x128xbf16>
    tpu.vector_store %arg9[%c7, %c0_42], %53 {strides = array<i32>} : memref<132x256xbf16, #tpu.memory_space<vmem>>, vector<5x128xbf16>,
    %55 = vector.extract_strided_slice %48 {offsets = [15, 0], sizes = [5, 128], strides = [1, 1]} : vector<100x128xbf16> to vector<5x128xbf16>
    %c6_43 = arith.constant 6 : index
    %c128_44 = arith.constant 128 : index
    %56 = vector.load %arg9[%c6_43, %c128_44] : memref<132x256xbf16, #tpu.memory_space<vmem>>, vector<5x128xbf16>
    tpu.vector_store %arg9[%c6_43, %c128_44], %55 {strides = array<i32>} : memref<132x256xbf16, #tpu.memory_space<vmem>>, vector<5x128xbf16>,
    %57 = vector.extract_strided_slice %48 {offsets = [20, 0], sizes = [5, 128], strides = [1, 1]} : vector<100x128xbf16> to vector<5x128xbf16>
    %c73 = arith.constant 73 : index
    %c0_45 = arith.constant 0 : index
    %58 = vector.load %arg9[%c73, %c0_45] : memref<132x256xbf16, #tpu.memory_space<vmem>>, vector<5x128xbf16>
    tpu.vector_store %arg9[%c73, %c0_45], %57 {strides = array<i32>} : memref<132x256xbf16, #tpu.memory_space<vmem>>, vector<5x128xbf16>,
    %59 = vector.extract_strided_slice %48 {offsets = [25, 0], sizes = [5, 128], strides = [1, 1]} : vector<100x128xbf16> to vector<5x128xbf16>
    %c72 = arith.constant 72 : index
    %c128_46 = arith.constant 128 : index
    %60 = vector.load %arg9[%c72, %c128_46] : memref<132x256xbf16, #tpu.memory_space<vmem>>, vector<5x128xbf16>
    tpu.vector_store %arg9[%c72, %c128_46], %59 {strides = array<i32>} : memref<132x256xbf16, #tpu.memory_space<vmem>>, vector<5x128xbf16>,
    %61 = vector.extract_strided_slice %48 {offsets = [30, 0], sizes = [5, 128], strides = [1, 1]} : vector<100x128xbf16> to vector<5x128xbf16>
    %c13 = arith.constant 13 : index
    %c0_47 = arith.constant 0 : index
    %62 = vector.load %arg9[%c13, %c0_47] : memref<132x256xbf16, #tpu.memory_space<vmem>>, vector<5x128xbf16>
    tpu.vector_store %arg9[%c13, %c0_47], %61 {strides = array<i32>} : memref<132x256xbf16, #tpu.memory_space<vmem>>, vector<5x128xbf16>,
    %63 = vector.extract_strided_slice %48 {offsets = [35, 0], sizes = [5, 128], strides = [1, 1]} : vector<100x128xbf16> to vector<5x128xbf16>
    %c12 = arith.constant 12 : index
    %c128_48 = arith.constant 128 : index
    %64 = vector.load %arg9[%c12, %c128_48] : memref<132x256xbf16, #tpu.memory_space<vmem>>, vector<5x128xbf16>
    tpu.vector_store %arg9[%c12, %c128_48], %63 {strides = array<i32>} : memref<132x256xbf16, #tpu.memory_space<vmem>>, vector<5x128xbf16>,
    %65 = vector.extract_strided_slice %48 {offsets = [40, 0], sizes = [5, 128], strides = [1, 1]} : vector<100x128xbf16> to vector<5x128xbf16>
    %c79 = arith.constant 79 : index
    %c0_49 = arith.constant 0 : index
    %66 = vector.load %arg9[%c79, %c0_49] : memref<132x256xbf16, #tpu.memory_space<vmem>>, vector<5x128xbf16>
    tpu.vector_store %arg9[%c79, %c0_49], %65 {strides = array<i32>} : memref<132x256xbf16, #tpu.memory_space<vmem>>, vector<5x128xbf16>,
    %67 = vector.extract_strided_slice %48 {offsets = [45, 0], sizes = [5, 128], strides = [1, 1]} : vector<100x128xbf16> to vector<5x128xbf16>
    %c78 = arith.constant 78 : index
    %c128_50 = arith.constant 128 : index
    %68 = vector.load %arg9[%c78, %c128_50] : memref<132x256xbf16, #tpu.memory_space<vmem>>, vector<5x128xbf16>
    tpu.vector_store %arg9[%c78, %c128_50], %67 {strides = array<i32>} : memref<132x256xbf16, #tpu.memory_space<vmem>>, vector<5x128xbf16>,
    %69 = vector.extract_strided_slice %48 {offsets = [50, 0], sizes = [5, 128], strides = [1, 1]} : vector<100x128xbf16> to vector<5x128xbf16>
    %c19 = arith.constant 19 : index
    %c0_51 = arith.constant 0 : index
    %70 = vector.load %arg9[%c19, %c0_51] : memref<132x256xbf16, #tpu.memory_space<vmem>>, vector<5x128xbf16>
    tpu.vector_store %arg9[%c19, %c0_51], %69 {strides = array<i32>} : memref<132x256xbf16, #tpu.memory_space<vmem>>, vector<5x128xbf16>,
    %71 = vector.extract_strided_slice %48 {offsets = [55, 0], sizes = [5, 128], strides = [1, 1]} : vector<100x128xbf16> to vector<5x128xbf16>
    %c18 = arith.constant 18 : index
    %c128_52 = arith.constant 128 : index
    %72 = vector.load %arg9[%c18, %c128_52] : memref<132x256xbf16, #tpu.memory_space<vmem>>, vector<5x128xbf16>
    tpu.vector_store %arg9[%c18, %c128_52], %71 {strides = array<i32>} : memref<132x256xbf16, #tpu.memory_space<vmem>>, vector<5x128xbf16>,
    %73 = vector.extract_strided_slice %48 {offsets = [60, 0], sizes = [5, 128], strides = [1, 1]} : vector<100x128xbf16> to vector<5x128xbf16>
    %c85 = arith.constant 85 : index
    %c0_53 = arith.constant 0 : index
    %74 = vector.load %arg9[%c85, %c0_53] : memref<132x256xbf16, #tpu.memory_space<vmem>>, vector<5x128xbf16>
    tpu.vector_store %arg9[%c85, %c0_53], %73 {strides = array<i32>} : memref<132x256xbf16, #tpu.memory_space<vmem>>, vector<5x128xbf16>,
    %75 = vector.extract_strided_slice %48 {offsets = [65, 0], sizes = [5, 128], strides = [1, 1]} : vector<100x128xbf16> to vector<5x128xbf16>
    %c84 = arith.constant 84 : index
    %c128_54 = arith.constant 128 : index
    %76 = vector.load %arg9[%c84, %c128_54] : memref<132x256xbf16, #tpu.memory_space<vmem>>, vector<5x128xbf16>
    tpu.vector_store %arg9[%c84, %c128_54], %75 {strides = array<i32>} : memref<132x256xbf16, #tpu.memory_space<vmem>>, vector<5x128xbf16>,
    %77 = vector.extract_strided_slice %48 {offsets = [70, 0], sizes = [5, 128], strides = [1, 1]} : vector<100x128xbf16> to vector<5x128xbf16>
    %c25 = arith.constant 25 : index
    %c0_55 = arith.constant 0 : index
    %78 = vector.load %arg9[%c25, %c0_55] : memref<132x256xbf16, #tpu.memory_space<vmem>>, vector<5x128xbf16>
    tpu.vector_store %arg9[%c25, %c0_55], %77 {strides = array<i32>} : memref<132x256xbf16, #tpu.memory_space<vmem>>, vector<5x128xbf16>,
    %79 = vector.extract_strided_slice %48 {offsets = [75, 0], sizes = [5, 128], strides = [1, 1]} : vector<100x128xbf16> to vector<5x128xbf16>
    %c24 = arith.constant 24 : index
    %c128_56 = arith.constant 128 : index
    %80 = vector.load %arg9[%c24, %c128_56] : memref<132x256xbf16, #tpu.memory_space<vmem>>, vector<5x128xbf16>
    tpu.vector_store %arg9[%c24, %c128_56], %79 {strides = array<i32>} : memref<132x256xbf16, #tpu.memory_space<vmem>>, vector<5x128xbf16>,
    %81 = vector.extract_strided_slice %48 {offsets = [80, 0], sizes = [5, 128], strides = [1, 1]} : vector<100x128xbf16> to vector<5x128xbf16>
    %c91 = arith.constant 91 : index
    %c0_57 = arith.constant 0 : index
    %82 = vector.load %arg9[%c91, %c0_57] : memref<132x256xbf16, #tpu.memory_space<vmem>>, vector<5x128xbf16>
    tpu.vector_store %arg9[%c91, %c0_57], %81 {strides = array<i32>} : memref<132x256xbf16, #tpu.memory_space<vmem>>, vector<5x128xbf16>,
    %83 = vector.extract_strided_slice %48 {offsets = [85, 0], sizes = [5, 128], strides = [1, 1]} : vector<100x128xbf16> to vector<5x128xbf16>
    %c90 = arith.constant 90 : index
    %c128_58 = arith.constant 128 : index
    %84 = vector.load %arg9[%c90, %c128_58] : memref<132x256xbf16, #tpu.memory_space<vmem>>, vector<5x128xbf16>
    tpu.vector_store %arg9[%c90, %c128_58], %83 {strides = array<i32>} : memref<132x256xbf16, #tpu.memory_space<vmem>>, vector<5x128xbf16>,
    %85 = vector.extract_strided_slice %48 {offsets = [90, 0], sizes = [5, 128], strides = [1, 1]} : vector<100x128xbf16> to vector<5x128xbf16>
    %c31 = arith.constant 31 : index
    %c0_59 = arith.constant 0 : index
    %86 = vector.load %arg9[%c31, %c0_59] : memref<132x256xbf16, #tpu.memory_space<vmem>>, vector<5x128xbf16>
    tpu.vector_store %arg9[%c31, %c0_59], %85 {strides = array<i32>} : memref<132x256xbf16, #tpu.memory_space<vmem>>, vector<5x128xbf16>,
    %87 = vector.extract_strided_slice %48 {offsets = [95, 0], sizes = [5, 128], strides = [1, 1]} : vector<100x128xbf16> to vector<5x128xbf16>
    %c30_60 = arith.constant 30 : index
    %c128_61 = arith.constant 128 : index
    %88 = vector.load %arg9[%c30_60, %c128_61] : memref<132x256xbf16, #tpu.memory_space<vmem>>, vector<5x128xbf16>
    tpu.vector_store %arg9[%c30_60, %c128_61], %87 {strides = array<i32>} : memref<132x256xbf16, #tpu.memory_space<vmem>>, vector<5x128xbf16>,
    %c0_62 = arith.constant 0 : index
    %c100 = arith.constant 100 : index
    %c0_63 = arith.constant 0 : index
    %89 = vector.load %arg1[%c0_62, %c100, %c0_63] : memref<1x460x128xbf16, #tpu.memory_space<vmem>>, vector<1x100x128xbf16>
    %90 = vector.shape_cast %89 : vector<1x100x128xbf16> to vector<100x128xbf16>
    %c0_64 = arith.constant 0 : index
    %c0_65 = arith.constant 0 : index
    %c0_66 = arith.constant 0 : index
    %91 = vector.load %arg2[%c0_64, %c0_65, %c0_66] : memref<7x128x128xbf16, #tpu.memory_space<vmem>>, vector<1x128x128xbf16>
    %92 = vector.shape_cast %91 : vector<1x128x128xbf16> to vector<128x128xbf16>
    %cst_67 = arith.constant dense<0.000000e+00> : vector<100x128xf32>
    %93 = tpu.matmul %90, %92, %cst_67 {dimension_numbers = #tpu.dot_dimension_numbers<[1], [0], [0], [1], [0, 0, 1, 1], [], []>} : vector<100x128xbf16>, vector<128x128xbf16>, vector<100x128xf32> -> vector<100x128xf32>
    %c0_68 = arith.constant 0 : index
    %c330 = arith.constant 330 : index
    %c0_69 = arith.constant 0 : index
    %94 = vector.load %arg1[%c0_68, %c330, %c0_69] : memref<1x460x128xbf16, #tpu.memory_space<vmem>>, vector<1x100x128xbf16>
    %95 = vector.shape_cast %94 : vector<1x100x128xbf16> to vector<100x128xbf16>
    %c1_70 = arith.constant 1 : index
    %c0_71 = arith.constant 0 : index
    %c0_72 = arith.constant 0 : index
    %96 = vector.load %arg2[%c1_70, %c0_71, %c0_72] : memref<7x128x128xbf16, #tpu.memory_space<vmem>>, vector<1x128x128xbf16>
    %97 = vector.shape_cast %96 : vector<1x128x128xbf16> to vector<128x128xbf16>
    %cst_73 = arith.constant dense<0.000000e+00> : vector<100x128xf32>
    %98 = tpu.matmul %95, %97, %cst_73 {dimension_numbers = #tpu.dot_dimension_numbers<[1], [0], [0], [1], [0, 0, 1, 1], [], []>} : vector<100x128xbf16>, vector<128x128xbf16>, vector<100x128xf32> -> vector<100x128xf32>
    %99 = arith.addf %93, %98 : vector<100x128xf32>
    %c0_74 = arith.constant 0 : index
    %c110 = arith.constant 110 : index
    %c0_75 = arith.constant 0 : index
    %100 = vector.load %arg1[%c0_74, %c110, %c0_75] : memref<1x460x128xbf16, #tpu.memory_space<vmem>>, vector<1x100x128xbf16>
    %101 = vector.shape_cast %100 : vector<1x100x128xbf16> to vector<100x128xbf16>
    %c2_76 = arith.constant 2 : index
    %c0_77 = arith.constant 0 : index
    %c0_78 = arith.constant 0 : index
    %102 = vector.load %arg2[%c2_76, %c0_77, %c0_78] : memref<7x128x128xbf16, #tpu.memory_space<vmem>>, vector<1x128x128xbf16>
    %103 = vector.shape_cast %102 : vector<1x128x128xbf16> to vector<128x128xbf16>
    %cst_79 = arith.constant dense<0.000000e+00> : vector<100x128xf32>
    %104 = tpu.matmul %101, %103, %cst_79 {dimension_numbers = #tpu.dot_dimension_numbers<[1], [0], [0], [1], [0, 0, 1, 1], [], []>} : vector<100x128xbf16>, vector<128x128xbf16>, vector<100x128xf32> -> vector<100x128xf32>
    %105 = arith.addf %99, %104 : vector<100x128xf32>
    %c0_80 = arith.constant 0 : index
    %c340 = arith.constant 340 : index
    %c0_81 = arith.constant 0 : index
    %106 = vector.load %arg1[%c0_80, %c340, %c0_81] : memref<1x460x128xbf16, #tpu.memory_space<vmem>>, vector<1x100x128xbf16>
    %107 = vector.shape_cast %106 : vector<1x100x128xbf16> to vector<100x128xbf16>
    %c3_82 = arith.constant 3 : index
    %c0_83 = arith.constant 0 : index
    %c0_84 = arith.constant 0 : index
    %108 = vector.load %arg2[%c3_82, %c0_83, %c0_84] : memref<7x128x128xbf16, #tpu.memory_space<vmem>>, vector<1x128x128xbf16>
    %109 = vector.shape_cast %108 : vector<1x128x128xbf16> to vector<128x128xbf16>
    %cst_85 = arith.constant dense<0.000000e+00> : vector<100x128xf32>
    %110 = tpu.matmul %107, %109, %cst_85 {dimension_numbers = #tpu.dot_dimension_numbers<[1], [0], [0], [1], [0, 0, 1, 1], [], []>} : vector<100x128xbf16>, vector<128x128xbf16>, vector<100x128xf32> -> vector<100x128xf32>
    %111 = arith.addf %105, %110 : vector<100x128xf32>
    %c0_86 = arith.constant 0 : index
    %c120 = arith.constant 120 : index
    %c0_87 = arith.constant 0 : index
    %112 = vector.load %arg1[%c0_86, %c120, %c0_87] : memref<1x460x128xbf16, #tpu.memory_space<vmem>>, vector<1x100x128xbf16>
    %113 = vector.shape_cast %112 : vector<1x100x128xbf16> to vector<100x128xbf16>
    %c4_88 = arith.constant 4 : index
    %c0_89 = arith.constant 0 : index
    %c0_90 = arith.constant 0 : index
    %114 = vector.load %arg2[%c4_88, %c0_89, %c0_90] : memref<7x128x128xbf16, #tpu.memory_space<vmem>>, vector<1x128x128xbf16>
    %115 = vector.shape_cast %114 : vector<1x128x128xbf16> to vector<128x128xbf16>
    %cst_91 = arith.constant dense<0.000000e+00> : vector<100x128xf32>
    %116 = tpu.matmul %113, %115, %cst_91 {dimension_numbers = #tpu.dot_dimension_numbers<[1], [0], [0], [1], [0, 0, 1, 1], [], []>} : vector<100x128xbf16>, vector<128x128xbf16>, vector<100x128xf32> -> vector<100x128xf32>
    %117 = arith.addf %111, %116 : vector<100x128xf32>
    %c0_92 = arith.constant 0 : index
    %c350 = arith.constant 350 : index
    %c0_93 = arith.constant 0 : index
    %118 = vector.load %arg1[%c0_92, %c350, %c0_93] : memref<1x460x128xbf16, #tpu.memory_space<vmem>>, vector<1x100x128xbf16>
    %119 = vector.shape_cast %118 : vector<1x100x128xbf16> to vector<100x128xbf16>
    %c5_94 = arith.constant 5 : index
    %c0_95 = arith.constant 0 : index
    %c0_96 = arith.constant 0 : index
    %120 = vector.load %arg2[%c5_94, %c0_95, %c0_96] : memref<7x128x128xbf16, #tpu.memory_space<vmem>>, vector<1x128x128xbf16>
    %121 = vector.shape_cast %120 : vector<1x128x128xbf16> to vector<128x128xbf16>
    %cst_97 = arith.constant dense<0.000000e+00> : vector<100x128xf32>
    %122 = tpu.matmul %119, %121, %cst_97 {dimension_numbers = #tpu.dot_dimension_numbers<[1], [0], [0], [1], [0, 0, 1, 1], [], []>} : vector<100x128xbf16>, vector<128x128xbf16>, vector<100x128xf32> -> vector<100x128xf32>
    %123 = arith.addf %117, %122 : vector<100x128xf32>
    %c0_98 = arith.constant 0 : index
    %c130 = arith.constant 130 : index
    %c0_99 = arith.constant 0 : index
    %124 = vector.load %arg1[%c0_98, %c130, %c0_99] : memref<1x460x128xbf16, #tpu.memory_space<vmem>>, vector<1x100x128xbf16>
    %125 = vector.shape_cast %124 : vector<1x100x128xbf16> to vector<100x128xbf16>
    %c6_100 = arith.constant 6 : index
    %c0_101 = arith.constant 0 : index
    %c0_102 = arith.constant 0 : index
    %126 = vector.load %arg2[%c6_100, %c0_101, %c0_102] : memref<7x128x128xbf16, #tpu.memory_space<vmem>>, vector<1x128x128xbf16>
    %127 = vector.shape_cast %126 : vector<1x128x128xbf16> to vector<128x128xbf16>
    %cst_103 = arith.constant dense<0.000000e+00> : vector<100x128xf32>
    %128 = tpu.matmul %125, %127, %cst_103 {dimension_numbers = #tpu.dot_dimension_numbers<[1], [0], [0], [1], [0, 0, 1, 1], [], []>} : vector<100x128xbf16>, vector<128x128xbf16>, vector<100x128xf32> -> vector<100x128xf32>
    %129 = arith.addf %123, %128 : vector<100x128xf32>
    %130 = vector.broadcast %2 : vector<1x128xf32> to vector<100x128xf32>
    %131 = arith.addf %129, %130 : vector<100x128xf32>
    %cst_104 = arith.constant 0.000000e+00 : f32
    %132 = vector.broadcast %cst_104 : f32 to vector<100x128xf32>
    %133 = arith.maximumf %131, %132 : vector<100x128xf32>
    %134 = arith.truncf %133 : vector<100x128xf32> to vector<100x128xbf16>
    %135 = vector.extract_strided_slice %134 {offsets = [0, 0], sizes = [5, 128], strides = [1, 1]} : vector<100x128xbf16> to vector<5x128xbf16>
    %c97 = arith.constant 97 : index
    %c0_105 = arith.constant 0 : index
    %136 = vector.load %arg9[%c97, %c0_105] : memref<132x256xbf16, #tpu.memory_space<vmem>>, vector<5x128xbf16>
    tpu.vector_store %arg9[%c97, %c0_105], %135 {strides = array<i32>} : memref<132x256xbf16, #tpu.memory_space<vmem>>, vector<5x128xbf16>,
    %137 = vector.extract_strided_slice %134 {offsets = [5, 0], sizes = [5, 128], strides = [1, 1]} : vector<100x128xbf16> to vector<5x128xbf16>
    %c96 = arith.constant 96 : index
    %c128_106 = arith.constant 128 : index
    %138 = vector.load %arg9[%c96, %c128_106] : memref<132x256xbf16, #tpu.memory_space<vmem>>, vector<5x128xbf16>
    tpu.vector_store %arg9[%c96, %c128_106], %137 {strides = array<i32>} : memref<132x256xbf16, #tpu.memory_space<vmem>>, vector<5x128xbf16>,
    %139 = vector.extract_strided_slice %134 {offsets = [10, 0], sizes = [5, 128], strides = [1, 1]} : vector<100x128xbf16> to vector<5x128xbf16>
    %c37 = arith.constant 37 : index
    %c0_107 = arith.constant 0 : index
    %140 = vector.load %arg9[%c37, %c0_107] : memref<132x256xbf16, #tpu.memory_space<vmem>>, vector<5x128xbf16>
    tpu.vector_store %arg9[%c37, %c0_107], %139 {strides = array<i32>} : memref<132x256xbf16, #tpu.memory_space<vmem>>, vector<5x128xbf16>,
    %141 = vector.extract_strided_slice %134 {offsets = [15, 0], sizes = [5, 128], strides = [1, 1]} : vector<100x128xbf16> to vector<5x128xbf16>
    %c36 = arith.constant 36 : index
    %c128_108 = arith.constant 128 : index
    %142 = vector.load %arg9[%c36, %c128_108] : memref<132x256xbf16, #tpu.memory_space<vmem>>, vector<5x128xbf16>
    tpu.vector_store %arg9[%c36, %c128_108], %141 {strides = array<i32>} : memref<132x256xbf16, #tpu.memory_space<vmem>>, vector<5x128xbf16>,
    %143 = vector.extract_strided_slice %134 {offsets = [20, 0], sizes = [5, 128], strides = [1, 1]} : vector<100x128xbf16> to vector<5x128xbf16>
    %c103 = arith.constant 103 : index
    %c0_109 = arith.constant 0 : index
    %144 = vector.load %arg9[%c103, %c0_109] : memref<132x256xbf16, #tpu.memory_space<vmem>>, vector<5x128xbf16>
    tpu.vector_store %arg9[%c103, %c0_109], %143 {strides = array<i32>} : memref<132x256xbf16, #tpu.memory_space<vmem>>, vector<5x128xbf16>,
    %145 = vector.extract_strided_slice %134 {offsets = [25, 0], sizes = [5, 128], strides = [1, 1]} : vector<100x128xbf16> to vector<5x128xbf16>
    %c102 = arith.constant 102 : index
    %c128_110 = arith.constant 128 : index
    %146 = vector.load %arg9[%c102, %c128_110] : memref<132x256xbf16, #tpu.memory_space<vmem>>, vector<5x128xbf16>
    tpu.vector_store %arg9[%c102, %c128_110], %145 {strides = array<i32>} : memref<132x256xbf16, #tpu.memory_space<vmem>>, vector<5x128xbf16>,
    %147 = vector.extract_strided_slice %134 {offsets = [30, 0], sizes = [5, 128], strides = [1, 1]} : vector<100x128xbf16> to vector<5x128xbf16>
    %c43 = arith.constant 43 : index
    %c0_111 = arith.constant 0 : index
    %148 = vector.load %arg9[%c43, %c0_111] : memref<132x256xbf16, #tpu.memory_space<vmem>>, vector<5x128xbf16>
    tpu.vector_store %arg9[%c43, %c0_111], %147 {strides = array<i32>} : memref<132x256xbf16, #tpu.memory_space<vmem>>, vector<5x128xbf16>,
    %149 = vector.extract_strided_slice %134 {offsets = [35, 0], sizes = [5, 128], strides = [1, 1]} : vector<100x128xbf16> to vector<5x128xbf16>
    %c42 = arith.constant 42 : index
    %c128_112 = arith.constant 128 : index
    %150 = vector.load %arg9[%c42, %c128_112] : memref<132x256xbf16, #tpu.memory_space<vmem>>, vector<5x128xbf16>
    tpu.vector_store %arg9[%c42, %c128_112], %149 {strides = array<i32>} : memref<132x256xbf16, #tpu.memory_space<vmem>>, vector<5x128xbf16>,
    %151 = vector.extract_strided_slice %134 {offsets = [40, 0], sizes = [5, 128], strides = [1, 1]} : vector<100x128xbf16> to vector<5x128xbf16>
    %c109 = arith.constant 109 : index
    %c0_113 = arith.constant 0 : index
    %152 = vector.load %arg9[%c109, %c0_113] : memref<132x256xbf16, #tpu.memory_space<vmem>>, vector<5x128xbf16>
    tpu.vector_store %arg9[%c109, %c0_113], %151 {strides = array<i32>} : memref<132x256xbf16, #tpu.memory_space<vmem>>, vector<5x128xbf16>,
    %153 = vector.extract_strided_slice %134 {offsets = [45, 0], sizes = [5, 128], strides = [1, 1]} : vector<100x128xbf16> to vector<5x128xbf16>
    %c108 = arith.constant 108 : index
    %c128_114 = arith.constant 128 : index
    %154 = vector.load %arg9[%c108, %c128_114] : memref<132x256xbf16, #tpu.memory_space<vmem>>, vector<5x128xbf16>
    tpu.vector_store %arg9[%c108, %c128_114], %153 {strides = array<i32>} : memref<132x256xbf16, #tpu.memory_space<vmem>>, vector<5x128xbf16>,
    %155 = vector.extract_strided_slice %134 {offsets = [50, 0], sizes = [5, 128], strides = [1, 1]} : vector<100x128xbf16> to vector<5x128xbf16>
    %c49 = arith.constant 49 : index
    %c0_115 = arith.constant 0 : index
    %156 = vector.load %arg9[%c49, %c0_115] : memref<132x256xbf16, #tpu.memory_space<vmem>>, vector<5x128xbf16>
    tpu.vector_store %arg9[%c49, %c0_115], %155 {strides = array<i32>} : memref<132x256xbf16, #tpu.memory_space<vmem>>, vector<5x128xbf16>,
    %157 = vector.extract_strided_slice %134 {offsets = [55, 0], sizes = [5, 128], strides = [1, 1]} : vector<100x128xbf16> to vector<5x128xbf16>
    %c48 = arith.constant 48 : index
    %c128_116 = arith.constant 128 : index
    %158 = vector.load %arg9[%c48, %c128_116] : memref<132x256xbf16, #tpu.memory_space<vmem>>, vector<5x128xbf16>
    tpu.vector_store %arg9[%c48, %c128_116], %157 {strides = array<i32>} : memref<132x256xbf16, #tpu.memory_space<vmem>>, vector<5x128xbf16>,
    %159 = vector.extract_strided_slice %134 {offsets = [60, 0], sizes = [5, 128], strides = [1, 1]} : vector<100x128xbf16> to vector<5x128xbf16>
    %c115 = arith.constant 115 : index
    %c0_117 = arith.constant 0 : index
    %160 = vector.load %arg9[%c115, %c0_117] : memref<132x256xbf16, #tpu.memory_space<vmem>>, vector<5x128xbf16>
    tpu.vector_store %arg9[%c115, %c0_117], %159 {strides = array<i32>} : memref<132x256xbf16, #tpu.memory_space<vmem>>, vector<5x128xbf16>,
    %161 = vector.extract_strided_slice %134 {offsets = [65, 0], sizes = [5, 128], strides = [1, 1]} : vector<100x128xbf16> to vector<5x128xbf16>
    %c114 = arith.constant 114 : index
    %c128_118 = arith.constant 128 : index
    %162 = vector.load %arg9[%c114, %c128_118] : memref<132x256xbf16, #tpu.memory_space<vmem>>, vector<5x128xbf16>
    tpu.vector_store %arg9[%c114, %c128_118], %161 {strides = array<i32>} : memref<132x256xbf16, #tpu.memory_space<vmem>>, vector<5x128xbf16>,
    %163 = vector.extract_strided_slice %134 {offsets = [70, 0], sizes = [5, 128], strides = [1, 1]} : vector<100x128xbf16> to vector<5x128xbf16>
    %c55 = arith.constant 55 : index
    %c0_119 = arith.constant 0 : index
    %164 = vector.load %arg9[%c55, %c0_119] : memref<132x256xbf16, #tpu.memory_space<vmem>>, vector<5x128xbf16>
    tpu.vector_store %arg9[%c55, %c0_119], %163 {strides = array<i32>} : memref<132x256xbf16, #tpu.memory_space<vmem>>, vector<5x128xbf16>,
    %165 = vector.extract_strided_slice %134 {offsets = [75, 0], sizes = [5, 128], strides = [1, 1]} : vector<100x128xbf16> to vector<5x128xbf16>
    %c54 = arith.constant 54 : index
    %c128_120 = arith.constant 128 : index
    %166 = vector.load %arg9[%c54, %c128_120] : memref<132x256xbf16, #tpu.memory_space<vmem>>, vector<5x128xbf16>
    tpu.vector_store %arg9[%c54, %c128_120], %165 {strides = array<i32>} : memref<132x256xbf16, #tpu.memory_space<vmem>>, vector<5x128xbf16>,
    %167 = vector.extract_strided_slice %134 {offsets = [80, 0], sizes = [5, 128], strides = [1, 1]} : vector<100x128xbf16> to vector<5x128xbf16>
    %c121 = arith.constant 121 : index
    %c0_121 = arith.constant 0 : index
    %168 = vector.load %arg9[%c121, %c0_121] : memref<132x256xbf16, #tpu.memory_space<vmem>>, vector<5x128xbf16>
    tpu.vector_store %arg9[%c121, %c0_121], %167 {strides = array<i32>} : memref<132x256xbf16, #tpu.memory_space<vmem>>, vector<5x128xbf16>,
    %169 = vector.extract_strided_slice %134 {offsets = [85, 0], sizes = [5, 128], strides = [1, 1]} : vector<100x128xbf16> to vector<5x128xbf16>
    %c120_122 = arith.constant 120 : index
    %c128_123 = arith.constant 128 : index
    %170 = vector.load %arg9[%c120_122, %c128_123] : memref<132x256xbf16, #tpu.memory_space<vmem>>, vector<5x128xbf16>
    tpu.vector_store %arg9[%c120_122, %c128_123], %169 {strides = array<i32>} : memref<132x256xbf16, #tpu.memory_space<vmem>>, vector<5x128xbf16>,
    %171 = vector.extract_strided_slice %134 {offsets = [90, 0], sizes = [5, 128], strides = [1, 1]} : vector<100x128xbf16> to vector<5x128xbf16>
    %c61 = arith.constant 61 : index
    %c0_124 = arith.constant 0 : index
    %172 = vector.load %arg9[%c61, %c0_124] : memref<132x256xbf16, #tpu.memory_space<vmem>>, vector<5x128xbf16>
    tpu.vector_store %arg9[%c61, %c0_124], %171 {strides = array<i32>} : memref<132x256xbf16, #tpu.memory_space<vmem>>, vector<5x128xbf16>,
    %173 = vector.extract_strided_slice %134 {offsets = [95, 0], sizes = [5, 128], strides = [1, 1]} : vector<100x128xbf16> to vector<5x128xbf16>
    %c60 = arith.constant 60 : index
    %c128_125 = arith.constant 128 : index
    %174 = vector.load %arg9[%c60, %c128_125] : memref<132x256xbf16, #tpu.memory_space<vmem>>, vector<5x128xbf16>
    tpu.vector_store %arg9[%c60, %c128_125], %173 {strides = array<i32>} : memref<132x256xbf16, #tpu.memory_space<vmem>>, vector<5x128xbf16>,
    %c0_126 = arith.constant 0 : index
    %c0_127 = arith.constant 0 : index
    %175 = vector.load %arg5[%c0_126, %c0_127] : memref<1x128xf32, #tpu.memory_space<vmem>>, vector<1x128xf32>
    %c0_128 = arith.constant 0 : index
    %c0_129 = arith.constant 0 : index
    %176 = vector.load %arg9[%c0_128, %c0_129] : memref<132x256xbf16, #tpu.memory_space<vmem>>, vector<48x256xbf16>
    %c0_130 = arith.constant 0 : index
    %c0_131 = arith.constant 0 : index
    %c0_132 = arith.constant 0 : index
    %177 = vector.load %arg4[%c0_130, %c0_131, %c0_132] : memref<7x256x128xbf16, #tpu.memory_space<vmem>>, vector<1x256x128xbf16>
    %178 = vector.shape_cast %177 : vector<1x256x128xbf16> to vector<256x128xbf16>
    %cst_133 = arith.constant dense<0.000000e+00> : vector<48x128xf32>
    %179 = tpu.matmul %176, %178, %cst_133 {dimension_numbers = #tpu.dot_dimension_numbers<[1], [0], [0], [1], [0, 0, 1, 1], [], []>} : vector<48x256xbf16>, vector<256x128xbf16>, vector<48x128xf32> -> vector<48x128xf32>
    %c66_134 = arith.constant 66 : index
    %c0_135 = arith.constant 0 : index
    %180 = vector.load %arg9[%c66_134, %c0_135] : memref<132x256xbf16, #tpu.memory_space<vmem>>, vector<48x256xbf16>
    %c1_136 = arith.constant 1 : index
    %c0_137 = arith.constant 0 : index
    %c0_138 = arith.constant 0 : index
    %181 = vector.load %arg4[%c1_136, %c0_137, %c0_138] : memref<7x256x128xbf16, #tpu.memory_space<vmem>>, vector<1x256x128xbf16>
    %182 = vector.shape_cast %181 : vector<1x256x128xbf16> to vector<256x128xbf16>
    %cst_139 = arith.constant dense<0.000000e+00> : vector<48x128xf32>
    %183 = tpu.matmul %180, %182, %cst_139 {dimension_numbers = #tpu.dot_dimension_numbers<[1], [0], [0], [1], [0, 0, 1, 1], [], []>} : vector<48x256xbf16>, vector<256x128xbf16>, vector<48x128xf32> -> vector<48x128xf32>
    %184 = arith.addf %179, %183 : vector<48x128xf32>
    %c6_140 = arith.constant 6 : index
    %c0_141 = arith.constant 0 : index
    %185 = vector.load %arg9[%c6_140, %c0_141] : memref<132x256xbf16, #tpu.memory_space<vmem>>, vector<48x256xbf16>
    %c2_142 = arith.constant 2 : index
    %c0_143 = arith.constant 0 : index
    %c0_144 = arith.constant 0 : index
    %186 = vector.load %arg4[%c2_142, %c0_143, %c0_144] : memref<7x256x128xbf16, #tpu.memory_space<vmem>>, vector<1x256x128xbf16>
    %187 = vector.shape_cast %186 : vector<1x256x128xbf16> to vector<256x128xbf16>
    %cst_145 = arith.constant dense<0.000000e+00> : vector<48x128xf32>
    %188 = tpu.matmul %185, %187, %cst_145 {dimension_numbers = #tpu.dot_dimension_numbers<[1], [0], [0], [1], [0, 0, 1, 1], [], []>} : vector<48x256xbf16>, vector<256x128xbf16>, vector<48x128xf32> -> vector<48x128xf32>
    %189 = arith.addf %184, %188 : vector<48x128xf32>
    %c72_146 = arith.constant 72 : index
    %c0_147 = arith.constant 0 : index
    %190 = vector.load %arg9[%c72_146, %c0_147] : memref<132x256xbf16, #tpu.memory_space<vmem>>, vector<48x256xbf16>
    %c3_148 = arith.constant 3 : index
    %c0_149 = arith.constant 0 : index
    %c0_150 = arith.constant 0 : index
    %191 = vector.load %arg4[%c3_148, %c0_149, %c0_150] : memref<7x256x128xbf16, #tpu.memory_space<vmem>>, vector<1x256x128xbf16>
    %192 = vector.shape_cast %191 : vector<1x256x128xbf16> to vector<256x128xbf16>
    %cst_151 = arith.constant dense<0.000000e+00> : vector<48x128xf32>
    %193 = tpu.matmul %190, %192, %cst_151 {dimension_numbers = #tpu.dot_dimension_numbers<[1], [0], [0], [1], [0, 0, 1, 1], [], []>} : vector<48x256xbf16>, vector<256x128xbf16>, vector<48x128xf32> -> vector<48x128xf32>
    %194 = arith.addf %189, %193 : vector<48x128xf32>
    %c12_152 = arith.constant 12 : index
    %c0_153 = arith.constant 0 : index
    %195 = vector.load %arg9[%c12_152, %c0_153] : memref<132x256xbf16, #tpu.memory_space<vmem>>, vector<48x256xbf16>
    %c4_154 = arith.constant 4 : index
    %c0_155 = arith.constant 0 : index
    %c0_156 = arith.constant 0 : index
    %196 = vector.load %arg4[%c4_154, %c0_155, %c0_156] : memref<7x256x128xbf16, #tpu.memory_space<vmem>>, vector<1x256x128xbf16>
    %197 = vector.shape_cast %196 : vector<1x256x128xbf16> to vector<256x128xbf16>
    %cst_157 = arith.constant dense<0.000000e+00> : vector<48x128xf32>
    %198 = tpu.matmul %195, %197, %cst_157 {dimension_numbers = #tpu.dot_dimension_numbers<[1], [0], [0], [1], [0, 0, 1, 1], [], []>} : vector<48x256xbf16>, vector<256x128xbf16>, vector<48x128xf32> -> vector<48x128xf32>
    %199 = arith.addf %194, %198 : vector<48x128xf32>
    %c78_158 = arith.constant 78 : index
    %c0_159 = arith.constant 0 : index
    %200 = vector.load %arg9[%c78_158, %c0_159] : memref<132x256xbf16, #tpu.memory_space<vmem>>, vector<48x256xbf16>
    %c5_160 = arith.constant 5 : index
    %c0_161 = arith.constant 0 : index
    %c0_162 = arith.constant 0 : index
    %201 = vector.load %arg4[%c5_160, %c0_161, %c0_162] : memref<7x256x128xbf16, #tpu.memory_space<vmem>>, vector<1x256x128xbf16>
    %202 = vector.shape_cast %201 : vector<1x256x128xbf16> to vector<256x128xbf16>
    %cst_163 = arith.constant dense<0.000000e+00> : vector<48x128xf32>
    %203 = tpu.matmul %200, %202, %cst_163 {dimension_numbers = #tpu.dot_dimension_numbers<[1], [0], [0], [1], [0, 0, 1, 1], [], []>} : vector<48x256xbf16>, vector<256x128xbf16>, vector<48x128xf32> -> vector<48x128xf32>
    %204 = arith.addf %199, %203 : vector<48x128xf32>
    %c18_164 = arith.constant 18 : index
    %c0_165 = arith.constant 0 : index
    %205 = vector.load %arg9[%c18_164, %c0_165] : memref<132x256xbf16, #tpu.memory_space<vmem>>, vector<48x256xbf16>
    %c6_166 = arith.constant 6 : index
    %c0_167 = arith.constant 0 : index
    %c0_168 = arith.constant 0 : index
    %206 = vector.load %arg4[%c6_166, %c0_167, %c0_168] : memref<7x256x128xbf16, #tpu.memory_space<vmem>>, vector<1x256x128xbf16>
    %207 = vector.shape_cast %206 : vector<1x256x128xbf16> to vector<256x128xbf16>
    %cst_169 = arith.constant dense<0.000000e+00> : vector<48x128xf32>
    %208 = tpu.matmul %205, %207, %cst_169 {dimension_numbers = #tpu.dot_dimension_numbers<[1], [0], [0], [1], [0, 0, 1, 1], [], []>} : vector<48x256xbf16>, vector<256x128xbf16>, vector<48x128xf32> -> vector<48x128xf32>
    %209 = arith.addf %204, %208 : vector<48x128xf32>
    %210 = vector.broadcast %175 : vector<1x128xf32> to vector<48x128xf32>
    %211 = arith.addf %209, %210 : vector<48x128xf32>
    %cst_170 = arith.constant 0.000000e+00 : f32
    %212 = vector.broadcast %cst_170 : f32 to vector<48x128xf32>
    %213 = arith.maximumf %211, %212 : vector<48x128xf32>
    %214 = arith.truncf %213 : vector<48x128xf32> to vector<48x128xbf16>
    %c0_171 = arith.constant 0 : index
    %c0_172 = arith.constant 0 : index
    %215 = vector.load %arg10[%c0_171, %c0_172] : memref<48x128xbf16, #tpu.memory_space<vmem>>, vector<48x128xbf16>
    tpu.vector_store %arg10[%c0_171, %c0_172], %214 {strides = array<i32>} : memref<48x128xbf16, #tpu.memory_space<vmem>>, vector<48x128xbf16>,
    %c0_173 = arith.constant 0 : index
    %c0_174 = arith.constant 0 : index
    %216 = vector.load %arg10[%c0_173, %c0_174] : memref<48x128xbf16, #tpu.memory_space<vmem>>, vector<1x128xbf16>
    %c0_175 = arith.constant 0 : index
    %c0_176 = arith.constant 0 : index
    %217 = vector.load %arg11[%c0_175, %c0_176] : memref<1x6144xbf16, #tpu.memory_space<vmem>>, vector<1x128xbf16>
    tpu.vector_store %arg11[%c0_175, %c0_176], %216 {strides = array<i32>} : memref<1x6144xbf16, #tpu.memory_space<vmem>>, vector<1x128xbf16>,
    %c1_177 = arith.constant 1 : index
    %c0_178 = arith.constant 0 : index
    %218 = vector.load %arg10[%c1_177, %c0_178] : memref<48x128xbf16, #tpu.memory_space<vmem>>, vector<1x128xbf16>
    %c0_179 = arith.constant 0 : index
    %c128_180 = arith.constant 128 : index
    %219 = vector.load %arg11[%c0_179, %c128_180] : memref<1x6144xbf16, #tpu.memory_space<vmem>>, vector<1x128xbf16>
    tpu.vector_store %arg11[%c0_179, %c128_180], %218 {strides = array<i32>} : memref<1x6144xbf16, #tpu.memory_space<vmem>>, vector<1x128xbf16>,
    %c2_181 = arith.constant 2 : index
    %c0_182 = arith.constant 0 : index
    %220 = vector.load %arg10[%c2_181, %c0_182] : memref<48x128xbf16, #tpu.memory_space<vmem>>, vector<1x128xbf16>
    %c0_183 = arith.constant 0 : index
    %c256 = arith.constant 256 : index
    %221 = vector.load %arg11[%c0_183, %c256] : memref<1x6144xbf16, #tpu.memory_space<vmem>>, vector<1x128xbf16>
    tpu.vector_store %arg11[%c0_183, %c256], %220 {strides = array<i32>} : memref<1x6144xbf16, #tpu.memory_space<vmem>>, vector<1x128xbf16>,
    %c3_184 = arith.constant 3 : index
    %c0_185 = arith.constant 0 : index
    %222 = vector.load %arg10[%c3_184, %c0_185] : memref<48x128xbf16, #tpu.memory_space<vmem>>, vector<1x128xbf16>
    %c0_186 = arith.constant 0 : index
    %c384 = arith.constant 384 : index
    %223 = vector.load %arg11[%c0_186, %c384] : memref<1x6144xbf16, #tpu.memory_space<vmem>>, vector<1x128xbf16>
    tpu.vector_store %arg11[%c0_186, %c384], %222 {strides = array<i32>} : memref<1x6144xbf16, #tpu.memory_space<vmem>>, vector<1x128xbf16>,
    %c4_187 = arith.constant 4 : index
    %c0_188 = arith.constant 0 : index
    %224 = vector.load %arg10[%c4_187, %c0_188] : memref<48x128xbf16, #tpu.memory_space<vmem>>, vector<1x128xbf16>
    %c0_189 = arith.constant 0 : index
    %c512 = arith.constant 512 : index
    %225 = vector.load %arg11[%c0_189, %c512] : memref<1x6144xbf16, #tpu.memory_space<vmem>>, vector<1x128xbf16>
    tpu.vector_store %arg11[%c0_189, %c512], %224 {strides = array<i32>} : memref<1x6144xbf16, #tpu.memory_space<vmem>>, vector<1x128xbf16>,
    %c5_190 = arith.constant 5 : index
    %c0_191 = arith.constant 0 : index
    %226 = vector.load %arg10[%c5_190, %c0_191] : memref<48x128xbf16, #tpu.memory_space<vmem>>, vector<1x128xbf16>
    %c0_192 = arith.constant 0 : index
    %c640 = arith.constant 640 : index
    %227 = vector.load %arg11[%c0_192, %c640] : memref<1x6144xbf16, #tpu.memory_space<vmem>>, vector<1x128xbf16>
    tpu.vector_store %arg11[%c0_192, %c640], %226 {strides = array<i32>} : memref<1x6144xbf16, #tpu.memory_space<vmem>>, vector<1x128xbf16>,
    %c6_193 = arith.constant 6 : index
    %c0_194 = arith.constant 0 : index
    %228 = vector.load %arg10[%c6_193, %c0_194] : memref<48x128xbf16, #tpu.memory_space<vmem>>, vector<1x128xbf16>
    %c0_195 = arith.constant 0 : index
    %c768 = arith.constant 768 : index
    %229 = vector.load %arg11[%c0_195, %c768] : memref<1x6144xbf16, #tpu.memory_space<vmem>>, vector<1x128xbf16>
    tpu.vector_store %arg11[%c0_195, %c768], %228 {strides = array<i32>} : memref<1x6144xbf16, #tpu.memory_space<vmem>>, vector<1x128xbf16>,
    %c7_196 = arith.constant 7 : index
    %c0_197 = arith.constant 0 : index
    %230 = vector.load %arg10[%c7_196, %c0_197] : memref<48x128xbf16, #tpu.memory_space<vmem>>, vector<1x128xbf16>
    %c0_198 = arith.constant 0 : index
    %c896 = arith.constant 896 : index
    %231 = vector.load %arg11[%c0_198, %c896] : memref<1x6144xbf16, #tpu.memory_space<vmem>>, vector<1x128xbf16>
    tpu.vector_store %arg11[%c0_198, %c896], %230 {strides = array<i32>} : memref<1x6144xbf16, #tpu.memory_space<vmem>>, vector<1x128xbf16>,
    %c8 = arith.constant 8 : index
    %c0_199 = arith.constant 0 : index
    %232 = vector.load %arg10[%c8, %c0_199] : memref<48x128xbf16, #tpu.memory_space<vmem>>, vector<1x128xbf16>
    %c0_200 = arith.constant 0 : index
    %c1024 = arith.constant 1024 : index
    %233 = vector.load %arg11[%c0_200, %c1024] : memref<1x6144xbf16, #tpu.memory_space<vmem>>, vector<1x128xbf16>
    tpu.vector_store %arg11[%c0_200, %c1024], %232 {strides = array<i32>} : memref<1x6144xbf16, #tpu.memory_space<vmem>>, vector<1x128xbf16>,
    %c9 = arith.constant 9 : index
    %c0_201 = arith.constant 0 : index
    %234 = vector.load %arg10[%c9, %c0_201] : memref<48x128xbf16, #tpu.memory_space<vmem>>, vector<1x128xbf16>
    %c0_202 = arith.constant 0 : index
    %c1152 = arith.constant 1152 : index
    %235 = vector.load %arg11[%c0_202, %c1152] : memref<1x6144xbf16, #tpu.memory_space<vmem>>, vector<1x128xbf16>
    tpu.vector_store %arg11[%c0_202, %c1152], %234 {strides = array<i32>} : memref<1x6144xbf16, #tpu.memory_space<vmem>>, vector<1x128xbf16>,
    %c10_203 = arith.constant 10 : index
    %c0_204 = arith.constant 0 : index
    %236 = vector.load %arg10[%c10_203, %c0_204] : memref<48x128xbf16, #tpu.memory_space<vmem>>, vector<1x128xbf16>
    %c0_205 = arith.constant 0 : index
    %c1280 = arith.constant 1280 : index
    %237 = vector.load %arg11[%c0_205, %c1280] : memref<1x6144xbf16, #tpu.memory_space<vmem>>, vector<1x128xbf16>
    tpu.vector_store %arg11[%c0_205, %c1280], %236 {strides = array<i32>} : memref<1x6144xbf16, #tpu.memory_space<vmem>>, vector<1x128xbf16>,
    %c11 = arith.constant 11 : index
    %c0_206 = arith.constant 0 : index
    %238 = vector.load %arg10[%c11, %c0_206] : memref<48x128xbf16, #tpu.memory_space<vmem>>, vector<1x128xbf16>
    %c0_207 = arith.constant 0 : index
    %c1408 = arith.constant 1408 : index
    %239 = vector.load %arg11[%c0_207, %c1408] : memref<1x6144xbf16, #tpu.memory_space<vmem>>, vector<1x128xbf16>
    tpu.vector_store %arg11[%c0_207, %c1408], %238 {strides = array<i32>} : memref<1x6144xbf16, #tpu.memory_space<vmem>>, vector<1x128xbf16>,
    %c12_208 = arith.constant 12 : index
    %c0_209 = arith.constant 0 : index
    %240 = vector.load %arg10[%c12_208, %c0_209] : memref<48x128xbf16, #tpu.memory_space<vmem>>, vector<1x128xbf16>
    %c0_210 = arith.constant 0 : index
    %c1536 = arith.constant 1536 : index
    %241 = vector.load %arg11[%c0_210, %c1536] : memref<1x6144xbf16, #tpu.memory_space<vmem>>, vector<1x128xbf16>
    tpu.vector_store %arg11[%c0_210, %c1536], %240 {strides = array<i32>} : memref<1x6144xbf16, #tpu.memory_space<vmem>>, vector<1x128xbf16>,
    %c13_211 = arith.constant 13 : index
    %c0_212 = arith.constant 0 : index
    %242 = vector.load %arg10[%c13_211, %c0_212] : memref<48x128xbf16, #tpu.memory_space<vmem>>, vector<1x128xbf16>
    %c0_213 = arith.constant 0 : index
    %c1664 = arith.constant 1664 : index
    %243 = vector.load %arg11[%c0_213, %c1664] : memref<1x6144xbf16, #tpu.memory_space<vmem>>, vector<1x128xbf16>
    tpu.vector_store %arg11[%c0_213, %c1664], %242 {strides = array<i32>} : memref<1x6144xbf16, #tpu.memory_space<vmem>>, vector<1x128xbf16>,
    %c14 = arith.constant 14 : index
    %c0_214 = arith.constant 0 : index
    %244 = vector.load %arg10[%c14, %c0_214] : memref<48x128xbf16, #tpu.memory_space<vmem>>, vector<1x128xbf16>
    %c0_215 = arith.constant 0 : index
    %c1792 = arith.constant 1792 : index
    %245 = vector.load %arg11[%c0_215, %c1792] : memref<1x6144xbf16, #tpu.memory_space<vmem>>, vector<1x128xbf16>
    tpu.vector_store %arg11[%c0_215, %c1792], %244 {strides = array<i32>} : memref<1x6144xbf16, #tpu.memory_space<vmem>>, vector<1x128xbf16>,
    %c15 = arith.constant 15 : index
    %c0_216 = arith.constant 0 : index
    %246 = vector.load %arg10[%c15, %c0_216] : memref<48x128xbf16, #tpu.memory_space<vmem>>, vector<1x128xbf16>
    %c0_217 = arith.constant 0 : index
    %c1920 = arith.constant 1920 : index
    %247 = vector.load %arg11[%c0_217, %c1920] : memref<1x6144xbf16, #tpu.memory_space<vmem>>, vector<1x128xbf16>
    tpu.vector_store %arg11[%c0_217, %c1920], %246 {strides = array<i32>} : memref<1x6144xbf16, #tpu.memory_space<vmem>>, vector<1x128xbf16>,
    %c16 = arith.constant 16 : index
    %c0_218 = arith.constant 0 : index
    %248 = vector.load %arg10[%c16, %c0_218] : memref<48x128xbf16, #tpu.memory_space<vmem>>, vector<1x128xbf16>
    %c0_219 = arith.constant 0 : index
    %c2048 = arith.constant 2048 : index
    %249 = vector.load %arg11[%c0_219, %c2048] : memref<1x6144xbf16, #tpu.memory_space<vmem>>, vector<1x128xbf16>
    tpu.vector_store %arg11[%c0_219, %c2048], %248 {strides = array<i32>} : memref<1x6144xbf16, #tpu.memory_space<vmem>>, vector<1x128xbf16>,
    %c17 = arith.constant 17 : index
    %c0_220 = arith.constant 0 : index
    %250 = vector.load %arg10[%c17, %c0_220] : memref<48x128xbf16, #tpu.memory_space<vmem>>, vector<1x128xbf16>
    %c0_221 = arith.constant 0 : index
    %c2176 = arith.constant 2176 : index
    %251 = vector.load %arg11[%c0_221, %c2176] : memref<1x6144xbf16, #tpu.memory_space<vmem>>, vector<1x128xbf16>
    tpu.vector_store %arg11[%c0_221, %c2176], %250 {strides = array<i32>} : memref<1x6144xbf16, #tpu.memory_space<vmem>>, vector<1x128xbf16>,
    %c18_222 = arith.constant 18 : index
    %c0_223 = arith.constant 0 : index
    %252 = vector.load %arg10[%c18_222, %c0_223] : memref<48x128xbf16, #tpu.memory_space<vmem>>, vector<1x128xbf16>
    %c0_224 = arith.constant 0 : index
    %c2304 = arith.constant 2304 : index
    %253 = vector.load %arg11[%c0_224, %c2304] : memref<1x6144xbf16, #tpu.memory_space<vmem>>, vector<1x128xbf16>
    tpu.vector_store %arg11[%c0_224, %c2304], %252 {strides = array<i32>} : memref<1x6144xbf16, #tpu.memory_space<vmem>>, vector<1x128xbf16>,
    %c19_225 = arith.constant 19 : index
    %c0_226 = arith.constant 0 : index
    %254 = vector.load %arg10[%c19_225, %c0_226] : memref<48x128xbf16, #tpu.memory_space<vmem>>, vector<1x128xbf16>
    %c0_227 = arith.constant 0 : index
    %c2432 = arith.constant 2432 : index
    %255 = vector.load %arg11[%c0_227, %c2432] : memref<1x6144xbf16, #tpu.memory_space<vmem>>, vector<1x128xbf16>
    tpu.vector_store %arg11[%c0_227, %c2432], %254 {strides = array<i32>} : memref<1x6144xbf16, #tpu.memory_space<vmem>>, vector<1x128xbf16>,
    %c20_228 = arith.constant 20 : index
    %c0_229 = arith.constant 0 : index
    %256 = vector.load %arg10[%c20_228, %c0_229] : memref<48x128xbf16, #tpu.memory_space<vmem>>, vector<1x128xbf16>
    %c0_230 = arith.constant 0 : index
    %c2560 = arith.constant 2560 : index
    %257 = vector.load %arg11[%c0_230, %c2560] : memref<1x6144xbf16, #tpu.memory_space<vmem>>, vector<1x128xbf16>
    tpu.vector_store %arg11[%c0_230, %c2560], %256 {strides = array<i32>} : memref<1x6144xbf16, #tpu.memory_space<vmem>>, vector<1x128xbf16>,
    %c21 = arith.constant 21 : index
    %c0_231 = arith.constant 0 : index
    %258 = vector.load %arg10[%c21, %c0_231] : memref<48x128xbf16, #tpu.memory_space<vmem>>, vector<1x128xbf16>
    %c0_232 = arith.constant 0 : index
    %c2688 = arith.constant 2688 : index
    %259 = vector.load %arg11[%c0_232, %c2688] : memref<1x6144xbf16, #tpu.memory_space<vmem>>, vector<1x128xbf16>
    tpu.vector_store %arg11[%c0_232, %c2688], %258 {strides = array<i32>} : memref<1x6144xbf16, #tpu.memory_space<vmem>>, vector<1x128xbf16>,
    %c22 = arith.constant 22 : index
    %c0_233 = arith.constant 0 : index
    %260 = vector.load %arg10[%c22, %c0_233] : memref<48x128xbf16, #tpu.memory_space<vmem>>, vector<1x128xbf16>
    %c0_234 = arith.constant 0 : index
    %c2816 = arith.constant 2816 : index
    %261 = vector.load %arg11[%c0_234, %c2816] : memref<1x6144xbf16, #tpu.memory_space<vmem>>, vector<1x128xbf16>
    tpu.vector_store %arg11[%c0_234, %c2816], %260 {strides = array<i32>} : memref<1x6144xbf16, #tpu.memory_space<vmem>>, vector<1x128xbf16>,
    %c23 = arith.constant 23 : index
    %c0_235 = arith.constant 0 : index
    %262 = vector.load %arg10[%c23, %c0_235] : memref<48x128xbf16, #tpu.memory_space<vmem>>, vector<1x128xbf16>
    %c0_236 = arith.constant 0 : index
    %c2944 = arith.constant 2944 : index
    %263 = vector.load %arg11[%c0_236, %c2944] : memref<1x6144xbf16, #tpu.memory_space<vmem>>, vector<1x128xbf16>
    tpu.vector_store %arg11[%c0_236, %c2944], %262 {strides = array<i32>} : memref<1x6144xbf16, #tpu.memory_space<vmem>>, vector<1x128xbf16>,
    %c24_237 = arith.constant 24 : index
    %c0_238 = arith.constant 0 : index
    %264 = vector.load %arg10[%c24_237, %c0_238] : memref<48x128xbf16, #tpu.memory_space<vmem>>, vector<1x128xbf16>
    %c0_239 = arith.constant 0 : index
    %c3072 = arith.constant 3072 : index
    %265 = vector.load %arg11[%c0_239, %c3072] : memref<1x6144xbf16, #tpu.memory_space<vmem>>, vector<1x128xbf16>
    tpu.vector_store %arg11[%c0_239, %c3072], %264 {strides = array<i32>} : memref<1x6144xbf16, #tpu.memory_space<vmem>>, vector<1x128xbf16>,
    %c25_240 = arith.constant 25 : index
    %c0_241 = arith.constant 0 : index
    %266 = vector.load %arg10[%c25_240, %c0_241] : memref<48x128xbf16, #tpu.memory_space<vmem>>, vector<1x128xbf16>
    %c0_242 = arith.constant 0 : index
    %c3200 = arith.constant 3200 : index
    %267 = vector.load %arg11[%c0_242, %c3200] : memref<1x6144xbf16, #tpu.memory_space<vmem>>, vector<1x128xbf16>
    tpu.vector_store %arg11[%c0_242, %c3200], %266 {strides = array<i32>} : memref<1x6144xbf16, #tpu.memory_space<vmem>>, vector<1x128xbf16>,
    %c26 = arith.constant 26 : index
    %c0_243 = arith.constant 0 : index
    %268 = vector.load %arg10[%c26, %c0_243] : memref<48x128xbf16, #tpu.memory_space<vmem>>, vector<1x128xbf16>
    %c0_244 = arith.constant 0 : index
    %c3328 = arith.constant 3328 : index
    %269 = vector.load %arg11[%c0_244, %c3328] : memref<1x6144xbf16, #tpu.memory_space<vmem>>, vector<1x128xbf16>
    tpu.vector_store %arg11[%c0_244, %c3328], %268 {strides = array<i32>} : memref<1x6144xbf16, #tpu.memory_space<vmem>>, vector<1x128xbf16>,
    %c27 = arith.constant 27 : index
    %c0_245 = arith.constant 0 : index
    %270 = vector.load %arg10[%c27, %c0_245] : memref<48x128xbf16, #tpu.memory_space<vmem>>, vector<1x128xbf16>
    %c0_246 = arith.constant 0 : index
    %c3456 = arith.constant 3456 : index
    %271 = vector.load %arg11[%c0_246, %c3456] : memref<1x6144xbf16, #tpu.memory_space<vmem>>, vector<1x128xbf16>
    tpu.vector_store %arg11[%c0_246, %c3456], %270 {strides = array<i32>} : memref<1x6144xbf16, #tpu.memory_space<vmem>>, vector<1x128xbf16>,
    %c28 = arith.constant 28 : index
    %c0_247 = arith.constant 0 : index
    %272 = vector.load %arg10[%c28, %c0_247] : memref<48x128xbf16, #tpu.memory_space<vmem>>, vector<1x128xbf16>
    %c0_248 = arith.constant 0 : index
    %c3584 = arith.constant 3584 : index
    %273 = vector.load %arg11[%c0_248, %c3584] : memref<1x6144xbf16, #tpu.memory_space<vmem>>, vector<1x128xbf16>
    tpu.vector_store %arg11[%c0_248, %c3584], %272 {strides = array<i32>} : memref<1x6144xbf16, #tpu.memory_space<vmem>>, vector<1x128xbf16>,
    %c29 = arith.constant 29 : index
    %c0_249 = arith.constant 0 : index
    %274 = vector.load %arg10[%c29, %c0_249] : memref<48x128xbf16, #tpu.memory_space<vmem>>, vector<1x128xbf16>
    %c0_250 = arith.constant 0 : index
    %c3712 = arith.constant 3712 : index
    %275 = vector.load %arg11[%c0_250, %c3712] : memref<1x6144xbf16, #tpu.memory_space<vmem>>, vector<1x128xbf16>
    tpu.vector_store %arg11[%c0_250, %c3712], %274 {strides = array<i32>} : memref<1x6144xbf16, #tpu.memory_space<vmem>>, vector<1x128xbf16>,
    %c30_251 = arith.constant 30 : index
    %c0_252 = arith.constant 0 : index
    %276 = vector.load %arg10[%c30_251, %c0_252] : memref<48x128xbf16, #tpu.memory_space<vmem>>, vector<1x128xbf16>
    %c0_253 = arith.constant 0 : index
    %c3840 = arith.constant 3840 : index
    %277 = vector.load %arg11[%c0_253, %c3840] : memref<1x6144xbf16, #tpu.memory_space<vmem>>, vector<1x128xbf16>
    tpu.vector_store %arg11[%c0_253, %c3840], %276 {strides = array<i32>} : memref<1x6144xbf16, #tpu.memory_space<vmem>>, vector<1x128xbf16>,
    %c31_254 = arith.constant 31 : index
    %c0_255 = arith.constant 0 : index
    %278 = vector.load %arg10[%c31_254, %c0_255] : memref<48x128xbf16, #tpu.memory_space<vmem>>, vector<1x128xbf16>
    %c0_256 = arith.constant 0 : index
    %c3968 = arith.constant 3968 : index
    %279 = vector.load %arg11[%c0_256, %c3968] : memref<1x6144xbf16, #tpu.memory_space<vmem>>, vector<1x128xbf16>
    tpu.vector_store %arg11[%c0_256, %c3968], %278 {strides = array<i32>} : memref<1x6144xbf16, #tpu.memory_space<vmem>>, vector<1x128xbf16>,
    %c32 = arith.constant 32 : index
    %c0_257 = arith.constant 0 : index
    %280 = vector.load %arg10[%c32, %c0_257] : memref<48x128xbf16, #tpu.memory_space<vmem>>, vector<1x128xbf16>
    %c0_258 = arith.constant 0 : index
    %c4096 = arith.constant 4096 : index
    %281 = vector.load %arg11[%c0_258, %c4096] : memref<1x6144xbf16, #tpu.memory_space<vmem>>, vector<1x128xbf16>
    tpu.vector_store %arg11[%c0_258, %c4096], %280 {strides = array<i32>} : memref<1x6144xbf16, #tpu.memory_space<vmem>>, vector<1x128xbf16>,
    %c33 = arith.constant 33 : index
    %c0_259 = arith.constant 0 : index
    %282 = vector.load %arg10[%c33, %c0_259] : memref<48x128xbf16, #tpu.memory_space<vmem>>, vector<1x128xbf16>
    %c0_260 = arith.constant 0 : index
    %c4224 = arith.constant 4224 : index
    %283 = vector.load %arg11[%c0_260, %c4224] : memref<1x6144xbf16, #tpu.memory_space<vmem>>, vector<1x128xbf16>
    tpu.vector_store %arg11[%c0_260, %c4224], %282 {strides = array<i32>} : memref<1x6144xbf16, #tpu.memory_space<vmem>>, vector<1x128xbf16>,
    %c34 = arith.constant 34 : index
    %c0_261 = arith.constant 0 : index
    %284 = vector.load %arg10[%c34, %c0_261] : memref<48x128xbf16, #tpu.memory_space<vmem>>, vector<1x128xbf16>
    %c0_262 = arith.constant 0 : index
    %c4352 = arith.constant 4352 : index
    %285 = vector.load %arg11[%c0_262, %c4352] : memref<1x6144xbf16, #tpu.memory_space<vmem>>, vector<1x128xbf16>
    tpu.vector_store %arg11[%c0_262, %c4352], %284 {strides = array<i32>} : memref<1x6144xbf16, #tpu.memory_space<vmem>>, vector<1x128xbf16>,
    %c35 = arith.constant 35 : index
    %c0_263 = arith.constant 0 : index
    %286 = vector.load %arg10[%c35, %c0_263] : memref<48x128xbf16, #tpu.memory_space<vmem>>, vector<1x128xbf16>
    %c0_264 = arith.constant 0 : index
    %c4480 = arith.constant 4480 : index
    %287 = vector.load %arg11[%c0_264, %c4480] : memref<1x6144xbf16, #tpu.memory_space<vmem>>, vector<1x128xbf16>
    tpu.vector_store %arg11[%c0_264, %c4480], %286 {strides = array<i32>} : memref<1x6144xbf16, #tpu.memory_space<vmem>>, vector<1x128xbf16>,
    %c36_265 = arith.constant 36 : index
    %c0_266 = arith.constant 0 : index
    %288 = vector.load %arg10[%c36_265, %c0_266] : memref<48x128xbf16, #tpu.memory_space<vmem>>, vector<1x128xbf16>
    %c0_267 = arith.constant 0 : index
    %c4608 = arith.constant 4608 : index
    %289 = vector.load %arg11[%c0_267, %c4608] : memref<1x6144xbf16, #tpu.memory_space<vmem>>, vector<1x128xbf16>
    tpu.vector_store %arg11[%c0_267, %c4608], %288 {strides = array<i32>} : memref<1x6144xbf16, #tpu.memory_space<vmem>>, vector<1x128xbf16>,
    %c37_268 = arith.constant 37 : index
    %c0_269 = arith.constant 0 : index
    %290 = vector.load %arg10[%c37_268, %c0_269] : memref<48x128xbf16, #tpu.memory_space<vmem>>, vector<1x128xbf16>
    %c0_270 = arith.constant 0 : index
    %c4736 = arith.constant 4736 : index
    %291 = vector.load %arg11[%c0_270, %c4736] : memref<1x6144xbf16, #tpu.memory_space<vmem>>, vector<1x128xbf16>
    tpu.vector_store %arg11[%c0_270, %c4736], %290 {strides = array<i32>} : memref<1x6144xbf16, #tpu.memory_space<vmem>>, vector<1x128xbf16>,
    %c38 = arith.constant 38 : index
    %c0_271 = arith.constant 0 : index
    %292 = vector.load %arg10[%c38, %c0_271] : memref<48x128xbf16, #tpu.memory_space<vmem>>, vector<1x128xbf16>
    %c0_272 = arith.constant 0 : index
    %c4864 = arith.constant 4864 : index
    %293 = vector.load %arg11[%c0_272, %c4864] : memref<1x6144xbf16, #tpu.memory_space<vmem>>, vector<1x128xbf16>
    tpu.vector_store %arg11[%c0_272, %c4864], %292 {strides = array<i32>} : memref<1x6144xbf16, #tpu.memory_space<vmem>>, vector<1x128xbf16>,
    %c39 = arith.constant 39 : index
    %c0_273 = arith.constant 0 : index
    %294 = vector.load %arg10[%c39, %c0_273] : memref<48x128xbf16, #tpu.memory_space<vmem>>, vector<1x128xbf16>
    %c0_274 = arith.constant 0 : index
    %c4992 = arith.constant 4992 : index
    %295 = vector.load %arg11[%c0_274, %c4992] : memref<1x6144xbf16, #tpu.memory_space<vmem>>, vector<1x128xbf16>
    tpu.vector_store %arg11[%c0_274, %c4992], %294 {strides = array<i32>} : memref<1x6144xbf16, #tpu.memory_space<vmem>>, vector<1x128xbf16>,
    %c40 = arith.constant 40 : index
    %c0_275 = arith.constant 0 : index
    %296 = vector.load %arg10[%c40, %c0_275] : memref<48x128xbf16, #tpu.memory_space<vmem>>, vector<1x128xbf16>
    %c0_276 = arith.constant 0 : index
    %c5120 = arith.constant 5120 : index
    %297 = vector.load %arg11[%c0_276, %c5120] : memref<1x6144xbf16, #tpu.memory_space<vmem>>, vector<1x128xbf16>
    tpu.vector_store %arg11[%c0_276, %c5120], %296 {strides = array<i32>} : memref<1x6144xbf16, #tpu.memory_space<vmem>>, vector<1x128xbf16>,
    %c41 = arith.constant 41 : index
    %c0_277 = arith.constant 0 : index
    %298 = vector.load %arg10[%c41, %c0_277] : memref<48x128xbf16, #tpu.memory_space<vmem>>, vector<1x128xbf16>
    %c0_278 = arith.constant 0 : index
    %c5248 = arith.constant 5248 : index
    %299 = vector.load %arg11[%c0_278, %c5248] : memref<1x6144xbf16, #tpu.memory_space<vmem>>, vector<1x128xbf16>
    tpu.vector_store %arg11[%c0_278, %c5248], %298 {strides = array<i32>} : memref<1x6144xbf16, #tpu.memory_space<vmem>>, vector<1x128xbf16>,
    %c42_279 = arith.constant 42 : index
    %c0_280 = arith.constant 0 : index
    %300 = vector.load %arg10[%c42_279, %c0_280] : memref<48x128xbf16, #tpu.memory_space<vmem>>, vector<1x128xbf16>
    %c0_281 = arith.constant 0 : index
    %c5376 = arith.constant 5376 : index
    %301 = vector.load %arg11[%c0_281, %c5376] : memref<1x6144xbf16, #tpu.memory_space<vmem>>, vector<1x128xbf16>
    tpu.vector_store %arg11[%c0_281, %c5376], %300 {strides = array<i32>} : memref<1x6144xbf16, #tpu.memory_space<vmem>>, vector<1x128xbf16>,
    %c43_282 = arith.constant 43 : index
    %c0_283 = arith.constant 0 : index
    %302 = vector.load %arg10[%c43_282, %c0_283] : memref<48x128xbf16, #tpu.memory_space<vmem>>, vector<1x128xbf16>
    %c0_284 = arith.constant 0 : index
    %c5504 = arith.constant 5504 : index
    %303 = vector.load %arg11[%c0_284, %c5504] : memref<1x6144xbf16, #tpu.memory_space<vmem>>, vector<1x128xbf16>
    tpu.vector_store %arg11[%c0_284, %c5504], %302 {strides = array<i32>} : memref<1x6144xbf16, #tpu.memory_space<vmem>>, vector<1x128xbf16>,
    %c44 = arith.constant 44 : index
    %c0_285 = arith.constant 0 : index
    %304 = vector.load %arg10[%c44, %c0_285] : memref<48x128xbf16, #tpu.memory_space<vmem>>, vector<1x128xbf16>
    %c0_286 = arith.constant 0 : index
    %c5632 = arith.constant 5632 : index
    %305 = vector.load %arg11[%c0_286, %c5632] : memref<1x6144xbf16, #tpu.memory_space<vmem>>, vector<1x128xbf16>
    tpu.vector_store %arg11[%c0_286, %c5632], %304 {strides = array<i32>} : memref<1x6144xbf16, #tpu.memory_space<vmem>>, vector<1x128xbf16>,
    %c45 = arith.constant 45 : index
    %c0_287 = arith.constant 0 : index
    %306 = vector.load %arg10[%c45, %c0_287] : memref<48x128xbf16, #tpu.memory_space<vmem>>, vector<1x128xbf16>
    %c0_288 = arith.constant 0 : index
    %c5760 = arith.constant 5760 : index
    %307 = vector.load %arg11[%c0_288, %c5760] : memref<1x6144xbf16, #tpu.memory_space<vmem>>, vector<1x128xbf16>
    tpu.vector_store %arg11[%c0_288, %c5760], %306 {strides = array<i32>} : memref<1x6144xbf16, #tpu.memory_space<vmem>>, vector<1x128xbf16>,
    %c46 = arith.constant 46 : index
    %c0_289 = arith.constant 0 : index
    %308 = vector.load %arg10[%c46, %c0_289] : memref<48x128xbf16, #tpu.memory_space<vmem>>, vector<1x128xbf16>
    %c0_290 = arith.constant 0 : index
    %c5888 = arith.constant 5888 : index
    %309 = vector.load %arg11[%c0_290, %c5888] : memref<1x6144xbf16, #tpu.memory_space<vmem>>, vector<1x128xbf16>
    tpu.vector_store %arg11[%c0_290, %c5888], %308 {strides = array<i32>} : memref<1x6144xbf16, #tpu.memory_space<vmem>>, vector<1x128xbf16>,
    %c47 = arith.constant 47 : index
    %c0_291 = arith.constant 0 : index
    %310 = vector.load %arg10[%c47, %c0_291] : memref<48x128xbf16, #tpu.memory_space<vmem>>, vector<1x128xbf16>
    %c0_292 = arith.constant 0 : index
    %c6016 = arith.constant 6016 : index
    %311 = vector.load %arg11[%c0_292, %c6016] : memref<1x6144xbf16, #tpu.memory_space<vmem>>, vector<1x128xbf16>
    tpu.vector_store %arg11[%c0_292, %c6016], %310 {strides = array<i32>} : memref<1x6144xbf16, #tpu.memory_space<vmem>>, vector<1x128xbf16>,
    %c0_293 = arith.constant 0 : index
    %c0_294 = arith.constant 0 : index
    %312 = vector.load %arg11[%c0_293, %c0_294] : memref<1x6144xbf16, #tpu.memory_space<vmem>>, vector<1x6144xbf16>
    %c0_295 = arith.constant 0 : index
    %c0_296 = arith.constant 0 : index
    %313 = vector.load %arg6[%c0_295, %c0_296] : memref<6144x32xbf16, #tpu.memory_space<vmem>>, vector<6144x32xbf16>
    %cst_297 = arith.constant dense<0.000000e+00> : vector<1x32xf32>
    %314 = tpu.matmul %312, %313, %cst_297 {dimension_numbers = #tpu.dot_dimension_numbers<[1], [0], [0], [1], [0, 0, 1, 1], [], []>} : vector<1x6144xbf16>, vector<6144x32xbf16>, vector<1x32xf32> -> vector<1x32xf32>
    %c0_298 = arith.constant 0 : index
    %c0_299 = arith.constant 0 : index
    %315 = vector.load %arg7[%c0_298, %c0_299] : memref<1x32xf32, #tpu.memory_space<vmem>>, vector<1x32xf32>
    %316 = arith.addf %314, %315 : vector<1x32xf32>
    %c0_300 = arith.constant 0 : index
    %c0_301 = arith.constant 0 : index
    %c0_302 = arith.constant 0 : index
    %317 = vector.load %arg8[%c0_300, %c0_301, %c0_302] : memref<1x1x32xf32, #tpu.memory_space<vmem>>, vector<1x1x32xf32>
    %318 = vector.shape_cast %317 : vector<1x1x32xf32> to vector<1x32xf32>
    %319 = vector.shape_cast %316 : vector<1x32xf32> to vector<1x1x32xf32>
    tpu.vector_store %arg8[%c0_300, %c0_301, %c0_302], %319 {strides = array<i32>} : memref<1x1x32xf32, #tpu.memory_space<vmem>>, vector<1x1x32xf32>,
    return
  }
  func.func @transform_0(%arg0: i32) -> (i32, i32, i32) {
    %c0_i32 = arith.constant 0 : i32
    %c0_i32_0 = arith.constant 0 : i32
    %c0_i32_1 = arith.constant 0 : i32
    return %arg0, %c0_i32, %c0_i32_0 : i32, i32, i32
  }
  func.func @transform_1(%arg0: i32) -> (i32, i32, i32) {
    %c0_i32 = arith.constant 0 : i32
    %c0_i32_0 = arith.constant 0 : i32
    %c0_i32_1 = arith.constant 0 : i32
    %c0_i32_2 = arith.constant 0 : i32
    return %c0_i32, %c0_i32_0, %c0_i32_1 : i32, i32, i32
  }
  func.func @transform_2(%arg0: i32) -> (i32, i32) {
    %c0_i32 = arith.constant 0 : i32
    %c0_i32_0 = arith.constant 0 : i32
    %c0_i32_1 = arith.constant 0 : i32
    return %c0_i32, %c0_i32_0 : i32, i32
  }
  func.func @transform_3(%arg0: i32) -> (i32, i32, i32) {
    %c0_i32 = arith.constant 0 : i32
    %c0_i32_0 = arith.constant 0 : i32
    %c0_i32_1 = arith.constant 0 : i32
    %c0_i32_2 = arith.constant 0 : i32
    return %c0_i32, %c0_i32_0, %c0_i32_1 : i32, i32, i32
  }
  func.func @transform_4(%arg0: i32) -> (i32, i32) {
    %c0_i32 = arith.constant 0 : i32
    %c0_i32_0 = arith.constant 0 : i32
    %c0_i32_1 = arith.constant 0 : i32
    return %c0_i32, %c0_i32_0 : i32, i32
  }
  func.func @transform_5(%arg0: i32) -> (i32, i32) {
    %c0_i32 = arith.constant 0 : i32
    %c0_i32_0 = arith.constant 0 : i32
    %c0_i32_1 = arith.constant 0 : i32
    return %c0_i32, %c0_i32_0 : i32, i32
  }
  func.func @transform_6(%arg0: i32) -> (i32, i32) {
    %c0_i32 = arith.constant 0 : i32
    %c0_i32_0 = arith.constant 0 : i32
    %c0_i32_1 = arith.constant 0 : i32
    return %c0_i32, %c0_i32_0 : i32, i32
  }
  func.func @transform_7(%arg0: i32) -> (i32, i32, i32) {
    %c0_i32 = arith.constant 0 : i32
    %c0_i32_0 = arith.constant 0 : i32
    %c0_i32_1 = arith.constant 0 : i32
    return %arg0, %c0_i32, %c0_i32_0 : i32, i32, i32
  }
}

</mosaic_0001>

<llo_original>
// kernel: css_encoder_short_forward.1
$region0: #{css_encoder_short_forward.1}
  #allocation0 [shape = 'u32[]', space=smem, size = 0x4, offset = 0x4, fixed_abs, tag = 'smem constant byte address 0x4 - core index']
  #allocation1 [shape = 'u32[72,128]{1,0:T(1,128)}', space=vmem, size = 0x9000, scoped, tag = 'internal scratch']
  #allocation2 [shape = 'bf16[132,256]{1,0:T(8,128)(2,1)}', space=vmem, size = 0x11000, scoped, tag = 'scratch operand']
  #allocation3 [shape = 'bf16[48,128]{1,0:T(8,128)(2,1)}', space=vmem, size = 0x3000, scoped, tag = 'scratch operand']
  #allocation4 [shape = 'bf16[1,6144]{1,0:T(2,128)(2,1)}', space=vmem, size = 0x6000, scoped, tag = 'scratch operand']
  %s0 = inlined_call_operand.vmem [shape: bf16[2,460,128], index: 0, kind: input, shape index: {}]
  %s1 = inlined_call_operand.vmem [shape: bf16[7,128,128], index: 1, kind: input, shape index: {}]
  %s2 = inlined_call_operand.vmem [shape: f32[1,128], index: 2, kind: input, shape index: {}]
  %s3 = inlined_call_operand.vmem [shape: bf16[7,256,128], index: 3, kind: input, shape index: {}]
  %s4 = inlined_call_operand.vmem [shape: f32[1,128], index: 4, kind: input, shape index: {}]
  %s5 = inlined_call_operand.vmem [shape: bf16[6144,32], index: 5, kind: input, shape index: {}]
  %s6 = inlined_call_operand.vmem [shape: f32[1,32], index: 6, kind: input, shape index: {}]
  %s7 = inlined_call_operand.hbm [shape: f32[2,1,32], index: 7, kind: output, shape index: {}]
  %s8 = sld [smem:[#allocation0]]
  $region61: #{css_encoder_short_forward.1} parent=0
    _
  %s10 = ssub.s32 1, %s8
  %s11 = scalar_select 0, %s10, %s8
  $region1: #{css_encoder_short_forward.1} parent=0
    #allocation5 [shape = 'u8[1024]{0}', space=vmem, size = 0x400, scoped, tag = 'output window, operand 0']
    #allocation6 [shape = 's32[2]{0}', space=sflag, size = 0x8, scoped, tag = 'scoped memory for css_encoder_short_forward.1']
    %12 = vsyncpa [#allocation6], 0
    %s13 = scalar_lea.sflag [#allocation6], 1
    %14 = vsyncpa %s13, 0
    loop: start=0, step=1, limit=4
    $region2: #{css_encoder_short_forward.1} parent=1 // loop_pre_header
      _
    $region3: #{css_encoder_short_forward.1} parent=1 // loop_header
      %s16 = sphi 0, %s20
      %p17 = scmp.ge.s32.totalorder %s16, 4
      %s26 = sphi 0, %s28
      %s29 = sphi 0, %s26
      %s30 = sphi 0, %s29
      %s46 = sphi 0, %s30
      %s50 = sphi 0, %s50
      %s52 = sphi 0, %s50
      %s53 = sphi 0, %s52
      %s67 = sphi 0, %s53
      %s71 = sphi 0, %s71
      %s73 = sphi 0, %s71
      %s74 = sphi 0, %s73
      %s88 = sphi 0, %s74
      %s92 = sphi 0, %s92
      %s94 = sphi 0, %s92
      %s95 = sphi 0, %s94
      %s109 = sphi 0, %s95
      %s113 = sphi 0, %s113
      %s115 = sphi 0, %s113
      %s116 = sphi 0, %s115
      %s130 = sphi 0, %s116
      %s134 = sphi 0, %s134
      %s136 = sphi 0, %s134
      %s137 = sphi 0, %s136
      %s151 = sphi 0, %s137
      %s155 = sphi 0, %s155
      %s157 = sphi 0, %s155
      %s158 = sphi 0, %s157
      %s172 = sphi 0, %s158
      %s178 = sphi 0, %s180
      %s181 = sphi 0, %s178
      %s182 = sphi 0, %s181
      %s198 = sphi 0, %s182
    $region4: #{css_encoder_short_forward.1} parent=1 // loop_header_branch
      %19 = sbr.rel (%p17) target = $region8
    $region5: #{css_encoder_short_forward.1} parent=1 // loop_body
      %s21 = ssub.s32 %s16, 1
      %s22 = ssub.s32 %s16, 2
      %s23 = sadd.s32 %s16, 1
      %s24 = ssub.s32 %s16, %s23
      %p25 = scmp.eq.s32.totalorder %s24, 0
      %s27 = sadd.s32 %s26, 1
      %s28 = scalar_select %p25, %s26, %s27
      %p31 = pneg %p25
      %p32 = scmp.eq.s32.totalorder %s16, 1
      %p33 = por %p31, %p32
      %p34 = scmp.ne.s32.totalorder %s26, %s29
      %p35 = scmp.eq.s32.totalorder %s16, 0
      %p36 = por %p34, %p35
      %p37 = scmp.ne.s32.totalorder %s26, %s29
      %p38 = scmp.eq.s32.totalorder %s21, 1
      %p39 = por %p37, %p38
      %p40 = scmp.ne.s32.totalorder %s29, %s30
      %p41 = scmp.eq.s32.totalorder %s21, 0
      %p42 = por %p40, %p41
      %p43 = scmp.ne.s32.totalorder %s29, %s30
      %p44 = scmp.eq.s32.totalorder %s22, 1
      %p45 = por %p43, %p44
      %p47 = scmp.ne.s32.totalorder %s30, %s46
      %p48 = scmp.eq.s32.totalorder %s22, 0
      %p49 = por %p47, %p48
      %s51 = sadd.s32 %s50, 1
      %p54 = scmp.eq.s32.totalorder %s16, 1
      %p55 = scmp.ne.s32.totalorder %s50, %s52
      %p56 = scmp.eq.s32.totalorder %s16, 0
      %p57 = por %p55, %p56
      %p58 = scmp.ne.s32.totalorder %s50, %s52
      %p59 = scmp.eq.s32.totalorder %s21, 1
      %p60 = por %p58, %p59
      %p61 = scmp.ne.s32.totalorder %s52, %s53
      %p62 = scmp.eq.s32.totalorder %s21, 0
      %p63 = por %p61, %p62
      %p64 = scmp.ne.s32.totalorder %s52, %s53
      %p65 = scmp.eq.s32.totalorder %s22, 1
      %p66 = por %p64, %p65
      %p68 = scmp.ne.s32.totalorder %s53, %s67
      %p69 = scmp.eq.s32.totalorder %s22, 0
      %p70 = por %p68, %p69
      %s72 = sadd.s32 %s71, 1
      %p75 = scmp.eq.s32.totalorder %s16, 1
      %p76 = scmp.ne.s32.totalorder %s71, %s73
      %p77 = scmp.eq.s32.totalorder %s16, 0
      %p78 = por %p76, %p77
      %p79 = scmp.ne.s32.totalorder %s71, %s73
      %p80 = scmp.eq.s32.totalorder %s21, 1
      %p81 = por %p79, %p80
      %p82 = scmp.ne.s32.totalorder %s73, %s74
      %p83 = scmp.eq.s32.totalorder %s21, 0
      %p84 = por %p82, %p83
      %p85 = scmp.ne.s32.totalorder %s73, %s74
      %p86 = scmp.eq.s32.totalorder %s22, 1
      %p87 = por %p85, %p86
      %p89 = scmp.ne.s32.totalorder %s74, %s88
      %p90 = scmp.eq.s32.totalorder %s22, 0
      %p91 = por %p89, %p90
      %s93 = sadd.s32 %s92, 1
      %p96 = scmp.eq.s32.totalorder %s16, 1
      %p97 = scmp.ne.s32.totalorder %s92, %s94
      %p98 = scmp.eq.s32.totalorder %s16, 0
      %p99 = por %p97, %p98
      %p100 = scmp.ne.s32.totalorder %s92, %s94
      %p101 = scmp.eq.s32.totalorder %s21, 1
      %p102 = por %p100, %p101
      %p103 = scmp.ne.s32.totalorder %s94, %s95
      %p104 = scmp.eq.s32.totalorder %s21, 0
      %p105 = por %p103, %p104
      %p106 = scmp.ne.s32.totalorder %s94, %s95
      %p107 = scmp.eq.s32.totalorder %s22, 1
      %p108 = por %p106, %p107
      %p110 = scmp.ne.s32.totalorder %s95, %s109
      %p111 = scmp.eq.s32.totalorder %s22, 0
      %p112 = por %p110, %p111
      %s114 = sadd.s32 %s113, 1
      %p117 = scmp.eq.s32.totalorder %s16, 1
      %p118 = scmp.ne.s32.totalorder %s113, %s115
      %p119 = scmp.eq.s32.totalorder %s16, 0
      %p120 = por %p118, %p119
      %p121 = scmp.ne.s32.totalorder %s113, %s115
      %p122 = scmp.eq.s32.totalorder %s21, 1
      %p123 = por %p121, %p122
      %p124 = scmp.ne.s32.totalorder %s115, %s116
      %p125 = scmp.eq.s32.totalorder %s21, 0
      %p126 = por %p124, %p125
      %p127 = scmp.ne.s32.totalorder %s115, %s116
      %p128 = scmp.eq.s32.totalorder %s22, 1
      %p129 = por %p127, %p128
      %p131 = scmp.ne.s32.totalorder %s116, %s130
      %p132 = scmp.eq.s32.totalorder %s22, 0
      %p133 = por %p131, %p132
      %s135 = sadd.s32 %s134, 1
      %p138 = scmp.eq.s32.totalorder %s16, 1
      %p139 = scmp.ne.s32.totalorder %s134, %s136
      %p140 = scmp.eq.s32.totalorder %s16, 0
      %p141 = por %p139, %p140
      %p142 = scmp.ne.s32.totalorder %s134, %s136
      %p143 = scmp.eq.s32.totalorder %s21, 1
      %p144 = por %p142, %p143
      %p145 = scmp.ne.s32.totalorder %s136, %s137
      %p146 = scmp.eq.s32.totalorder %s21, 0
      %p147 = por %p145, %p146
      %p148 = scmp.ne.s32.totalorder %s136, %s137
      %p149 = scmp.eq.s32.totalorder %s22, 1
      %p150 = por %p148, %p149
      %p152 = scmp.ne.s32.totalorder %s137, %s151
      %p153 = scmp.eq.s32.totalorder %s22, 0
      %p154 = por %p152, %p153
      %s156 = sadd.s32 %s155, 1
      %p159 = scmp.eq.s32.totalorder %s16, 1
      %p160 = scmp.ne.s32.totalorder %s155, %s157
      %p161 = scmp.eq.s32.totalorder %s16, 0
      %p162 = por %p160, %p161
      %p163 = scmp.ne.s32.totalorder %s155, %s157
      %p164 = scmp.eq.s32.totalorder %s21, 1
      %p165 = por %p163, %p164
      %p166 = scmp.ne.s32.totalorder %s157, %s158
      %p167 = scmp.eq.s32.totalorder %s21, 0
      %p168 = por %p166, %p167
      %p169 = scmp.ne.s32.totalorder %s157, %s158
      %p170 = scmp.eq.s32.totalorder %s22, 1
      %p171 = por %p169, %p170
      %p173 = scmp.ne.s32.totalorder %s158, %s172
      %p174 = scmp.eq.s32.totalorder %s22, 0
      %p175 = por %p173, %p174
      %s176 = ssub.s32 %s16, %s23
      %p177 = scmp.eq.s32.totalorder %s176, 0
      %s179 = sadd.s32 %s178, 1
      %s180 = scalar_select %p177, %s178, %s179
      %p183 = pneg %p177
      %p184 = scmp.eq.s32.totalorder %s16, 1
      %p185 = por %p183, %p184
      %p186 = scmp.ne.s32.totalorder %s178, %s181
      %p187 = scmp.eq.s32.totalorder %s16, 0
      %p188 = por %p186, %p187
      %p189 = scmp.ne.s32.totalorder %s178, %s181
      %p190 = scmp.eq.s32.totalorder %s21, 1
      %p191 = por %p189, %p190
      %p192 = scmp.ne.s32.totalorder %s181, %s182
      %p193 = scmp.eq.s32.totalorder %s21, 0
      %p194 = por %p192, %p193
      %p195 = scmp.ne.s32.totalorder %s181, %s182
      %p196 = scmp.eq.s32.totalorder %s22, 1
      %p197 = por %p195, %p196
      %p199 = scmp.ne.s32.totalorder %s182, %s198
      %p200 = scmp.eq.s32.totalorder %s22, 0
      %p201 = por %p199, %p200
      %p202 = scmp.le.s32.totalorder 1, %s16
      %p203 = scmp.lt.s32.totalorder %s16, 3
      %p204 = pnand %p202, %p203
      %p205 = pneg %p204
      // Predicated region
      $region9: #{css_encoder_short_forward.1} parent=5 // pred_check
        _
      $region10: #{css_encoder_short_forward.1} parent=5 // pred_check_branch
        %207 = sbr.rel (%p204) target = $region12
      $region11: #{css_encoder_short_forward.1} parent=5 // pred_region
        %s208 = ssub.s32 %s16, 1
        // Predicated region
        $region13: #{css_encoder_short_forward.1} parent=11 // pred_check
          %p209 = pneg %p63
        $region14: #{css_encoder_short_forward.1} parent=11 // pred_check_branch
          %211 = sbr.rel (%p209) target = $region16
        $region15: #{css_encoder_short_forward.1} parent=11 // pred_region
          _
        $region16: #{css_encoder_short_forward.1} parent=11 // pred_fallthru
          _
        // Predicated region
        $region17: #{css_encoder_short_forward.1} parent=11 // pred_check
          %p212 = pneg %p84
        $region18: #{css_encoder_short_forward.1} parent=11 // pred_check_branch
          %214 = sbr.rel (%p212) target = $region20
        $region19: #{css_encoder_short_forward.1} parent=11 // pred_region
          _
        $region20: #{css_encoder_short_forward.1} parent=11 // pred_fallthru
          _
        // Predicated region
        $region21: #{css_encoder_short_forward.1} parent=11 // pred_check
          %p215 = pneg %p105
        $region22: #{css_encoder_short_forward.1} parent=11 // pred_check_branch
          %217 = sbr.rel (%p215) target = $region24
        $region23: #{css_encoder_short_forward.1} parent=11 // pred_region
          _
        $region24: #{css_encoder_short_forward.1} parent=11 // pred_fallthru
          _
        // Predicated region
        $region25: #{css_encoder_short_forward.1} parent=11 // pred_check
          %p218 = pneg %p126
        $region26: #{css_encoder_short_forward.1} parent=11 // pred_check_branch
          %220 = sbr.rel (%p218) target = $region28
        $region27: #{css_encoder_short_forward.1} parent=11 // pred_region
          _
        $region28: #{css_encoder_short_forward.1} parent=11 // pred_fallthru
          _
        // Predicated region
        $region29: #{css_encoder_short_forward.1} parent=11 // pred_check
          %p221 = pneg %p147
        $region30: #{css_encoder_short_forward.1} parent=11 // pred_check_branch
          %223 = sbr.rel (%p221) target = $region32
        $region31: #{css_encoder_short_forward.1} parent=11 // pred_region
          _
        $region32: #{css_encoder_short_forward.1} parent=11 // pred_fallthru
          _
        // Predicated region
        $region33: #{css_encoder_short_forward.1} parent=11 // pred_check
          %p224 = pneg %p168
        $region34: #{css_encoder_short_forward.1} parent=11 // pred_check_branch
          %226 = sbr.rel (%p224) target = $region36
        $region35: #{css_encoder_short_forward.1} parent=11 // pred_region
          _
        $region36: #{css_encoder_short_forward.1} parent=11 // pred_fallthru
          _
      $region12: #{css_encoder_short_forward.1} parent=5 // pred_fallthru
        _
      %p227 = scmp.lt.s32.totalorder %s16, 2
      // Predicated region
      $region37: #{css_encoder_short_forward.1} parent=5 // pred_check
        %p228 = pneg %p227
      $region38: #{css_encoder_short_forward.1} parent=5 // pred_check_branch
        %230 = sbr.rel (%p228) target = $region40
      $region39: #{css_encoder_short_forward.1} parent=5 // pred_region
        // Predicated region
        $region41: #{css_encoder_short_forward.1} parent=39 // pred_check
          %p231 = pneg %p36
        $region42: #{css_encoder_short_forward.1} parent=39 // pred_check_branch
          %233 = sbr.rel (%p231) target = $region44
        $region43: #{css_encoder_short_forward.1} parent=39 // pred_region
          %p234 = scmp.lt.s32.totalorder %s16, 1
          %s235 = scalar_select %p234, %s16, 1
          %s236 = smul.addr %s235, 58
          %s237 = smul.addr %s236, 4
          %s238 = scalar_lea.vmem %s0, %s237
        $region44: #{css_encoder_short_forward.1} parent=39 // pred_fallthru
          _
      $region40: #{css_encoder_short_forward.1} parent=5 // pred_fallthru
        _
      %p239 = scmp.le.s32.totalorder 1, %s16
      %p240 = scmp.lt.s32.totalorder %s16, 3
      %p241 = pnand %p239, %p240
      %p242 = pneg %p241
      // Predicated region
      $region45: #{css_encoder_short_forward.1} parent=5 // pred_check
        _
      $region46: #{css_encoder_short_forward.1} parent=5 // pred_check_branch
        %244 = sbr.rel (%p241) target = $region48
      $region47: #{css_encoder_short_forward.1} parent=5 // pred_region
        %s245 = ssub.s32 %s16, 1
        %p246 = scmp.lt.s32.totalorder %s21, 1
        %s247 = scalar_select %p246, %s21, 1
        %s248 = smul.addr %s247, 58
        %s249 = smul.addr %s248, 4
        %s250 = scalar_lea.vmem %s0, %s249
        %p251 = pneg %p42
        %p252 = pneg %p39
        %p253 = pneg %p63
        %p254 = pneg %p60
        %p255 = pneg %p84
        %p256 = pneg %p81
        %p257 = pneg %p105
        %p258 = pneg %p102
        %p259 = pneg %p126
        %p260 = pneg %p123
        %p261 = pneg %p147
        %p262 = pneg %p144
        %p263 = pneg %p168
        %p264 = pneg %p165
        %p265 = pneg %p194
        %p266 = pneg %p191
        %s267 = sand.u32 %s181, 1
        %s268 = scalar_lea.sflag [#allocation6], %s267
        %s269 = sand.u32 %s181, 1
        %s270 = scalar_lea.vmem [#allocation5], %s269
        %p271 = scmp.lt.s32.totalorder %s21, 1
        %s272 = scalar_select %p271, %s21, 1
        %s273 = smul.addr %s272, 58
        %s274 = smul.addr %s273, 4
        %s275 = scalar_lea.vmem %s0, %s274
        %277 = vst [vmem:[#allocation2] sm:$0xff] 0
        %278 = vst [vmem:[#allocation2 + $0x8] sm:$0xff] 0
        %279 = vst [vmem:[#allocation2 + $0x10] sm:$0xff] 0
        %280 = vst [vmem:[#allocation2 + $0x18] sm:$0xff] 0
        %281 = vst [vmem:[#allocation2 + $0x20] sm:$0xff] 0
        %282 = vst [vmem:[#allocation2 + $0x28] sm:$0xff] 0
        %283 = vst [vmem:[#allocation2 + $0x30] sm:$0xff] 0
        %284 = vst [vmem:[#allocation2 + $0x38] sm:$0xff] 0
        %285 = vst [vmem:[#allocation2 + $0x40] sm:$0xff] 0
        %286 = vst [vmem:[#allocation2 + $0x48] sm:$0xff] 0
        %287 = vst [vmem:[#allocation2 + $0x50] sm:$0xff] 0
        %288 = vst [vmem:[#allocation2 + $0x58] sm:$0xff] 0
        %289 = vst [vmem:[#allocation2 + $0x60] sm:$0xff] 0
        %290 = vst [vmem:[#allocation2 + $0x68] sm:$0xff] 0
        %291 = vst [vmem:[#allocation2 + $0x70] sm:$0xff] 0
        %292 = vst [vmem:[#allocation2 + $0x78] sm:$0xff] 0
        %293 = vst [vmem:[#allocation2 + $0x80] sm:$0x33] 0
        %v294 = vld [vmem:[%s2] sm:$0x1]
        %v295 = vld [vmem:[%s275] sm:$0xf]
        %v296 = vld [vmem:[%s275 + $0x4] sm:$0xf]
        %v297 = vld [vmem:[%s275 + $0x8] sm:$0xf]
        %v298 = vld [vmem:[%s275 + $0xc] sm:$0xf]
        %v299 = vld [vmem:[%s275 + $0x10] sm:$0xf]
        %v300 = vld [vmem:[%s275 + $0x14] sm:$0xf]
        %v301 = vld [vmem:[%s275 + $0x18] sm:$0xf]
        %v302 = vld [vmem:[%s275 + $0x1c] sm:$0xf]
        %v303 = vld [vmem:[%s275 + $0x20] sm:$0xf]
        %v304 = vld [vmem:[%s275 + $0x24] sm:$0xf]
        %v305 = vld [vmem:[%s275 + $0x28] sm:$0xf]
        %v306 = vld [vmem:[%s275 + $0x2c] sm:$0xf]
        %v307 = vld [vmem:[%s275 + $0x30] sm:$0x3]
        %v308 = vld [vmem:[%s1] sm:$0xf]
        %v309 = vld [vmem:[%s1 + $0x4] sm:$0xf]
        %v310 = vld [vmem:[%s1 + $0x8] sm:$0xf]
        %v311 = vld [vmem:[%s1 + $0xc] sm:$0xf]
        %v312 = vld [vmem:[%s1 + $0x10] sm:$0xf]
        %v313 = vld [vmem:[%s1 + $0x14] sm:$0xf]
        %v314 = vld [vmem:[%s1 + $0x18] sm:$0xf]
        %v315 = vld [vmem:[%s1 + $0x1c] sm:$0xf]
        %v316 = vld [vmem:[%s1 + $0x20] sm:$0xf]
        %v317 = vld [vmem:[%s1 + $0x24] sm:$0xf]
        %v318 = vld [vmem:[%s1 + $0x28] sm:$0xf]
        %v319 = vld [vmem:[%s1 + $0x2c] sm:$0xf]
        %v320 = vld [vmem:[%s1 + $0x30] sm:$0xf]
        %v321 = vld [vmem:[%s1 + $0x34] sm:$0xf]
        %v322 = vld [vmem:[%s1 + $0x38] sm:$0xf]
        %v323 = vld [vmem:[%s1 + $0x3c] sm:$0xf]
        %v324 = vld [vmem:[%s275 + $0x70] sm:$0x8]
        %v325 = vld [vmem:[%s275 + $0x74] sm:$0xf]
        %v326 = vld [vmem:[%s275 + $0x78] sm:$0xf]
        %v327 = vld [vmem:[%s275 + $0x7c] sm:$0xf]
        %v328 = vld [vmem:[%s275 + $0x80] sm:$0xf]
        %v329 = vld [vmem:[%s275 + $0x84] sm:$0xf]
        %v330 = vld [vmem:[%s275 + $0x88] sm:$0xf]
        %v331 = vld [vmem:[%s275 + $0x8c] sm:$0xf]
        %v332 = vld [vmem:[%s275 + $0x90] sm:$0xf]
        %v333 = vld [vmem:[%s275 + $0x94] sm:$0xf]
        %v334 = vld [vmem:[%s275 + $0x98] sm:$0xf]
        %v335 = vld [vmem:[%s275 + $0x9c] sm:$0xf]
        %v336 = vld [vmem:[%s275 + $0xa0] sm:$0xf]
        %v337 = vld [vmem:[%s275 + $0xa4] sm:$0x1]
        %s338 = scalar_lea.vmem %s1, 64
        %v339 = vld [vmem:[%s338] sm:$0xf]
        %v340 = vld [vmem:[%s338 + $0x4] sm:$0xf]
        %v341 = vld [vmem:[%s338 + $0x8] sm:$0xf]
        %v342 = vld [vmem:[%s338 + $0xc] sm:$0xf]
        %v343 = vld [vmem:[%s338 + $0x10] sm:$0xf]
        %v344 = vld [vmem:[%s338 + $0x14] sm:$0xf]
        %v345 = vld [vmem:[%s338 + $0x18] sm:$0xf]
        %v346 = vld [vmem:[%s338 + $0x1c] sm:$0xf]
        %v347 = vld [vmem:[%s338 + $0x20] sm:$0xf]
        %v348 = vld [vmem:[%s338 + $0x24] sm:$0xf]
        %v349 = vld [vmem:[%s338 + $0x28] sm:$0xf]
        %v350 = vld [vmem:[%s338 + $0x2c] sm:$0xf]
        %v351 = vld [vmem:[%s338 + $0x30] sm:$0xf]
        %v352 = vld [vmem:[%s338 + $0x34] sm:$0xf]
        %v353 = vld [vmem:[%s338 + $0x38] sm:$0xf]
        %v354 = vld [vmem:[%s338 + $0x3c] sm:$0xf]
        %v369 = vunpack.c.l.b16 %v324
        %v370 = vunpack.c.l.b16 %v325
        %v371 = vunpack.c.l.b16 %v326
        %v372 = vunpack.c.l.b16 %v327
        %v373 = vunpack.c.l.b16 %v328
        %v374 = vunpack.c.l.b16 %v329
        %v375 = vunpack.c.l.b16 %v330
        %v376 = vunpack.c.l.b16 %v331
        %v377 = vunpack.c.l.b16 %v332
        %v378 = vunpack.c.l.b16 %v333
        %v379 = vunpack.c.l.b16 %v334
        %v380 = vunpack.c.l.b16 %v335
        %v381 = vunpack.c.l.b16 %v336
        %v382 = vunpack.c.l.b16 %v337
        %v383 = vpack.c.b16 %v370, %v369
        %v384 = vpack.c.b16 %v372, %v371
        %v385 = vpack.c.b16 %v374, %v373
        %v386 = vpack.c.b16 %v376, %v375
        %v387 = vpack.c.b16 %v378, %v377
        %v388 = vpack.c.b16 %v380, %v379
        %v389 = vpack.c.b16 %v382, %v381
        %vm390 = vcmask 1044480
        %v391 = vrot.slane %v383, 3
        %v392 = vrot.slane %v384, 3
        %v393 = vsel %vm390, %v391, %v392
        %v394 = vrot.slane %v385, 3
        %v395 = vsel %vm390, %v392, %v394
        %v396 = vrot.slane %v386, 3
        %v397 = vsel %vm390, %v394, %v396
        %v398 = vrot.slane %v387, 3
        %v399 = vsel %vm390, %v396, %v398
        %v400 = vrot.slane %v388, 3
        %v401 = vsel %vm390, %v398, %v400
        %v402 = vrot.slane %v389, 3
        %v403 = vsel %vm390, %v400, %v402
        %v427 = vunpack.c.l.b16 %v339
        %v428 = vunpack.c.l.b16 %v340
        %v429 = vunpack.c.l.b16 %v341
        %v430 = vunpack.c.l.b16 %v342
        %v431 = vunpack.c.l.b16 %v343
        %v432 = vunpack.c.l.b16 %v344
        %v433 = vunpack.c.l.b16 %v345
        %v434 = vunpack.c.l.b16 %v346
        %v435 = vunpack.c.l.b16 %v347
        %v436 = vunpack.c.l.b16 %v348
        %v437 = vunpack.c.l.b16 %v349
        %v438 = vunpack.c.l.b16 %v350
        %v439 = vunpack.c.l.b16 %v351
        %v440 = vunpack.c.l.b16 %v352
        %v441 = vunpack.c.l.b16 %v353
        %v442 = vunpack.c.l.b16 %v354
        %v443 = vpack.c.b16 %v428, %v427
        %v444 = vpack.c.b16 %v430, %v429
        %v445 = vpack.c.b16 %v432, %v431
        %v446 = vpack.c.b16 %v434, %v433
        %v447 = vpack.c.b16 %v436, %v435
        %v448 = vpack.c.b16 %v438, %v437
        %v449 = vpack.c.b16 %v440, %v439
        %v450 = vpack.c.b16 %v442, %v441
        %459 = vmatpush.bf16.msra.mxu0 %v450
        %460 = vmatpush.bf16.msra.mxu0 %v449
        %461 = vmatpush.bf16.msra.mxu0 %v448
        %462 = vmatpush.bf16.msra.mxu0 %v447
        %463 = vmatpush.bf16.msra.mxu0 %v446
        %464 = vmatpush.bf16.msra.mxu0 %v445
        %465 = vmatpush.bf16.msra.mxu0 %v444
        %466 = vmatpush.bf16.msra.mxu0 %v443
        %467 = vmatmul.bf16.gmra.mxu0 %v393
        %v468 = vpop.f32.mrf.mxu0
        %v469 = vadd.f32 0.0, %v468
        %v470 = vpop.f32.mrf.mxu0
        %v471 = vadd.f32 0.0, %v470
        %472 = vmatmul.bf16.gmra.mxu0 %v395
        %v473 = vpop.f32.mrf.mxu0
        %v474 = vadd.f32 0.0, %v473
        %v475 = vpop.f32.mrf.mxu0
        %v476 = vadd.f32 0.0, %v475
        %477 = vmatmul.bf16.gmra.mxu0 %v397
        %v478 = vpop.f32.mrf.mxu0
        %v479 = vadd.f32 0.0, %v478
        %v480 = vpop.f32.mrf.mxu0
        %v481 = vadd.f32 0.0, %v480
        %482 = vmatmul.bf16.gmra.mxu0 %v399
        %v483 = vpop.f32.mrf.mxu0
        %v484 = vadd.f32 0.0, %v483
        %v485 = vpop.f32.mrf.mxu0
        %v486 = vadd.f32 0.0, %v485
        %487 = vmatmul.bf16.gmra.mxu0 %v401
        %v488 = vpop.f32.mrf.mxu0
        %v489 = vadd.f32 0.0, %v488
        %v490 = vpop.f32.mrf.mxu0
        %v491 = vadd.f32 0.0, %v490
        %492 = vmatmul.bf16.gmra.mxu0 %v403
        %v493 = vpop.f32.mrf.mxu0
        %v494 = vadd.f32 0.0, %v493
        %v495 = vpop.f32.mrf.mxu0
        %v496 = vadd.f32 0.0, %v495
        %497 = vmatmul.bf16.gmra.mxu0 %v402
        %v498 = vpop.f32.mrf.mxu0
        %v499 = vadd.f32 0.0, %v498
        %v500 = vpop.f32.mrf.mxu0
        %501 = vdwg.mxu0
        %v515 = vunpack.c.l.b16 %v295
        %v516 = vunpack.c.l.b16 %v296
        %v517 = vunpack.c.l.b16 %v297
        %v518 = vunpack.c.l.b16 %v298
        %v519 = vunpack.c.l.b16 %v299
        %v520 = vunpack.c.l.b16 %v300
        %v521 = vunpack.c.l.b16 %v301
        %v522 = vunpack.c.l.b16 %v302
        %v523 = vunpack.c.l.b16 %v303
        %v524 = vunpack.c.l.b16 %v304
        %v525 = vunpack.c.l.b16 %v305
        %v526 = vunpack.c.l.b16 %v306
        %v527 = vunpack.c.l.b16 %v307
        %v528 = vpack.c.b16 %v516, %v515
        %v529 = vpack.c.b16 %v518, %v517
        %v530 = vpack.c.b16 %v520, %v519
        %v531 = vpack.c.b16 %v522, %v521
        %v532 = vpack.c.b16 %v524, %v523
        %v533 = vpack.c.b16 %v526, %v525
        %v534 = vpack.c.b16 %v527, %v527
        %v558 = vunpack.c.l.b16 %v308
        %v559 = vunpack.c.l.b16 %v309
        %v560 = vunpack.c.l.b16 %v310
        %v561 = vunpack.c.l.b16 %v311
        %v562 = vunpack.c.l.b16 %v312
        %v563 = vunpack.c.l.b16 %v313
        %v564 = vunpack.c.l.b16 %v314
        %v565 = vunpack.c.l.b16 %v315
        %v566 = vunpack.c.l.b16 %v316
        %v567 = vunpack.c.l.b16 %v317
        %v568 = vunpack.c.l.b16 %v318
        %v569 = vunpack.c.l.b16 %v319
        %v570 = vunpack.c.l.b16 %v320
        %v571 = vunpack.c.l.b16 %v321
        %v572 = vunpack.c.l.b16 %v322
        %v573 = vunpack.c.l.b16 %v323
        %v574 = vpack.c.b16 %v559, %v558
        %v575 = vpack.c.b16 %v561, %v560
        %v576 = vpack.c.b16 %v563, %v562
        %v577 = vpack.c.b16 %v565, %v564
        %v578 = vpack.c.b16 %v567, %v566
        %v579 = vpack.c.b16 %v569, %v568
        %v580 = vpack.c.b16 %v571, %v570
        %v581 = vpack.c.b16 %v573, %v572
        %590 = vmatpush.bf16.msra.mxu0 %v581
        %591 = vmatpush.bf16.msra.mxu0 %v580
        %592 = vmatpush.bf16.msra.mxu0 %v579
        %593 = vmatpush.bf16.msra.mxu0 %v578
        %594 = vmatpush.bf16.msra.mxu0 %v577
        %595 = vmatpush.bf16.msra.mxu0 %v576
        %596 = vmatpush.bf16.msra.mxu0 %v575
        %597 = vmatpush.bf16.msra.mxu0 %v574
        %598 = vmatmul.bf16.gmra.mxu0 %v528
        %v599 = vpop.f32.mrf.mxu0
        %v600 = vadd.f32 %v469, %v599
        %v601 = vpop.f32.mrf.mxu0
        %v602 = vadd.f32 %v471, %v601
        %603 = vmatmul.bf16.gmra.mxu0 %v529
        %v604 = vpop.f32.mrf.mxu0
        %v605 = vadd.f32 %v474, %v604
        %v606 = vpop.f32.mrf.mxu0
        %v607 = vadd.f32 %v476, %v606
        %608 = vmatmul.bf16.gmra.mxu0 %v530
        %v609 = vpop.f32.mrf.mxu0
        %v610 = vadd.f32 %v479, %v609
        %v611 = vpop.f32.mrf.mxu0
        %v612 = vadd.f32 %v481, %v611
        %613 = vmatmul.bf16.gmra.mxu0 %v531
        %v614 = vpop.f32.mrf.mxu0
        %v615 = vadd.f32 %v484, %v614
        %v616 = vpop.f32.mrf.mxu0
        %v617 = vadd.f32 %v486, %v616
        %618 = vmatmul.bf16.gmra.mxu0 %v532
        %v619 = vpop.f32.mrf.mxu0
        %v620 = vadd.f32 %v489, %v619
        %v621 = vpop.f32.mrf.mxu0
        %v622 = vadd.f32 %v491, %v621
        %623 = vmatmul.bf16.gmra.mxu0 %v533
        %v624 = vpop.f32.mrf.mxu0
        %v625 = vadd.f32 %v494, %v624
        %v626 = vpop.f32.mrf.mxu0
        %v627 = vadd.f32 %v496, %v626
        %628 = vmatmul.bf16.gmra.mxu0 %v534
        %v629 = vpop.f32.mrf.mxu0
        %v630 = vadd.f32 %v499, %v629
        %v631 = vpop.f32.mrf.mxu0
        %632 = vdwg.mxu0
        %v633 = vld [vmem:[%s275 + $0x4] sm:$0xe]
        %v634 = vld [vmem:[%s275 + $0x8] sm:$0xf]
        %v635 = vld [vmem:[%s275 + $0xc] sm:$0xf]
        %v636 = vld [vmem:[%s275 + $0x10] sm:$0xf]
        %v637 = vld [vmem:[%s275 + $0x14] sm:$0xf]
        %v638 = vld [vmem:[%s275 + $0x18] sm:$0xf]
        %v639 = vld [vmem:[%s275 + $0x1c] sm:$0xf]
        %v640 = vld [vmem:[%s275 + $0x20] sm:$0xf]
        %v641 = vld [vmem:[%s275 + $0x24] sm:$0xf]
        %v642 = vld [vmem:[%s275 + $0x28] sm:$0xf]
        %v643 = vld [vmem:[%s275 + $0x2c] sm:$0xf]
        %v644 = vld [vmem:[%s275 + $0x30] sm:$0xf]
        %v645 = vld [vmem:[%s275 + $0x34] sm:$0x7]
        %s646 = scalar_lea.vmem %s1, 128
        %v647 = vld [vmem:[%s646] sm:$0xf]
        %v648 = vld [vmem:[%s646 + $0x4] sm:$0xf]
        %v649 = vld [vmem:[%s646 + $0x8] sm:$0xf]
        %v650 = vld [vmem:[%s646 + $0xc] sm:$0xf]
        %v651 = vld [vmem:[%s646 + $0x10] sm:$0xf]
        %v652 = vld [vmem:[%s646 + $0x14] sm:$0xf]
        %v653 = vld [vmem:[%s646 + $0x18] sm:$0xf]
        %v654 = vld [vmem:[%s646 + $0x1c] sm:$0xf]
        %v655 = vld [vmem:[%s646 + $0x20] sm:$0xf]
        %v656 = vld [vmem:[%s646 + $0x24] sm:$0xf]
        %v657 = vld [vmem:[%s646 + $0x28] sm:$0xf]
        %v658 = vld [vmem:[%s646 + $0x2c] sm:$0xf]
        %v659 = vld [vmem:[%s646 + $0x30] sm:$0xf]
        %v660 = vld [vmem:[%s646 + $0x34] sm:$0xf]
        %v661 = vld [vmem:[%s646 + $0x38] sm:$0xf]
        %v662 = vld [vmem:[%s646 + $0x3c] sm:$0xf]
        %v676 = vunpack.c.l.b16 %v633
        %v677 = vunpack.c.l.b16 %v634
        %v678 = vunpack.c.l.b16 %v635
        %v679 = vunpack.c.l.b16 %v636
        %v680 = vunpack.c.l.b16 %v637
        %v681 = vunpack.c.l.b16 %v638
        %v682 = vunpack.c.l.b16 %v639
        %v683 = vunpack.c.l.b16 %v640
        %v684 = vunpack.c.l.b16 %v641
        %v685 = vunpack.c.l.b16 %v642
        %v686 = vunpack.c.l.b16 %v643
        %v687 = vunpack.c.l.b16 %v644
        %v688 = vunpack.c.l.b16 %v645
        %v689 = vpack.c.b16 %v677, %v676
        %v690 = vpack.c.b16 %v679, %v678
        %v691 = vpack.c.b16 %v681, %v680
        %v692 = vpack.c.b16 %v683, %v682
        %v693 = vpack.c.b16 %v685, %v684
        %v694 = vpack.c.b16 %v687, %v686
        %v695 = vpack.c.b16 %v688, %v688
        %vm696 = vcmask 1046528
        %v697 = vrot.slane %v689, 1
        %v698 = vrot.slane %v690, 1
        %v699 = vsel %vm696, %v697, %v698
        %v700 = vrot.slane %v691, 1
        %v701 = vsel %vm696, %v698, %v700
        %v702 = vrot.slane %v692, 1
        %v703 = vsel %vm696, %v700, %v702
        %v704 = vrot.slane %v693, 1
        %v705 = vsel %vm696, %v702, %v704
        %v706 = vrot.slane %v694, 1
        %v707 = vsel %vm696, %v704, %v706
        %v708 = vrot.slane %v695, 1
        %v709 = vsel %vm696, %v706, %v708
        %v733 = vunpack.c.l.b16 %v647
        %v734 = vunpack.c.l.b16 %v648
        %v735 = vunpack.c.l.b16 %v649
        %v736 = vunpack.c.l.b16 %v650
        %v737 = vunpack.c.l.b16 %v651
        %v738 = vunpack.c.l.b16 %v652
        %v739 = vunpack.c.l.b16 %v653
        %v740 = vunpack.c.l.b16 %v654
        %v741 = vunpack.c.l.b16 %v655
        %v742 = vunpack.c.l.b16 %v656
        %v743 = vunpack.c.l.b16 %v657
        %v744 = vunpack.c.l.b16 %v658
        %v745 = vunpack.c.l.b16 %v659
        %v746 = vunpack.c.l.b16 %v660
        %v747 = vunpack.c.l.b16 %v661
        %v748 = vunpack.c.l.b16 %v662
        %v749 = vpack.c.b16 %v734, %v733
        %v750 = vpack.c.b16 %v736, %v735
        %v751 = vpack.c.b16 %v738, %v737
        %v752 = vpack.c.b16 %v740, %v739
        %v753 = vpack.c.b16 %v742, %v741
        %v754 = vpack.c.b16 %v744, %v743
        %v755 = vpack.c.b16 %v746, %v745
        %v756 = vpack.c.b16 %v748, %v747
        %765 = vmatpush.bf16.msra.mxu0 %v756
        %766 = vmatpush.bf16.msra.mxu0 %v755
        %767 = vmatpush.bf16.msra.mxu0 %v754
        %768 = vmatpush.bf16.msra.mxu0 %v753
        %769 = vmatpush.bf16.msra.mxu0 %v752
        %770 = vmatpush.bf16.msra.mxu0 %v751
        %771 = vmatpush.bf16.msra.mxu0 %v750
        %772 = vmatpush.bf16.msra.mxu0 %v749
        %773 = vmatmul.bf16.gmra.mxu0 %v699
        %v774 = vpop.f32.mrf.mxu0
        %v775 = vadd.f32 0.0, %v774
        %v776 = vpop.f32.mrf.mxu0
        %v777 = vadd.f32 0.0, %v776
        %778 = vmatmul.bf16.gmra.mxu0 %v701
        %v779 = vpop.f32.mrf.mxu0
        %v780 = vadd.f32 0.0, %v779
        %v781 = vpop.f32.mrf.mxu0
        %v782 = vadd.f32 0.0, %v781
        %783 = vmatmul.bf16.gmra.mxu0 %v703
        %v784 = vpop.f32.mrf.mxu0
        %v785 = vadd.f32 0.0, %v784
        %v786 = vpop.f32.mrf.mxu0
        %v787 = vadd.f32 0.0, %v786
        %788 = vmatmul.bf16.gmra.mxu0 %v705
        %v789 = vpop.f32.mrf.mxu0
        %v790 = vadd.f32 0.0, %v789
        %v791 = vpop.f32.mrf.mxu0
        %v792 = vadd.f32 0.0, %v791
        %793 = vmatmul.bf16.gmra.mxu0 %v707
        %v794 = vpop.f32.mrf.mxu0
        %v795 = vadd.f32 0.0, %v794
        %v796 = vpop.f32.mrf.mxu0
        %v797 = vadd.f32 0.0, %v796
        %798 = vmatmul.bf16.gmra.mxu0 %v709
        %v799 = vpop.f32.mrf.mxu0
        %v800 = vadd.f32 0.0, %v799
        %v801 = vpop.f32.mrf.mxu0
        %v802 = vadd.f32 0.0, %v801
        %803 = vmatmul.bf16.gmra.mxu0 %v708
        %v804 = vpop.f32.mrf.mxu0
        %v805 = vadd.f32 0.0, %v804
        %v806 = vpop.f32.mrf.mxu0
        %807 = vdwg.mxu0
        %v808 = vadd.f32 %v600, %v775
        %v809 = vadd.f32 %v602, %v777
        %v810 = vadd.f32 %v605, %v780
        %v811 = vadd.f32 %v607, %v782
        %v812 = vadd.f32 %v610, %v785
        %v813 = vadd.f32 %v612, %v787
        %v814 = vadd.f32 %v615, %v790
        %v815 = vadd.f32 %v617, %v792
        %v816 = vadd.f32 %v620, %v795
        %v817 = vadd.f32 %v622, %v797
        %v818 = vadd.f32 %v625, %v800
        %v819 = vadd.f32 %v627, %v802
        %v820 = vadd.f32 %v630, %v805
        %v821 = vld [vmem:[%s275 + $0x78] sm:$0xf]
        %v822 = vld [vmem:[%s275 + $0x7c] sm:$0xf]
        %v823 = vld [vmem:[%s275 + $0x80] sm:$0xf]
        %v824 = vld [vmem:[%s275 + $0x84] sm:$0xf]
        %v825 = vld [vmem:[%s275 + $0x88] sm:$0xf]
        %v826 = vld [vmem:[%s275 + $0x8c] sm:$0xf]
        %v827 = vld [vmem:[%s275 + $0x90] sm:$0xf]
        %v828 = vld [vmem:[%s275 + $0x94] sm:$0xf]
        %v829 = vld [vmem:[%s275 + $0x98] sm:$0xf]
        %v830 = vld [vmem:[%s275 + $0x9c] sm:$0xf]
        %v831 = vld [vmem:[%s275 + $0xa0] sm:$0xf]
        %v832 = vld [vmem:[%s275 + $0xa4] sm:$0xf]
        %v833 = vld [vmem:[%s275 + $0xa8] sm:$0x3]
        %s834 = scalar_lea.vmem %s1, 192
        %v835 = vld [vmem:[%s834] sm:$0xf]
        %v836 = vld [vmem:[%s834 + $0x4] sm:$0xf]
        %v837 = vld [vmem:[%s834 + $0x8] sm:$0xf]
        %v838 = vld [vmem:[%s834 + $0xc] sm:$0xf]
        %v839 = vld [vmem:[%s834 + $0x10] sm:$0xf]
        %v840 = vld [vmem:[%s834 + $0x14] sm:$0xf]
        %v841 = vld [vmem:[%s834 + $0x18] sm:$0xf]
        %v842 = vld [vmem:[%s834 + $0x1c] sm:$0xf]
        %v843 = vld [vmem:[%s834 + $0x20] sm:$0xf]
        %v844 = vld [vmem:[%s834 + $0x24] sm:$0xf]
        %v845 = vld [vmem:[%s834 + $0x28] sm:$0xf]
        %v846 = vld [vmem:[%s834 + $0x2c] sm:$0xf]
        %v847 = vld [vmem:[%s834 + $0x30] sm:$0xf]
        %v848 = vld [vmem:[%s834 + $0x34] sm:$0xf]
        %v849 = vld [vmem:[%s834 + $0x38] sm:$0xf]
        %v850 = vld [vmem:[%s834 + $0x3c] sm:$0xf]
        %v864 = vunpack.c.l.b16 %v821
        %v865 = vunpack.c.l.b16 %v822
        %v866 = vunpack.c.l.b16 %v823
        %v867 = vunpack.c.l.b16 %v824
        %v868 = vunpack.c.l.b16 %v825
        %v869 = vunpack.c.l.b16 %v826
        %v870 = vunpack.c.l.b16 %v827
        %v871 = vunpack.c.l.b16 %v828
        %v872 = vunpack.c.l.b16 %v829
        %v873 = vunpack.c.l.b16 %v830
        %v874 = vunpack.c.l.b16 %v831
        %v875 = vunpack.c.l.b16 %v832
        %v876 = vunpack.c.l.b16 %v833
        %v877 = vpack.c.b16 %v865, %v864
        %v878 = vpack.c.b16 %v867, %v866
        %v879 = vpack.c.b16 %v869, %v868
        %v880 = vpack.c.b16 %v871, %v870
        %v881 = vpack.c.b16 %v873, %v872
        %v882 = vpack.c.b16 %v875, %v874
        %v883 = vpack.c.b16 %v876, %v876
        %v907 = vunpack.c.l.b16 %v835
        %v908 = vunpack.c.l.b16 %v836
        %v909 = vunpack.c.l.b16 %v837
        %v910 = vunpack.c.l.b16 %v838
        %v911 = vunpack.c.l.b16 %v839
        %v912 = vunpack.c.l.b16 %v840
        %v913 = vunpack.c.l.b16 %v841
        %v914 = vunpack.c.l.b16 %v842
        %v915 = vunpack.c.l.b16 %v843
        %v916 = vunpack.c.l.b16 %v844
        %v917 = vunpack.c.l.b16 %v845
        %v918 = vunpack.c.l.b16 %v846
        %v919 = vunpack.c.l.b16 %v847
        %v920 = vunpack.c.l.b16 %v848
        %v921 = vunpack.c.l.b16 %v849
        %v922 = vunpack.c.l.b16 %v850
        %v923 = vpack.c.b16 %v908, %v907
        %v924 = vpack.c.b16 %v910, %v909
        %v925 = vpack.c.b16 %v912, %v911
        %v926 = vpack.c.b16 %v914, %v913
        %v927 = vpack.c.b16 %v916, %v915
        %v928 = vpack.c.b16 %v918, %v917
        %v929 = vpack.c.b16 %v920, %v919
        %v930 = vpack.c.b16 %v922, %v921
        %939 = vmatpush.bf16.msra.mxu0 %v930
        %940 = vmatpush.bf16.msra.mxu0 %v929
        %941 = vmatpush.bf16.msra.mxu0 %v928
        %942 = vmatpush.bf16.msra.mxu0 %v927
        %943 = vmatpush.bf16.msra.mxu0 %v926
        %944 = vmatpush.bf16.msra.mxu0 %v925
        %945 = vmatpush.bf16.msra.mxu0 %v924
        %946 = vmatpush.bf16.msra.mxu0 %v923
        %947 = vmatmul.bf16.gmra.mxu0 %v877
        %v948 = vpop.f32.mrf.mxu0
        %v949 = vadd.f32 0.0, %v948
        %v950 = vpop.f32.mrf.mxu0
        %v951 = vadd.f32 0.0, %v950
        %952 = vmatmul.bf16.gmra.mxu0 %v878
        %v953 = vpop.f32.mrf.mxu0
        %v954 = vadd.f32 0.0, %v953
        %v955 = vpop.f32.mrf.mxu0
        %v956 = vadd.f32 0.0, %v955
        %957 = vmatmul.bf16.gmra.mxu0 %v879
        %v958 = vpop.f32.mrf.mxu0
        %v959 = vadd.f32 0.0, %v958
        %v960 = vpop.f32.mrf.mxu0
        %v961 = vadd.f32 0.0, %v960
        %962 = vmatmul.bf16.gmra.mxu0 %v880
        %v963 = vpop.f32.mrf.mxu0
        %v964 = vadd.f32 0.0, %v963
        %v965 = vpop.f32.mrf.mxu0
        %v966 = vadd.f32 0.0, %v965
        %967 = vmatmul.bf16.gmra.mxu0 %v881
        %v968 = vpop.f32.mrf.mxu0
        %v969 = vadd.f32 0.0, %v968
        %v970 = vpop.f32.mrf.mxu0
        %v971 = vadd.f32 0.0, %v970
        %972 = vmatmul.bf16.gmra.mxu0 %v882
        %v973 = vpop.f32.mrf.mxu0
        %v974 = vadd.f32 0.0, %v973
        %v975 = vpop.f32.mrf.mxu0
        %v976 = vadd.f32 0.0, %v975
        %977 = vmatmul.bf16.gmra.mxu0 %v883
        %v978 = vpop.f32.mrf.mxu0
        %v979 = vadd.f32 0.0, %v978
        %v980 = vpop.f32.mrf.mxu0
        %981 = vdwg.mxu0
        %v982 = vadd.f32 %v808, %v949
        %v983 = vadd.f32 %v809, %v951
        %v984 = vadd.f32 %v810, %v954
        %v985 = vadd.f32 %v811, %v956
        %v986 = vadd.f32 %v812, %v959
        %v987 = vadd.f32 %v813, %v961
        %v988 = vadd.f32 %v814, %v964
        %v989 = vadd.f32 %v815, %v966
        %v990 = vadd.f32 %v816, %v969
        %v991 = vadd.f32 %v817, %v971
        %v992 = vadd.f32 %v818, %v974
        %v993 = vadd.f32 %v819, %v976
        %v994 = vadd.f32 %v820, %v979
        %v995 = vld [vmem:[%s275 + $0x8] sm:$0xc]
        %v996 = vld [vmem:[%s275 + $0xc] sm:$0xf]
        %v997 = vld [vmem:[%s275 + $0x10] sm:$0xf]
        %v998 = vld [vmem:[%s275 + $0x14] sm:$0xf]
        %v999 = vld [vmem:[%s275 + $0x18] sm:$0xf]
        %v1000 = vld [vmem:[%s275 + $0x1c] sm:$0xf]
        %v1001 = vld [vmem:[%s275 + $0x20] sm:$0xf]
        %v1002 = vld [vmem:[%s275 + $0x24] sm:$0xf]
        %v1003 = vld [vmem:[%s275 + $0x28] sm:$0xf]
        %v1004 = vld [vmem:[%s275 + $0x2c] sm:$0xf]
        %v1005 = vld [vmem:[%s275 + $0x30] sm:$0xf]
        %v1006 = vld [vmem:[%s275 + $0x34] sm:$0xf]
        %v1007 = vld [vmem:[%s275 + $0x38] sm:$0xf]
        %s1008 = scalar_lea.vmem %s1, 256
        %v1009 = vld [vmem:[%s1008] sm:$0xf]
        %v1010 = vld [vmem:[%s1008 + $0x4] sm:$0xf]
        %v1011 = vld [vmem:[%s1008 + $0x8] sm:$0xf]
        %v1012 = vld [vmem:[%s1008 + $0xc] sm:$0xf]
        %v1013 = vld [vmem:[%s1008 + $0x10] sm:$0xf]
        %v1014 = vld [vmem:[%s1008 + $0x14] sm:$0xf]
        %v1015 = vld [vmem:[%s1008 + $0x18] sm:$0xf]
        %v1016 = vld [vmem:[%s1008 + $0x1c] sm:$0xf]
        %v1017 = vld [vmem:[%s1008 + $0x20] sm:$0xf]
        %v1018 = vld [vmem:[%s1008 + $0x24] sm:$0xf]
        %v1019 = vld [vmem:[%s1008 + $0x28] sm:$0xf]
        %v1020 = vld [vmem:[%s1008 + $0x2c] sm:$0xf]
        %v1021 = vld [vmem:[%s1008 + $0x30] sm:$0xf]
        %v1022 = vld [vmem:[%s1008 + $0x34] sm:$0xf]
        %v1023 = vld [vmem:[%s1008 + $0x38] sm:$0xf]
        %v1024 = vld [vmem:[%s1008 + $0x3c] sm:$0xf]
        %v1038 = vunpack.c.l.b16 %v995
        %v1039 = vunpack.c.l.b16 %v996
        %v1040 = vunpack.c.l.b16 %v997
        %v1041 = vunpack.c.l.b16 %v998
        %v1042 = vunpack.c.l.b16 %v999
        %v1043 = vunpack.c.l.b16 %v1000
        %v1044 = vunpack.c.l.b16 %v1001
        %v1045 = vunpack.c.l.b16 %v1002
        %v1046 = vunpack.c.l.b16 %v1003
        %v1047 = vunpack.c.l.b16 %v1004
        %v1048 = vunpack.c.l.b16 %v1005
        %v1049 = vunpack.c.l.b16 %v1006
        %v1050 = vunpack.c.l.b16 %v1007
        %v1051 = vpack.c.b16 %v1039, %v1038
        %v1052 = vpack.c.b16 %v1041, %v1040
        %v1053 = vpack.c.b16 %v1043, %v1042
        %v1054 = vpack.c.b16 %v1045, %v1044
        %v1055 = vpack.c.b16 %v1047, %v1046
        %v1056 = vpack.c.b16 %v1049, %v1048
        %v1057 = vpack.c.b16 %v1050, %v1050
        %vm1058 = vcmask 1045504
        %v1059 = vrot.slane %v1051, 2
        %v1060 = vrot.slane %v1052, 2
        %v1061 = vsel %vm1058, %v1059, %v1060
        %v1062 = vrot.slane %v1053, 2
        %v1063 = vsel %vm1058, %v1060, %v1062
        %v1064 = vrot.slane %v1054, 2
        %v1065 = vsel %vm1058, %v1062, %v1064
        %v1066 = vrot.slane %v1055, 2
        %v1067 = vsel %vm1058, %v1064, %v1066
        %v1068 = vrot.slane %v1056, 2
        %v1069 = vsel %vm1058, %v1066, %v1068
        %v1070 = vrot.slane %v1057, 2
        %v1071 = vsel %vm1058, %v1068, %v1070
        %v1095 = vunpack.c.l.b16 %v1009
        %v1096 = vunpack.c.l.b16 %v1010
        %v1097 = vunpack.c.l.b16 %v1011
        %v1098 = vunpack.c.l.b16 %v1012
        %v1099 = vunpack.c.l.b16 %v1013
        %v1100 = vunpack.c.l.b16 %v1014
        %v1101 = vunpack.c.l.b16 %v1015
        %v1102 = vunpack.c.l.b16 %v1016
        %v1103 = vunpack.c.l.b16 %v1017
        %v1104 = vunpack.c.l.b16 %v1018
        %v1105 = vunpack.c.l.b16 %v1019
        %v1106 = vunpack.c.l.b16 %v1020
        %v1107 = vunpack.c.l.b16 %v1021
        %v1108 = vunpack.c.l.b16 %v1022
        %v1109 = vunpack.c.l.b16 %v1023
        %v1110 = vunpack.c.l.b16 %v1024
        %v1111 = vpack.c.b16 %v1096, %v1095
        %v1112 = vpack.c.b16 %v1098, %v1097
        %v1113 = vpack.c.b16 %v1100, %v1099
        %v1114 = vpack.c.b16 %v1102, %v1101
        %v1115 = vpack.c.b16 %v1104, %v1103
        %v1116 = vpack.c.b16 %v1106, %v1105
        %v1117 = vpack.c.b16 %v1108, %v1107
        %v1118 = vpack.c.b16 %v1110, %v1109
        %1127 = vmatpush.bf16.msra.mxu0 %v1118
        %1128 = vmatpush.bf16.msra.mxu0 %v1117
        %1129 = vmatpush.bf16.msra.mxu0 %v1116
        %1130 = vmatpush.bf16.msra.mxu0 %v1115
        %1131 = vmatpush.bf16.msra.mxu0 %v1114
        %1132 = vmatpush.bf16.msra.mxu0 %v1113
        %1133 = vmatpush.bf16.msra.mxu0 %v1112
        %1134 = vmatpush.bf16.msra.mxu0 %v1111
        %1135 = vmatmul.bf16.gmra.mxu0 %v1061
        %v1136 = vpop.f32.mrf.mxu0
        %v1137 = vadd.f32 0.0, %v1136
        %v1138 = vpop.f32.mrf.mxu0
        %v1139 = vadd.f32 0.0, %v1138
        %1140 = vmatmul.bf16.gmra.mxu0 %v1063
        %v1141 = vpop.f32.mrf.mxu0
        %v1142 = vadd.f32 0.0, %v1141
        %v1143 = vpop.f32.mrf.mxu0
        %v1144 = vadd.f32 0.0, %v1143
        %1145 = vmatmul.bf16.gmra.mxu0 %v1065
        %v1146 = vpop.f32.mrf.mxu0
        %v1147 = vadd.f32 0.0, %v1146
        %v1148 = vpop.f32.mrf.mxu0
        %v1149 = vadd.f32 0.0, %v1148
        %1150 = vmatmul.bf16.gmra.mxu0 %v1067
        %v1151 = vpop.f32.mrf.mxu0
        %v1152 = vadd.f32 0.0, %v1151
        %v1153 = vpop.f32.mrf.mxu0
        %v1154 = vadd.f32 0.0, %v1153
        %1155 = vmatmul.bf16.gmra.mxu0 %v1069
        %v1156 = vpop.f32.mrf.mxu0
        %v1157 = vadd.f32 0.0, %v1156
        %v1158 = vpop.f32.mrf.mxu0
        %v1159 = vadd.f32 0.0, %v1158
        %1160 = vmatmul.bf16.gmra.mxu0 %v1071
        %v1161 = vpop.f32.mrf.mxu0
        %v1162 = vadd.f32 0.0, %v1161
        %v1163 = vpop.f32.mrf.mxu0
        %v1164 = vadd.f32 0.0, %v1163
        %1165 = vmatmul.bf16.gmra.mxu0 %v1070
        %v1166 = vpop.f32.mrf.mxu0
        %v1167 = vadd.f32 0.0, %v1166
        %v1168 = vpop.f32.mrf.mxu0
        %1169 = vdwg.mxu0
        %v1170 = vadd.f32 %v982, %v1137
        %v1171 = vadd.f32 %v983, %v1139
        %v1172 = vadd.f32 %v984, %v1142
        %v1173 = vadd.f32 %v985, %v1144
        %v1174 = vadd.f32 %v986, %v1147
        %v1175 = vadd.f32 %v987, %v1149
        %v1176 = vadd.f32 %v988, %v1152
        %v1177 = vadd.f32 %v989, %v1154
        %v1178 = vadd.f32 %v990, %v1157
        %v1179 = vadd.f32 %v991, %v1159
        %v1180 = vadd.f32 %v992, %v1162
        %v1181 = vadd.f32 %v993, %v1164
        %v1182 = vadd.f32 %v994, %v1167
        %v1183 = vld [vmem:[%s275 + $0x7c] sm:$0xe]
        %v1184 = vld [vmem:[%s275 + $0x80] sm:$0xf]
        %v1185 = vld [vmem:[%s275 + $0x84] sm:$0xf]
        %v1186 = vld [vmem:[%s275 + $0x88] sm:$0xf]
        %v1187 = vld [vmem:[%s275 + $0x8c] sm:$0xf]
        %v1188 = vld [vmem:[%s275 + $0x90] sm:$0xf]
        %v1189 = vld [vmem:[%s275 + $0x94] sm:$0xf]
        %v1190 = vld [vmem:[%s275 + $0x98] sm:$0xf]
        %v1191 = vld [vmem:[%s275 + $0x9c] sm:$0xf]
        %v1192 = vld [vmem:[%s275 + $0xa0] sm:$0xf]
        %v1193 = vld [vmem:[%s275 + $0xa4] sm:$0xf]
        %v1194 = vld [vmem:[%s275 + $0xa8] sm:$0xf]
        %v1195 = vld [vmem:[%s275 + $0xac] sm:$0x7]
        %s1196 = scalar_lea.vmem %s1, 320
        %v1197 = vld [vmem:[%s1196] sm:$0xf]
        %v1198 = vld [vmem:[%s1196 + $0x4] sm:$0xf]
        %v1199 = vld [vmem:[%s1196 + $0x8] sm:$0xf]
        %v1200 = vld [vmem:[%s1196 + $0xc] sm:$0xf]
        %v1201 = vld [vmem:[%s1196 + $0x10] sm:$0xf]
        %v1202 = vld [vmem:[%s1196 + $0x14] sm:$0xf]
        %v1203 = vld [vmem:[%s1196 + $0x18] sm:$0xf]
        %v1204 = vld [vmem:[%s1196 + $0x1c] sm:$0xf]
        %v1205 = vld [vmem:[%s1196 + $0x20] sm:$0xf]
        %v1206 = vld [vmem:[%s1196 + $0x24] sm:$0xf]
        %v1207 = vld [vmem:[%s1196 + $0x28] sm:$0xf]
        %v1208 = vld [vmem:[%s1196 + $0x2c] sm:$0xf]
        %v1209 = vld [vmem:[%s1196 + $0x30] sm:$0xf]
        %v1210 = vld [vmem:[%s1196 + $0x34] sm:$0xf]
        %v1211 = vld [vmem:[%s1196 + $0x38] sm:$0xf]
        %v1212 = vld [vmem:[%s1196 + $0x3c] sm:$0xf]
        %v1226 = vunpack.c.l.b16 %v1183
        %v1227 = vunpack.c.l.b16 %v1184
        %v1228 = vunpack.c.l.b16 %v1185
        %v1229 = vunpack.c.l.b16 %v1186
        %v1230 = vunpack.c.l.b16 %v1187
        %v1231 = vunpack.c.l.b16 %v1188
        %v1232 = vunpack.c.l.b16 %v1189
        %v1233 = vunpack.c.l.b16 %v1190
        %v1234 = vunpack.c.l.b16 %v1191
        %v1235 = vunpack.c.l.b16 %v1192
        %v1236 = vunpack.c.l.b16 %v1193
        %v1237 = vunpack.c.l.b16 %v1194
        %v1238 = vunpack.c.l.b16 %v1195
        %v1239 = vpack.c.b16 %v1227, %v1226
        %v1240 = vpack.c.b16 %v1229, %v1228
        %v1241 = vpack.c.b16 %v1231, %v1230
        %v1242 = vpack.c.b16 %v1233, %v1232
        %v1243 = vpack.c.b16 %v1235, %v1234
        %v1244 = vpack.c.b16 %v1237, %v1236
        %v1245 = vpack.c.b16 %v1238, %v1238
        %v1246 = vrot.slane %v1239, 1
        %v1247 = vrot.slane %v1240, 1
        %v1248 = vsel %vm696, %v1246, %v1247
        %v1249 = vrot.slane %v1241, 1
        %v1250 = vsel %vm696, %v1247, %v1249
        %v1251 = vrot.slane %v1242, 1
        %v1252 = vsel %vm696, %v1249, %v1251
        %v1253 = vrot.slane %v1243, 1
        %v1254 = vsel %vm696, %v1251, %v1253
        %v1255 = vrot.slane %v1244, 1
        %v1256 = vsel %vm696, %v1253, %v1255
        %v1257 = vrot.slane %v1245, 1
        %v1258 = vsel %vm696, %v1255, %v1257
        %v1282 = vunpack.c.l.b16 %v1197
        %v1283 = vunpack.c.l.b16 %v1198
        %v1284 = vunpack.c.l.b16 %v1199
        %v1285 = vunpack.c.l.b16 %v1200
        %v1286 = vunpack.c.l.b16 %v1201
        %v1287 = vunpack.c.l.b16 %v1202
        %v1288 = vunpack.c.l.b16 %v1203
        %v1289 = vunpack.c.l.b16 %v1204
        %v1290 = vunpack.c.l.b16 %v1205
        %v1291 = vunpack.c.l.b16 %v1206
        %v1292 = vunpack.c.l.b16 %v1207
        %v1293 = vunpack.c.l.b16 %v1208
        %v1294 = vunpack.c.l.b16 %v1209
        %v1295 = vunpack.c.l.b16 %v1210
        %v1296 = vunpack.c.l.b16 %v1211
        %v1297 = vunpack.c.l.b16 %v1212
        %v1298 = vpack.c.b16 %v1283, %v1282
        %v1299 = vpack.c.b16 %v1285, %v1284
        %v1300 = vpack.c.b16 %v1287, %v1286
        %v1301 = vpack.c.b16 %v1289, %v1288
        %v1302 = vpack.c.b16 %v1291, %v1290
        %v1303 = vpack.c.b16 %v1293, %v1292
        %v1304 = vpack.c.b16 %v1295, %v1294
        %v1305 = vpack.c.b16 %v1297, %v1296
        %1314 = vmatpush.bf16.msra.mxu0 %v1305
        %1315 = vmatpush.bf16.msra.mxu0 %v1304
        %1316 = vmatpush.bf16.msra.mxu0 %v1303
        %1317 = vmatpush.bf16.msra.mxu0 %v1302
        %1318 = vmatpush.bf16.msra.mxu0 %v1301
        %1319 = vmatpush.bf16.msra.mxu0 %v1300
        %1320 = vmatpush.bf16.msra.mxu0 %v1299
        %1321 = vmatpush.bf16.msra.mxu0 %v1298
        %1322 = vmatmul.bf16.gmra.mxu0 %v1248
        %v1323 = vpop.f32.mrf.mxu0
        %v1324 = vadd.f32 0.0, %v1323
        %v1325 = vpop.f32.mrf.mxu0
        %v1326 = vadd.f32 0.0, %v1325
        %1327 = vmatmul.bf16.gmra.mxu0 %v1250
        %v1328 = vpop.f32.mrf.mxu0
        %v1329 = vadd.f32 0.0, %v1328
        %v1330 = vpop.f32.mrf.mxu0
        %v1331 = vadd.f32 0.0, %v1330
        %1332 = vmatmul.bf16.gmra.mxu0 %v1252
        %v1333 = vpop.f32.mrf.mxu0
        %v1334 = vadd.f32 0.0, %v1333
        %v1335 = vpop.f32.mrf.mxu0
        %v1336 = vadd.f32 0.0, %v1335
        %1337 = vmatmul.bf16.gmra.mxu0 %v1254
        %v1338 = vpop.f32.mrf.mxu0
        %v1339 = vadd.f32 0.0, %v1338
        %v1340 = vpop.f32.mrf.mxu0
        %v1341 = vadd.f32 0.0, %v1340
        %1342 = vmatmul.bf16.gmra.mxu0 %v1256
        %v1343 = vpop.f32.mrf.mxu0
        %v1344 = vadd.f32 0.0, %v1343
        %v1345 = vpop.f32.mrf.mxu0
        %v1346 = vadd.f32 0.0, %v1345
        %1347 = vmatmul.bf16.gmra.mxu0 %v1258
        %v1348 = vpop.f32.mrf.mxu0
        %v1349 = vadd.f32 0.0, %v1348
        %v1350 = vpop.f32.mrf.mxu0
        %v1351 = vadd.f32 0.0, %v1350
        %1352 = vmatmul.bf16.gmra.mxu0 %v1257
        %v1353 = vpop.f32.mrf.mxu0
        %v1354 = vadd.f32 0.0, %v1353
        %v1355 = vpop.f32.mrf.mxu0
        %1356 = vdwg.mxu0
        %v1357 = vadd.f32 %v1170, %v1324
        %v1358 = vadd.f32 %v1171, %v1326
        %v1359 = vadd.f32 %v1172, %v1329
        %v1360 = vadd.f32 %v1173, %v1331
        %v1361 = vadd.f32 %v1174, %v1334
        %v1362 = vadd.f32 %v1175, %v1336
        %v1363 = vadd.f32 %v1176, %v1339
        %v1364 = vadd.f32 %v1177, %v1341
        %v1365 = vadd.f32 %v1178, %v1344
        %v1366 = vadd.f32 %v1179, %v1346
        %v1367 = vadd.f32 %v1180, %v1349
        %v1368 = vadd.f32 %v1181, %v1351
        %v1369 = vadd.f32 %v1182, %v1354
        %v1370 = vld [vmem:[%s275 + $0xc] sm:$0x8]
        %v1371 = vld [vmem:[%s275 + $0x10] sm:$0xf]
        %v1372 = vld [vmem:[%s275 + $0x14] sm:$0xf]
        %v1373 = vld [vmem:[%s275 + $0x18] sm:$0xf]
        %v1374 = vld [vmem:[%s275 + $0x1c] sm:$0xf]
        %v1375 = vld [vmem:[%s275 + $0x20] sm:$0xf]
        %v1376 = vld [vmem:[%s275 + $0x24] sm:$0xf]
        %v1377 = vld [vmem:[%s275 + $0x28] sm:$0xf]
        %v1378 = vld [vmem:[%s275 + $0x2c] sm:$0xf]
        %v1379 = vld [vmem:[%s275 + $0x30] sm:$0xf]
        %v1380 = vld [vmem:[%s275 + $0x34] sm:$0xf]
        %v1381 = vld [vmem:[%s275 + $0x38] sm:$0xf]
        %v1382 = vld [vmem:[%s275 + $0x3c] sm:$0xf]
        %v1383 = vld [vmem:[%s275 + $0x40] sm:$0x1]
        %s1384 = scalar_lea.vmem %s1, 384
        %v1385 = vld [vmem:[%s1384] sm:$0xf]
        %v1386 = vld [vmem:[%s1384 + $0x4] sm:$0xf]
        %v1387 = vld [vmem:[%s1384 + $0x8] sm:$0xf]
        %v1388 = vld [vmem:[%s1384 + $0xc] sm:$0xf]
        %v1389 = vld [vmem:[%s1384 + $0x10] sm:$0xf]
        %v1390 = vld [vmem:[%s1384 + $0x14] sm:$0xf]
        %v1391 = vld [vmem:[%s1384 + $0x18] sm:$0xf]
        %v1392 = vld [vmem:[%s1384 + $0x1c] sm:$0xf]
        %v1393 = vld [vmem:[%s1384 + $0x20] sm:$0xf]
        %v1394 = vld [vmem:[%s1384 + $0x24] sm:$0xf]
        %v1395 = vld [vmem:[%s1384 + $0x28] sm:$0xf]
        %v1396 = vld [vmem:[%s1384 + $0x2c] sm:$0xf]
        %v1397 = vld [vmem:[%s1384 + $0x30] sm:$0xf]
        %v1398 = vld [vmem:[%s1384 + $0x34] sm:$0xf]
        %v1399 = vld [vmem:[%s1384 + $0x38] sm:$0xf]
        %v1400 = vld [vmem:[%s1384 + $0x3c] sm:$0xf]
        %v1415 = vunpack.c.l.b16 %v1370
        %v1416 = vunpack.c.l.b16 %v1371
        %v1417 = vunpack.c.l.b16 %v1372
        %v1418 = vunpack.c.l.b16 %v1373
        %v1419 = vunpack.c.l.b16 %v1374
        %v1420 = vunpack.c.l.b16 %v1375
        %v1421 = vunpack.c.l.b16 %v1376
        %v1422 = vunpack.c.l.b16 %v1377
        %v1423 = vunpack.c.l.b16 %v1378
        %v1424 = vunpack.c.l.b16 %v1379
        %v1425 = vunpack.c.l.b16 %v1380
        %v1426 = vunpack.c.l.b16 %v1381
        %v1427 = vunpack.c.l.b16 %v1382
        %v1428 = vunpack.c.l.b16 %v1383
        %v1429 = vpack.c.b16 %v1416, %v1415
        %v1430 = vpack.c.b16 %v1418, %v1417
        %v1431 = vpack.c.b16 %v1420, %v1419
        %v1432 = vpack.c.b16 %v1422, %v1421
        %v1433 = vpack.c.b16 %v1424, %v1423
        %v1434 = vpack.c.b16 %v1426, %v1425
        %v1435 = vpack.c.b16 %v1428, %v1427
        %v1436 = vrot.slane %v1429, 3
        %v1437 = vrot.slane %v1430, 3
        %v1438 = vsel %vm390, %v1436, %v1437
        %v1439 = vrot.slane %v1431, 3
        %v1440 = vsel %vm390, %v1437, %v1439
        %v1441 = vrot.slane %v1432, 3
        %v1442 = vsel %vm390, %v1439, %v1441
        %v1443 = vrot.slane %v1433, 3
        %v1444 = vsel %vm390, %v1441, %v1443
        %v1445 = vrot.slane %v1434, 3
        %v1446 = vsel %vm390, %v1443, %v1445
        %v1447 = vrot.slane %v1435, 3
        %v1448 = vsel %vm390, %v1445, %v1447
        %v1472 = vunpack.c.l.b16 %v1385
        %v1473 = vunpack.c.l.b16 %v1386
        %v1474 = vunpack.c.l.b16 %v1387
        %v1475 = vunpack.c.l.b16 %v1388
        %v1476 = vunpack.c.l.b16 %v1389
        %v1477 = vunpack.c.l.b16 %v1390
        %v1478 = vunpack.c.l.b16 %v1391
        %v1479 = vunpack.c.l.b16 %v1392
        %v1480 = vunpack.c.l.b16 %v1393
        %v1481 = vunpack.c.l.b16 %v1394
        %v1482 = vunpack.c.l.b16 %v1395
        %v1483 = vunpack.c.l.b16 %v1396
        %v1484 = vunpack.c.l.b16 %v1397
        %v1485 = vunpack.c.l.b16 %v1398
        %v1486 = vunpack.c.l.b16 %v1399
        %v1487 = vunpack.c.l.b16 %v1400
        %v1488 = vpack.c.b16 %v1473, %v1472
        %v1489 = vpack.c.b16 %v1475, %v1474
        %v1490 = vpack.c.b16 %v1477, %v1476
        %v1491 = vpack.c.b16 %v1479, %v1478
        %v1492 = vpack.c.b16 %v1481, %v1480
        %v1493 = vpack.c.b16 %v1483, %v1482
        %v1494 = vpack.c.b16 %v1485, %v1484
        %v1495 = vpack.c.b16 %v1487, %v1486
        %1504 = vmatpush.bf16.msra.mxu0 %v1495
        %1505 = vmatpush.bf16.msra.mxu0 %v1494
        %1506 = vmatpush.bf16.msra.mxu0 %v1493
        %1507 = vmatpush.bf16.msra.mxu0 %v1492
        %1508 = vmatpush.bf16.msra.mxu0 %v1491
        %1509 = vmatpush.bf16.msra.mxu0 %v1490
        %1510 = vmatpush.bf16.msra.mxu0 %v1489
        %1511 = vmatpush.bf16.msra.mxu0 %v1488
        %1512 = vmatmul.bf16.gmra.mxu0 %v1438
        %v1513 = vpop.f32.mrf.mxu0
        %v1514 = vadd.f32 0.0, %v1513
        %v1515 = vpop.f32.mrf.mxu0
        %v1516 = vadd.f32 0.0, %v1515
        %1517 = vmatmul.bf16.gmra.mxu0 %v1440
        %v1518 = vpop.f32.mrf.mxu0
        %v1519 = vadd.f32 0.0, %v1518
        %v1520 = vpop.f32.mrf.mxu0
        %v1521 = vadd.f32 0.0, %v1520
        %1522 = vmatmul.bf16.gmra.mxu0 %v1442
        %v1523 = vpop.f32.mrf.mxu0
        %v1524 = vadd.f32 0.0, %v1523
        %v1525 = vpop.f32.mrf.mxu0
        %v1526 = vadd.f32 0.0, %v1525
        %1527 = vmatmul.bf16.gmra.mxu0 %v1444
        %v1528 = vpop.f32.mrf.mxu0
        %v1529 = vadd.f32 0.0, %v1528
        %v1530 = vpop.f32.mrf.mxu0
        %v1531 = vadd.f32 0.0, %v1530
        %1532 = vmatmul.bf16.gmra.mxu0 %v1446
        %v1533 = vpop.f32.mrf.mxu0
        %v1534 = vadd.f32 0.0, %v1533
        %v1535 = vpop.f32.mrf.mxu0
        %v1536 = vadd.f32 0.0, %v1535
        %1537 = vmatmul.bf16.gmra.mxu0 %v1448
        %v1538 = vpop.f32.mrf.mxu0
        %v1539 = vadd.f32 0.0, %v1538
        %v1540 = vpop.f32.mrf.mxu0
        %v1541 = vadd.f32 0.0, %v1540
        %1542 = vmatmul.bf16.gmra.mxu0 %v1447
        %v1543 = vpop.f32.mrf.mxu0
        %v1544 = vadd.f32 0.0, %v1543
        %v1545 = vpop.f32.mrf.mxu0
        %1546 = vdwg.mxu0
        %v1547 = vadd.f32 %v1357, %v1514
        %v1548 = vadd.f32 %v1358, %v1516
        %v1549 = vadd.f32 %v1359, %v1519
        %v1550 = vadd.f32 %v1360, %v1521
        %v1551 = vadd.f32 %v1361, %v1524
        %v1552 = vadd.f32 %v1362, %v1526
        %v1553 = vadd.f32 %v1363, %v1529
        %v1554 = vadd.f32 %v1364, %v1531
        %v1555 = vadd.f32 %v1365, %v1534
        %v1556 = vadd.f32 %v1366, %v1536
        %v1557 = vadd.f32 %v1367, %v1539
        %v1558 = vadd.f32 %v1368, %v1541
        %v1559 = vadd.f32 %v1369, %v1544
        %v1561 = vperm.slane %v294, 0
        %v1563 = vadd.f32 %v1547, %v1561
        %v1564 = vadd.f32 %v1548, %v1561
        %v1565 = vadd.f32 %v1549, %v1561
        %v1566 = vadd.f32 %v1550, %v1561
        %v1567 = vadd.f32 %v1551, %v1561
        %v1568 = vadd.f32 %v1552, %v1561
        %v1569 = vadd.f32 %v1553, %v1561
        %v1570 = vadd.f32 %v1554, %v1561
        %v1571 = vadd.f32 %v1555, %v1561
        %v1572 = vadd.f32 %v1556, %v1561
        %v1573 = vadd.f32 %v1557, %v1561
        %v1574 = vadd.f32 %v1558, %v1561
        %v1575 = vadd.f32 %v1559, %v1561
        %v1576 = vmax.f32 %v1563, 0.0
        %v1577 = vmax.f32 %v1564, 0.0
        %v1578 = vmax.f32 %v1565, 0.0
        %v1579 = vmax.f32 %v1566, 0.0
        %v1580 = vmax.f32 %v1567, 0.0
        %v1581 = vmax.f32 %v1568, 0.0
        %v1582 = vmax.f32 %v1569, 0.0
        %v1583 = vmax.f32 %v1570, 0.0
        %v1584 = vmax.f32 %v1571, 0.0
        %v1585 = vmax.f32 %v1572, 0.0
        %v1586 = vmax.f32 %v1573, 0.0
        %v1587 = vmax.f32 %v1574, 0.0
        %v1588 = vmax.f32 %v1575, 0.0
        %v1589 = vpack.c.bf16 %v1576, %v1576
        %v1590 = vpack.c.bf16 %v1577, %v1577
        %v1591 = vpack.c.bf16 %v1578, %v1578
        %v1592 = vpack.c.bf16 %v1579, %v1579
        %v1593 = vpack.c.bf16 %v1580, %v1580
        %v1594 = vpack.c.bf16 %v1581, %v1581
        %v1595 = vpack.c.bf16 %v1582, %v1582
        %v1596 = vpack.c.bf16 %v1583, %v1583
        %v1597 = vpack.c.bf16 %v1584, %v1584
        %v1598 = vpack.c.bf16 %v1585, %v1585
        %v1599 = vpack.c.bf16 %v1586, %v1586
        %v1600 = vpack.c.bf16 %v1587, %v1587
        %v1601 = vpack.c.bf16 %v1588, %v1588
        %v1603 = vshrl.u32 %v1589, 16
        %v1605 = vrot.slane %v1603, 6
        %v1606 = vshll.u32 %v1589, 16
        %v1608 = vrot.slane %v1606, 7
        %v1609 = vor.u32 %v1605, %v1608
        %vm1611 = vcmask 1043457
        %vm1612 = vsmask.f32 7942
        %vm1613 = vmand %vm1611, %vm1612
        %v1614 = vld [vmem:[#allocation2 + $0x40] sm:$0xe]
        %v1615 = vsel %vm1613, %v1609, %v1614
        %1616 = vst [vmem:[#allocation2 + $0x40] sm:$0xe] %v1615
        %vm1617 = vsmask.f32 2304
        %vm1618 = vsmask.f32 6416
        %vm1619 = vmor %vm1617, %vm1618
        %v1620 = vrot.slane %v1603, 5
        %v1621 = vrot.slane %v1606, 6
        %v1622 = vor.u32 %v1620, %v1621
        %v1623 = vrot.slane %v1622, 4
        %v1625 = vshrl.u32 %v1590, 16
        %v1627 = vrot.slane %v1625, 5
        %v1628 = vshll.u32 %v1590, 16
        %v1630 = vrot.slane %v1628, 6
        %v1631 = vor.u32 %v1627, %v1630
        %v1632 = vsel %vm1619, %v1623, %v1631
        %vm1634 = vsmask.f32 3328
        %vm1635 = vmand %vm1611, %vm1634
        %v1636 = vld [vmem:[#allocation2 + $0x44] sm:$0xe]
        %v1637 = vsel %vm1635, %v1632, %v1636
        %1638 = vst [vmem:[#allocation2 + $0x44] sm:$0xe] %v1637
        %v1639 = vrot.slane %v1631, 4
        %vm1642 = vcmask 1043459
        %vm1643 = vsmask.f32 7950
        %vm1644 = vmand %vm1642, %vm1643
        %v1645 = vld [vmem:[#allocation2] sm:$0x8]
        %v1646 = vsel %vm1644, %v1630, %v1645
        %1647 = vst [vmem:[#allocation2] sm:$0x8] %v1646
        %1648 = vst [vmem:[#allocation2 + $0x8] sm:$0x3] %v1639
        %vm1649 = vsmask.f32 7440
        %vm1650 = vmor %vm1634, %vm1649
        %v1651 = vrot.slane %v1625, 4
        %v1652 = vrot.slane %v1651, 4
        %v1654 = vshll.u32 %v1591, 16
        %v1656 = vrot.slane %v1654, 5
        %v1657 = vsel %vm1650, %v1652, %v1656
        %v1658 = vshrl.u32 %v1591, 16
        %v1660 = vrot.slane %v1658, 4
        %v1661 = vor.u32 %v1660, %v1656
        %v1662 = vrot.slane %v1661, 4
        %1665 = vst [vmem:[#allocation2 + $0x4] sm:$0x8] %v1657
        %vm1666 = vcmask 1041408
        %vm1667 = vsmask.f32 1280
        %vm1668 = vmand %vm1666, %vm1667
        %v1669 = vld [vmem:[#allocation2 + $0xc] sm:$0x3]
        %v1670 = vsel %vm1668, %v1662, %v1669
        %1671 = vst [vmem:[#allocation2 + $0xc] sm:$0x3] %v1670
        %v1672 = vrot.slane %v1658, 5
        %v1673 = vrot.slane %v1654, 6
        %v1674 = vor.u32 %v1672, %v1673
        %v1675 = vrot.slane %v1674, 4
        %v1677 = vshll.u32 %v1592, 16
        %v1679 = vrot.slane %v1677, 6
        %v1680 = vsel %vm1619, %v1675, %v1679
        %vm1682 = vcmask 1042432
        %vm1683 = vsmask.f32 7938
        %vm1684 = vmand %vm1682, %vm1683
        %v1685 = vld [vmem:[#allocation2 + $0x48] sm:$0x7]
        %v1686 = vsel %vm1684, %v1680, %v1685
        %1687 = vst [vmem:[#allocation2 + $0x48] sm:$0x7] %v1686
        %v1688 = vshrl.u32 %v1592, 16
        %v1690 = vrot.slane %v1688, 4
        %v1691 = vrot.slane %v1677, 5
        %v1692 = vor.u32 %v1690, %v1691
        %v1693 = vrot.slane %v1692, 4
        %vm1695 = vmand %vm1682, %vm1617
        %v1696 = vld [vmem:[#allocation2 + $0x4c] sm:$0x7]
        %v1697 = vsel %vm1695, %v1693, %v1696
        %1698 = vst [vmem:[#allocation2 + $0x4c] sm:$0x7] %v1697
        %v1700 = vshll.u32 %v1593, 16
        %v1702 = vrot.slane %v1700, 5
        %v1703 = vsel %vm1650, %v1693, %v1702
        %v1704 = vshrl.u32 %v1593, 16
        %v1706 = vrot.slane %v1704, 4
        %v1707 = vor.u32 %v1706, %v1702
        %v1708 = vrot.slane %v1707, 4
        %vm1711 = vcmask 1043458
        %vm1712 = vsmask.f32 7946
        %vm1713 = vmand %vm1711, %vm1712
        %v1714 = vld [vmem:[#allocation2 + $0x8] sm:$0xc]
        %v1715 = vsel %vm1713, %v1703, %v1714
        %1716 = vst [vmem:[#allocation2 + $0x8] sm:$0xc] %v1715
        %1717 = vst [vmem:[#allocation2 + $0x10] sm:$0x1] %v1708
        %v1718 = vrot.slane %v1704, 7
        %v1719 = vor.u32 %v1718, %v1700
        %v1720 = vrot.slane %v1718, 4
        %1723 = vst [vmem:[#allocation2 + $0xc] sm:$0xc] %v1719
        %vm1724 = vcmask 1040384
        %vm1725 = vsmask.f32 256
        %vm1726 = vmand %vm1724, %vm1725
        %v1727 = vld [vmem:[#allocation2 + $0x14] sm:$0x1]
        %v1728 = vsel %vm1726, %v1720, %v1727
        %1729 = vst [vmem:[#allocation2 + $0x14] sm:$0x1] %v1728
        %v1731 = vshll.u32 %v1594, 16
        %v1733 = vrot.slane %v1731, 5
        %v1734 = vshrl.u32 %v1594, 16
        %v1736 = vrot.slane %v1734, 4
        %v1737 = vor.u32 %v1736, %v1733
        %v1738 = vrot.slane %v1737, 4
        %v1741 = vld [vmem:[#allocation2 + $0x48] sm:$0x8]
        %v1742 = vsel %vm1644, %v1733, %v1741
        %1743 = vst [vmem:[#allocation2 + $0x48] sm:$0x8] %v1742
        %1744 = vst [vmem:[#allocation2 + $0x50] sm:$0x3] %v1738
        %vm1745 = vsmask.f32 4368
        %vm1746 = vmor %vm1725, %vm1745
        %v1747 = vrot.slane %v1734, 7
        %v1748 = vor.u32 %v1747, %v1731
        %v1749 = vrot.slane %v1747, 4
        %v1751 = vshrl.u32 %v1595, 16
        %v1753 = vrot.slane %v1751, 7
        %v1754 = vshll.u32 %v1595, 16
        %v1756 = vor.u32 %v1753, %v1754
        %v1757 = vsel %vm1746, %v1749, %v1756
        %1760 = vst [vmem:[#allocation2 + $0x4c] sm:$0x8] %v1748
        %v1761 = vld [vmem:[#allocation2 + $0x54] sm:$0x3]
        %v1762 = vsel %vm1668, %v1757, %v1761
        %1763 = vst [vmem:[#allocation2 + $0x54] sm:$0x3] %v1762
        %v1765 = vld [vmem:[#allocation2 + $0x10] sm:$0xe]
        %v1766 = vsel %vm1613, %v1756, %v1765
        %1767 = vst [vmem:[#allocation2 + $0x10] sm:$0xe] %v1766
        %vm1768 = vsmask.f32 5392
        %vm1769 = vmor %vm1667, %vm1768
        %v1770 = vrot.slane %v1751, 6
        %v1771 = vrot.slane %v1770, 4
        %v1773 = vshrl.u32 %v1596, 16
        %v1775 = vrot.slane %v1773, 6
        %v1776 = vshll.u32 %v1596, 16
        %v1778 = vrot.slane %v1776, 7
        %v1779 = vor.u32 %v1775, %v1778
        %v1780 = vsel %vm1769, %v1771, %v1779
        %v1782 = vld [vmem:[#allocation2 + $0x14] sm:$0xe]
        %v1783 = vsel %vm1635, %v1780, %v1782
        %1784 = vst [vmem:[#allocation2 + $0x14] sm:$0xe] %v1783
        %v1785 = vrot.slane %v1773, 7
        %v1786 = vor.u32 %v1785, %v1776
        %v1787 = vrot.slane %v1785, 4
        %v1789 = vshll.u32 %v1597, 16
        %v1791 = vsel %vm1746, %v1787, %v1789
        %v1794 = vld [vmem:[#allocation2 + $0x50] sm:$0xc]
        %v1795 = vsel %vm1713, %v1786, %v1794
        %1796 = vst [vmem:[#allocation2 + $0x50] sm:$0xc] %v1795
        %1797 = vst [vmem:[#allocation2 + $0x58] sm:$0x1] %v1791
        %v1798 = vshrl.u32 %v1597, 16
        %v1800 = vrot.slane %v1798, 6
        %v1801 = vrot.slane %v1789, 7
        %v1802 = vor.u32 %v1800, %v1801
        %v1803 = vrot.slane %v1800, 4
        %1806 = vst [vmem:[#allocation2 + $0x54] sm:$0xc] %v1802
        %v1807 = vld [vmem:[#allocation2 + $0x5c] sm:$0x1]
        %v1808 = vsel %vm1726, %v1803, %v1807
        %1809 = vst [vmem:[#allocation2 + $0x5c] sm:$0x1] %v1808
        %v1810 = vrot.slane %v1802, 4
        %v1812 = vshrl.u32 %v1598, 16
        %v1814 = vrot.slane %v1812, 6
        %v1815 = vshll.u32 %v1598, 16
        %v1817 = vrot.slane %v1815, 7
        %v1818 = vor.u32 %v1814, %v1817
        %v1819 = vsel %vm1769, %v1810, %v1818
        %v1821 = vld [vmem:[#allocation2 + $0x18] sm:$0x7]
        %v1822 = vsel %vm1684, %v1819, %v1821
        %1823 = vst [vmem:[#allocation2 + $0x18] sm:$0x7] %v1822
        %v1824 = vrot.slane %v1812, 5
        %v1825 = vrot.slane %v1815, 6
        %v1826 = vor.u32 %v1824, %v1825
        %v1827 = vrot.slane %v1826, 4
        %v1829 = vld [vmem:[#allocation2 + $0x1c] sm:$0x7]
        %v1830 = vsel %vm1695, %v1827, %v1829
        %1831 = vst [vmem:[#allocation2 + $0x1c] sm:$0x7] %v1830
        %v1833 = vshrl.u32 %v1599, 16
        %v1835 = vrot.slane %v1833, 6
        %v1836 = vshll.u32 %v1599, 16
        %v1838 = vrot.slane %v1836, 7
        %v1839 = vor.u32 %v1835, %v1838
        %v1841 = vld [vmem:[#allocation2 + $0x58] sm:$0xe]
        %v1842 = vsel %vm1613, %v1839, %v1841
        %1843 = vst [vmem:[#allocation2 + $0x58] sm:$0xe] %v1842
        %v1844 = vrot.slane %v1833, 5
        %v1845 = vrot.slane %v1836, 6
        %v1846 = vor.u32 %v1844, %v1845
        %v1847 = vrot.slane %v1846, 4
        %v1849 = vshrl.u32 %v1600, 16
        %v1851 = vrot.slane %v1849, 5
        %v1852 = vshll.u32 %v1600, 16
        %v1854 = vrot.slane %v1852, 6
        %v1855 = vor.u32 %v1851, %v1854
        %v1856 = vsel %vm1619, %v1847, %v1855
        %v1858 = vld [vmem:[#allocation2 + $0x5c] sm:$0xe]
        %v1859 = vsel %vm1635, %v1856, %v1858
        %1860 = vst [vmem:[#allocation2 + $0x5c] sm:$0xe] %v1859
        %v1861 = vrot.slane %v1855, 4
        %v1864 = vld [vmem:[#allocation2 + $0x18] sm:$0x8]
        %v1865 = vsel %vm1644, %v1854, %v1864
        %1866 = vst [vmem:[#allocation2 + $0x18] sm:$0x8] %v1865
        %1867 = vst [vmem:[#allocation2 + $0x20] sm:$0x3] %v1861
        %v1868 = vrot.slane %v1849, 4
        %v1869 = vrot.slane %v1868, 4
        %v1871 = vshll.u32 %v1601, 16
        %v1873 = vrot.slane %v1871, 5
        %v1874 = vsel %vm1650, %v1869, %v1873
        %v1875 = vshrl.u32 %v1601, 16
        %v1877 = vrot.slane %v1875, 4
        %v1878 = vor.u32 %v1877, %v1873
        %v1879 = vrot.slane %v1878, 4
        %1882 = vst [vmem:[#allocation2 + $0x1c] sm:$0x8] %v1874
        %v1883 = vld [vmem:[#allocation2 + $0x24] sm:$0x3]
        %v1884 = vsel %vm1668, %v1879, %v1883
        %1885 = vst [vmem:[#allocation2 + $0x24] sm:$0x3] %v1884
        %v1886 = vld [vmem:[%s275 + $0x30] sm:$0xc]
        %v1887 = vld [vmem:[%s275 + $0x34] sm:$0xf]
        %v1888 = vld [vmem:[%s275 + $0x38] sm:$0xf]
        %v1889 = vld [vmem:[%s275 + $0x3c] sm:$0xf]
        %v1890 = vld [vmem:[%s275 + $0x40] sm:$0xf]
        %v1891 = vld [vmem:[%s275 + $0x44] sm:$0xf]
        %v1892 = vld [vmem:[%s275 + $0x48] sm:$0xf]
        %v1893 = vld [vmem:[%s275 + $0x4c] sm:$0xf]
        %v1894 = vld [vmem:[%s275 + $0x50] sm:$0xf]
        %v1895 = vld [vmem:[%s275 + $0x54] sm:$0xf]
        %v1896 = vld [vmem:[%s275 + $0x58] sm:$0xf]
        %v1897 = vld [vmem:[%s275 + $0x5c] sm:$0xf]
        %v1898 = vld [vmem:[%s275 + $0x60] sm:$0xf]
        %v1899 = vld [vmem:[%s1] sm:$0xf]
        %v1900 = vld [vmem:[%s1 + $0x4] sm:$0xf]
        %v1901 = vld [vmem:[%s1 + $0x8] sm:$0xf]
        %v1902 = vld [vmem:[%s1 + $0xc] sm:$0xf]
        %v1903 = vld [vmem:[%s1 + $0x10] sm:$0xf]
        %v1904 = vld [vmem:[%s1 + $0x14] sm:$0xf]
        %v1905 = vld [vmem:[%s1 + $0x18] sm:$0xf]
        %v1906 = vld [vmem:[%s1 + $0x1c] sm:$0xf]
        %v1907 = vld [vmem:[%s1 + $0x20] sm:$0xf]
        %v1908 = vld [vmem:[%s1 + $0x24] sm:$0xf]
        %v1909 = vld [vmem:[%s1 + $0x28] sm:$0xf]
        %v1910 = vld [vmem:[%s1 + $0x2c] sm:$0xf]
        %v1911 = vld [vmem:[%s1 + $0x30] sm:$0xf]
        %v1912 = vld [vmem:[%s1 + $0x34] sm:$0xf]
        %v1913 = vld [vmem:[%s1 + $0x38] sm:$0xf]
        %v1914 = vld [vmem:[%s1 + $0x3c] sm:$0xf]
        %v1915 = vld [vmem:[%s275 + $0xa4] sm:$0xe]
        %v1916 = vld [vmem:[%s275 + $0xa8] sm:$0xf]
        %v1917 = vld [vmem:[%s275 + $0xac] sm:$0xf]
        %v1918 = vld [vmem:[%s275 + $0xb0] sm:$0xf]
        %v1919 = vld [vmem:[%s275 + $0xb4] sm:$0xf]
        %v1920 = vld [vmem:[%s275 + $0xb8] sm:$0xf]
        %v1921 = vld [vmem:[%s275 + $0xbc] sm:$0xf]
        %v1922 = vld [vmem:[%s275 + $0xc0] sm:$0xf]
        %v1923 = vld [vmem:[%s275 + $0xc4] sm:$0xf]
        %v1924 = vld [vmem:[%s275 + $0xc8] sm:$0xf]
        %v1925 = vld [vmem:[%s275 + $0xcc] sm:$0xf]
        %v1926 = vld [vmem:[%s275 + $0xd0] sm:$0xf]
        %v1927 = vld [vmem:[%s275 + $0xd4] sm:$0x7]
        %v1928 = vld [vmem:[%s338] sm:$0xf]
        %v1929 = vld [vmem:[%s338 + $0x4] sm:$0xf]
        %v1930 = vld [vmem:[%s338 + $0x8] sm:$0xf]
        %v1931 = vld [vmem:[%s338 + $0xc] sm:$0xf]
        %v1932 = vld [vmem:[%s338 + $0x10] sm:$0xf]
        %v1933 = vld [vmem:[%s338 + $0x14] sm:$0xf]
        %v1934 = vld [vmem:[%s338 + $0x18] sm:$0xf]
        %v1935 = vld [vmem:[%s338 + $0x1c] sm:$0xf]
        %v1936 = vld [vmem:[%s338 + $0x20] sm:$0xf]
        %v1937 = vld [vmem:[%s338 + $0x24] sm:$0xf]
        %v1938 = vld [vmem:[%s338 + $0x28] sm:$0xf]
        %v1939 = vld [vmem:[%s338 + $0x2c] sm:$0xf]
        %v1940 = vld [vmem:[%s338 + $0x30] sm:$0xf]
        %v1941 = vld [vmem:[%s338 + $0x34] sm:$0xf]
        %v1942 = vld [vmem:[%s338 + $0x38] sm:$0xf]
        %v1943 = vld [vmem:[%s338 + $0x3c] sm:$0xf]
        %v1957 = vunpack.c.l.b16 %v1915
        %v1958 = vunpack.c.l.b16 %v1916
        %v1959 = vunpack.c.l.b16 %v1917
        %v1960 = vunpack.c.l.b16 %v1918
        %v1961 = vunpack.c.l.b16 %v1919
        %v1962 = vunpack.c.l.b16 %v1920
        %v1963 = vunpack.c.l.b16 %v1921
        %v1964 = vunpack.c.l.b16 %v1922
        %v1965 = vunpack.c.l.b16 %v1923
        %v1966 = vunpack.c.l.b16 %v1924
        %v1967 = vunpack.c.l.b16 %v1925
        %v1968 = vunpack.c.l.b16 %v1926
        %v1969 = vunpack.c.l.b16 %v1927
        %v1970 = vpack.c.b16 %v1958, %v1957
        %v1971 = vpack.c.b16 %v1960, %v1959
        %v1972 = vpack.c.b16 %v1962, %v1961
        %v1973 = vpack.c.b16 %v1964, %v1963
        %v1974 = vpack.c.b16 %v1966, %v1965
        %v1975 = vpack.c.b16 %v1968, %v1967
        %v1976 = vpack.c.b16 %v1969, %v1969
        %v1977 = vrot.slane %v1970, 1
        %v1978 = vrot.slane %v1971, 1
        %v1979 = vsel %vm696, %v1977, %v1978
        %v1980 = vrot.slane %v1972, 1
        %v1981 = vsel %vm696, %v1978, %v1980
        %v1982 = vrot.slane %v1973, 1
        %v1983 = vsel %vm696, %v1980, %v1982
        %v1984 = vrot.slane %v1974, 1
        %v1985 = vsel %vm696, %v1982, %v1984
        %v1986 = vrot.slane %v1975, 1
        %v1987 = vsel %vm696, %v1984, %v1986
        %v1988 = vrot.slane %v1976, 1
        %v1989 = vsel %vm696, %v1986, %v1988
        %v2013 = vunpack.c.l.b16 %v1928
        %v2014 = vunpack.c.l.b16 %v1929
        %v2015 = vunpack.c.l.b16 %v1930
        %v2016 = vunpack.c.l.b16 %v1931
        %v2017 = vunpack.c.l.b16 %v1932
        %v2018 = vunpack.c.l.b16 %v1933
        %v2019 = vunpack.c.l.b16 %v1934
        %v2020 = vunpack.c.l.b16 %v1935
        %v2021 = vunpack.c.l.b16 %v1936
        %v2022 = vunpack.c.l.b16 %v1937
        %v2023 = vunpack.c.l.b16 %v1938
        %v2024 = vunpack.c.l.b16 %v1939
        %v2025 = vunpack.c.l.b16 %v1940
        %v2026 = vunpack.c.l.b16 %v1941
        %v2027 = vunpack.c.l.b16 %v1942
        %v2028 = vunpack.c.l.b16 %v1943
        %v2029 = vpack.c.b16 %v2014, %v2013
        %v2030 = vpack.c.b16 %v2016, %v2015
        %v2031 = vpack.c.b16 %v2018, %v2017
        %v2032 = vpack.c.b16 %v2020, %v2019
        %v2033 = vpack.c.b16 %v2022, %v2021
        %v2034 = vpack.c.b16 %v2024, %v2023
        %v2035 = vpack.c.b16 %v2026, %v2025
        %v2036 = vpack.c.b16 %v2028, %v2027
        %2045 = vmatpush.bf16.msra.mxu0 %v2036
        %2046 = vmatpush.bf16.msra.mxu0 %v2035
        %2047 = vmatpush.bf16.msra.mxu0 %v2034
        %2048 = vmatpush.bf16.msra.mxu0 %v2033
        %2049 = vmatpush.bf16.msra.mxu0 %v2032
        %2050 = vmatpush.bf16.msra.mxu0 %v2031
        %2051 = vmatpush.bf16.msra.mxu0 %v2030
        %2052 = vmatpush.bf16.msra.mxu0 %v2029
        %2053 = vmatmul.bf16.gmra.mxu0 %v1979
        %v2054 = vpop.f32.mrf.mxu0
        %v2055 = vadd.f32 0.0, %v2054
        %v2056 = vpop.f32.mrf.mxu0
        %v2057 = vadd.f32 0.0, %v2056
        %2058 = vmatmul.bf16.gmra.mxu0 %v1981
        %v2059 = vpop.f32.mrf.mxu0
        %v2060 = vadd.f32 0.0, %v2059
        %v2061 = vpop.f32.mrf.mxu0
        %v2062 = vadd.f32 0.0, %v2061
        %2063 = vmatmul.bf16.gmra.mxu0 %v1983
        %v2064 = vpop.f32.mrf.mxu0
        %v2065 = vadd.f32 0.0, %v2064
        %v2066 = vpop.f32.mrf.mxu0
        %v2067 = vadd.f32 0.0, %v2066
        %2068 = vmatmul.bf16.gmra.mxu0 %v1985
        %v2069 = vpop.f32.mrf.mxu0
        %v2070 = vadd.f32 0.0, %v2069
        %v2071 = vpop.f32.mrf.mxu0
        %v2072 = vadd.f32 0.0, %v2071
        %2073 = vmatmul.bf16.gmra.mxu0 %v1987
        %v2074 = vpop.f32.mrf.mxu0
        %v2075 = vadd.f32 0.0, %v2074
        %v2076 = vpop.f32.mrf.mxu0
        %v2077 = vadd.f32 0.0, %v2076
        %2078 = vmatmul.bf16.gmra.mxu0 %v1989
        %v2079 = vpop.f32.mrf.mxu0
        %v2080 = vadd.f32 0.0, %v2079
        %v2081 = vpop.f32.mrf.mxu0
        %v2082 = vadd.f32 0.0, %v2081
        %2083 = vmatmul.bf16.gmra.mxu0 %v1988
        %v2084 = vpop.f32.mrf.mxu0
        %v2085 = vadd.f32 0.0, %v2084
        %v2086 = vpop.f32.mrf.mxu0
        %2087 = vdwg.mxu0
        %v2101 = vunpack.c.l.b16 %v1886
        %v2102 = vunpack.c.l.b16 %v1887
        %v2103 = vunpack.c.l.b16 %v1888
        %v2104 = vunpack.c.l.b16 %v1889
        %v2105 = vunpack.c.l.b16 %v1890
        %v2106 = vunpack.c.l.b16 %v1891
        %v2107 = vunpack.c.l.b16 %v1892
        %v2108 = vunpack.c.l.b16 %v1893
        %v2109 = vunpack.c.l.b16 %v1894
        %v2110 = vunpack.c.l.b16 %v1895
        %v2111 = vunpack.c.l.b16 %v1896
        %v2112 = vunpack.c.l.b16 %v1897
        %v2113 = vunpack.c.l.b16 %v1898
        %v2114 = vpack.c.b16 %v2102, %v2101
        %v2115 = vpack.c.b16 %v2104, %v2103
        %v2116 = vpack.c.b16 %v2106, %v2105
        %v2117 = vpack.c.b16 %v2108, %v2107
        %v2118 = vpack.c.b16 %v2110, %v2109
        %v2119 = vpack.c.b16 %v2112, %v2111
        %v2120 = vpack.c.b16 %v2113, %v2113
        %v2121 = vrot.slane %v2114, 2
        %v2122 = vrot.slane %v2115, 2
        %v2123 = vsel %vm1058, %v2121, %v2122
        %v2124 = vrot.slane %v2116, 2
        %v2125 = vsel %vm1058, %v2122, %v2124
        %v2126 = vrot.slane %v2117, 2
        %v2127 = vsel %vm1058, %v2124, %v2126
        %v2128 = vrot.slane %v2118, 2
        %v2129 = vsel %vm1058, %v2126, %v2128
        %v2130 = vrot.slane %v2119, 2
        %v2131 = vsel %vm1058, %v2128, %v2130
        %v2132 = vrot.slane %v2120, 2
        %v2133 = vsel %vm1058, %v2130, %v2132
        %v2157 = vunpack.c.l.b16 %v1899
        %v2158 = vunpack.c.l.b16 %v1900
        %v2159 = vunpack.c.l.b16 %v1901
        %v2160 = vunpack.c.l.b16 %v1902
        %v2161 = vunpack.c.l.b16 %v1903
        %v2162 = vunpack.c.l.b16 %v1904
        %v2163 = vunpack.c.l.b16 %v1905
        %v2164 = vunpack.c.l.b16 %v1906
        %v2165 = vunpack.c.l.b16 %v1907
        %v2166 = vunpack.c.l.b16 %v1908
        %v2167 = vunpack.c.l.b16 %v1909
        %v2168 = vunpack.c.l.b16 %v1910
        %v2169 = vunpack.c.l.b16 %v1911
        %v2170 = vunpack.c.l.b16 %v1912
        %v2171 = vunpack.c.l.b16 %v1913
        %v2172 = vunpack.c.l.b16 %v1914
        %v2173 = vpack.c.b16 %v2158, %v2157
        %v2174 = vpack.c.b16 %v2160, %v2159
        %v2175 = vpack.c.b16 %v2162, %v2161
        %v2176 = vpack.c.b16 %v2164, %v2163
        %v2177 = vpack.c.b16 %v2166, %v2165
        %v2178 = vpack.c.b16 %v2168, %v2167
        %v2179 = vpack.c.b16 %v2170, %v2169
        %v2180 = vpack.c.b16 %v2172, %v2171
        %2189 = vmatpush.bf16.msra.mxu0 %v2180
        %2190 = vmatpush.bf16.msra.mxu0 %v2179
        %2191 = vmatpush.bf16.msra.mxu0 %v2178
        %2192 = vmatpush.bf16.msra.mxu0 %v2177
        %2193 = vmatpush.bf16.msra.mxu0 %v2176
        %2194 = vmatpush.bf16.msra.mxu0 %v2175
        %2195 = vmatpush.bf16.msra.mxu0 %v2174
        %2196 = vmatpush.bf16.msra.mxu0 %v2173
        %2197 = vmatmul.bf16.gmra.mxu0 %v2123
        %v2198 = vpop.f32.mrf.mxu0
        %v2199 = vadd.f32 %v2055, %v2198
        %v2200 = vpop.f32.mrf.mxu0
        %v2201 = vadd.f32 %v2057, %v2200
        %2202 = vmatmul.bf16.gmra.mxu0 %v2125
        %v2203 = vpop.f32.mrf.mxu0
        %v2204 = vadd.f32 %v2060, %v2203
        %v2205 = vpop.f32.mrf.mxu0
        %v2206 = vadd.f32 %v2062, %v2205
        %2207 = vmatmul.bf16.gmra.mxu0 %v2127
        %v2208 = vpop.f32.mrf.mxu0
        %v2209 = vadd.f32 %v2065, %v2208
        %v2210 = vpop.f32.mrf.mxu0
        %v2211 = vadd.f32 %v2067, %v2210
        %2212 = vmatmul.bf16.gmra.mxu0 %v2129
        %v2213 = vpop.f32.mrf.mxu0
        %v2214 = vadd.f32 %v2070, %v2213
        %v2215 = vpop.f32.mrf.mxu0
        %v2216 = vadd.f32 %v2072, %v2215
        %2217 = vmatmul.bf16.gmra.mxu0 %v2131
        %v2218 = vpop.f32.mrf.mxu0
        %v2219 = vadd.f32 %v2075, %v2218
        %v2220 = vpop.f32.mrf.mxu0
        %v2221 = vadd.f32 %v2077, %v2220
        %2222 = vmatmul.bf16.gmra.mxu0 %v2133
        %v2223 = vpop.f32.mrf.mxu0
        %v2224 = vadd.f32 %v2080, %v2223
        %v2225 = vpop.f32.mrf.mxu0
        %v2226 = vadd.f32 %v2082, %v2225
        %2227 = vmatmul.bf16.gmra.mxu0 %v2132
        %v2228 = vpop.f32.mrf.mxu0
        %v2229 = vadd.f32 %v2085, %v2228
        %v2230 = vpop.f32.mrf.mxu0
        %2231 = vdwg.mxu0
        %v2232 = vld [vmem:[%s275 + $0x34] sm:$0x8]
        %v2233 = vld [vmem:[%s275 + $0x38] sm:$0xf]
        %v2234 = vld [vmem:[%s275 + $0x3c] sm:$0xf]
        %v2235 = vld [vmem:[%s275 + $0x40] sm:$0xf]
        %v2236 = vld [vmem:[%s275 + $0x44] sm:$0xf]
        %v2237 = vld [vmem:[%s275 + $0x48] sm:$0xf]
        %v2238 = vld [vmem:[%s275 + $0x4c] sm:$0xf]
        %v2239 = vld [vmem:[%s275 + $0x50] sm:$0xf]
        %v2240 = vld [vmem:[%s275 + $0x54] sm:$0xf]
        %v2241 = vld [vmem:[%s275 + $0x58] sm:$0xf]
        %v2242 = vld [vmem:[%s275 + $0x5c] sm:$0xf]
        %v2243 = vld [vmem:[%s275 + $0x60] sm:$0xf]
        %v2244 = vld [vmem:[%s275 + $0x64] sm:$0xf]
        %v2245 = vld [vmem:[%s275 + $0x68] sm:$0x1]
        %v2246 = vld [vmem:[%s646] sm:$0xf]
        %v2247 = vld [vmem:[%s646 + $0x4] sm:$0xf]
        %v2248 = vld [vmem:[%s646 + $0x8] sm:$0xf]
        %v2249 = vld [vmem:[%s646 + $0xc] sm:$0xf]
        %v2250 = vld [vmem:[%s646 + $0x10] sm:$0xf]
        %v2251 = vld [vmem:[%s646 + $0x14] sm:$0xf]
        %v2252 = vld [vmem:[%s646 + $0x18] sm:$0xf]
        %v2253 = vld [vmem:[%s646 + $0x1c] sm:$0xf]
        %v2254 = vld [vmem:[%s646 + $0x20] sm:$0xf]
        %v2255 = vld [vmem:[%s646 + $0x24] sm:$0xf]
        %v2256 = vld [vmem:[%s646 + $0x28] sm:$0xf]
        %v2257 = vld [vmem:[%s646 + $0x2c] sm:$0xf]
        %v2258 = vld [vmem:[%s646 + $0x30] sm:$0xf]
        %v2259 = vld [vmem:[%s646 + $0x34] sm:$0xf]
        %v2260 = vld [vmem:[%s646 + $0x38] sm:$0xf]
        %v2261 = vld [vmem:[%s646 + $0x3c] sm:$0xf]
        %v2276 = vunpack.c.l.b16 %v2232
        %v2277 = vunpack.c.l.b16 %v2233
        %v2278 = vunpack.c.l.b16 %v2234
        %v2279 = vunpack.c.l.b16 %v2235
        %v2280 = vunpack.c.l.b16 %v2236
        %v2281 = vunpack.c.l.b16 %v2237
        %v2282 = vunpack.c.l.b16 %v2238
        %v2283 = vunpack.c.l.b16 %v2239
        %v2284 = vunpack.c.l.b16 %v2240
        %v2285 = vunpack.c.l.b16 %v2241
        %v2286 = vunpack.c.l.b16 %v2242
        %v2287 = vunpack.c.l.b16 %v2243
        %v2288 = vunpack.c.l.b16 %v2244
        %v2289 = vunpack.c.l.b16 %v2245
        %v2290 = vpack.c.b16 %v2277, %v2276
        %v2291 = vpack.c.b16 %v2279, %v2278
        %v2292 = vpack.c.b16 %v2281, %v2280
        %v2293 = vpack.c.b16 %v2283, %v2282
        %v2294 = vpack.c.b16 %v2285, %v2284
        %v2295 = vpack.c.b16 %v2287, %v2286
        %v2296 = vpack.c.b16 %v2289, %v2288
        %v2297 = vrot.slane %v2290, 3
        %v2298 = vrot.slane %v2291, 3
        %v2299 = vsel %vm390, %v2297, %v2298
        %v2300 = vrot.slane %v2292, 3
        %v2301 = vsel %vm390, %v2298, %v2300
        %v2302 = vrot.slane %v2293, 3
        %v2303 = vsel %vm390, %v2300, %v2302
        %v2304 = vrot.slane %v2294, 3
        %v2305 = vsel %vm390, %v2302, %v2304
        %v2306 = vrot.slane %v2295, 3
        %v2307 = vsel %vm390, %v2304, %v2306
        %v2308 = vrot.slane %v2296, 3
        %v2309 = vsel %vm390, %v2306, %v2308
        %v2333 = vunpack.c.l.b16 %v2246
        %v2334 = vunpack.c.l.b16 %v2247
        %v2335 = vunpack.c.l.b16 %v2248
        %v2336 = vunpack.c.l.b16 %v2249
        %v2337 = vunpack.c.l.b16 %v2250
        %v2338 = vunpack.c.l.b16 %v2251
        %v2339 = vunpack.c.l.b16 %v2252
        %v2340 = vunpack.c.l.b16 %v2253
        %v2341 = vunpack.c.l.b16 %v2254
        %v2342 = vunpack.c.l.b16 %v2255
        %v2343 = vunpack.c.l.b16 %v2256
        %v2344 = vunpack.c.l.b16 %v2257
        %v2345 = vunpack.c.l.b16 %v2258
        %v2346 = vunpack.c.l.b16 %v2259
        %v2347 = vunpack.c.l.b16 %v2260
        %v2348 = vunpack.c.l.b16 %v2261
        %v2349 = vpack.c.b16 %v2334, %v2333
        %v2350 = vpack.c.b16 %v2336, %v2335
        %v2351 = vpack.c.b16 %v2338, %v2337
        %v2352 = vpack.c.b16 %v2340, %v2339
        %v2353 = vpack.c.b16 %v2342, %v2341
        %v2354 = vpack.c.b16 %v2344, %v2343
        %v2355 = vpack.c.b16 %v2346, %v2345
        %v2356 = vpack.c.b16 %v2348, %v2347
        %2365 = vmatpush.bf16.msra.mxu0 %v2356
        %2366 = vmatpush.bf16.msra.mxu0 %v2355
        %2367 = vmatpush.bf16.msra.mxu0 %v2354
        %2368 = vmatpush.bf16.msra.mxu0 %v2353
        %2369 = vmatpush.bf16.msra.mxu0 %v2352
        %2370 = vmatpush.bf16.msra.mxu0 %v2351
        %2371 = vmatpush.bf16.msra.mxu0 %v2350
        %2372 = vmatpush.bf16.msra.mxu0 %v2349
        %2373 = vmatmul.bf16.gmra.mxu0 %v2299
        %v2374 = vpop.f32.mrf.mxu0
        %v2375 = vadd.f32 0.0, %v2374
        %v2376 = vpop.f32.mrf.mxu0
        %v2377 = vadd.f32 0.0, %v2376
        %2378 = vmatmul.bf16.gmra.mxu0 %v2301
        %v2379 = vpop.f32.mrf.mxu0
        %v2380 = vadd.f32 0.0, %v2379
        %v2381 = vpop.f32.mrf.mxu0
        %v2382 = vadd.f32 0.0, %v2381
        %2383 = vmatmul.bf16.gmra.mxu0 %v2303
        %v2384 = vpop.f32.mrf.mxu0
        %v2385 = vadd.f32 0.0, %v2384
        %v2386 = vpop.f32.mrf.mxu0
        %v2387 = vadd.f32 0.0, %v2386
        %2388 = vmatmul.bf16.gmra.mxu0 %v2305
        %v2389 = vpop.f32.mrf.mxu0
        %v2390 = vadd.f32 0.0, %v2389
        %v2391 = vpop.f32.mrf.mxu0
        %v2392 = vadd.f32 0.0, %v2391
        %2393 = vmatmul.bf16.gmra.mxu0 %v2307
        %v2394 = vpop.f32.mrf.mxu0
        %v2395 = vadd.f32 0.0, %v2394
        %v2396 = vpop.f32.mrf.mxu0
        %v2397 = vadd.f32 0.0, %v2396
        %2398 = vmatmul.bf16.gmra.mxu0 %v2309
        %v2399 = vpop.f32.mrf.mxu0
        %v2400 = vadd.f32 0.0, %v2399
        %v2401 = vpop.f32.mrf.mxu0
        %v2402 = vadd.f32 0.0, %v2401
        %2403 = vmatmul.bf16.gmra.mxu0 %v2308
        %v2404 = vpop.f32.mrf.mxu0
        %v2405 = vadd.f32 0.0, %v2404
        %v2406 = vpop.f32.mrf.mxu0
        %2407 = vdwg.mxu0
        %v2408 = vadd.f32 %v2199, %v2375
        %v2409 = vadd.f32 %v2201, %v2377
        %v2410 = vadd.f32 %v2204, %v2380
        %v2411 = vadd.f32 %v2206, %v2382
        %v2412 = vadd.f32 %v2209, %v2385
        %v2413 = vadd.f32 %v2211, %v2387
        %v2414 = vadd.f32 %v2214, %v2390
        %v2415 = vadd.f32 %v2216, %v2392
        %v2416 = vadd.f32 %v2219, %v2395
        %v2417 = vadd.f32 %v2221, %v2397
        %v2418 = vadd.f32 %v2224, %v2400
        %v2419 = vadd.f32 %v2226, %v2402
        %v2420 = vadd.f32 %v2229, %v2405
        %v2421 = vld [vmem:[%s275 + $0xa8] sm:$0xc]
        %v2422 = vld [vmem:[%s275 + $0xac] sm:$0xf]
        %v2423 = vld [vmem:[%s275 + $0xb0] sm:$0xf]
        %v2424 = vld [vmem:[%s275 + $0xb4] sm:$0xf]
        %v2425 = vld [vmem:[%s275 + $0xb8] sm:$0xf]
        %v2426 = vld [vmem:[%s275 + $0xbc] sm:$0xf]
        %v2427 = vld [vmem:[%s275 + $0xc0] sm:$0xf]
        %v2428 = vld [vmem:[%s275 + $0xc4] sm:$0xf]
        %v2429 = vld [vmem:[%s275 + $0xc8] sm:$0xf]
        %v2430 = vld [vmem:[%s275 + $0xcc] sm:$0xf]
        %v2431 = vld [vmem:[%s275 + $0xd0] sm:$0xf]
        %v2432 = vld [vmem:[%s275 + $0xd4] sm:$0xf]
        %v2433 = vld [vmem:[%s275 + $0xd8] sm:$0xf]
        %v2434 = vld [vmem:[%s834] sm:$0xf]
        %v2435 = vld [vmem:[%s834 + $0x4] sm:$0xf]
        %v2436 = vld [vmem:[%s834 + $0x8] sm:$0xf]
        %v2437 = vld [vmem:[%s834 + $0xc] sm:$0xf]
        %v2438 = vld [vmem:[%s834 + $0x10] sm:$0xf]
        %v2439 = vld [vmem:[%s834 + $0x14] sm:$0xf]
        %v2440 = vld [vmem:[%s834 + $0x18] sm:$0xf]
        %v2441 = vld [vmem:[%s834 + $0x1c] sm:$0xf]
        %v2442 = vld [vmem:[%s834 + $0x20] sm:$0xf]
        %v2443 = vld [vmem:[%s834 + $0x24] sm:$0xf]
        %v2444 = vld [vmem:[%s834 + $0x28] sm:$0xf]
        %v2445 = vld [vmem:[%s834 + $0x2c] sm:$0xf]
        %v2446 = vld [vmem:[%s834 + $0x30] sm:$0xf]
        %v2447 = vld [vmem:[%s834 + $0x34] sm:$0xf]
        %v2448 = vld [vmem:[%s834 + $0x38] sm:$0xf]
        %v2449 = vld [vmem:[%s834 + $0x3c] sm:$0xf]
        %v2463 = vunpack.c.l.b16 %v2421
        %v2464 = vunpack.c.l.b16 %v2422
        %v2465 = vunpack.c.l.b16 %v2423
        %v2466 = vunpack.c.l.b16 %v2424
        %v2467 = vunpack.c.l.b16 %v2425
        %v2468 = vunpack.c.l.b16 %v2426
        %v2469 = vunpack.c.l.b16 %v2427
        %v2470 = vunpack.c.l.b16 %v2428
        %v2471 = vunpack.c.l.b16 %v2429
        %v2472 = vunpack.c.l.b16 %v2430
        %v2473 = vunpack.c.l.b16 %v2431
        %v2474 = vunpack.c.l.b16 %v2432
        %v2475 = vunpack.c.l.b16 %v2433
        %v2476 = vpack.c.b16 %v2464, %v2463
        %v2477 = vpack.c.b16 %v2466, %v2465
        %v2478 = vpack.c.b16 %v2468, %v2467
        %v2479 = vpack.c.b16 %v2470, %v2469
        %v2480 = vpack.c.b16 %v2472, %v2471
        %v2481 = vpack.c.b16 %v2474, %v2473
        %v2482 = vpack.c.b16 %v2475, %v2475
        %v2483 = vrot.slane %v2476, 2
        %v2484 = vrot.slane %v2477, 2
        %v2485 = vsel %vm1058, %v2483, %v2484
        %v2486 = vrot.slane %v2478, 2
        %v2487 = vsel %vm1058, %v2484, %v2486
        %v2488 = vrot.slane %v2479, 2
        %v2489 = vsel %vm1058, %v2486, %v2488
        %v2490 = vrot.slane %v2480, 2
        %v2491 = vsel %vm1058, %v2488, %v2490
        %v2492 = vrot.slane %v2481, 2
        %v2493 = vsel %vm1058, %v2490, %v2492
        %v2494 = vrot.slane %v2482, 2
        %v2495 = vsel %vm1058, %v2492, %v2494
        %v2519 = vunpack.c.l.b16 %v2434
        %v2520 = vunpack.c.l.b16 %v2435
        %v2521 = vunpack.c.l.b16 %v2436
        %v2522 = vunpack.c.l.b16 %v2437
        %v2523 = vunpack.c.l.b16 %v2438
        %v2524 = vunpack.c.l.b16 %v2439
        %v2525 = vunpack.c.l.b16 %v2440
        %v2526 = vunpack.c.l.b16 %v2441
        %v2527 = vunpack.c.l.b16 %v2442
        %v2528 = vunpack.c.l.b16 %v2443
        %v2529 = vunpack.c.l.b16 %v2444
        %v2530 = vunpack.c.l.b16 %v2445
        %v2531 = vunpack.c.l.b16 %v2446
        %v2532 = vunpack.c.l.b16 %v2447
        %v2533 = vunpack.c.l.b16 %v2448
        %v2534 = vunpack.c.l.b16 %v2449
        %v2535 = vpack.c.b16 %v2520, %v2519
        %v2536 = vpack.c.b16 %v2522, %v2521
        %v2537 = vpack.c.b16 %v2524, %v2523
        %v2538 = vpack.c.b16 %v2526, %v2525
        %v2539 = vpack.c.b16 %v2528, %v2527
        %v2540 = vpack.c.b16 %v2530, %v2529
        %v2541 = vpack.c.b16 %v2532, %v2531
        %v2542 = vpack.c.b16 %v2534, %v2533
        %2551 = vmatpush.bf16.msra.mxu0 %v2542
        %2552 = vmatpush.bf16.msra.mxu0 %v2541
        %2553 = vmatpush.bf16.msra.mxu0 %v2540
        %2554 = vmatpush.bf16.msra.mxu0 %v2539
        %2555 = vmatpush.bf16.msra.mxu0 %v2538
        %2556 = vmatpush.bf16.msra.mxu0 %v2537
        %2557 = vmatpush.bf16.msra.mxu0 %v2536
        %2558 = vmatpush.bf16.msra.mxu0 %v2535
        %2559 = vmatmul.bf16.gmra.mxu0 %v2485
        %v2560 = vpop.f32.mrf.mxu0
        %v2561 = vadd.f32 0.0, %v2560
        %v2562 = vpop.f32.mrf.mxu0
        %v2563 = vadd.f32 0.0, %v2562
        %2564 = vmatmul.bf16.gmra.mxu0 %v2487
        %v2565 = vpop.f32.mrf.mxu0
        %v2566 = vadd.f32 0.0, %v2565
        %v2567 = vpop.f32.mrf.mxu0
        %v2568 = vadd.f32 0.0, %v2567
        %2569 = vmatmul.bf16.gmra.mxu0 %v2489
        %v2570 = vpop.f32.mrf.mxu0
        %v2571 = vadd.f32 0.0, %v2570
        %v2572 = vpop.f32.mrf.mxu0
        %v2573 = vadd.f32 0.0, %v2572
        %2574 = vmatmul.bf16.gmra.mxu0 %v2491
        %v2575 = vpop.f32.mrf.mxu0
        %v2576 = vadd.f32 0.0, %v2575
        %v2577 = vpop.f32.mrf.mxu0
        %v2578 = vadd.f32 0.0, %v2577
        %2579 = vmatmul.bf16.gmra.mxu0 %v2493
        %v2580 = vpop.f32.mrf.mxu0
        %v2581 = vadd.f32 0.0, %v2580
        %v2582 = vpop.f32.mrf.mxu0
        %v2583 = vadd.f32 0.0, %v2582
        %2584 = vmatmul.bf16.gmra.mxu0 %v2495
        %v2585 = vpop.f32.mrf.mxu0
        %v2586 = vadd.f32 0.0, %v2585
        %v2587 = vpop.f32.mrf.mxu0
        %v2588 = vadd.f32 0.0, %v2587
        %2589 = vmatmul.bf16.gmra.mxu0 %v2494
        %v2590 = vpop.f32.mrf.mxu0
        %v2591 = vadd.f32 0.0, %v2590
        %v2592 = vpop.f32.mrf.mxu0
        %2593 = vdwg.mxu0
        %v2594 = vadd.f32 %v2408, %v2561
        %v2595 = vadd.f32 %v2409, %v2563
        %v2596 = vadd.f32 %v2410, %v2566
        %v2597 = vadd.f32 %v2411, %v2568
        %v2598 = vadd.f32 %v2412, %v2571
        %v2599 = vadd.f32 %v2413, %v2573
        %v2600 = vadd.f32 %v2414, %v2576
        %v2601 = vadd.f32 %v2415, %v2578
        %v2602 = vadd.f32 %v2416, %v2581
        %v2603 = vadd.f32 %v2417, %v2583
        %v2604 = vadd.f32 %v2418, %v2586
        %v2605 = vadd.f32 %v2419, %v2588
        %v2606 = vadd.f32 %v2420, %v2591
        %v2607 = vld [vmem:[%s275 + $0x3c] sm:$0xf]
        %v2608 = vld [vmem:[%s275 + $0x40] sm:$0xf]
        %v2609 = vld [vmem:[%s275 + $0x44] sm:$0xf]
        %v2610 = vld [vmem:[%s275 + $0x48] sm:$0xf]
        %v2611 = vld [vmem:[%s275 + $0x4c] sm:$0xf]
        %v2612 = vld [vmem:[%s275 + $0x50] sm:$0xf]
        %v2613 = vld [vmem:[%s275 + $0x54] sm:$0xf]
        %v2614 = vld [vmem:[%s275 + $0x58] sm:$0xf]
        %v2615 = vld [vmem:[%s275 + $0x5c] sm:$0xf]
        %v2616 = vld [vmem:[%s275 + $0x60] sm:$0xf]
        %v2617 = vld [vmem:[%s275 + $0x64] sm:$0xf]
        %v2618 = vld [vmem:[%s275 + $0x68] sm:$0xf]
        %v2619 = vld [vmem:[%s275 + $0x6c] sm:$0x3]
        %v2620 = vld [vmem:[%s1008] sm:$0xf]
        %v2621 = vld [vmem:[%s1008 + $0x4] sm:$0xf]
        %v2622 = vld [vmem:[%s1008 + $0x8] sm:$0xf]
        %v2623 = vld [vmem:[%s1008 + $0xc] sm:$0xf]
        %v2624 = vld [vmem:[%s1008 + $0x10] sm:$0xf]
        %v2625 = vld [vmem:[%s1008 + $0x14] sm:$0xf]
        %v2626 = vld [vmem:[%s1008 + $0x18] sm:$0xf]
        %v2627 = vld [vmem:[%s1008 + $0x1c] sm:$0xf]
        %v2628 = vld [vmem:[%s1008 + $0x20] sm:$0xf]
        %v2629 = vld [vmem:[%s1008 + $0x24] sm:$0xf]
        %v2630 = vld [vmem:[%s1008 + $0x28] sm:$0xf]
        %v2631 = vld [vmem:[%s1008 + $0x2c] sm:$0xf]
        %v2632 = vld [vmem:[%s1008 + $0x30] sm:$0xf]
        %v2633 = vld [vmem:[%s1008 + $0x34] sm:$0xf]
        %v2634 = vld [vmem:[%s1008 + $0x38] sm:$0xf]
        %v2635 = vld [vmem:[%s1008 + $0x3c] sm:$0xf]
        %v2649 = vunpack.c.l.b16 %v2607
        %v2650 = vunpack.c.l.b16 %v2608
        %v2651 = vunpack.c.l.b16 %v2609
        %v2652 = vunpack.c.l.b16 %v2610
        %v2653 = vunpack.c.l.b16 %v2611
        %v2654 = vunpack.c.l.b16 %v2612
        %v2655 = vunpack.c.l.b16 %v2613
        %v2656 = vunpack.c.l.b16 %v2614
        %v2657 = vunpack.c.l.b16 %v2615
        %v2658 = vunpack.c.l.b16 %v2616
        %v2659 = vunpack.c.l.b16 %v2617
        %v2660 = vunpack.c.l.b16 %v2618
        %v2661 = vunpack.c.l.b16 %v2619
        %v2662 = vpack.c.b16 %v2650, %v2649
        %v2663 = vpack.c.b16 %v2652, %v2651
        %v2664 = vpack.c.b16 %v2654, %v2653
        %v2665 = vpack.c.b16 %v2656, %v2655
        %v2666 = vpack.c.b16 %v2658, %v2657
        %v2667 = vpack.c.b16 %v2660, %v2659
        %v2668 = vpack.c.b16 %v2661, %v2661
        %v2692 = vunpack.c.l.b16 %v2620
        %v2693 = vunpack.c.l.b16 %v2621
        %v2694 = vunpack.c.l.b16 %v2622
        %v2695 = vunpack.c.l.b16 %v2623
        %v2696 = vunpack.c.l.b16 %v2624
        %v2697 = vunpack.c.l.b16 %v2625
        %v2698 = vunpack.c.l.b16 %v2626
        %v2699 = vunpack.c.l.b16 %v2627
        %v2700 = vunpack.c.l.b16 %v2628
        %v2701 = vunpack.c.l.b16 %v2629
        %v2702 = vunpack.c.l.b16 %v2630
        %v2703 = vunpack.c.l.b16 %v2631
        %v2704 = vunpack.c.l.b16 %v2632
        %v2705 = vunpack.c.l.b16 %v2633
        %v2706 = vunpack.c.l.b16 %v2634
        %v2707 = vunpack.c.l.b16 %v2635
        %v2708 = vpack.c.b16 %v2693, %v2692
        %v2709 = vpack.c.b16 %v2695, %v2694
        %v2710 = vpack.c.b16 %v2697, %v2696
        %v2711 = vpack.c.b16 %v2699, %v2698
        %v2712 = vpack.c.b16 %v2701, %v2700
        %v2713 = vpack.c.b16 %v2703, %v2702
        %v2714 = vpack.c.b16 %v2705, %v2704
        %v2715 = vpack.c.b16 %v2707, %v2706
        %2724 = vmatpush.bf16.msra.mxu0 %v2715
        %2725 = vmatpush.bf16.msra.mxu0 %v2714
        %2726 = vmatpush.bf16.msra.mxu0 %v2713
        %2727 = vmatpush.bf16.msra.mxu0 %v2712
        %2728 = vmatpush.bf16.msra.mxu0 %v2711
        %2729 = vmatpush.bf16.msra.mxu0 %v2710
        %2730 = vmatpush.bf16.msra.mxu0 %v2709
        %2731 = vmatpush.bf16.msra.mxu0 %v2708
        %2732 = vmatmul.bf16.gmra.mxu0 %v2662
        %v2733 = vpop.f32.mrf.mxu0
        %v2734 = vadd.f32 0.0, %v2733
        %v2735 = vpop.f32.mrf.mxu0
        %v2736 = vadd.f32 0.0, %v2735
        %2737 = vmatmul.bf16.gmra.mxu0 %v2663
        %v2738 = vpop.f32.mrf.mxu0
        %v2739 = vadd.f32 0.0, %v2738
        %v2740 = vpop.f32.mrf.mxu0
        %v2741 = vadd.f32 0.0, %v2740
        %2742 = vmatmul.bf16.gmra.mxu0 %v2664
        %v2743 = vpop.f32.mrf.mxu0
        %v2744 = vadd.f32 0.0, %v2743
        %v2745 = vpop.f32.mrf.mxu0
        %v2746 = vadd.f32 0.0, %v2745
        %2747 = vmatmul.bf16.gmra.mxu0 %v2665
        %v2748 = vpop.f32.mrf.mxu0
        %v2749 = vadd.f32 0.0, %v2748
        %v2750 = vpop.f32.mrf.mxu0
        %v2751 = vadd.f32 0.0, %v2750
        %2752 = vmatmul.bf16.gmra.mxu0 %v2666
        %v2753 = vpop.f32.mrf.mxu0
        %v2754 = vadd.f32 0.0, %v2753
        %v2755 = vpop.f32.mrf.mxu0
        %v2756 = vadd.f32 0.0, %v2755
        %2757 = vmatmul.bf16.gmra.mxu0 %v2667
        %v2758 = vpop.f32.mrf.mxu0
        %v2759 = vadd.f32 0.0, %v2758
        %v2760 = vpop.f32.mrf.mxu0
        %v2761 = vadd.f32 0.0, %v2760
        %2762 = vmatmul.bf16.gmra.mxu0 %v2668
        %v2763 = vpop.f32.mrf.mxu0
        %v2764 = vadd.f32 0.0, %v2763
        %v2765 = vpop.f32.mrf.mxu0
        %2766 = vdwg.mxu0
        %v2767 = vadd.f32 %v2594, %v2734
        %v2768 = vadd.f32 %v2595, %v2736
        %v2769 = vadd.f32 %v2596, %v2739
        %v2770 = vadd.f32 %v2597, %v2741
        %v2771 = vadd.f32 %v2598, %v2744
        %v2772 = vadd.f32 %v2599, %v2746
        %v2773 = vadd.f32 %v2600, %v2749
        %v2774 = vadd.f32 %v2601, %v2751
        %v2775 = vadd.f32 %v2602, %v2754
        %v2776 = vadd.f32 %v2603, %v2756
        %v2777 = vadd.f32 %v2604, %v2759
        %v2778 = vadd.f32 %v2605, %v2761
        %v2779 = vadd.f32 %v2606, %v2764
        %v2780 = vld [vmem:[%s275 + $0xac] sm:$0x8]
        %v2781 = vld [vmem:[%s275 + $0xb0] sm:$0xf]
        %v2782 = vld [vmem:[%s275 + $0xb4] sm:$0xf]
        %v2783 = vld [vmem:[%s275 + $0xb8] sm:$0xf]
        %v2784 = vld [vmem:[%s275 + $0xbc] sm:$0xf]
        %v2785 = vld [vmem:[%s275 + $0xc0] sm:$0xf]
        %v2786 = vld [vmem:[%s275 + $0xc4] sm:$0xf]
        %v2787 = vld [vmem:[%s275 + $0xc8] sm:$0xf]
        %v2788 = vld [vmem:[%s275 + $0xcc] sm:$0xf]
        %v2789 = vld [vmem:[%s275 + $0xd0] sm:$0xf]
        %v2790 = vld [vmem:[%s275 + $0xd4] sm:$0xf]
        %v2791 = vld [vmem:[%s275 + $0xd8] sm:$0xf]
        %v2792 = vld [vmem:[%s275 + $0xdc] sm:$0xf]
        %v2793 = vld [vmem:[%s275 + $0xe0] sm:$0x1]
        %v2794 = vld [vmem:[%s1196] sm:$0xf]
        %v2795 = vld [vmem:[%s1196 + $0x4] sm:$0xf]
        %v2796 = vld [vmem:[%s1196 + $0x8] sm:$0xf]
        %v2797 = vld [vmem:[%s1196 + $0xc] sm:$0xf]
        %v2798 = vld [vmem:[%s1196 + $0x10] sm:$0xf]
        %v2799 = vld [vmem:[%s1196 + $0x14] sm:$0xf]
        %v2800 = vld [vmem:[%s1196 + $0x18] sm:$0xf]
        %v2801 = vld [vmem:[%s1196 + $0x1c] sm:$0xf]
        %v2802 = vld [vmem:[%s1196 + $0x20] sm:$0xf]
        %v2803 = vld [vmem:[%s1196 + $0x24] sm:$0xf]
        %v2804 = vld [vmem:[%s1196 + $0x28] sm:$0xf]
        %v2805 = vld [vmem:[%s1196 + $0x2c] sm:$0xf]
        %v2806 = vld [vmem:[%s1196 + $0x30] sm:$0xf]
        %v2807 = vld [vmem:[%s1196 + $0x34] sm:$0xf]
        %v2808 = vld [vmem:[%s1196 + $0x38] sm:$0xf]
        %v2809 = vld [vmem:[%s1196 + $0x3c] sm:$0xf]
        %v2824 = vunpack.c.l.b16 %v2780
        %v2825 = vunpack.c.l.b16 %v2781
        %v2826 = vunpack.c.l.b16 %v2782
        %v2827 = vunpack.c.l.b16 %v2783
        %v2828 = vunpack.c.l.b16 %v2784
        %v2829 = vunpack.c.l.b16 %v2785
        %v2830 = vunpack.c.l.b16 %v2786
        %v2831 = vunpack.c.l.b16 %v2787
        %v2832 = vunpack.c.l.b16 %v2788
        %v2833 = vunpack.c.l.b16 %v2789
        %v2834 = vunpack.c.l.b16 %v2790
        %v2835 = vunpack.c.l.b16 %v2791
        %v2836 = vunpack.c.l.b16 %v2792
        %v2837 = vunpack.c.l.b16 %v2793
        %v2838 = vpack.c.b16 %v2825, %v2824
        %v2839 = vpack.c.b16 %v2827, %v2826
        %v2840 = vpack.c.b16 %v2829, %v2828
        %v2841 = vpack.c.b16 %v2831, %v2830
        %v2842 = vpack.c.b16 %v2833, %v2832
        %v2843 = vpack.c.b16 %v2835, %v2834
        %v2844 = vpack.c.b16 %v2837, %v2836
        %v2845 = vrot.slane %v2838, 3
        %v2846 = vrot.slane %v2839, 3
        %v2847 = vsel %vm390, %v2845, %v2846
        %v2848 = vrot.slane %v2840, 3
        %v2849 = vsel %vm390, %v2846, %v2848
        %v2850 = vrot.slane %v2841, 3
        %v2851 = vsel %vm390, %v2848, %v2850
        %v2852 = vrot.slane %v2842, 3
        %v2853 = vsel %vm390, %v2850, %v2852
        %v2854 = vrot.slane %v2843, 3
        %v2855 = vsel %vm390, %v2852, %v2854
        %v2856 = vrot.slane %v2844, 3
        %v2857 = vsel %vm390, %v2854, %v2856
        %v2881 = vunpack.c.l.b16 %v2794
        %v2882 = vunpack.c.l.b16 %v2795
        %v2883 = vunpack.c.l.b16 %v2796
        %v2884 = vunpack.c.l.b16 %v2797
        %v2885 = vunpack.c.l.b16 %v2798
        %v2886 = vunpack.c.l.b16 %v2799
        %v2887 = vunpack.c.l.b16 %v2800
        %v2888 = vunpack.c.l.b16 %v2801
        %v2889 = vunpack.c.l.b16 %v2802
        %v2890 = vunpack.c.l.b16 %v2803
        %v2891 = vunpack.c.l.b16 %v2804
        %v2892 = vunpack.c.l.b16 %v2805
        %v2893 = vunpack.c.l.b16 %v2806
        %v2894 = vunpack.c.l.b16 %v2807
        %v2895 = vunpack.c.l.b16 %v2808
        %v2896 = vunpack.c.l.b16 %v2809
        %v2897 = vpack.c.b16 %v2882, %v2881
        %v2898 = vpack.c.b16 %v2884, %v2883
        %v2899 = vpack.c.b16 %v2886, %v2885
        %v2900 = vpack.c.b16 %v2888, %v2887
        %v2901 = vpack.c.b16 %v2890, %v2889
        %v2902 = vpack.c.b16 %v2892, %v2891
        %v2903 = vpack.c.b16 %v2894, %v2893
        %v2904 = vpack.c.b16 %v2896, %v2895
        %2913 = vmatpush.bf16.msra.mxu0 %v2904
        %2914 = vmatpush.bf16.msra.mxu0 %v2903
        %2915 = vmatpush.bf16.msra.mxu0 %v2902
        %2916 = vmatpush.bf16.msra.mxu0 %v2901
        %2917 = vmatpush.bf16.msra.mxu0 %v2900
        %2918 = vmatpush.bf16.msra.mxu0 %v2899
        %2919 = vmatpush.bf16.msra.mxu0 %v2898
        %2920 = vmatpush.bf16.msra.mxu0 %v2897
        %2921 = vmatmul.bf16.gmra.mxu0 %v2847
        %v2922 = vpop.f32.mrf.mxu0
        %v2923 = vadd.f32 0.0, %v2922
        %v2924 = vpop.f32.mrf.mxu0
        %v2925 = vadd.f32 0.0, %v2924
        %2926 = vmatmul.bf16.gmra.mxu0 %v2849
        %v2927 = vpop.f32.mrf.mxu0
        %v2928 = vadd.f32 0.0, %v2927
        %v2929 = vpop.f32.mrf.mxu0
        %v2930 = vadd.f32 0.0, %v2929
        %2931 = vmatmul.bf16.gmra.mxu0 %v2851
        %v2932 = vpop.f32.mrf.mxu0
        %v2933 = vadd.f32 0.0, %v2932
        %v2934 = vpop.f32.mrf.mxu0
        %v2935 = vadd.f32 0.0, %v2934
        %2936 = vmatmul.bf16.gmra.mxu0 %v2853
        %v2937 = vpop.f32.mrf.mxu0
        %v2938 = vadd.f32 0.0, %v2937
        %v2939 = vpop.f32.mrf.mxu0
        %v2940 = vadd.f32 0.0, %v2939
        %2941 = vmatmul.bf16.gmra.mxu0 %v2855
        %v2942 = vpop.f32.mrf.mxu0
        %v2943 = vadd.f32 0.0, %v2942
        %v2944 = vpop.f32.mrf.mxu0
        %v2945 = vadd.f32 0.0, %v2944
        %2946 = vmatmul.bf16.gmra.mxu0 %v2857
        %v2947 = vpop.f32.mrf.mxu0
        %v2948 = vadd.f32 0.0, %v2947
        %v2949 = vpop.f32.mrf.mxu0
        %v2950 = vadd.f32 0.0, %v2949
        %2951 = vmatmul.bf16.gmra.mxu0 %v2856
        %v2952 = vpop.f32.mrf.mxu0
        %v2953 = vadd.f32 0.0, %v2952
        %v2954 = vpop.f32.mrf.mxu0
        %2955 = vdwg.mxu0
        %v2956 = vadd.f32 %v2767, %v2923
        %v2957 = vadd.f32 %v2768, %v2925
        %v2958 = vadd.f32 %v2769, %v2928
        %v2959 = vadd.f32 %v2770, %v2930
        %v2960 = vadd.f32 %v2771, %v2933
        %v2961 = vadd.f32 %v2772, %v2935
        %v2962 = vadd.f32 %v2773, %v2938
        %v2963 = vadd.f32 %v2774, %v2940
        %v2964 = vadd.f32 %v2775, %v2943
        %v2965 = vadd.f32 %v2776, %v2945
        %v2966 = vadd.f32 %v2777, %v2948
        %v2967 = vadd.f32 %v2778, %v2950
        %v2968 = vadd.f32 %v2779, %v2953
        %v2969 = vld [vmem:[%s275 + $0x40] sm:$0xe]
        %v2970 = vld [vmem:[%s275 + $0x44] sm:$0xf]
        %v2971 = vld [vmem:[%s275 + $0x48] sm:$0xf]
        %v2972 = vld [vmem:[%s275 + $0x4c] sm:$0xf]
        %v2973 = vld [vmem:[%s275 + $0x50] sm:$0xf]
        %v2974 = vld [vmem:[%s275 + $0x54] sm:$0xf]
        %v2975 = vld [vmem:[%s275 + $0x58] sm:$0xf]
        %v2976 = vld [vmem:[%s275 + $0x5c] sm:$0xf]
        %v2977 = vld [vmem:[%s275 + $0x60] sm:$0xf]
        %v2978 = vld [vmem:[%s275 + $0x64] sm:$0xf]
        %v2979 = vld [vmem:[%s275 + $0x68] sm:$0xf]
        %v2980 = vld [vmem:[%s275 + $0x6c] sm:$0xf]
        %v2981 = vld [vmem:[%s275 + $0x70] sm:$0x7]
        %v2982 = vld [vmem:[%s1384] sm:$0xf]
        %v2983 = vld [vmem:[%s1384 + $0x4] sm:$0xf]
        %v2984 = vld [vmem:[%s1384 + $0x8] sm:$0xf]
        %v2985 = vld [vmem:[%s1384 + $0xc] sm:$0xf]
        %v2986 = vld [vmem:[%s1384 + $0x10] sm:$0xf]
        %v2987 = vld [vmem:[%s1384 + $0x14] sm:$0xf]
        %v2988 = vld [vmem:[%s1384 + $0x18] sm:$0xf]
        %v2989 = vld [vmem:[%s1384 + $0x1c] sm:$0xf]
        %v2990 = vld [vmem:[%s1384 + $0x20] sm:$0xf]
        %v2991 = vld [vmem:[%s1384 + $0x24] sm:$0xf]
        %v2992 = vld [vmem:[%s1384 + $0x28] sm:$0xf]
        %v2993 = vld [vmem:[%s1384 + $0x2c] sm:$0xf]
        %v2994 = vld [vmem:[%s1384 + $0x30] sm:$0xf]
        %v2995 = vld [vmem:[%s1384 + $0x34] sm:$0xf]
        %v2996 = vld [vmem:[%s1384 + $0x38] sm:$0xf]
        %v2997 = vld [vmem:[%s1384 + $0x3c] sm:$0xf]
        %v3011 = vunpack.c.l.b16 %v2969
        %v3012 = vunpack.c.l.b16 %v2970
        %v3013 = vunpack.c.l.b16 %v2971
        %v3014 = vunpack.c.l.b16 %v2972
        %v3015 = vunpack.c.l.b16 %v2973
        %v3016 = vunpack.c.l.b16 %v2974
        %v3017 = vunpack.c.l.b16 %v2975
        %v3018 = vunpack.c.l.b16 %v2976
        %v3019 = vunpack.c.l.b16 %v2977
        %v3020 = vunpack.c.l.b16 %v2978
        %v3021 = vunpack.c.l.b16 %v2979
        %v3022 = vunpack.c.l.b16 %v2980
        %v3023 = vunpack.c.l.b16 %v2981
        %v3024 = vpack.c.b16 %v3012, %v3011
        %v3025 = vpack.c.b16 %v3014, %v3013
        %v3026 = vpack.c.b16 %v3016, %v3015
        %v3027 = vpack.c.b16 %v3018, %v3017
        %v3028 = vpack.c.b16 %v3020, %v3019
        %v3029 = vpack.c.b16 %v3022, %v3021
        %v3030 = vpack.c.b16 %v3023, %v3023
        %v3031 = vrot.slane %v3024, 1
        %v3032 = vrot.slane %v3025, 1
        %v3033 = vsel %vm696, %v3031, %v3032
        %v3034 = vrot.slane %v3026, 1
        %v3035 = vsel %vm696, %v3032, %v3034
        %v3036 = vrot.slane %v3027, 1
        %v3037 = vsel %vm696, %v3034, %v3036
        %v3038 = vrot.slane %v3028, 1
        %v3039 = vsel %vm696, %v3036, %v3038
        %v3040 = vrot.slane %v3029, 1
        %v3041 = vsel %vm696, %v3038, %v3040
        %v3042 = vrot.slane %v3030, 1
        %v3043 = vsel %vm696, %v3040, %v3042
        %v3067 = vunpack.c.l.b16 %v2982
        %v3068 = vunpack.c.l.b16 %v2983
        %v3069 = vunpack.c.l.b16 %v2984
        %v3070 = vunpack.c.l.b16 %v2985
        %v3071 = vunpack.c.l.b16 %v2986
        %v3072 = vunpack.c.l.b16 %v2987
        %v3073 = vunpack.c.l.b16 %v2988
        %v3074 = vunpack.c.l.b16 %v2989
        %v3075 = vunpack.c.l.b16 %v2990
        %v3076 = vunpack.c.l.b16 %v2991
        %v3077 = vunpack.c.l.b16 %v2992
        %v3078 = vunpack.c.l.b16 %v2993
        %v3079 = vunpack.c.l.b16 %v2994
        %v3080 = vunpack.c.l.b16 %v2995
        %v3081 = vunpack.c.l.b16 %v2996
        %v3082 = vunpack.c.l.b16 %v2997
        %v3083 = vpack.c.b16 %v3068, %v3067
        %v3084 = vpack.c.b16 %v3070, %v3069
        %v3085 = vpack.c.b16 %v3072, %v3071
        %v3086 = vpack.c.b16 %v3074, %v3073
        %v3087 = vpack.c.b16 %v3076, %v3075
        %v3088 = vpack.c.b16 %v3078, %v3077
        %v3089 = vpack.c.b16 %v3080, %v3079
        %v3090 = vpack.c.b16 %v3082, %v3081
        %3099 = vmatpush.bf16.msra.mxu0 %v3090
        %3100 = vmatpush.bf16.msra.mxu0 %v3089
        %3101 = vmatpush.bf16.msra.mxu0 %v3088
        %3102 = vmatpush.bf16.msra.mxu0 %v3087
        %3103 = vmatpush.bf16.msra.mxu0 %v3086
        %3104 = vmatpush.bf16.msra.mxu0 %v3085
        %3105 = vmatpush.bf16.msra.mxu0 %v3084
        %3106 = vmatpush.bf16.msra.mxu0 %v3083
        %3107 = vmatmul.bf16.gmra.mxu0 %v3033
        %v3108 = vpop.f32.mrf.mxu0
        %v3109 = vadd.f32 0.0, %v3108
        %v3110 = vpop.f32.mrf.mxu0
        %v3111 = vadd.f32 0.0, %v3110
        %3112 = vmatmul.bf16.gmra.mxu0 %v3035
        %v3113 = vpop.f32.mrf.mxu0
        %v3114 = vadd.f32 0.0, %v3113
        %v3115 = vpop.f32.mrf.mxu0
        %v3116 = vadd.f32 0.0, %v3115
        %3117 = vmatmul.bf16.gmra.mxu0 %v3037
        %v3118 = vpop.f32.mrf.mxu0
        %v3119 = vadd.f32 0.0, %v3118
        %v3120 = vpop.f32.mrf.mxu0
        %v3121 = vadd.f32 0.0, %v3120
        %3122 = vmatmul.bf16.gmra.mxu0 %v3039
        %v3123 = vpop.f32.mrf.mxu0
        %v3124 = vadd.f32 0.0, %v3123
        %v3125 = vpop.f32.mrf.mxu0
        %v3126 = vadd.f32 0.0, %v3125
        %3127 = vmatmul.bf16.gmra.mxu0 %v3041
        %v3128 = vpop.f32.mrf.mxu0
        %v3129 = vadd.f32 0.0, %v3128
        %v3130 = vpop.f32.mrf.mxu0
        %v3131 = vadd.f32 0.0, %v3130
        %3132 = vmatmul.bf16.gmra.mxu0 %v3043
        %v3133 = vpop.f32.mrf.mxu0
        %v3134 = vadd.f32 0.0, %v3133
        %v3135 = vpop.f32.mrf.mxu0
        %v3136 = vadd.f32 0.0, %v3135
        %3137 = vmatmul.bf16.gmra.mxu0 %v3042
        %v3138 = vpop.f32.mrf.mxu0
        %v3139 = vadd.f32 0.0, %v3138
        %v3140 = vpop.f32.mrf.mxu0
        %3141 = vdwg.mxu0
        %v3142 = vadd.f32 %v2956, %v3109
        %v3143 = vadd.f32 %v2957, %v3111
        %v3144 = vadd.f32 %v2958, %v3114
        %v3145 = vadd.f32 %v2959, %v3116
        %v3146 = vadd.f32 %v2960, %v3119
        %v3147 = vadd.f32 %v2961, %v3121
        %v3148 = vadd.f32 %v2962, %v3124
        %v3149 = vadd.f32 %v2963, %v3126
        %v3150 = vadd.f32 %v2964, %v3129
        %v3151 = vadd.f32 %v2965, %v3131
        %v3152 = vadd.f32 %v2966, %v3134
        %v3153 = vadd.f32 %v2967, %v3136
        %v3154 = vadd.f32 %v2968, %v3139
        %v3155 = vadd.f32 %v3142, %v1561
        %v3156 = vadd.f32 %v3143, %v1561
        %v3157 = vadd.f32 %v3144, %v1561
        %v3158 = vadd.f32 %v3145, %v1561
        %v3159 = vadd.f32 %v3146, %v1561
        %v3160 = vadd.f32 %v3147, %v1561
        %v3161 = vadd.f32 %v3148, %v1561
        %v3162 = vadd.f32 %v3149, %v1561
        %v3163 = vadd.f32 %v3150, %v1561
        %v3164 = vadd.f32 %v3151, %v1561
        %v3165 = vadd.f32 %v3152, %v1561
        %v3166 = vadd.f32 %v3153, %v1561
        %v3167 = vadd.f32 %v3154, %v1561
        %v3168 = vmax.f32 %v3155, 0.0
        %v3169 = vmax.f32 %v3156, 0.0
        %v3170 = vmax.f32 %v3157, 0.0
        %v3171 = vmax.f32 %v3158, 0.0
        %v3172 = vmax.f32 %v3159, 0.0
        %v3173 = vmax.f32 %v3160, 0.0
        %v3174 = vmax.f32 %v3161, 0.0
        %v3175 = vmax.f32 %v3162, 0.0
        %v3176 = vmax.f32 %v3163, 0.0
        %v3177 = vmax.f32 %v3164, 0.0
        %v3178 = vmax.f32 %v3165, 0.0
        %v3179 = vmax.f32 %v3166, 0.0
        %v3180 = vmax.f32 %v3167, 0.0
        %v3181 = vpack.c.bf16 %v3168, %v3168
        %v3182 = vpack.c.bf16 %v3169, %v3169
        %v3183 = vpack.c.bf16 %v3170, %v3170
        %v3184 = vpack.c.bf16 %v3171, %v3171
        %v3185 = vpack.c.bf16 %v3172, %v3172
        %v3186 = vpack.c.bf16 %v3173, %v3173
        %v3187 = vpack.c.bf16 %v3174, %v3174
        %v3188 = vpack.c.bf16 %v3175, %v3175
        %v3189 = vpack.c.bf16 %v3176, %v3176
        %v3190 = vpack.c.bf16 %v3177, %v3177
        %v3191 = vpack.c.bf16 %v3178, %v3178
        %v3192 = vpack.c.bf16 %v3179, %v3179
        %v3193 = vpack.c.bf16 %v3180, %v3180
        %v3195 = vshrl.u32 %v3181, 16
        %v3197 = vrot.slane %v3195, 7
        %v3198 = vshll.u32 %v3181, 16
        %v3200 = vor.u32 %v3197, %v3198
        %v3202 = vld [vmem:[#allocation2 + $0x60] sm:$0x7]
        %v3203 = vsel %vm1684, %v3200, %v3202
        %3204 = vst [vmem:[#allocation2 + $0x60] sm:$0x7] %v3203
        %v3205 = vrot.slane %v3195, 6
        %v3206 = vrot.slane %v3198, 7
        %v3207 = vor.u32 %v3205, %v3206
        %v3208 = vrot.slane %v3207, 4
        %v3210 = vshrl.u32 %v3182, 16
        %v3212 = vrot.slane %v3210, 6
        %v3213 = vshll.u32 %v3182, 16
        %v3215 = vrot.slane %v3213, 7
        %v3216 = vor.u32 %v3212, %v3215
        %v3217 = vsel %vm1769, %v3208, %v3216
        %v3219 = vld [vmem:[#allocation2 + $0x64] sm:$0x7]
        %v3220 = vsel %vm1695, %v3217, %v3219
        %3221 = vst [vmem:[#allocation2 + $0x64] sm:$0x7] %v3220
        %v3222 = vrot.slane %v3216, 4
        %v3225 = vld [vmem:[#allocation2 + $0x20] sm:$0xc]
        %v3226 = vsel %vm1713, %v3216, %v3225
        %3227 = vst [vmem:[#allocation2 + $0x20] sm:$0xc] %v3226
        %3228 = vst [vmem:[#allocation2 + $0x28] sm:$0x1] %v3222
        %v3229 = vrot.slane %v3210, 5
        %v3230 = vrot.slane %v3229, 4
        %v3232 = vshrl.u32 %v3183, 16
        %v3234 = vrot.slane %v3232, 5
        %v3235 = vshll.u32 %v3183, 16
        %v3237 = vrot.slane %v3235, 6
        %v3238 = vor.u32 %v3234, %v3237
        %v3239 = vsel %vm1619, %v3230, %v3238
        %v3240 = vrot.slane %v3234, 4
        %3243 = vst [vmem:[#allocation2 + $0x24] sm:$0xc] %v3239
        %v3244 = vld [vmem:[#allocation2 + $0x2c] sm:$0x1]
        %v3245 = vsel %vm1726, %v3240, %v3244
        %3246 = vst [vmem:[#allocation2 + $0x2c] sm:$0x1] %v3245
        %v3247 = vrot.slane %v3235, 7
        %v3248 = vrot.slane %v3232, 6
        %v3249 = vor.u32 %v3248, %v3247
        %v3250 = vrot.slane %v3249, 4
        %v3252 = vshll.u32 %v3184, 16
        %v3254 = vrot.slane %v3252, 7
        %v3255 = vsel %vm1769, %v3250, %v3254
        %v3258 = vld [vmem:[#allocation2 + $0x60] sm:$0x8]
        %v3259 = vsel %vm1644, %v3247, %v3258
        %3260 = vst [vmem:[#allocation2 + $0x60] sm:$0x8] %v3259
        %3261 = vst [vmem:[#allocation2 + $0x68] sm:$0x3] %v3255
        %v3262 = vshrl.u32 %v3184, 16
        %v3264 = vrot.slane %v3262, 5
        %v3265 = vrot.slane %v3252, 6
        %v3266 = vor.u32 %v3264, %v3265
        %v3267 = vrot.slane %v3266, 4
        %3270 = vst [vmem:[#allocation2 + $0x64] sm:$0x8] %v3266
        %v3271 = vld [vmem:[#allocation2 + $0x6c] sm:$0x3]
        %v3272 = vsel %vm1668, %v3267, %v3271
        %3273 = vst [vmem:[#allocation2 + $0x6c] sm:$0x3] %v3272
        %v3275 = vshrl.u32 %v3185, 16
        %v3277 = vrot.slane %v3275, 5
        %v3278 = vshll.u32 %v3185, 16
        %v3280 = vrot.slane %v3278, 6
        %v3281 = vor.u32 %v3277, %v3280
        %v3282 = vsel %vm1619, %v3267, %v3281
        %v3284 = vld [vmem:[#allocation2 + $0x28] sm:$0xe]
        %v3285 = vsel %vm1613, %v3282, %v3284
        %3286 = vst [vmem:[#allocation2 + $0x28] sm:$0xe] %v3285
        %v3287 = vrot.slane %v3275, 4
        %v3288 = vrot.slane %v3278, 5
        %v3289 = vor.u32 %v3287, %v3288
        %v3290 = vrot.slane %v3289, 4
        %v3292 = vld [vmem:[#allocation2 + $0x2c] sm:$0xe]
        %v3293 = vsel %vm1635, %v3290, %v3292
        %3294 = vst [vmem:[#allocation2 + $0x2c] sm:$0xe] %v3293
        %v3296 = vshrl.u32 %v3186, 16
        %v3298 = vrot.slane %v3296, 5
        %v3299 = vshll.u32 %v3186, 16
        %v3301 = vrot.slane %v3299, 6
        %v3302 = vor.u32 %v3298, %v3301
        %v3303 = vrot.slane %v3302, 4
        %v3306 = vld [vmem:[#allocation2 + $0x68] sm:$0xc]
        %v3307 = vsel %vm1713, %v3302, %v3306
        %3308 = vst [vmem:[#allocation2 + $0x68] sm:$0xc] %v3307
        %3309 = vst [vmem:[#allocation2 + $0x70] sm:$0x1] %v3303
        %v3310 = vrot.slane %v3296, 4
        %v3311 = vrot.slane %v3299, 5
        %v3312 = vor.u32 %v3310, %v3311
        %v3313 = vrot.slane %v3312, 4
        %v3315 = vshll.u32 %v3187, 16
        %v3317 = vrot.slane %v3315, 5
        %v3318 = vsel %vm1650, %v3313, %v3317
        %v3319 = vshrl.u32 %v3187, 16
        %v3321 = vrot.slane %v3319, 4
        %v3322 = vrot.slane %v3321, 4
        %3325 = vst [vmem:[#allocation2 + $0x6c] sm:$0xc] %v3318
        %v3326 = vld [vmem:[#allocation2 + $0x74] sm:$0x1]
        %v3327 = vsel %vm1726, %v3322, %v3326
        %3328 = vst [vmem:[#allocation2 + $0x74] sm:$0x1] %v3327
        %v3329 = vor.u32 %v3321, %v3317
        %v3330 = vrot.slane %v3329, 4
        %v3332 = vld [vmem:[#allocation2 + $0x30] sm:$0x7]
        %v3333 = vsel %vm1684, %v3330, %v3332
        %3334 = vst [vmem:[#allocation2 + $0x30] sm:$0x7] %v3333
        %v3335 = vrot.slane %v3319, 7
        %v3336 = vrot.slane %v3335, 4
        %v3338 = vshrl.u32 %v3188, 16
        %v3340 = vrot.slane %v3338, 7
        %v3341 = vshll.u32 %v3188, 16
        %v3343 = vor.u32 %v3340, %v3341
        %v3344 = vsel %vm1746, %v3336, %v3343
        %v3346 = vld [vmem:[#allocation2 + $0x34] sm:$0x7]
        %v3347 = vsel %vm1695, %v3344, %v3346
        %3348 = vst [vmem:[#allocation2 + $0x34] sm:$0x7] %v3347
        %v3349 = vrot.slane %v3338, 4
        %v3350 = vrot.slane %v3341, 5
        %v3351 = vor.u32 %v3349, %v3350
        %v3352 = vrot.slane %v3351, 4
        %v3354 = vshll.u32 %v3189, 16
        %v3356 = vrot.slane %v3354, 5
        %v3357 = vsel %vm1650, %v3352, %v3356
        %v3359 = vld [vmem:[#allocation2 + $0x70] sm:$0xe]
        %v3360 = vsel %vm1613, %v3357, %v3359
        %3361 = vst [vmem:[#allocation2 + $0x70] sm:$0xe] %v3360
        %v3362 = vshrl.u32 %v3189, 16
        %v3364 = vrot.slane %v3362, 7
        %v3365 = vor.u32 %v3364, %v3354
        %v3367 = vld [vmem:[#allocation2 + $0x74] sm:$0xe]
        %v3368 = vsel %vm1635, %v3365, %v3367
        %3369 = vst [vmem:[#allocation2 + $0x74] sm:$0xe] %v3368
        %v3370 = vrot.slane %v3364, 4
        %v3372 = vshrl.u32 %v3190, 16
        %v3374 = vrot.slane %v3372, 7
        %v3375 = vshll.u32 %v3190, 16
        %v3377 = vor.u32 %v3374, %v3375
        %v3378 = vsel %vm1746, %v3370, %v3377
        %v3381 = vld [vmem:[#allocation2 + $0x30] sm:$0x8]
        %v3382 = vsel %vm1644, %v3354, %v3381
        %3383 = vst [vmem:[#allocation2 + $0x30] sm:$0x8] %v3382
        %3384 = vst [vmem:[#allocation2 + $0x38] sm:$0x3] %v3378
        %v3385 = vrot.slane %v3372, 6
        %v3386 = vrot.slane %v3375, 7
        %v3387 = vor.u32 %v3385, %v3386
        %v3388 = vrot.slane %v3387, 4
        %3391 = vst [vmem:[#allocation2 + $0x34] sm:$0x8] %v3387
        %v3392 = vld [vmem:[#allocation2 + $0x3c] sm:$0x3]
        %v3393 = vsel %vm1668, %v3388, %v3392
        %3394 = vst [vmem:[#allocation2 + $0x3c] sm:$0x3] %v3393
        %v3396 = vshrl.u32 %v3191, 16
        %v3398 = vrot.slane %v3396, 7
        %v3399 = vshll.u32 %v3191, 16
        %v3401 = vor.u32 %v3398, %v3399
        %v3403 = vld [vmem:[#allocation2 + $0x78] sm:$0x7]
        %v3404 = vsel %vm1684, %v3401, %v3403
        %3405 = vst [vmem:[#allocation2 + $0x78] sm:$0x7] %v3404
        %v3406 = vrot.slane %v3396, 6
        %v3407 = vrot.slane %v3399, 7
        %v3408 = vor.u32 %v3406, %v3407
        %v3409 = vrot.slane %v3408, 4
        %v3411 = vshrl.u32 %v3192, 16
        %v3413 = vrot.slane %v3411, 6
        %v3414 = vshll.u32 %v3192, 16
        %v3416 = vrot.slane %v3414, 7
        %v3417 = vor.u32 %v3413, %v3416
        %v3418 = vsel %vm1769, %v3409, %v3417
        %v3420 = vld [vmem:[#allocation2 + $0x7c] sm:$0x7]
        %v3421 = vsel %vm1695, %v3418, %v3420
        %3422 = vst [vmem:[#allocation2 + $0x7c] sm:$0x7] %v3421
        %v3423 = vrot.slane %v3417, 4
        %v3426 = vld [vmem:[#allocation2 + $0x38] sm:$0xc]
        %v3427 = vsel %vm1713, %v3417, %v3426
        %3428 = vst [vmem:[#allocation2 + $0x38] sm:$0xc] %v3427
        %3429 = vst [vmem:[#allocation2 + $0x40] sm:$0x1] %v3423
        %v3430 = vrot.slane %v3411, 5
        %v3431 = vrot.slane %v3430, 4
        %v3433 = vshrl.u32 %v3193, 16
        %v3435 = vrot.slane %v3433, 5
        %v3436 = vshll.u32 %v3193, 16
        %v3438 = vrot.slane %v3436, 6
        %v3439 = vor.u32 %v3435, %v3438
        %v3440 = vsel %vm1619, %v3431, %v3439
        %v3441 = vrot.slane %v3435, 4
        %3444 = vst [vmem:[#allocation2 + $0x3c] sm:$0xc] %v3440
        %v3445 = vld [vmem:[#allocation2 + $0x44] sm:$0x1]
        %v3446 = vsel %vm1726, %v3441, %v3445
        %3447 = vst [vmem:[#allocation2 + $0x44] sm:$0x1] %v3446
        %v3448 = vld [vmem:[%s4] sm:$0x1]
        %v3449 = vld [vmem:[#allocation2] sm:$0xff]
        %v3450 = vld [vmem:[#allocation2 + $0x8] sm:$0xff]
        %v3451 = vld [vmem:[#allocation2 + $0x10] sm:$0xff]
        %v3452 = vld [vmem:[#allocation2 + $0x18] sm:$0xff]
        %v3453 = vld [vmem:[#allocation2 + $0x20] sm:$0xff]
        %v3454 = vld [vmem:[#allocation2 + $0x28] sm:$0xff]
        %v3455 = vld [vmem:[%s3] sm:$0xf]
        %v3456 = vld [vmem:[%s3 + $0x4] sm:$0xf]
        %v3457 = vld [vmem:[%s3 + $0x8] sm:$0xf]
        %v3458 = vld [vmem:[%s3 + $0xc] sm:$0xf]
        %v3459 = vld [vmem:[%s3 + $0x10] sm:$0xf]
        %v3460 = vld [vmem:[%s3 + $0x14] sm:$0xf]
        %v3461 = vld [vmem:[%s3 + $0x18] sm:$0xf]
        %v3462 = vld [vmem:[%s3 + $0x1c] sm:$0xf]
        %v3463 = vld [vmem:[%s3 + $0x20] sm:$0xf]
        %v3464 = vld [vmem:[%s3 + $0x24] sm:$0xf]
        %v3465 = vld [vmem:[%s3 + $0x28] sm:$0xf]
        %v3466 = vld [vmem:[%s3 + $0x2c] sm:$0xf]
        %v3467 = vld [vmem:[%s3 + $0x30] sm:$0xf]
        %v3468 = vld [vmem:[%s3 + $0x34] sm:$0xf]
        %v3469 = vld [vmem:[%s3 + $0x38] sm:$0xf]
        %v3470 = vld [vmem:[%s3 + $0x3c] sm:$0xf]
        %v3471 = vld [vmem:[%s3 + $0x40] sm:$0xf]
        %v3472 = vld [vmem:[%s3 + $0x44] sm:$0xf]
        %v3473 = vld [vmem:[%s3 + $0x48] sm:$0xf]
        %v3474 = vld [vmem:[%s3 + $0x4c] sm:$0xf]
        %v3475 = vld [vmem:[%s3 + $0x50] sm:$0xf]
        %v3476 = vld [vmem:[%s3 + $0x54] sm:$0xf]
        %v3477 = vld [vmem:[%s3 + $0x58] sm:$0xf]
        %v3478 = vld [vmem:[%s3 + $0x5c] sm:$0xf]
        %v3479 = vld [vmem:[%s3 + $0x60] sm:$0xf]
        %v3480 = vld [vmem:[%s3 + $0x64] sm:$0xf]
        %v3481 = vld [vmem:[%s3 + $0x68] sm:$0xf]
        %v3482 = vld [vmem:[%s3 + $0x6c] sm:$0xf]
        %v3483 = vld [vmem:[%s3 + $0x70] sm:$0xf]
        %v3484 = vld [vmem:[%s3 + $0x74] sm:$0xf]
        %v3485 = vld [vmem:[%s3 + $0x78] sm:$0xf]
        %v3486 = vld [vmem:[%s3 + $0x7c] sm:$0xf]
        %v3487 = vld [vmem:[#allocation2 + $0x40] sm:$0xee]
        %v3488 = vld [vmem:[#allocation2 + $0x48] sm:$0xff]
        %v3489 = vld [vmem:[#allocation2 + $0x50] sm:$0xff]
        %v3490 = vld [vmem:[#allocation2 + $0x58] sm:$0xff]
        %v3491 = vld [vmem:[#allocation2 + $0x60] sm:$0xff]
        %v3492 = vld [vmem:[#allocation2 + $0x68] sm:$0xff]
        %v3493 = vld [vmem:[#allocation2 + $0x70] sm:$0x11]
        %s3494 = scalar_lea.vmem %s3, 128
        %v3495 = vld [vmem:[%s3494] sm:$0xf]
        %v3496 = vld [vmem:[%s3494 + $0x4] sm:$0xf]
        %v3497 = vld [vmem:[%s3494 + $0x8] sm:$0xf]
        %v3498 = vld [vmem:[%s3494 + $0xc] sm:$0xf]
        %v3499 = vld [vmem:[%s3494 + $0x10] sm:$0xf]
        %v3500 = vld [vmem:[%s3494 + $0x14] sm:$0xf]
        %v3501 = vld [vmem:[%s3494 + $0x18] sm:$0xf]
        %v3502 = vld [vmem:[%s3494 + $0x1c] sm:$0xf]
        %v3503 = vld [vmem:[%s3494 + $0x20] sm:$0xf]
        %v3504 = vld [vmem:[%s3494 + $0x24] sm:$0xf]
        %v3505 = vld [vmem:[%s3494 + $0x28] sm:$0xf]
        %v3506 = vld [vmem:[%s3494 + $0x2c] sm:$0xf]
        %v3507 = vld [vmem:[%s3494 + $0x30] sm:$0xf]
        %v3508 = vld [vmem:[%s3494 + $0x34] sm:$0xf]
        %v3509 = vld [vmem:[%s3494 + $0x38] sm:$0xf]
        %v3510 = vld [vmem:[%s3494 + $0x3c] sm:$0xf]
        %v3511 = vld [vmem:[%s3494 + $0x40] sm:$0xf]
        %v3512 = vld [vmem:[%s3494 + $0x44] sm:$0xf]
        %v3513 = vld [vmem:[%s3494 + $0x48] sm:$0xf]
        %v3514 = vld [vmem:[%s3494 + $0x4c] sm:$0xf]
        %v3515 = vld [vmem:[%s3494 + $0x50] sm:$0xf]
        %v3516 = vld [vmem:[%s3494 + $0x54] sm:$0xf]
        %v3517 = vld [vmem:[%s3494 + $0x58] sm:$0xf]
        %v3518 = vld [vmem:[%s3494 + $0x5c] sm:$0xf]
        %v3519 = vld [vmem:[%s3494 + $0x60] sm:$0xf]
        %v3520 = vld [vmem:[%s3494 + $0x64] sm:$0xf]
        %v3521 = vld [vmem:[%s3494 + $0x68] sm:$0xf]
        %v3522 = vld [vmem:[%s3494 + $0x6c] sm:$0xf]
        %v3523 = vld [vmem:[%s3494 + $0x70] sm:$0xf]
        %v3524 = vld [vmem:[%s3494 + $0x74] sm:$0xf]
        %v3525 = vld [vmem:[%s3494 + $0x78] sm:$0xf]
        %v3526 = vld [vmem:[%s3494 + $0x7c] sm:$0xf]
        %v3534 = vunpack.c.l.b16 %v3487
        %v3535 = vunpack.c.h.b16 %v3487
        %v3536 = vunpack.c.l.b16 %v3488
        %v3537 = vunpack.c.h.b16 %v3488
        %v3538 = vunpack.c.l.b16 %v3489
        %v3539 = vunpack.c.h.b16 %v3489
        %v3540 = vunpack.c.l.b16 %v3490
        %v3541 = vunpack.c.h.b16 %v3490
        %v3542 = vunpack.c.l.b16 %v3491
        %v3543 = vunpack.c.h.b16 %v3491
        %v3544 = vunpack.c.l.b16 %v3492
        %v3545 = vunpack.c.h.b16 %v3492
        %v3546 = vunpack.c.l.b16 %v3493
        %v3547 = vunpack.c.h.b16 %v3493
        %v3548 = vpack.c.b16 %v3536, %v3534
        %v3549 = vpack.c.b16 %v3537, %v3535
        %v3550 = vpack.c.b16 %v3540, %v3538
        %v3551 = vpack.c.b16 %v3541, %v3539
        %v3552 = vpack.c.b16 %v3544, %v3542
        %v3553 = vpack.c.b16 %v3545, %v3543
        %v3554 = vpack.c.b16 %v3546, %v3546
        %v3555 = vpack.c.b16 %v3547, %v3547
        %v3556 = vrot.slane %v3548, 1
        %v3557 = vrot.slane %v3550, 1
        %v3558 = vsel %vm696, %v3556, %v3557
        %v3559 = vrot.slane %v3549, 1
        %v3560 = vrot.slane %v3551, 1
        %v3561 = vsel %vm696, %v3559, %v3560
        %v3562 = vrot.slane %v3552, 1
        %v3563 = vsel %vm696, %v3557, %v3562
        %v3564 = vrot.slane %v3553, 1
        %v3565 = vsel %vm696, %v3560, %v3564
        %v3566 = vrot.slane %v3554, 1
        %v3567 = vsel %vm696, %v3562, %v3566
        %v3568 = vrot.slane %v3555, 1
        %v3569 = vsel %vm696, %v3564, %v3568
        %v3608 = vunpack.c.l.b16 %v3495
        %v3609 = vunpack.c.l.b16 %v3496
        %v3610 = vunpack.c.l.b16 %v3497
        %v3611 = vunpack.c.l.b16 %v3498
        %v3612 = vunpack.c.l.b16 %v3499
        %v3613 = vunpack.c.l.b16 %v3500
        %v3614 = vunpack.c.l.b16 %v3501
        %v3615 = vunpack.c.l.b16 %v3502
        %v3616 = vunpack.c.l.b16 %v3503
        %v3617 = vunpack.c.l.b16 %v3504
        %v3618 = vunpack.c.l.b16 %v3505
        %v3619 = vunpack.c.l.b16 %v3506
        %v3620 = vunpack.c.l.b16 %v3507
        %v3621 = vunpack.c.l.b16 %v3508
        %v3622 = vunpack.c.l.b16 %v3509
        %v3623 = vunpack.c.l.b16 %v3510
        %v3624 = vunpack.c.l.b16 %v3511
        %v3625 = vunpack.c.l.b16 %v3512
        %v3626 = vunpack.c.l.b16 %v3513
        %v3627 = vunpack.c.l.b16 %v3514
        %v3628 = vunpack.c.l.b16 %v3515
        %v3629 = vunpack.c.l.b16 %v3516
        %v3630 = vunpack.c.l.b16 %v3517
        %v3631 = vunpack.c.l.b16 %v3518
        %v3632 = vunpack.c.l.b16 %v3519
        %v3633 = vunpack.c.l.b16 %v3520
        %v3634 = vunpack.c.l.b16 %v3521
        %v3635 = vunpack.c.l.b16 %v3522
        %v3636 = vunpack.c.l.b16 %v3523
        %v3637 = vunpack.c.l.b16 %v3524
        %v3638 = vunpack.c.l.b16 %v3525
        %v3639 = vunpack.c.l.b16 %v3526
        %v3640 = vpack.c.b16 %v3609, %v3608
        %v3641 = vpack.c.b16 %v3611, %v3610
        %v3642 = vpack.c.b16 %v3613, %v3612
        %v3643 = vpack.c.b16 %v3615, %v3614
        %v3644 = vpack.c.b16 %v3617, %v3616
        %v3645 = vpack.c.b16 %v3619, %v3618
        %v3646 = vpack.c.b16 %v3621, %v3620
        %v3647 = vpack.c.b16 %v3623, %v3622
        %v3648 = vpack.c.b16 %v3625, %v3624
        %v3649 = vpack.c.b16 %v3627, %v3626
        %v3650 = vpack.c.b16 %v3629, %v3628
        %v3651 = vpack.c.b16 %v3631, %v3630
        %v3652 = vpack.c.b16 %v3633, %v3632
        %v3653 = vpack.c.b16 %v3635, %v3634
        %v3654 = vpack.c.b16 %v3637, %v3636
        %v3655 = vpack.c.b16 %v3639, %v3638
        %3672 = vmatpush.bf16.msra.mxu0 %v3647
        %3673 = vmatpush.bf16.msra.mxu0 %v3646
        %3674 = vmatpush.bf16.msra.mxu0 %v3645
        %3675 = vmatpush.bf16.msra.mxu0 %v3644
        %3676 = vmatpush.bf16.msra.mxu0 %v3643
        %3677 = vmatpush.bf16.msra.mxu0 %v3642
        %3678 = vmatpush.bf16.msra.mxu0 %v3641
        %3679 = vmatpush.bf16.msra.mxu0 %v3640
        %3680 = vmatmul.bf16.gmra.mxu0 %v3558
        %v3681 = vpop.f32.mrf.mxu0
        %v3682 = vadd.f32 0.0, %v3681
        %v3683 = vpop.f32.mrf.mxu0
        %v3684 = vadd.f32 0.0, %v3683
        %3685 = vmatmul.bf16.gmra.mxu0 %v3563
        %v3686 = vpop.f32.mrf.mxu0
        %v3687 = vadd.f32 0.0, %v3686
        %v3688 = vpop.f32.mrf.mxu0
        %v3689 = vadd.f32 0.0, %v3688
        %3690 = vmatmul.bf16.gmra.mxu0 %v3567
        %v3691 = vpop.f32.mrf.mxu0
        %v3692 = vadd.f32 0.0, %v3691
        %v3693 = vpop.f32.mrf.mxu0
        %v3694 = vadd.f32 0.0, %v3693
        %3695 = vdwg.mxu0
        %3696 = vmatpush.bf16.msra.mxu0 %v3655
        %3697 = vmatpush.bf16.msra.mxu0 %v3654
        %3698 = vmatpush.bf16.msra.mxu0 %v3653
        %3699 = vmatpush.bf16.msra.mxu0 %v3652
        %3700 = vmatpush.bf16.msra.mxu0 %v3651
        %3701 = vmatpush.bf16.msra.mxu0 %v3650
        %3702 = vmatpush.bf16.msra.mxu0 %v3649
        %3703 = vmatpush.bf16.msra.mxu0 %v3648
        %3704 = vmatmul.bf16.gmra.mxu0 %v3561
        %v3705 = vpop.f32.mrf.mxu0
        %v3706 = vadd.f32 %v3682, %v3705
        %v3707 = vpop.f32.mrf.mxu0
        %v3708 = vadd.f32 %v3684, %v3707
        %3709 = vmatmul.bf16.gmra.mxu0 %v3565
        %v3710 = vpop.f32.mrf.mxu0
        %v3711 = vadd.f32 %v3687, %v3710
        %v3712 = vpop.f32.mrf.mxu0
        %v3713 = vadd.f32 %v3689, %v3712
        %3714 = vmatmul.bf16.gmra.mxu0 %v3569
        %v3715 = vpop.f32.mrf.mxu0
        %v3716 = vadd.f32 %v3692, %v3715
        %v3717 = vpop.f32.mrf.mxu0
        %v3718 = vadd.f32 %v3694, %v3717
        %3719 = vdwg.mxu0
        %v3726 = vunpack.c.l.b16 %v3449
        %v3727 = vunpack.c.h.b16 %v3449
        %v3728 = vunpack.c.l.b16 %v3450
        %v3729 = vunpack.c.h.b16 %v3450
        %v3730 = vunpack.c.l.b16 %v3451
        %v3731 = vunpack.c.h.b16 %v3451
        %v3732 = vunpack.c.l.b16 %v3452
        %v3733 = vunpack.c.h.b16 %v3452
        %v3734 = vunpack.c.l.b16 %v3453
        %v3735 = vunpack.c.h.b16 %v3453
        %v3736 = vunpack.c.l.b16 %v3454
        %v3737 = vunpack.c.h.b16 %v3454
        %v3738 = vpack.c.b16 %v3728, %v3726
        %v3739 = vpack.c.b16 %v3729, %v3727
        %v3740 = vpack.c.b16 %v3732, %v3730
        %v3741 = vpack.c.b16 %v3733, %v3731
        %v3742 = vpack.c.b16 %v3736, %v3734
        %v3743 = vpack.c.b16 %v3737, %v3735
        %v3782 = vunpack.c.l.b16 %v3455
        %v3783 = vunpack.c.l.b16 %v3456
        %v3784 = vunpack.c.l.b16 %v3457
        %v3785 = vunpack.c.l.b16 %v3458
        %v3786 = vunpack.c.l.b16 %v3459
        %v3787 = vunpack.c.l.b16 %v3460
        %v3788 = vunpack.c.l.b16 %v3461
        %v3789 = vunpack.c.l.b16 %v3462
        %v3790 = vunpack.c.l.b16 %v3463
        %v3791 = vunpack.c.l.b16 %v3464
        %v3792 = vunpack.c.l.b16 %v3465
        %v3793 = vunpack.c.l.b16 %v3466
        %v3794 = vunpack.c.l.b16 %v3467
        %v3795 = vunpack.c.l.b16 %v3468
        %v3796 = vunpack.c.l.b16 %v3469
        %v3797 = vunpack.c.l.b16 %v3470
        %v3798 = vunpack.c.l.b16 %v3471
        %v3799 = vunpack.c.l.b16 %v3472
        %v3800 = vunpack.c.l.b16 %v3473
        %v3801 = vunpack.c.l.b16 %v3474
        %v3802 = vunpack.c.l.b16 %v3475
        %v3803 = vunpack.c.l.b16 %v3476
        %v3804 = vunpack.c.l.b16 %v3477
        %v3805 = vunpack.c.l.b16 %v3478
        %v3806 = vunpack.c.l.b16 %v3479
        %v3807 = vunpack.c.l.b16 %v3480
        %v3808 = vunpack.c.l.b16 %v3481
        %v3809 = vunpack.c.l.b16 %v3482
        %v3810 = vunpack.c.l.b16 %v3483
        %v3811 = vunpack.c.l.b16 %v3484
        %v3812 = vunpack.c.l.b16 %v3485
        %v3813 = vunpack.c.l.b16 %v3486
        %v3814 = vpack.c.b16 %v3783, %v3782
        %v3815 = vpack.c.b16 %v3785, %v3784
        %v3816 = vpack.c.b16 %v3787, %v3786
        %v3817 = vpack.c.b16 %v3789, %v3788
        %v3818 = vpack.c.b16 %v3791, %v3790
        %v3819 = vpack.c.b16 %v3793, %v3792
        %v3820 = vpack.c.b16 %v3795, %v3794
        %v3821 = vpack.c.b16 %v3797, %v3796
        %v3822 = vpack.c.b16 %v3799, %v3798
        %v3823 = vpack.c.b16 %v3801, %v3800
        %v3824 = vpack.c.b16 %v3803, %v3802
        %v3825 = vpack.c.b16 %v3805, %v3804
        %v3826 = vpack.c.b16 %v3807, %v3806
        %v3827 = vpack.c.b16 %v3809, %v3808
        %v3828 = vpack.c.b16 %v3811, %v3810
        %v3829 = vpack.c.b16 %v3813, %v3812
        %3846 = vmatpush.bf16.msra.mxu0 %v3821
        %3847 = vmatpush.bf16.msra.mxu0 %v3820
        %3848 = vmatpush.bf16.msra.mxu0 %v3819
        %3849 = vmatpush.bf16.msra.mxu0 %v3818
        %3850 = vmatpush.bf16.msra.mxu0 %v3817
        %3851 = vmatpush.bf16.msra.mxu0 %v3816
        %3852 = vmatpush.bf16.msra.mxu0 %v3815
        %3853 = vmatpush.bf16.msra.mxu0 %v3814
        %3854 = vmatmul.bf16.gmra.mxu0 %v3738
        %v3855 = vpop.f32.mrf.mxu0
        %v3856 = vadd.f32 %v3706, %v3855
        %v3857 = vpop.f32.mrf.mxu0
        %v3858 = vadd.f32 %v3708, %v3857
        %3859 = vmatmul.bf16.gmra.mxu0 %v3740
        %v3860 = vpop.f32.mrf.mxu0
        %v3861 = vadd.f32 %v3711, %v3860
        %v3862 = vpop.f32.mrf.mxu0
        %v3863 = vadd.f32 %v3713, %v3862
        %3864 = vmatmul.bf16.gmra.mxu0 %v3742
        %v3865 = vpop.f32.mrf.mxu0
        %v3866 = vadd.f32 %v3716, %v3865
        %v3867 = vpop.f32.mrf.mxu0
        %v3868 = vadd.f32 %v3718, %v3867
        %3869 = vdwg.mxu0
        %3870 = vmatpush.bf16.msra.mxu0 %v3829
        %3871 = vmatpush.bf16.msra.mxu0 %v3828
        %3872 = vmatpush.bf16.msra.mxu0 %v3827
        %3873 = vmatpush.bf16.msra.mxu0 %v3826
        %3874 = vmatpush.bf16.msra.mxu0 %v3825
        %3875 = vmatpush.bf16.msra.mxu0 %v3824
        %3876 = vmatpush.bf16.msra.mxu0 %v3823
        %3877 = vmatpush.bf16.msra.mxu0 %v3822
        %3878 = vmatmul.bf16.gmra.mxu0 %v3739
        %v3879 = vpop.f32.mrf.mxu0
        %v3880 = vadd.f32 %v3856, %v3879
        %v3881 = vpop.f32.mrf.mxu0
        %v3882 = vadd.f32 %v3858, %v3881
        %3883 = vmatmul.bf16.gmra.mxu0 %v3741
        %v3884 = vpop.f32.mrf.mxu0
        %v3885 = vadd.f32 %v3861, %v3884
        %v3886 = vpop.f32.mrf.mxu0
        %v3887 = vadd.f32 %v3863, %v3886
        %3888 = vmatmul.bf16.gmra.mxu0 %v3743
        %v3889 = vpop.f32.mrf.mxu0
        %v3890 = vadd.f32 %v3866, %v3889
        %v3891 = vpop.f32.mrf.mxu0
        %v3892 = vadd.f32 %v3868, %v3891
        %3893 = vdwg.mxu0
        %v3894 = vld [vmem:[#allocation2] sm:$0x88]
        %v3895 = vld [vmem:[#allocation2 + $0x8] sm:$0xff]
        %v3896 = vld [vmem:[#allocation2 + $0x10] sm:$0xff]
        %v3897 = vld [vmem:[#allocation2 + $0x18] sm:$0xff]
        %v3898 = vld [vmem:[#allocation2 + $0x20] sm:$0xff]
        %v3899 = vld [vmem:[#allocation2 + $0x28] sm:$0xff]
        %v3900 = vld [vmem:[#allocation2 + $0x30] sm:$0x77]
        %s3901 = scalar_lea.vmem %s3, 256
        %v3902 = vld [vmem:[%s3901] sm:$0xf]
        %v3903 = vld [vmem:[%s3901 + $0x4] sm:$0xf]
        %v3904 = vld [vmem:[%s3901 + $0x8] sm:$0xf]
        %v3905 = vld [vmem:[%s3901 + $0xc] sm:$0xf]
        %v3906 = vld [vmem:[%s3901 + $0x10] sm:$0xf]
        %v3907 = vld [vmem:[%s3901 + $0x14] sm:$0xf]
        %v3908 = vld [vmem:[%s3901 + $0x18] sm:$0xf]
        %v3909 = vld [vmem:[%s3901 + $0x1c] sm:$0xf]
        %v3910 = vld [vmem:[%s3901 + $0x20] sm:$0xf]
        %v3911 = vld [vmem:[%s3901 + $0x24] sm:$0xf]
        %v3912 = vld [vmem:[%s3901 + $0x28] sm:$0xf]
        %v3913 = vld [vmem:[%s3901 + $0x2c] sm:$0xf]
        %v3914 = vld [vmem:[%s3901 + $0x30] sm:$0xf]
        %v3915 = vld [vmem:[%s3901 + $0x34] sm:$0xf]
        %v3916 = vld [vmem:[%s3901 + $0x38] sm:$0xf]
        %v3917 = vld [vmem:[%s3901 + $0x3c] sm:$0xf]
        %v3918 = vld [vmem:[%s3901 + $0x40] sm:$0xf]
        %v3919 = vld [vmem:[%s3901 + $0x44] sm:$0xf]
        %v3920 = vld [vmem:[%s3901 + $0x48] sm:$0xf]
        %v3921 = vld [vmem:[%s3901 + $0x4c] sm:$0xf]
        %v3922 = vld [vmem:[%s3901 + $0x50] sm:$0xf]
        %v3923 = vld [vmem:[%s3901 + $0x54] sm:$0xf]
        %v3924 = vld [vmem:[%s3901 + $0x58] sm:$0xf]
        %v3925 = vld [vmem:[%s3901 + $0x5c] sm:$0xf]
        %v3926 = vld [vmem:[%s3901 + $0x60] sm:$0xf]
        %v3927 = vld [vmem:[%s3901 + $0x64] sm:$0xf]
        %v3928 = vld [vmem:[%s3901 + $0x68] sm:$0xf]
        %v3929 = vld [vmem:[%s3901 + $0x6c] sm:$0xf]
        %v3930 = vld [vmem:[%s3901 + $0x70] sm:$0xf]
        %v3931 = vld [vmem:[%s3901 + $0x74] sm:$0xf]
        %v3932 = vld [vmem:[%s3901 + $0x78] sm:$0xf]
        %v3933 = vld [vmem:[%s3901 + $0x7c] sm:$0xf]
        %v3941 = vunpack.c.l.b16 %v3894
        %v3942 = vunpack.c.h.b16 %v3894
        %v3943 = vunpack.c.l.b16 %v3895
        %v3944 = vunpack.c.h.b16 %v3895
        %v3945 = vunpack.c.l.b16 %v3896
        %v3946 = vunpack.c.h.b16 %v3896
        %v3947 = vunpack.c.l.b16 %v3897
        %v3948 = vunpack.c.h.b16 %v3897
        %v3949 = vunpack.c.l.b16 %v3898
        %v3950 = vunpack.c.h.b16 %v3898
        %v3951 = vunpack.c.l.b16 %v3899
        %v3952 = vunpack.c.h.b16 %v3899
        %v3953 = vunpack.c.l.b16 %v3900
        %v3954 = vunpack.c.h.b16 %v3900
        %v3955 = vpack.c.b16 %v3943, %v3941
        %v3956 = vpack.c.b16 %v3944, %v3942
        %v3957 = vpack.c.b16 %v3947, %v3945
        %v3958 = vpack.c.b16 %v3948, %v3946
        %v3959 = vpack.c.b16 %v3951, %v3949
        %v3960 = vpack.c.b16 %v3952, %v3950
        %v3961 = vpack.c.b16 %v3953, %v3953
        %v3962 = vpack.c.b16 %v3954, %v3954
        %v3963 = vrot.slane %v3955, 3
        %v3964 = vrot.slane %v3957, 3
        %v3965 = vsel %vm390, %v3963, %v3964
        %v3966 = vrot.slane %v3956, 3
        %v3967 = vrot.slane %v3958, 3
        %v3968 = vsel %vm390, %v3966, %v3967
        %v3969 = vrot.slane %v3959, 3
        %v3970 = vsel %vm390, %v3964, %v3969
        %v3971 = vrot.slane %v3960, 3
        %v3972 = vsel %vm390, %v3967, %v3971
        %v3973 = vrot.slane %v3961, 3
        %v3974 = vsel %vm390, %v3969, %v3973
        %v3975 = vrot.slane %v3962, 3
        %v3976 = vsel %vm390, %v3971, %v3975
        %v4015 = vunpack.c.l.b16 %v3902
        %v4016 = vunpack.c.l.b16 %v3903
        %v4017 = vunpack.c.l.b16 %v3904
        %v4018 = vunpack.c.l.b16 %v3905
        %v4019 = vunpack.c.l.b16 %v3906
        %v4020 = vunpack.c.l.b16 %v3907
        %v4021 = vunpack.c.l.b16 %v3908
        %v4022 = vunpack.c.l.b16 %v3909
        %v4023 = vunpack.c.l.b16 %v3910
        %v4024 = vunpack.c.l.b16 %v3911
        %v4025 = vunpack.c.l.b16 %v3912
        %v4026 = vunpack.c.l.b16 %v3913
        %v4027 = vunpack.c.l.b16 %v3914
        %v4028 = vunpack.c.l.b16 %v3915
        %v4029 = vunpack.c.l.b16 %v3916
        %v4030 = vunpack.c.l.b16 %v3917
        %v4031 = vunpack.c.l.b16 %v3918
        %v4032 = vunpack.c.l.b16 %v3919
        %v4033 = vunpack.c.l.b16 %v3920
        %v4034 = vunpack.c.l.b16 %v3921
        %v4035 = vunpack.c.l.b16 %v3922
        %v4036 = vunpack.c.l.b16 %v3923
        %v4037 = vunpack.c.l.b16 %v3924
        %v4038 = vunpack.c.l.b16 %v3925
        %v4039 = vunpack.c.l.b16 %v3926
        %v4040 = vunpack.c.l.b16 %v3927
        %v4041 = vunpack.c.l.b16 %v3928
        %v4042 = vunpack.c.l.b16 %v3929
        %v4043 = vunpack.c.l.b16 %v3930
        %v4044 = vunpack.c.l.b16 %v3931
        %v4045 = vunpack.c.l.b16 %v3932
        %v4046 = vunpack.c.l.b16 %v3933
        %v4047 = vpack.c.b16 %v4016, %v4015
        %v4048 = vpack.c.b16 %v4018, %v4017
        %v4049 = vpack.c.b16 %v4020, %v4019
        %v4050 = vpack.c.b16 %v4022, %v4021
        %v4051 = vpack.c.b16 %v4024, %v4023
        %v4052 = vpack.c.b16 %v4026, %v4025
        %v4053 = vpack.c.b16 %v4028, %v4027
        %v4054 = vpack.c.b16 %v4030, %v4029
        %v4055 = vpack.c.b16 %v4032, %v4031
        %v4056 = vpack.c.b16 %v4034, %v4033
        %v4057 = vpack.c.b16 %v4036, %v4035
        %v4058 = vpack.c.b16 %v4038, %v4037
        %v4059 = vpack.c.b16 %v4040, %v4039
        %v4060 = vpack.c.b16 %v4042, %v4041
        %v4061 = vpack.c.b16 %v4044, %v4043
        %v4062 = vpack.c.b16 %v4046, %v4045
        %4079 = vmatpush.bf16.msra.mxu0 %v4054
        %4080 = vmatpush.bf16.msra.mxu0 %v4053
        %4081 = vmatpush.bf16.msra.mxu0 %v4052
        %4082 = vmatpush.bf16.msra.mxu0 %v4051
        %4083 = vmatpush.bf16.msra.mxu0 %v4050
        %4084 = vmatpush.bf16.msra.mxu0 %v4049
        %4085 = vmatpush.bf16.msra.mxu0 %v4048
        %4086 = vmatpush.bf16.msra.mxu0 %v4047
        %4087 = vmatmul.bf16.gmra.mxu0 %v3965
        %v4088 = vpop.f32.mrf.mxu0
        %v4089 = vadd.f32 0.0, %v4088
        %v4090 = vpop.f32.mrf.mxu0
        %v4091 = vadd.f32 0.0, %v4090
        %4092 = vmatmul.bf16.gmra.mxu0 %v3970
        %v4093 = vpop.f32.mrf.mxu0
        %v4094 = vadd.f32 0.0, %v4093
        %v4095 = vpop.f32.mrf.mxu0
        %v4096 = vadd.f32 0.0, %v4095
        %4097 = vmatmul.bf16.gmra.mxu0 %v3974
        %v4098 = vpop.f32.mrf.mxu0
        %v4099 = vadd.f32 0.0, %v4098
        %v4100 = vpop.f32.mrf.mxu0
        %v4101 = vadd.f32 0.0, %v4100
        %4102 = vdwg.mxu0
        %4103 = vmatpush.bf16.msra.mxu0 %v4062
        %4104 = vmatpush.bf16.msra.mxu0 %v4061
        %4105 = vmatpush.bf16.msra.mxu0 %v4060
        %4106 = vmatpush.bf16.msra.mxu0 %v4059
        %4107 = vmatpush.bf16.msra.mxu0 %v4058
        %4108 = vmatpush.bf16.msra.mxu0 %v4057
        %4109 = vmatpush.bf16.msra.mxu0 %v4056
        %4110 = vmatpush.bf16.msra.mxu0 %v4055
        %4111 = vmatmul.bf16.gmra.mxu0 %v3968
        %v4112 = vpop.f32.mrf.mxu0
        %v4113 = vadd.f32 %v4089, %v4112
        %v4114 = vpop.f32.mrf.mxu0
        %v4115 = vadd.f32 %v4091, %v4114
        %4116 = vmatmul.bf16.gmra.mxu0 %v3972
        %v4117 = vpop.f32.mrf.mxu0
        %v4118 = vadd.f32 %v4094, %v4117
        %v4119 = vpop.f32.mrf.mxu0
        %v4120 = vadd.f32 %v4096, %v4119
        %4121 = vmatmul.bf16.gmra.mxu0 %v3976
        %v4122 = vpop.f32.mrf.mxu0
        %v4123 = vadd.f32 %v4099, %v4122
        %v4124 = vpop.f32.mrf.mxu0
        %v4125 = vadd.f32 %v4101, %v4124
        %4126 = vdwg.mxu0
        %v4127 = vadd.f32 %v3880, %v4113
        %v4128 = vadd.f32 %v3882, %v4115
        %v4129 = vadd.f32 %v3885, %v4118
        %v4130 = vadd.f32 %v3887, %v4120
        %v4131 = vadd.f32 %v3890, %v4123
        %v4132 = vadd.f32 %v3892, %v4125
        %v4133 = vld [vmem:[#allocation2 + $0x70] sm:$0xff]
        %s4134 = scalar_lea.vmem %s3, 384
        %v4135 = vld [vmem:[%s4134] sm:$0xf]
        %v4136 = vld [vmem:[%s4134 + $0x4] sm:$0xf]
        %v4137 = vld [vmem:[%s4134 + $0x8] sm:$0xf]
        %v4138 = vld [vmem:[%s4134 + $0xc] sm:$0xf]
        %v4139 = vld [vmem:[%s4134 + $0x10] sm:$0xf]
        %v4140 = vld [vmem:[%s4134 + $0x14] sm:$0xf]
        %v4141 = vld [vmem:[%s4134 + $0x18] sm:$0xf]
        %v4142 = vld [vmem:[%s4134 + $0x1c] sm:$0xf]
        %v4143 = vld [vmem:[%s4134 + $0x20] sm:$0xf]
        %v4144 = vld [vmem:[%s4134 + $0x24] sm:$0xf]
        %v4145 = vld [vmem:[%s4134 + $0x28] sm:$0xf]
        %v4146 = vld [vmem:[%s4134 + $0x2c] sm:$0xf]
        %v4147 = vld [vmem:[%s4134 + $0x30] sm:$0xf]
        %v4148 = vld [vmem:[%s4134 + $0x34] sm:$0xf]
        %v4149 = vld [vmem:[%s4134 + $0x38] sm:$0xf]
        %v4150 = vld [vmem:[%s4134 + $0x3c] sm:$0xf]
        %v4151 = vld [vmem:[%s4134 + $0x40] sm:$0xf]
        %v4152 = vld [vmem:[%s4134 + $0x44] sm:$0xf]
        %v4153 = vld [vmem:[%s4134 + $0x48] sm:$0xf]
        %v4154 = vld [vmem:[%s4134 + $0x4c] sm:$0xf]
        %v4155 = vld [vmem:[%s4134 + $0x50] sm:$0xf]
        %v4156 = vld [vmem:[%s4134 + $0x54] sm:$0xf]
        %v4157 = vld [vmem:[%s4134 + $0x58] sm:$0xf]
        %v4158 = vld [vmem:[%s4134 + $0x5c] sm:$0xf]
        %v4159 = vld [vmem:[%s4134 + $0x60] sm:$0xf]
        %v4160 = vld [vmem:[%s4134 + $0x64] sm:$0xf]
        %v4161 = vld [vmem:[%s4134 + $0x68] sm:$0xf]
        %v4162 = vld [vmem:[%s4134 + $0x6c] sm:$0xf]
        %v4163 = vld [vmem:[%s4134 + $0x70] sm:$0xf]
        %v4164 = vld [vmem:[%s4134 + $0x74] sm:$0xf]
        %v4165 = vld [vmem:[%s4134 + $0x78] sm:$0xf]
        %v4166 = vld [vmem:[%s4134 + $0x7c] sm:$0xf]
        %v4168 = vunpack.c.l.b16 %v4133
        %v4169 = vunpack.c.h.b16 %v4133
        %v4170 = vpack.c.b16 %v3538, %v3536
        %v4171 = vpack.c.b16 %v3539, %v3537
        %v4172 = vpack.c.b16 %v3542, %v3540
        %v4173 = vpack.c.b16 %v3543, %v3541
        %v4174 = vpack.c.b16 %v4168, %v3544
        %v4175 = vpack.c.b16 %v4169, %v3545
        %v4214 = vunpack.c.l.b16 %v4135
        %v4215 = vunpack.c.l.b16 %v4136
        %v4216 = vunpack.c.l.b16 %v4137
        %v4217 = vunpack.c.l.b16 %v4138
        %v4218 = vunpack.c.l.b16 %v4139
        %v4219 = vunpack.c.l.b16 %v4140
        %v4220 = vunpack.c.l.b16 %v4141
        %v4221 = vunpack.c.l.b16 %v4142
        %v4222 = vunpack.c.l.b16 %v4143
        %v4223 = vunpack.c.l.b16 %v4144
        %v4224 = vunpack.c.l.b16 %v4145
        %v4225 = vunpack.c.l.b16 %v4146
        %v4226 = vunpack.c.l.b16 %v4147
        %v4227 = vunpack.c.l.b16 %v4148
        %v4228 = vunpack.c.l.b16 %v4149
        %v4229 = vunpack.c.l.b16 %v4150
        %v4230 = vunpack.c.l.b16 %v4151
        %v4231 = vunpack.c.l.b16 %v4152
        %v4232 = vunpack.c.l.b16 %v4153
        %v4233 = vunpack.c.l.b16 %v4154
        %v4234 = vunpack.c.l.b16 %v4155
        %v4235 = vunpack.c.l.b16 %v4156
        %v4236 = vunpack.c.l.b16 %v4157
        %v4237 = vunpack.c.l.b16 %v4158
        %v4238 = vunpack.c.l.b16 %v4159
        %v4239 = vunpack.c.l.b16 %v4160
        %v4240 = vunpack.c.l.b16 %v4161
        %v4241 = vunpack.c.l.b16 %v4162
        %v4242 = vunpack.c.l.b16 %v4163
        %v4243 = vunpack.c.l.b16 %v4164
        %v4244 = vunpack.c.l.b16 %v4165
        %v4245 = vunpack.c.l.b16 %v4166
        %v4246 = vpack.c.b16 %v4215, %v4214
        %v4247 = vpack.c.b16 %v4217, %v4216
        %v4248 = vpack.c.b16 %v4219, %v4218
        %v4249 = vpack.c.b16 %v4221, %v4220
        %v4250 = vpack.c.b16 %v4223, %v4222
        %v4251 = vpack.c.b16 %v4225, %v4224
        %v4252 = vpack.c.b16 %v4227, %v4226
        %v4253 = vpack.c.b16 %v4229, %v4228
        %v4254 = vpack.c.b16 %v4231, %v4230
        %v4255 = vpack.c.b16 %v4233, %v4232
        %v4256 = vpack.c.b16 %v4235, %v4234
        %v4257 = vpack.c.b16 %v4237, %v4236
        %v4258 = vpack.c.b16 %v4239, %v4238
        %v4259 = vpack.c.b16 %v4241, %v4240
        %v4260 = vpack.c.b16 %v4243, %v4242
        %v4261 = vpack.c.b16 %v4245, %v4244
        %4278 = vmatpush.bf16.msra.mxu0 %v4253
        %4279 = vmatpush.bf16.msra.mxu0 %v4252
        %4280 = vmatpush.bf16.msra.mxu0 %v4251
        %4281 = vmatpush.bf16.msra.mxu0 %v4250
        %4282 = vmatpush.bf16.msra.mxu0 %v4249
        %4283 = vmatpush.bf16.msra.mxu0 %v4248
        %4284 = vmatpush.bf16.msra.mxu0 %v4247
        %4285 = vmatpush.bf16.msra.mxu0 %v4246
        %4286 = vmatmul.bf16.gmra.mxu0 %v4170
        %v4287 = vpop.f32.mrf.mxu0
        %v4288 = vadd.f32 0.0, %v4287
        %v4289 = vpop.f32.mrf.mxu0
        %v4290 = vadd.f32 0.0, %v4289
        %4291 = vmatmul.bf16.gmra.mxu0 %v4172
        %v4292 = vpop.f32.mrf.mxu0
        %v4293 = vadd.f32 0.0, %v4292
        %v4294 = vpop.f32.mrf.mxu0
        %v4295 = vadd.f32 0.0, %v4294
        %4296 = vmatmul.bf16.gmra.mxu0 %v4174
        %v4297 = vpop.f32.mrf.mxu0
        %v4298 = vadd.f32 0.0, %v4297
        %v4299 = vpop.f32.mrf.mxu0
        %v4300 = vadd.f32 0.0, %v4299
        %4301 = vdwg.mxu0
        %4302 = vmatpush.bf16.msra.mxu0 %v4261
        %4303 = vmatpush.bf16.msra.mxu0 %v4260
        %4304 = vmatpush.bf16.msra.mxu0 %v4259
        %4305 = vmatpush.bf16.msra.mxu0 %v4258
        %4306 = vmatpush.bf16.msra.mxu0 %v4257
        %4307 = vmatpush.bf16.msra.mxu0 %v4256
        %4308 = vmatpush.bf16.msra.mxu0 %v4255
        %4309 = vmatpush.bf16.msra.mxu0 %v4254
        %4310 = vmatmul.bf16.gmra.mxu0 %v4171
        %v4311 = vpop.f32.mrf.mxu0
        %v4312 = vadd.f32 %v4288, %v4311
        %v4313 = vpop.f32.mrf.mxu0
        %v4314 = vadd.f32 %v4290, %v4313
        %4315 = vmatmul.bf16.gmra.mxu0 %v4173
        %v4316 = vpop.f32.mrf.mxu0
        %v4317 = vadd.f32 %v4293, %v4316
        %v4318 = vpop.f32.mrf.mxu0
        %v4319 = vadd.f32 %v4295, %v4318
        %4320 = vmatmul.bf16.gmra.mxu0 %v4175
        %v4321 = vpop.f32.mrf.mxu0
        %v4322 = vadd.f32 %v4298, %v4321
        %v4323 = vpop.f32.mrf.mxu0
        %v4324 = vadd.f32 %v4300, %v4323
        %4325 = vdwg.mxu0
        %v4326 = vadd.f32 %v4127, %v4312
        %v4327 = vadd.f32 %v4128, %v4314
        %v4328 = vadd.f32 %v4129, %v4317
        %v4329 = vadd.f32 %v4130, %v4319
        %v4330 = vadd.f32 %v4131, %v4322
        %v4331 = vadd.f32 %v4132, %v4324
        %v4332 = vld [vmem:[#allocation2 + $0x8] sm:$0xcc]
        %v4333 = vld [vmem:[#allocation2 + $0x10] sm:$0xff]
        %v4334 = vld [vmem:[#allocation2 + $0x18] sm:$0xff]
        %v4335 = vld [vmem:[#allocation2 + $0x20] sm:$0xff]
        %v4336 = vld [vmem:[#allocation2 + $0x28] sm:$0xff]
        %v4337 = vld [vmem:[#allocation2 + $0x30] sm:$0xff]
        %v4338 = vld [vmem:[#allocation2 + $0x38] sm:$0x33]
        %s4339 = scalar_lea.vmem %s3, 512
        %v4340 = vld [vmem:[%s4339] sm:$0xf]
        %v4341 = vld [vmem:[%s4339 + $0x4] sm:$0xf]
        %v4342 = vld [vmem:[%s4339 + $0x8] sm:$0xf]
        %v4343 = vld [vmem:[%s4339 + $0xc] sm:$0xf]
        %v4344 = vld [vmem:[%s4339 + $0x10] sm:$0xf]
        %v4345 = vld [vmem:[%s4339 + $0x14] sm:$0xf]
        %v4346 = vld [vmem:[%s4339 + $0x18] sm:$0xf]
        %v4347 = vld [vmem:[%s4339 + $0x1c] sm:$0xf]
        %v4348 = vld [vmem:[%s4339 + $0x20] sm:$0xf]
        %v4349 = vld [vmem:[%s4339 + $0x24] sm:$0xf]
        %v4350 = vld [vmem:[%s4339 + $0x28] sm:$0xf]
        %v4351 = vld [vmem:[%s4339 + $0x2c] sm:$0xf]
        %v4352 = vld [vmem:[%s4339 + $0x30] sm:$0xf]
        %v4353 = vld [vmem:[%s4339 + $0x34] sm:$0xf]
        %v4354 = vld [vmem:[%s4339 + $0x38] sm:$0xf]
        %v4355 = vld [vmem:[%s4339 + $0x3c] sm:$0xf]
        %v4356 = vld [vmem:[%s4339 + $0x40] sm:$0xf]
        %v4357 = vld [vmem:[%s4339 + $0x44] sm:$0xf]
        %v4358 = vld [vmem:[%s4339 + $0x48] sm:$0xf]
        %v4359 = vld [vmem:[%s4339 + $0x4c] sm:$0xf]
        %v4360 = vld [vmem:[%s4339 + $0x50] sm:$0xf]
        %v4361 = vld [vmem:[%s4339 + $0x54] sm:$0xf]
        %v4362 = vld [vmem:[%s4339 + $0x58] sm:$0xf]
        %v4363 = vld [vmem:[%s4339 + $0x5c] sm:$0xf]
        %v4364 = vld [vmem:[%s4339 + $0x60] sm:$0xf]
        %v4365 = vld [vmem:[%s4339 + $0x64] sm:$0xf]
        %v4366 = vld [vmem:[%s4339 + $0x68] sm:$0xf]
        %v4367 = vld [vmem:[%s4339 + $0x6c] sm:$0xf]
        %v4368 = vld [vmem:[%s4339 + $0x70] sm:$0xf]
        %v4369 = vld [vmem:[%s4339 + $0x74] sm:$0xf]
        %v4370 = vld [vmem:[%s4339 + $0x78] sm:$0xf]
        %v4371 = vld [vmem:[%s4339 + $0x7c] sm:$0xf]
        %v4379 = vunpack.c.l.b16 %v4332
        %v4380 = vunpack.c.h.b16 %v4332
        %v4381 = vunpack.c.l.b16 %v4333
        %v4382 = vunpack.c.h.b16 %v4333
        %v4383 = vunpack.c.l.b16 %v4334
        %v4384 = vunpack.c.h.b16 %v4334
        %v4385 = vunpack.c.l.b16 %v4335
        %v4386 = vunpack.c.h.b16 %v4335
        %v4387 = vunpack.c.l.b16 %v4336
        %v4388 = vunpack.c.h.b16 %v4336
        %v4389 = vunpack.c.l.b16 %v4337
        %v4390 = vunpack.c.h.b16 %v4337
        %v4391 = vunpack.c.l.b16 %v4338
        %v4392 = vunpack.c.h.b16 %v4338
        %v4393 = vpack.c.b16 %v4381, %v4379
        %v4394 = vpack.c.b16 %v4382, %v4380
        %v4395 = vpack.c.b16 %v4385, %v4383
        %v4396 = vpack.c.b16 %v4386, %v4384
        %v4397 = vpack.c.b16 %v4389, %v4387
        %v4398 = vpack.c.b16 %v4390, %v4388
        %v4399 = vpack.c.b16 %v4391, %v4391
        %v4400 = vpack.c.b16 %v4392, %v4392
        %v4401 = vrot.slane %v4393, 2
        %v4402 = vrot.slane %v4395, 2
        %v4403 = vsel %vm1058, %v4401, %v4402
        %v4404 = vrot.slane %v4394, 2
        %v4405 = vrot.slane %v4396, 2
        %v4406 = vsel %vm1058, %v4404, %v4405
        %v4407 = vrot.slane %v4397, 2
        %v4408 = vsel %vm1058, %v4402, %v4407
        %v4409 = vrot.slane %v4398, 2
        %v4410 = vsel %vm1058, %v4405, %v4409
        %v4411 = vrot.slane %v4399, 2
        %v4412 = vsel %vm1058, %v4407, %v4411
        %v4413 = vrot.slane %v4400, 2
        %v4414 = vsel %vm1058, %v4409, %v4413
        %v4453 = vunpack.c.l.b16 %v4340
        %v4454 = vunpack.c.l.b16 %v4341
        %v4455 = vunpack.c.l.b16 %v4342
        %v4456 = vunpack.c.l.b16 %v4343
        %v4457 = vunpack.c.l.b16 %v4344
        %v4458 = vunpack.c.l.b16 %v4345
        %v4459 = vunpack.c.l.b16 %v4346
        %v4460 = vunpack.c.l.b16 %v4347
        %v4461 = vunpack.c.l.b16 %v4348
        %v4462 = vunpack.c.l.b16 %v4349
        %v4463 = vunpack.c.l.b16 %v4350
        %v4464 = vunpack.c.l.b16 %v4351
        %v4465 = vunpack.c.l.b16 %v4352
        %v4466 = vunpack.c.l.b16 %v4353
        %v4467 = vunpack.c.l.b16 %v4354
        %v4468 = vunpack.c.l.b16 %v4355
        %v4469 = vunpack.c.l.b16 %v4356
        %v4470 = vunpack.c.l.b16 %v4357
        %v4471 = vunpack.c.l.b16 %v4358
        %v4472 = vunpack.c.l.b16 %v4359
        %v4473 = vunpack.c.l.b16 %v4360
        %v4474 = vunpack.c.l.b16 %v4361
        %v4475 = vunpack.c.l.b16 %v4362
        %v4476 = vunpack.c.l.b16 %v4363
        %v4477 = vunpack.c.l.b16 %v4364
        %v4478 = vunpack.c.l.b16 %v4365
        %v4479 = vunpack.c.l.b16 %v4366
        %v4480 = vunpack.c.l.b16 %v4367
        %v4481 = vunpack.c.l.b16 %v4368
        %v4482 = vunpack.c.l.b16 %v4369
        %v4483 = vunpack.c.l.b16 %v4370
        %v4484 = vunpack.c.l.b16 %v4371
        %v4485 = vpack.c.b16 %v4454, %v4453
        %v4486 = vpack.c.b16 %v4456, %v4455
        %v4487 = vpack.c.b16 %v4458, %v4457
        %v4488 = vpack.c.b16 %v4460, %v4459
        %v4489 = vpack.c.b16 %v4462, %v4461
        %v4490 = vpack.c.b16 %v4464, %v4463
        %v4491 = vpack.c.b16 %v4466, %v4465
        %v4492 = vpack.c.b16 %v4468, %v4467
        %v4493 = vpack.c.b16 %v4470, %v4469
        %v4494 = vpack.c.b16 %v4472, %v4471
        %v4495 = vpack.c.b16 %v4474, %v4473
        %v4496 = vpack.c.b16 %v4476, %v4475
        %v4497 = vpack.c.b16 %v4478, %v4477
        %v4498 = vpack.c.b16 %v4480, %v4479
        %v4499 = vpack.c.b16 %v4482, %v4481
        %v4500 = vpack.c.b16 %v4484, %v4483
        %4517 = vmatpush.bf16.msra.mxu0 %v4492
        %4518 = vmatpush.bf16.msra.mxu0 %v4491
        %4519 = vmatpush.bf16.msra.mxu0 %v4490
        %4520 = vmatpush.bf16.msra.mxu0 %v4489
        %4521 = vmatpush.bf16.msra.mxu0 %v4488
        %4522 = vmatpush.bf16.msra.mxu0 %v4487
        %4523 = vmatpush.bf16.msra.mxu0 %v4486
        %4524 = vmatpush.bf16.msra.mxu0 %v4485
        %4525 = vmatmul.bf16.gmra.mxu0 %v4403
        %v4526 = vpop.f32.mrf.mxu0
        %v4527 = vadd.f32 0.0, %v4526
        %v4528 = vpop.f32.mrf.mxu0
        %v4529 = vadd.f32 0.0, %v4528
        %4530 = vmatmul.bf16.gmra.mxu0 %v4408
        %v4531 = vpop.f32.mrf.mxu0
        %v4532 = vadd.f32 0.0, %v4531
        %v4533 = vpop.f32.mrf.mxu0
        %v4534 = vadd.f32 0.0, %v4533
        %4535 = vmatmul.bf16.gmra.mxu0 %v4412
        %v4536 = vpop.f32.mrf.mxu0
        %v4537 = vadd.f32 0.0, %v4536
        %v4538 = vpop.f32.mrf.mxu0
        %v4539 = vadd.f32 0.0, %v4538
        %4540 = vdwg.mxu0
        %4541 = vmatpush.bf16.msra.mxu0 %v4500
        %4542 = vmatpush.bf16.msra.mxu0 %v4499
        %4543 = vmatpush.bf16.msra.mxu0 %v4498
        %4544 = vmatpush.bf16.msra.mxu0 %v4497
        %4545 = vmatpush.bf16.msra.mxu0 %v4496
        %4546 = vmatpush.bf16.msra.mxu0 %v4495
        %4547 = vmatpush.bf16.msra.mxu0 %v4494
        %4548 = vmatpush.bf16.msra.mxu0 %v4493
        %4549 = vmatmul.bf16.gmra.mxu0 %v4406
        %v4550 = vpop.f32.mrf.mxu0
        %v4551 = vadd.f32 %v4527, %v4550
        %v4552 = vpop.f32.mrf.mxu0
        %v4553 = vadd.f32 %v4529, %v4552
        %4554 = vmatmul.bf16.gmra.mxu0 %v4410
        %v4555 = vpop.f32.mrf.mxu0
        %v4556 = vadd.f32 %v4532, %v4555
        %v4557 = vpop.f32.mrf.mxu0
        %v4558 = vadd.f32 %v4534, %v4557
        %4559 = vmatmul.bf16.gmra.mxu0 %v4414
        %v4560 = vpop.f32.mrf.mxu0
        %v4561 = vadd.f32 %v4537, %v4560
        %v4562 = vpop.f32.mrf.mxu0
        %v4563 = vadd.f32 %v4539, %v4562
        %4564 = vdwg.mxu0
        %v4565 = vadd.f32 %v4326, %v4551
        %v4566 = vadd.f32 %v4327, %v4553
        %v4567 = vadd.f32 %v4328, %v4556
        %v4568 = vadd.f32 %v4329, %v4558
        %v4569 = vadd.f32 %v4330, %v4561
        %v4570 = vadd.f32 %v4331, %v4563
        %v4571 = vld [vmem:[#allocation2 + $0x48] sm:$0x88]
        %v4572 = vld [vmem:[#allocation2 + $0x50] sm:$0xff]
        %v4573 = vld [vmem:[#allocation2 + $0x58] sm:$0xff]
        %v4574 = vld [vmem:[#allocation2 + $0x60] sm:$0xff]
        %v4575 = vld [vmem:[#allocation2 + $0x68] sm:$0xff]
        %v4576 = vld [vmem:[#allocation2 + $0x70] sm:$0xff]
        %v4577 = vld [vmem:[#allocation2 + $0x78] sm:$0x77]
        %s4578 = scalar_lea.vmem %s3, 640
        %v4579 = vld [vmem:[%s4578] sm:$0xf]
        %v4580 = vld [vmem:[%s4578 + $0x4] sm:$0xf]
        %v4581 = vld [vmem:[%s4578 + $0x8] sm:$0xf]
        %v4582 = vld [vmem:[%s4578 + $0xc] sm:$0xf]
        %v4583 = vld [vmem:[%s4578 + $0x10] sm:$0xf]
        %v4584 = vld [vmem:[%s4578 + $0x14] sm:$0xf]
        %v4585 = vld [vmem:[%s4578 + $0x18] sm:$0xf]
        %v4586 = vld [vmem:[%s4578 + $0x1c] sm:$0xf]
        %v4587 = vld [vmem:[%s4578 + $0x20] sm:$0xf]
        %v4588 = vld [vmem:[%s4578 + $0x24] sm:$0xf]
        %v4589 = vld [vmem:[%s4578 + $0x28] sm:$0xf]
        %v4590 = vld [vmem:[%s4578 + $0x2c] sm:$0xf]
        %v4591 = vld [vmem:[%s4578 + $0x30] sm:$0xf]
        %v4592 = vld [vmem:[%s4578 + $0x34] sm:$0xf]
        %v4593 = vld [vmem:[%s4578 + $0x38] sm:$0xf]
        %v4594 = vld [vmem:[%s4578 + $0x3c] sm:$0xf]
        %v4595 = vld [vmem:[%s4578 + $0x40] sm:$0xf]
        %v4596 = vld [vmem:[%s4578 + $0x44] sm:$0xf]
        %v4597 = vld [vmem:[%s4578 + $0x48] sm:$0xf]
        %v4598 = vld [vmem:[%s4578 + $0x4c] sm:$0xf]
        %v4599 = vld [vmem:[%s4578 + $0x50] sm:$0xf]
        %v4600 = vld [vmem:[%s4578 + $0x54] sm:$0xf]
        %v4601 = vld [vmem:[%s4578 + $0x58] sm:$0xf]
        %v4602 = vld [vmem:[%s4578 + $0x5c] sm:$0xf]
        %v4603 = vld [vmem:[%s4578 + $0x60] sm:$0xf]
        %v4604 = vld [vmem:[%s4578 + $0x64] sm:$0xf]
        %v4605 = vld [vmem:[%s4578 + $0x68] sm:$0xf]
        %v4606 = vld [vmem:[%s4578 + $0x6c] sm:$0xf]
        %v4607 = vld [vmem:[%s4578 + $0x70] sm:$0xf]
        %v4608 = vld [vmem:[%s4578 + $0x74] sm:$0xf]
        %v4609 = vld [vmem:[%s4578 + $0x78] sm:$0xf]
        %v4610 = vld [vmem:[%s4578 + $0x7c] sm:$0xf]
        %v4618 = vunpack.c.l.b16 %v4571
        %v4619 = vunpack.c.h.b16 %v4571
        %v4620 = vunpack.c.l.b16 %v4572
        %v4621 = vunpack.c.h.b16 %v4572
        %v4622 = vunpack.c.l.b16 %v4573
        %v4623 = vunpack.c.h.b16 %v4573
        %v4624 = vunpack.c.l.b16 %v4574
        %v4625 = vunpack.c.h.b16 %v4574
        %v4626 = vunpack.c.l.b16 %v4575
        %v4627 = vunpack.c.h.b16 %v4575
        %v4628 = vunpack.c.l.b16 %v4576
        %v4629 = vunpack.c.h.b16 %v4576
        %v4630 = vunpack.c.l.b16 %v4577
        %v4631 = vunpack.c.h.b16 %v4577
        %v4632 = vpack.c.b16 %v4620, %v4618
        %v4633 = vpack.c.b16 %v4621, %v4619
        %v4634 = vpack.c.b16 %v4624, %v4622
        %v4635 = vpack.c.b16 %v4625, %v4623
        %v4636 = vpack.c.b16 %v4628, %v4626
        %v4637 = vpack.c.b16 %v4629, %v4627
        %v4638 = vpack.c.b16 %v4630, %v4630
        %v4639 = vpack.c.b16 %v4631, %v4631
        %v4640 = vrot.slane %v4632, 3
        %v4641 = vrot.slane %v4634, 3
        %v4642 = vsel %vm390, %v4640, %v4641
        %v4643 = vrot.slane %v4633, 3
        %v4644 = vrot.slane %v4635, 3
        %v4645 = vsel %vm390, %v4643, %v4644
        %v4646 = vrot.slane %v4636, 3
        %v4647 = vsel %vm390, %v4641, %v4646
        %v4648 = vrot.slane %v4637, 3
        %v4649 = vsel %vm390, %v4644, %v4648
        %v4650 = vrot.slane %v4638, 3
        %v4651 = vsel %vm390, %v4646, %v4650
        %v4652 = vrot.slane %v4639, 3
        %v4653 = vsel %vm390, %v4648, %v4652
        %v4692 = vunpack.c.l.b16 %v4579
        %v4693 = vunpack.c.l.b16 %v4580
        %v4694 = vunpack.c.l.b16 %v4581
        %v4695 = vunpack.c.l.b16 %v4582
        %v4696 = vunpack.c.l.b16 %v4583
        %v4697 = vunpack.c.l.b16 %v4584
        %v4698 = vunpack.c.l.b16 %v4585
        %v4699 = vunpack.c.l.b16 %v4586
        %v4700 = vunpack.c.l.b16 %v4587
        %v4701 = vunpack.c.l.b16 %v4588
        %v4702 = vunpack.c.l.b16 %v4589
        %v4703 = vunpack.c.l.b16 %v4590
        %v4704 = vunpack.c.l.b16 %v4591
        %v4705 = vunpack.c.l.b16 %v4592
        %v4706 = vunpack.c.l.b16 %v4593
        %v4707 = vunpack.c.l.b16 %v4594
        %v4708 = vunpack.c.l.b16 %v4595
        %v4709 = vunpack.c.l.b16 %v4596
        %v4710 = vunpack.c.l.b16 %v4597
        %v4711 = vunpack.c.l.b16 %v4598
        %v4712 = vunpack.c.l.b16 %v4599
        %v4713 = vunpack.c.l.b16 %v4600
        %v4714 = vunpack.c.l.b16 %v4601
        %v4715 = vunpack.c.l.b16 %v4602
        %v4716 = vunpack.c.l.b16 %v4603
        %v4717 = vunpack.c.l.b16 %v4604
        %v4718 = vunpack.c.l.b16 %v4605
        %v4719 = vunpack.c.l.b16 %v4606
        %v4720 = vunpack.c.l.b16 %v4607
        %v4721 = vunpack.c.l.b16 %v4608
        %v4722 = vunpack.c.l.b16 %v4609
        %v4723 = vunpack.c.l.b16 %v4610
        %v4724 = vpack.c.b16 %v4693, %v4692
        %v4725 = vpack.c.b16 %v4695, %v4694
        %v4726 = vpack.c.b16 %v4697, %v4696
        %v4727 = vpack.c.b16 %v4699, %v4698
        %v4728 = vpack.c.b16 %v4701, %v4700
        %v4729 = vpack.c.b16 %v4703, %v4702
        %v4730 = vpack.c.b16 %v4705, %v4704
        %v4731 = vpack.c.b16 %v4707, %v4706
        %v4732 = vpack.c.b16 %v4709, %v4708
        %v4733 = vpack.c.b16 %v4711, %v4710
        %v4734 = vpack.c.b16 %v4713, %v4712
        %v4735 = vpack.c.b16 %v4715, %v4714
        %v4736 = vpack.c.b16 %v4717, %v4716
        %v4737 = vpack.c.b16 %v4719, %v4718
        %v4738 = vpack.c.b16 %v4721, %v4720
        %v4739 = vpack.c.b16 %v4723, %v4722
        %4756 = vmatpush.bf16.msra.mxu0 %v4731
        %4757 = vmatpush.bf16.msra.mxu0 %v4730
        %4758 = vmatpush.bf16.msra.mxu0 %v4729
        %4759 = vmatpush.bf16.msra.mxu0 %v4728
        %4760 = vmatpush.bf16.msra.mxu0 %v4727
        %4761 = vmatpush.bf16.msra.mxu0 %v4726
        %4762 = vmatpush.bf16.msra.mxu0 %v4725
        %4763 = vmatpush.bf16.msra.mxu0 %v4724
        %4764 = vmatmul.bf16.gmra.mxu0 %v4642
        %v4765 = vpop.f32.mrf.mxu0
        %v4766 = vadd.f32 0.0, %v4765
        %v4767 = vpop.f32.mrf.mxu0
        %v4768 = vadd.f32 0.0, %v4767
        %4769 = vmatmul.bf16.gmra.mxu0 %v4647
        %v4770 = vpop.f32.mrf.mxu0
        %v4771 = vadd.f32 0.0, %v4770
        %v4772 = vpop.f32.mrf.mxu0
        %v4773 = vadd.f32 0.0, %v4772
        %4774 = vmatmul.bf16.gmra.mxu0 %v4651
        %v4775 = vpop.f32.mrf.mxu0
        %v4776 = vadd.f32 0.0, %v4775
        %v4777 = vpop.f32.mrf.mxu0
        %v4778 = vadd.f32 0.0, %v4777
        %4779 = vdwg.mxu0
        %4780 = vmatpush.bf16.msra.mxu0 %v4739
        %4781 = vmatpush.bf16.msra.mxu0 %v4738
        %4782 = vmatpush.bf16.msra.mxu0 %v4737
        %4783 = vmatpush.bf16.msra.mxu0 %v4736
        %4784 = vmatpush.bf16.msra.mxu0 %v4735
        %4785 = vmatpush.bf16.msra.mxu0 %v4734
        %4786 = vmatpush.bf16.msra.mxu0 %v4733
        %4787 = vmatpush.bf16.msra.mxu0 %v4732
        %4788 = vmatmul.bf16.gmra.mxu0 %v4645
        %v4789 = vpop.f32.mrf.mxu0
        %v4790 = vadd.f32 %v4766, %v4789
        %v4791 = vpop.f32.mrf.mxu0
        %v4792 = vadd.f32 %v4768, %v4791
        %4793 = vmatmul.bf16.gmra.mxu0 %v4649
        %v4794 = vpop.f32.mrf.mxu0
        %v4795 = vadd.f32 %v4771, %v4794
        %v4796 = vpop.f32.mrf.mxu0
        %v4797 = vadd.f32 %v4773, %v4796
        %4798 = vmatmul.bf16.gmra.mxu0 %v4653
        %v4799 = vpop.f32.mrf.mxu0
        %v4800 = vadd.f32 %v4776, %v4799
        %v4801 = vpop.f32.mrf.mxu0
        %v4802 = vadd.f32 %v4778, %v4801
        %4803 = vdwg.mxu0
        %v4804 = vadd.f32 %v4565, %v4790
        %v4805 = vadd.f32 %v4566, %v4792
        %v4806 = vadd.f32 %v4567, %v4795
        %v4807 = vadd.f32 %v4568, %v4797
        %v4808 = vadd.f32 %v4569, %v4800
        %v4809 = vadd.f32 %v4570, %v4802
        %v4810 = vld [vmem:[#allocation2 + $0x10] sm:$0xee]
        %v4811 = vld [vmem:[#allocation2 + $0x18] sm:$0xff]
        %v4812 = vld [vmem:[#allocation2 + $0x20] sm:$0xff]
        %v4813 = vld [vmem:[#allocation2 + $0x28] sm:$0xff]
        %v4814 = vld [vmem:[#allocation2 + $0x30] sm:$0xff]
        %v4815 = vld [vmem:[#allocation2 + $0x38] sm:$0xff]
        %v4816 = vld [vmem:[#allocation2 + $0x40] sm:$0x11]
        %s4817 = scalar_lea.vmem %s3, 768
        %v4818 = vld [vmem:[%s4817] sm:$0xf]
        %v4819 = vld [vmem:[%s4817 + $0x4] sm:$0xf]
        %v4820 = vld [vmem:[%s4817 + $0x8] sm:$0xf]
        %v4821 = vld [vmem:[%s4817 + $0xc] sm:$0xf]
        %v4822 = vld [vmem:[%s4817 + $0x10] sm:$0xf]
        %v4823 = vld [vmem:[%s4817 + $0x14] sm:$0xf]
        %v4824 = vld [vmem:[%s4817 + $0x18] sm:$0xf]
        %v4825 = vld [vmem:[%s4817 + $0x1c] sm:$0xf]
        %v4826 = vld [vmem:[%s4817 + $0x20] sm:$0xf]
        %v4827 = vld [vmem:[%s4817 + $0x24] sm:$0xf]
        %v4828 = vld [vmem:[%s4817 + $0x28] sm:$0xf]
        %v4829 = vld [vmem:[%s4817 + $0x2c] sm:$0xf]
        %v4830 = vld [vmem:[%s4817 + $0x30] sm:$0xf]
        %v4831 = vld [vmem:[%s4817 + $0x34] sm:$0xf]
        %v4832 = vld [vmem:[%s4817 + $0x38] sm:$0xf]
        %v4833 = vld [vmem:[%s4817 + $0x3c] sm:$0xf]
        %v4834 = vld [vmem:[%s4817 + $0x40] sm:$0xf]
        %v4835 = vld [vmem:[%s4817 + $0x44] sm:$0xf]
        %v4836 = vld [vmem:[%s4817 + $0x48] sm:$0xf]
        %v4837 = vld [vmem:[%s4817 + $0x4c] sm:$0xf]
        %v4838 = vld [vmem:[%s4817 + $0x50] sm:$0xf]
        %v4839 = vld [vmem:[%s4817 + $0x54] sm:$0xf]
        %v4840 = vld [vmem:[%s4817 + $0x58] sm:$0xf]
        %v4841 = vld [vmem:[%s4817 + $0x5c] sm:$0xf]
        %v4842 = vld [vmem:[%s4817 + $0x60] sm:$0xf]
        %v4843 = vld [vmem:[%s4817 + $0x64] sm:$0xf]
        %v4844 = vld [vmem:[%s4817 + $0x68] sm:$0xf]
        %v4845 = vld [vmem:[%s4817 + $0x6c] sm:$0xf]
        %v4846 = vld [vmem:[%s4817 + $0x70] sm:$0xf]
        %v4847 = vld [vmem:[%s4817 + $0x74] sm:$0xf]
        %v4848 = vld [vmem:[%s4817 + $0x78] sm:$0xf]
        %v4849 = vld [vmem:[%s4817 + $0x7c] sm:$0xf]
        %v4857 = vunpack.c.l.b16 %v4810
        %v4858 = vunpack.c.h.b16 %v4810
        %v4859 = vunpack.c.l.b16 %v4811
        %v4860 = vunpack.c.h.b16 %v4811
        %v4861 = vunpack.c.l.b16 %v4812
        %v4862 = vunpack.c.h.b16 %v4812
        %v4863 = vunpack.c.l.b16 %v4813
        %v4864 = vunpack.c.h.b16 %v4813
        %v4865 = vunpack.c.l.b16 %v4814
        %v4866 = vunpack.c.h.b16 %v4814
        %v4867 = vunpack.c.l.b16 %v4815
        %v4868 = vunpack.c.h.b16 %v4815
        %v4869 = vunpack.c.l.b16 %v4816
        %v4870 = vunpack.c.h.b16 %v4816
        %v4871 = vpack.c.b16 %v4859, %v4857
        %v4872 = vpack.c.b16 %v4860, %v4858
        %v4873 = vpack.c.b16 %v4863, %v4861
        %v4874 = vpack.c.b16 %v4864, %v4862
        %v4875 = vpack.c.b16 %v4867, %v4865
        %v4876 = vpack.c.b16 %v4868, %v4866
        %v4877 = vpack.c.b16 %v4869, %v4869
        %v4878 = vpack.c.b16 %v4870, %v4870
        %v4879 = vrot.slane %v4871, 1
        %v4880 = vrot.slane %v4873, 1
        %v4881 = vsel %vm696, %v4879, %v4880
        %v4882 = vrot.slane %v4872, 1
        %v4883 = vrot.slane %v4874, 1
        %v4884 = vsel %vm696, %v4882, %v4883
        %v4885 = vrot.slane %v4875, 1
        %v4886 = vsel %vm696, %v4880, %v4885
        %v4887 = vrot.slane %v4876, 1
        %v4888 = vsel %vm696, %v4883, %v4887
        %v4889 = vrot.slane %v4877, 1
        %v4890 = vsel %vm696, %v4885, %v4889
        %v4891 = vrot.slane %v4878, 1
        %v4892 = vsel %vm696, %v4887, %v4891
        %v4931 = vunpack.c.l.b16 %v4818
        %v4932 = vunpack.c.l.b16 %v4819
        %v4933 = vunpack.c.l.b16 %v4820
        %v4934 = vunpack.c.l.b16 %v4821
        %v4935 = vunpack.c.l.b16 %v4822
        %v4936 = vunpack.c.l.b16 %v4823
        %v4937 = vunpack.c.l.b16 %v4824
        %v4938 = vunpack.c.l.b16 %v4825
        %v4939 = vunpack.c.l.b16 %v4826
        %v4940 = vunpack.c.l.b16 %v4827
        %v4941 = vunpack.c.l.b16 %v4828
        %v4942 = vunpack.c.l.b16 %v4829
        %v4943 = vunpack.c.l.b16 %v4830
        %v4944 = vunpack.c.l.b16 %v4831
        %v4945 = vunpack.c.l.b16 %v4832
        %v4946 = vunpack.c.l.b16 %v4833
        %v4947 = vunpack.c.l.b16 %v4834
        %v4948 = vunpack.c.l.b16 %v4835
        %v4949 = vunpack.c.l.b16 %v4836
        %v4950 = vunpack.c.l.b16 %v4837
        %v4951 = vunpack.c.l.b16 %v4838
        %v4952 = vunpack.c.l.b16 %v4839
        %v4953 = vunpack.c.l.b16 %v4840
        %v4954 = vunpack.c.l.b16 %v4841
        %v4955 = vunpack.c.l.b16 %v4842
        %v4956 = vunpack.c.l.b16 %v4843
        %v4957 = vunpack.c.l.b16 %v4844
        %v4958 = vunpack.c.l.b16 %v4845
        %v4959 = vunpack.c.l.b16 %v4846
        %v4960 = vunpack.c.l.b16 %v4847
        %v4961 = vunpack.c.l.b16 %v4848
        %v4962 = vunpack.c.l.b16 %v4849
        %v4963 = vpack.c.b16 %v4932, %v4931
        %v4964 = vpack.c.b16 %v4934, %v4933
        %v4965 = vpack.c.b16 %v4936, %v4935
        %v4966 = vpack.c.b16 %v4938, %v4937
        %v4967 = vpack.c.b16 %v4940, %v4939
        %v4968 = vpack.c.b16 %v4942, %v4941
        %v4969 = vpack.c.b16 %v4944, %v4943
        %v4970 = vpack.c.b16 %v4946, %v4945
        %v4971 = vpack.c.b16 %v4948, %v4947
        %v4972 = vpack.c.b16 %v4950, %v4949
        %v4973 = vpack.c.b16 %v4952, %v4951
        %v4974 = vpack.c.b16 %v4954, %v4953
        %v4975 = vpack.c.b16 %v4956, %v4955
        %v4976 = vpack.c.b16 %v4958, %v4957
        %v4977 = vpack.c.b16 %v4960, %v4959
        %v4978 = vpack.c.b16 %v4962, %v4961
        %4995 = vmatpush.bf16.msra.mxu0 %v4970
        %4996 = vmatpush.bf16.msra.mxu0 %v4969
        %4997 = vmatpush.bf16.msra.mxu0 %v4968
        %4998 = vmatpush.bf16.msra.mxu0 %v4967
        %4999 = vmatpush.bf16.msra.mxu0 %v4966
        %5000 = vmatpush.bf16.msra.mxu0 %v4965
        %5001 = vmatpush.bf16.msra.mxu0 %v4964
        %5002 = vmatpush.bf16.msra.mxu0 %v4963
        %5003 = vmatmul.bf16.gmra.mxu0 %v4881
        %v5004 = vpop.f32.mrf.mxu0
        %v5005 = vadd.f32 0.0, %v5004
        %v5006 = vpop.f32.mrf.mxu0
        %v5007 = vadd.f32 0.0, %v5006
        %5008 = vmatmul.bf16.gmra.mxu0 %v4886
        %v5009 = vpop.f32.mrf.mxu0
        %v5010 = vadd.f32 0.0, %v5009
        %v5011 = vpop.f32.mrf.mxu0
        %v5012 = vadd.f32 0.0, %v5011
        %5013 = vmatmul.bf16.gmra.mxu0 %v4890
        %v5014 = vpop.f32.mrf.mxu0
        %v5015 = vadd.f32 0.0, %v5014
        %v5016 = vpop.f32.mrf.mxu0
        %v5017 = vadd.f32 0.0, %v5016
        %5018 = vdwg.mxu0
        %5019 = vmatpush.bf16.msra.mxu0 %v4978
        %5020 = vmatpush.bf16.msra.mxu0 %v4977
        %5021 = vmatpush.bf16.msra.mxu0 %v4976
        %5022 = vmatpush.bf16.msra.mxu0 %v4975
        %5023 = vmatpush.bf16.msra.mxu0 %v4974
        %5024 = vmatpush.bf16.msra.mxu0 %v4973
        %5025 = vmatpush.bf16.msra.mxu0 %v4972
        %5026 = vmatpush.bf16.msra.mxu0 %v4971
        %5027 = vmatmul.bf16.gmra.mxu0 %v4884
        %v5028 = vpop.f32.mrf.mxu0
        %v5029 = vadd.f32 %v5005, %v5028
        %v5030 = vpop.f32.mrf.mxu0
        %v5031 = vadd.f32 %v5007, %v5030
        %5032 = vmatmul.bf16.gmra.mxu0 %v4888
        %v5033 = vpop.f32.mrf.mxu0
        %v5034 = vadd.f32 %v5010, %v5033
        %v5035 = vpop.f32.mrf.mxu0
        %v5036 = vadd.f32 %v5012, %v5035
        %5037 = vmatmul.bf16.gmra.mxu0 %v4892
        %v5038 = vpop.f32.mrf.mxu0
        %v5039 = vadd.f32 %v5015, %v5038
        %v5040 = vpop.f32.mrf.mxu0
        %v5041 = vadd.f32 %v5017, %v5040
        %5042 = vdwg.mxu0
        %v5043 = vadd.f32 %v4804, %v5029
        %v5044 = vadd.f32 %v4805, %v5031
        %v5045 = vadd.f32 %v4806, %v5034
        %v5046 = vadd.f32 %v4807, %v5036
        %v5047 = vadd.f32 %v4808, %v5039
        %v5048 = vadd.f32 %v4809, %v5041
        %v5050 = vperm.slane %v3448, 0
        %v5052 = vadd.f32 %v5043, %v5050
        %v5053 = vadd.f32 %v5044, %v5050
        %v5054 = vadd.f32 %v5045, %v5050
        %v5055 = vadd.f32 %v5046, %v5050
        %v5056 = vadd.f32 %v5047, %v5050
        %v5057 = vadd.f32 %v5048, %v5050
        %v5058 = vmax.f32 %v5052, 0.0
        %v5059 = vmax.f32 %v5053, 0.0
        %v5060 = vmax.f32 %v5054, 0.0
        %v5061 = vmax.f32 %v5055, 0.0
        %v5062 = vmax.f32 %v5056, 0.0
        %v5063 = vmax.f32 %v5057, 0.0
        %v5064 = vpack.c.bf16 %v5058, %v5058
        %v5065 = vpack.c.bf16 %v5059, %v5059
        %v5066 = vpack.c.bf16 %v5060, %v5060
        %v5067 = vpack.c.bf16 %v5061, %v5061
        %v5068 = vpack.c.bf16 %v5062, %v5062
        %v5069 = vpack.c.bf16 %v5063, %v5063
        %5070 = vst [vmem:[#allocation3] sm:$0xf] %v5064
        %5071 = vst [vmem:[#allocation3 + $0x4] sm:$0xf] %v5065
        %5072 = vst [vmem:[#allocation3 + $0x8] sm:$0xf] %v5066
        %5073 = vst [vmem:[#allocation3 + $0xc] sm:$0xf] %v5067
        %5074 = vst [vmem:[#allocation3 + $0x10] sm:$0xf] %v5068
        %5075 = vst [vmem:[#allocation3 + $0x14] sm:$0xf] %v5069
        %v5076 = vld [vmem:[#allocation3] sm:$0x1]
        %v5077 = vld [vmem:[#allocation4] sm:$0x1]
        %v5078 = vsel %vm1726, %v5076, %v5077
        %5079 = vst [vmem:[#allocation4] sm:$0x1] %v5078
        %v5080 = vld [vmem:[#allocation3] sm:$0x1]
        %v5082 = vrot.slane %v5080, 3
        %vm5083 = vcmask 1040384
        %v5086 = vsel %vm5083, %v5080, %v5082
        %v5087 = vshrl.u32 %v5086, 16
        %v5089 = vrot.slane %v5087, 7
        %v5090 = vrot.slane %v5089, 1
        %v5092 = vld [vmem:[#allocation4 + $0x1] sm:$0x1]
        %v5093 = vsel %vm1726, %v5090, %v5092
        %5094 = vst [vmem:[#allocation4 + $0x1] sm:$0x1] %v5093
        %v5095 = vld [vmem:[#allocation3] sm:$0x2]
        %5097 = vst [vmem:[#allocation1] sm:$0xff] %v5095
        %s5098 = scalar_lea.vmem [#allocation1], 1
        %v5099 = vld [vmem:[%s5098] ss:$4 sm:$0xff]
        %v5101 = vld [vmem:[#allocation4 + $0x2] sm:$0x1]
        %v5102 = vsel %vm1726, %v5099, %v5101
        %5103 = vst [vmem:[#allocation4 + $0x2] sm:$0x1] %v5102
        %v5104 = vld [vmem:[#allocation3] sm:$0x2]
        %5106 = vst [vmem:[#allocation1] sm:$0xff] %v5104
        %s5107 = scalar_lea.vmem [#allocation1], 1
        %v5108 = vld [vmem:[%s5107] ss:$4 sm:$0xff]
        %v5109 = vshrl.u32 %v5108, 16
        %v5111 = vrot.slane %v5109, 7
        %v5112 = vrot.slane %v5111, 1
        %v5114 = vld [vmem:[#allocation4 + $0x3] sm:$0x1]
        %v5115 = vsel %vm1726, %v5112, %v5114
        %5116 = vst [vmem:[#allocation4 + $0x3] sm:$0x1] %v5115
        %v5117 = vld [vmem:[#allocation3] sm:$0x4]
        %5119 = vst [vmem:[#allocation1] sm:$0xff] %v5117
        %s5120 = scalar_lea.vmem [#allocation1], 2
        %v5121 = vld [vmem:[%s5120] ss:$4 sm:$0xff]
        %v5123 = vld [vmem:[#allocation4 + $0x4] sm:$0x1]
        %v5124 = vsel %vm1726, %v5121, %v5123
        %5125 = vst [vmem:[#allocation4 + $0x4] sm:$0x1] %v5124
        %v5126 = vld [vmem:[#allocation3] sm:$0x4]
        %5128 = vst [vmem:[#allocation1] sm:$0xff] %v5126
        %s5129 = scalar_lea.vmem [#allocation1], 2
        %v5130 = vld [vmem:[%s5129] ss:$4 sm:$0xff]
        %v5131 = vshrl.u32 %v5130, 16
        %v5133 = vrot.slane %v5131, 7
        %v5134 = vrot.slane %v5133, 1
        %v5136 = vld [vmem:[#allocation4 + $0x5] sm:$0x1]
        %v5137 = vsel %vm1726, %v5134, %v5136
        %5138 = vst [vmem:[#allocation4 + $0x5] sm:$0x1] %v5137
        %v5139 = vld [vmem:[#allocation3] sm:$0x8]
        %5141 = vst [vmem:[#allocation1] sm:$0xff] %v5139
        %s5142 = scalar_lea.vmem [#allocation1], 3
        %v5143 = vld [vmem:[%s5142] ss:$4 sm:$0xff]
        %v5145 = vld [vmem:[#allocation4 + $0x6] sm:$0x1]
        %v5146 = vsel %vm1726, %v5143, %v5145
        %5147 = vst [vmem:[#allocation4 + $0x6] sm:$0x1] %v5146
        %v5148 = vld [vmem:[#allocation3] sm:$0x8]
        %5150 = vst [vmem:[#allocation1] sm:$0xff] %v5148
        %s5151 = scalar_lea.vmem [#allocation1], 3
        %v5152 = vld [vmem:[%s5151] ss:$4 sm:$0xff]
        %v5153 = vshrl.u32 %v5152, 16
        %v5155 = vrot.slane %v5153, 7
        %v5156 = vrot.slane %v5155, 1
        %v5158 = vld [vmem:[#allocation4 + $0x7] sm:$0x1]
        %v5159 = vsel %vm1726, %v5156, %v5158
        %5160 = vst [vmem:[#allocation4 + $0x7] sm:$0x1] %v5159
        %v5161 = vld [vmem:[#allocation3 + $0x4] sm:$0x1]
        %v5162 = vld [vmem:[#allocation4 + $0x8] sm:$0x1]
        %v5163 = vsel %vm1726, %v5161, %v5162
        %5164 = vst [vmem:[#allocation4 + $0x8] sm:$0x1] %v5163
        %v5165 = vld [vmem:[#allocation3 + $0x4] sm:$0x1]
        %v5167 = vrot.slane %v5165, 3
        %v5170 = vsel %vm5083, %v5165, %v5167
        %v5171 = vshrl.u32 %v5170, 16
        %v5173 = vrot.slane %v5171, 7
        %v5174 = vrot.slane %v5173, 1
        %v5176 = vld [vmem:[#allocation4 + $0x9] sm:$0x1]
        %v5177 = vsel %vm1726, %v5174, %v5176
        %5178 = vst [vmem:[#allocation4 + $0x9] sm:$0x1] %v5177
        %v5179 = vld [vmem:[#allocation3 + $0x4] sm:$0x2]
        %5181 = vst [vmem:[#allocation1] sm:$0xff] %v5179
        %s5182 = scalar_lea.vmem [#allocation1], 1
        %v5183 = vld [vmem:[%s5182] ss:$4 sm:$0xff]
        %v5185 = vld [vmem:[#allocation4 + $0xa] sm:$0x1]
        %v5186 = vsel %vm1726, %v5183, %v5185
        %5187 = vst [vmem:[#allocation4 + $0xa] sm:$0x1] %v5186
        %v5188 = vld [vmem:[#allocation3 + $0x4] sm:$0x2]
        %5190 = vst [vmem:[#allocation1] sm:$0xff] %v5188
        %s5191 = scalar_lea.vmem [#allocation1], 1
        %v5192 = vld [vmem:[%s5191] ss:$4 sm:$0xff]
        %v5193 = vshrl.u32 %v5192, 16
        %v5195 = vrot.slane %v5193, 7
        %v5196 = vrot.slane %v5195, 1
        %v5198 = vld [vmem:[#allocation4 + $0xb] sm:$0x1]
        %v5199 = vsel %vm1726, %v5196, %v5198
        %5200 = vst [vmem:[#allocation4 + $0xb] sm:$0x1] %v5199
        %v5201 = vld [vmem:[#allocation3 + $0x4] sm:$0x4]
        %5203 = vst [vmem:[#allocation1] sm:$0xff] %v5201
        %s5204 = scalar_lea.vmem [#allocation1], 2
        %v5205 = vld [vmem:[%s5204] ss:$4 sm:$0xff]
        %v5207 = vld [vmem:[#allocation4 + $0xc] sm:$0x1]
        %v5208 = vsel %vm1726, %v5205, %v5207
        %5209 = vst [vmem:[#allocation4 + $0xc] sm:$0x1] %v5208
        %v5210 = vld [vmem:[#allocation3 + $0x4] sm:$0x4]
        %5212 = vst [vmem:[#allocation1] sm:$0xff] %v5210
        %s5213 = scalar_lea.vmem [#allocation1], 2
        %v5214 = vld [vmem:[%s5213] ss:$4 sm:$0xff]
        %v5215 = vshrl.u32 %v5214, 16
        %v5217 = vrot.slane %v5215, 7
        %v5218 = vrot.slane %v5217, 1
        %v5220 = vld [vmem:[#allocation4 + $0xd] sm:$0x1]
        %v5221 = vsel %vm1726, %v5218, %v5220
        %5222 = vst [vmem:[#allocation4 + $0xd] sm:$0x1] %v5221
        %v5223 = vld [vmem:[#allocation3 + $0x4] sm:$0x8]
        %5225 = vst [vmem:[#allocation1] sm:$0xff] %v5223
        %s5226 = scalar_lea.vmem [#allocation1], 3
        %v5227 = vld [vmem:[%s5226] ss:$4 sm:$0xff]
        %v5229 = vld [vmem:[#allocation4 + $0xe] sm:$0x1]
        %v5230 = vsel %vm1726, %v5227, %v5229
        %5231 = vst [vmem:[#allocation4 + $0xe] sm:$0x1] %v5230
        %v5232 = vld [vmem:[#allocation3 + $0x4] sm:$0x8]
        %5234 = vst [vmem:[#allocation1] sm:$0xff] %v5232
        %s5235 = scalar_lea.vmem [#allocation1], 3
        %v5236 = vld [vmem:[%s5235] ss:$4 sm:$0xff]
        %v5237 = vshrl.u32 %v5236, 16
        %v5239 = vrot.slane %v5237, 7
        %v5240 = vrot.slane %v5239, 1
        %v5242 = vld [vmem:[#allocation4 + $0xf] sm:$0x1]
        %v5243 = vsel %vm1726, %v5240, %v5242
        %5244 = vst [vmem:[#allocation4 + $0xf] sm:$0x1] %v5243
        %v5245 = vld [vmem:[#allocation3 + $0x8] sm:$0x1]
        %v5246 = vld [vmem:[#allocation4 + $0x10] sm:$0x1]
        %v5247 = vsel %vm1726, %v5245, %v5246
        %5248 = vst [vmem:[#allocation4 + $0x10] sm:$0x1] %v5247
        %v5249 = vld [vmem:[#allocation3 + $0x8] sm:$0x1]
        %v5251 = vrot.slane %v5249, 3
        %v5254 = vsel %vm5083, %v5249, %v5251
        %v5255 = vshrl.u32 %v5254, 16
        %v5257 = vrot.slane %v5255, 7
        %v5258 = vrot.slane %v5257, 1
        %v5260 = vld [vmem:[#allocation4 + $0x11] sm:$0x1]
        %v5261 = vsel %vm1726, %v5258, %v5260
        %5262 = vst [vmem:[#allocation4 + $0x11] sm:$0x1] %v5261
        %v5263 = vld [vmem:[#allocation3 + $0x8] sm:$0x2]
        %5265 = vst [vmem:[#allocation1] sm:$0xff] %v5263
        %s5266 = scalar_lea.vmem [#allocation1], 1
        %v5267 = vld [vmem:[%s5266] ss:$4 sm:$0xff]
        %v5269 = vld [vmem:[#allocation4 + $0x12] sm:$0x1]
        %v5270 = vsel %vm1726, %v5267, %v5269
        %5271 = vst [vmem:[#allocation4 + $0x12] sm:$0x1] %v5270
        %v5272 = vld [vmem:[#allocation3 + $0x8] sm:$0x2]
        %5274 = vst [vmem:[#allocation1] sm:$0xff] %v5272
        %s5275 = scalar_lea.vmem [#allocation1], 1
        %v5276 = vld [vmem:[%s5275] ss:$4 sm:$0xff]
        %v5277 = vshrl.u32 %v5276, 16
        %v5279 = vrot.slane %v5277, 7
        %v5280 = vrot.slane %v5279, 1
        %v5282 = vld [vmem:[#allocation4 + $0x13] sm:$0x1]
        %v5283 = vsel %vm1726, %v5280, %v5282
        %5284 = vst [vmem:[#allocation4 + $0x13] sm:$0x1] %v5283
        %v5285 = vld [vmem:[#allocation3 + $0x8] sm:$0x4]
        %5287 = vst [vmem:[#allocation1] sm:$0xff] %v5285
        %s5288 = scalar_lea.vmem [#allocation1], 2
        %v5289 = vld [vmem:[%s5288] ss:$4 sm:$0xff]
        %v5291 = vld [vmem:[#allocation4 + $0x14] sm:$0x1]
        %v5292 = vsel %vm1726, %v5289, %v5291
        %5293 = vst [vmem:[#allocation4 + $0x14] sm:$0x1] %v5292
        %v5294 = vld [vmem:[#allocation3 + $0x8] sm:$0x4]
        %5296 = vst [vmem:[#allocation1] sm:$0xff] %v5294
        %s5297 = scalar_lea.vmem [#allocation1], 2
        %v5298 = vld [vmem:[%s5297] ss:$4 sm:$0xff]
        %v5299 = vshrl.u32 %v5298, 16
        %v5301 = vrot.slane %v5299, 7
        %v5302 = vrot.slane %v5301, 1
        %v5304 = vld [vmem:[#allocation4 + $0x15] sm:$0x1]
        %v5305 = vsel %vm1726, %v5302, %v5304
        %5306 = vst [vmem:[#allocation4 + $0x15] sm:$0x1] %v5305
        %v5307 = vld [vmem:[#allocation3 + $0x8] sm:$0x8]
        %5309 = vst [vmem:[#allocation1] sm:$0xff] %v5307
        %s5310 = scalar_lea.vmem [#allocation1], 3
        %v5311 = vld [vmem:[%s5310] ss:$4 sm:$0xff]
        %v5313 = vld [vmem:[#allocation4 + $0x16] sm:$0x1]
        %v5314 = vsel %vm1726, %v5311, %v5313
        %5315 = vst [vmem:[#allocation4 + $0x16] sm:$0x1] %v5314
        %v5316 = vld [vmem:[#allocation3 + $0x8] sm:$0x8]
        %5318 = vst [vmem:[#allocation1] sm:$0xff] %v5316
        %s5319 = scalar_lea.vmem [#allocation1], 3
        %v5320 = vld [vmem:[%s5319] ss:$4 sm:$0xff]
        %v5321 = vshrl.u32 %v5320, 16
        %v5323 = vrot.slane %v5321, 7
        %v5324 = vrot.slane %v5323, 1
        %v5326 = vld [vmem:[#allocation4 + $0x17] sm:$0x1]
        %v5327 = vsel %vm1726, %v5324, %v5326
        %5328 = vst [vmem:[#allocation4 + $0x17] sm:$0x1] %v5327
        %v5329 = vld [vmem:[#allocation3 + $0xc] sm:$0x1]
        %v5330 = vld [vmem:[#allocation4 + $0x18] sm:$0x1]
        %v5331 = vsel %vm1726, %v5329, %v5330
        %5332 = vst [vmem:[#allocation4 + $0x18] sm:$0x1] %v5331
        %v5333 = vld [vmem:[#allocation3 + $0xc] sm:$0x1]
        %v5335 = vrot.slane %v5333, 3
        %v5338 = vsel %vm5083, %v5333, %v5335
        %v5339 = vshrl.u32 %v5338, 16
        %v5341 = vrot.slane %v5339, 7
        %v5342 = vrot.slane %v5341, 1
        %v5344 = vld [vmem:[#allocation4 + $0x19] sm:$0x1]
        %v5345 = vsel %vm1726, %v5342, %v5344
        %5346 = vst [vmem:[#allocation4 + $0x19] sm:$0x1] %v5345
        %v5347 = vld [vmem:[#allocation3 + $0xc] sm:$0x2]
        %5349 = vst [vmem:[#allocation1] sm:$0xff] %v5347
        %s5350 = scalar_lea.vmem [#allocation1], 1
        %v5351 = vld [vmem:[%s5350] ss:$4 sm:$0xff]
        %v5353 = vld [vmem:[#allocation4 + $0x1a] sm:$0x1]
        %v5354 = vsel %vm1726, %v5351, %v5353
        %5355 = vst [vmem:[#allocation4 + $0x1a] sm:$0x1] %v5354
        %v5356 = vld [vmem:[#allocation3 + $0xc] sm:$0x2]
        %5358 = vst [vmem:[#allocation1] sm:$0xff] %v5356
        %s5359 = scalar_lea.vmem [#allocation1], 1
        %v5360 = vld [vmem:[%s5359] ss:$4 sm:$0xff]
        %v5361 = vshrl.u32 %v5360, 16
        %v5363 = vrot.slane %v5361, 7
        %v5364 = vrot.slane %v5363, 1
        %v5366 = vld [vmem:[#allocation4 + $0x1b] sm:$0x1]
        %v5367 = vsel %vm1726, %v5364, %v5366
        %5368 = vst [vmem:[#allocation4 + $0x1b] sm:$0x1] %v5367
        %v5369 = vld [vmem:[#allocation3 + $0xc] sm:$0x4]
        %5371 = vst [vmem:[#allocation1] sm:$0xff] %v5369
        %s5372 = scalar_lea.vmem [#allocation1], 2
        %v5373 = vld [vmem:[%s5372] ss:$4 sm:$0xff]
        %v5375 = vld [vmem:[#allocation4 + $0x1c] sm:$0x1]
        %v5376 = vsel %vm1726, %v5373, %v5375
        %5377 = vst [vmem:[#allocation4 + $0x1c] sm:$0x1] %v5376
        %v5378 = vld [vmem:[#allocation3 + $0xc] sm:$0x4]
        %5380 = vst [vmem:[#allocation1] sm:$0xff] %v5378
        %s5381 = scalar_lea.vmem [#allocation1], 2
        %v5382 = vld [vmem:[%s5381] ss:$4 sm:$0xff]
        %v5383 = vshrl.u32 %v5382, 16
        %v5385 = vrot.slane %v5383, 7
        %v5386 = vrot.slane %v5385, 1
        %v5388 = vld [vmem:[#allocation4 + $0x1d] sm:$0x1]
        %v5389 = vsel %vm1726, %v5386, %v5388
        %5390 = vst [vmem:[#allocation4 + $0x1d] sm:$0x1] %v5389
        %v5391 = vld [vmem:[#allocation3 + $0xc] sm:$0x8]
        %5393 = vst [vmem:[#allocation1] sm:$0xff] %v5391
        %s5394 = scalar_lea.vmem [#allocation1], 3
        %v5395 = vld [vmem:[%s5394] ss:$4 sm:$0xff]
        %v5397 = vld [vmem:[#allocation4 + $0x1e] sm:$0x1]
        %v5398 = vsel %vm1726, %v5395, %v5397
        %5399 = vst [vmem:[#allocation4 + $0x1e] sm:$0x1] %v5398
        %v5400 = vld [vmem:[#allocation3 + $0xc] sm:$0x8]
        %5402 = vst [vmem:[#allocation1] sm:$0xff] %v5400
        %s5403 = scalar_lea.vmem [#allocation1], 3
        %v5404 = vld [vmem:[%s5403] ss:$4 sm:$0xff]
        %v5405 = vshrl.u32 %v5404, 16
        %v5407 = vrot.slane %v5405, 7
        %v5408 = vrot.slane %v5407, 1
        %v5410 = vld [vmem:[#allocation4 + $0x1f] sm:$0x1]
        %v5411 = vsel %vm1726, %v5408, %v5410
        %5412 = vst [vmem:[#allocation4 + $0x1f] sm:$0x1] %v5411
        %v5413 = vld [vmem:[#allocation3 + $0x10] sm:$0x1]
        %v5414 = vld [vmem:[#allocation4 + $0x20] sm:$0x1]
        %v5415 = vsel %vm1726, %v5413, %v5414
        %5416 = vst [vmem:[#allocation4 + $0x20] sm:$0x1] %v5415
        %v5417 = vld [vmem:[#allocation3 + $0x10] sm:$0x1]
        %v5419 = vrot.slane %v5417, 3
        %v5422 = vsel %vm5083, %v5417, %v5419
        %v5423 = vshrl.u32 %v5422, 16
        %v5425 = vrot.slane %v5423, 7
        %v5426 = vrot.slane %v5425, 1
        %v5428 = vld [vmem:[#allocation4 + $0x21] sm:$0x1]
        %v5429 = vsel %vm1726, %v5426, %v5428
        %5430 = vst [vmem:[#allocation4 + $0x21] sm:$0x1] %v5429
        %v5431 = vld [vmem:[#allocation3 + $0x10] sm:$0x2]
        %5433 = vst [vmem:[#allocation1] sm:$0xff] %v5431
        %s5434 = scalar_lea.vmem [#allocation1], 1
        %v5435 = vld [vmem:[%s5434] ss:$4 sm:$0xff]
        %v5437 = vld [vmem:[#allocation4 + $0x22] sm:$0x1]
        %v5438 = vsel %vm1726, %v5435, %v5437
        %5439 = vst [vmem:[#allocation4 + $0x22] sm:$0x1] %v5438
        %v5440 = vld [vmem:[#allocation3 + $0x10] sm:$0x2]
        %5442 = vst [vmem:[#allocation1] sm:$0xff] %v5440
        %s5443 = scalar_lea.vmem [#allocation1], 1
        %v5444 = vld [vmem:[%s5443] ss:$4 sm:$0xff]
        %v5445 = vshrl.u32 %v5444, 16
        %v5447 = vrot.slane %v5445, 7
        %v5448 = vrot.slane %v5447, 1
        %v5450 = vld [vmem:[#allocation4 + $0x23] sm:$0x1]
        %v5451 = vsel %vm1726, %v5448, %v5450
        %5452 = vst [vmem:[#allocation4 + $0x23] sm:$0x1] %v5451
        %v5453 = vld [vmem:[#allocation3 + $0x10] sm:$0x4]
        %5455 = vst [vmem:[#allocation1] sm:$0xff] %v5453
        %s5456 = scalar_lea.vmem [#allocation1], 2
        %v5457 = vld [vmem:[%s5456] ss:$4 sm:$0xff]
        %v5459 = vld [vmem:[#allocation4 + $0x24] sm:$0x1]
        %v5460 = vsel %vm1726, %v5457, %v5459
        %5461 = vst [vmem:[#allocation4 + $0x24] sm:$0x1] %v5460
        %v5462 = vld [vmem:[#allocation3 + $0x10] sm:$0x4]
        %5464 = vst [vmem:[#allocation1] sm:$0xff] %v5462
        %s5465 = scalar_lea.vmem [#allocation1], 2
        %v5466 = vld [vmem:[%s5465] ss:$4 sm:$0xff]
        %v5467 = vshrl.u32 %v5466, 16
        %v5469 = vrot.slane %v5467, 7
        %v5470 = vrot.slane %v5469, 1
        %v5472 = vld [vmem:[#allocation4 + $0x25] sm:$0x1]
        %v5473 = vsel %vm1726, %v5470, %v5472
        %5474 = vst [vmem:[#allocation4 + $0x25] sm:$0x1] %v5473
        %v5475 = vld [vmem:[#allocation3 + $0x10] sm:$0x8]
        %5477 = vst [vmem:[#allocation1] sm:$0xff] %v5475
        %s5478 = scalar_lea.vmem [#allocation1], 3
        %v5479 = vld [vmem:[%s5478] ss:$4 sm:$0xff]
        %v5481 = vld [vmem:[#allocation4 + $0x26] sm:$0x1]
        %v5482 = vsel %vm1726, %v5479, %v5481
        %5483 = vst [vmem:[#allocation4 + $0x26] sm:$0x1] %v5482
        %v5484 = vld [vmem:[#allocation3 + $0x10] sm:$0x8]
        %5486 = vst [vmem:[#allocation1] sm:$0xff] %v5484
        %s5487 = scalar_lea.vmem [#allocation1], 3
        %v5488 = vld [vmem:[%s5487] ss:$4 sm:$0xff]
        %v5489 = vshrl.u32 %v5488, 16
        %v5491 = vrot.slane %v5489, 7
        %v5492 = vrot.slane %v5491, 1
        %v5494 = vld [vmem:[#allocation4 + $0x27] sm:$0x1]
        %v5495 = vsel %vm1726, %v5492, %v5494
        %5496 = vst [vmem:[#allocation4 + $0x27] sm:$0x1] %v5495
        %v5497 = vld [vmem:[#allocation3 + $0x14] sm:$0x1]
        %v5498 = vld [vmem:[#allocation4 + $0x28] sm:$0x1]
        %v5499 = vsel %vm1726, %v5497, %v5498
        %5500 = vst [vmem:[#allocation4 + $0x28] sm:$0x1] %v5499
        %v5501 = vld [vmem:[#allocation3 + $0x14] sm:$0x1]
        %v5503 = vrot.slane %v5501, 3
        %v5506 = vsel %vm5083, %v5501, %v5503
        %v5507 = vshrl.u32 %v5506, 16
        %v5509 = vrot.slane %v5507, 7
        %v5510 = vrot.slane %v5509, 1
        %v5512 = vld [vmem:[#allocation4 + $0x29] sm:$0x1]
        %v5513 = vsel %vm1726, %v5510, %v5512
        %5514 = vst [vmem:[#allocation4 + $0x29] sm:$0x1] %v5513
        %v5515 = vld [vmem:[#allocation3 + $0x14] sm:$0x2]
        %5517 = vst [vmem:[#allocation1] sm:$0xff] %v5515
        %s5518 = scalar_lea.vmem [#allocation1], 1
        %v5519 = vld [vmem:[%s5518] ss:$4 sm:$0xff]
        %v5521 = vld [vmem:[#allocation4 + $0x2a] sm:$0x1]
        %v5522 = vsel %vm1726, %v5519, %v5521
        %5523 = vst [vmem:[#allocation4 + $0x2a] sm:$0x1] %v5522
        %v5524 = vld [vmem:[#allocation3 + $0x14] sm:$0x2]
        %5526 = vst [vmem:[#allocation1] sm:$0xff] %v5524
        %s5527 = scalar_lea.vmem [#allocation1], 1
        %v5528 = vld [vmem:[%s5527] ss:$4 sm:$0xff]
        %v5529 = vshrl.u32 %v5528, 16
        %v5531 = vrot.slane %v5529, 7
        %v5532 = vrot.slane %v5531, 1
        %v5534 = vld [vmem:[#allocation4 + $0x2b] sm:$0x1]
        %v5535 = vsel %vm1726, %v5532, %v5534
        %5536 = vst [vmem:[#allocation4 + $0x2b] sm:$0x1] %v5535
        %v5537 = vld [vmem:[#allocation3 + $0x14] sm:$0x4]
        %5539 = vst [vmem:[#allocation1] sm:$0xff] %v5537
        %s5540 = scalar_lea.vmem [#allocation1], 2
        %v5541 = vld [vmem:[%s5540] ss:$4 sm:$0xff]
        %v5543 = vld [vmem:[#allocation4 + $0x2c] sm:$0x1]
        %v5544 = vsel %vm1726, %v5541, %v5543
        %5545 = vst [vmem:[#allocation4 + $0x2c] sm:$0x1] %v5544
        %v5546 = vld [vmem:[#allocation3 + $0x14] sm:$0x4]
        %5548 = vst [vmem:[#allocation1] sm:$0xff] %v5546
        %s5549 = scalar_lea.vmem [#allocation1], 2
        %v5550 = vld [vmem:[%s5549] ss:$4 sm:$0xff]
        %v5551 = vshrl.u32 %v5550, 16
        %v5553 = vrot.slane %v5551, 7
        %v5554 = vrot.slane %v5553, 1
        %v5556 = vld [vmem:[#allocation4 + $0x2d] sm:$0x1]
        %v5557 = vsel %vm1726, %v5554, %v5556
        %5558 = vst [vmem:[#allocation4 + $0x2d] sm:$0x1] %v5557
        %v5559 = vld [vmem:[#allocation3 + $0x14] sm:$0x8]
        %5561 = vst [vmem:[#allocation1] sm:$0xff] %v5559
        %s5562 = scalar_lea.vmem [#allocation1], 3
        %v5563 = vld [vmem:[%s5562] ss:$4 sm:$0xff]
        %v5565 = vld [vmem:[#allocation4 + $0x2e] sm:$0x1]
        %v5566 = vsel %vm1726, %v5563, %v5565
        %5567 = vst [vmem:[#allocation4 + $0x2e] sm:$0x1] %v5566
        %v5568 = vld [vmem:[#allocation3 + $0x14] sm:$0x8]
        %5570 = vst [vmem:[#allocation1] sm:$0xff] %v5568
        %s5571 = scalar_lea.vmem [#allocation1], 3
        %v5572 = vld [vmem:[%s5571] ss:$4 sm:$0xff]
        %v5573 = vshrl.u32 %v5572, 16
        %v5575 = vrot.slane %v5573, 7
        %v5576 = vrot.slane %v5575, 1
        %v5578 = vld [vmem:[#allocation4 + $0x2f] sm:$0x1]
        %v5579 = vsel %vm1726, %v5576, %v5578
        %5580 = vst [vmem:[#allocation4 + $0x2f] sm:$0x1] %v5579
        %v5581 = vld [vmem:[#allocation4] sm:$0xff]
        %v5582 = vld [vmem:[#allocation4 + $0x8] sm:$0xff]
        %v5583 = vld [vmem:[#allocation4 + $0x10] sm:$0xff]
        %v5584 = vld [vmem:[#allocation4 + $0x18] sm:$0xff]
        %v5585 = vld [vmem:[#allocation4 + $0x20] sm:$0xff]
        %v5586 = vld [vmem:[#allocation4 + $0x28] sm:$0xff]
        %v5587 = vld [vmem:[%s5] sm:$0xf]
        %v5588 = vld [vmem:[%s5 + $0x4] sm:$0xf]
        %v5589 = vld [vmem:[%s5 + $0x8] sm:$0xf]
        %v5590 = vld [vmem:[%s5 + $0xc] sm:$0xf]
        %v5591 = vld [vmem:[%s5 + $0x10] sm:$0xf]
        %v5592 = vld [vmem:[%s5 + $0x14] sm:$0xf]
        %v5593 = vld [vmem:[%s5 + $0x18] sm:$0xf]
        %v5594 = vld [vmem:[%s5 + $0x1c] sm:$0xf]
        %v5595 = vld [vmem:[%s5 + $0x20] sm:$0xf]
        %v5596 = vld [vmem:[%s5 + $0x24] sm:$0xf]
        %v5597 = vld [vmem:[%s5 + $0x28] sm:$0xf]
        %v5598 = vld [vmem:[%s5 + $0x2c] sm:$0xf]
        %v5599 = vld [vmem:[%s5 + $0x30] sm:$0xf]
        %v5600 = vld [vmem:[%s5 + $0x34] sm:$0xf]
        %v5601 = vld [vmem:[%s5 + $0x38] sm:$0xf]
        %v5602 = vld [vmem:[%s5 + $0x3c] sm:$0xf]
        %v5603 = vld [vmem:[%s5 + $0x40] sm:$0xf]
        %v5604 = vld [vmem:[%s5 + $0x44] sm:$0xf]
        %v5605 = vld [vmem:[%s5 + $0x48] sm:$0xf]
        %v5606 = vld [vmem:[%s5 + $0x4c] sm:$0xf]
        %v5607 = vld [vmem:[%s5 + $0x50] sm:$0xf]
        %v5608 = vld [vmem:[%s5 + $0x54] sm:$0xf]
        %v5609 = vld [vmem:[%s5 + $0x58] sm:$0xf]
        %v5610 = vld [vmem:[%s5 + $0x5c] sm:$0xf]
        %v5611 = vld [vmem:[%s5 + $0x60] sm:$0xf]
        %v5612 = vld [vmem:[%s5 + $0x64] sm:$0xf]
        %v5613 = vld [vmem:[%s5 + $0x68] sm:$0xf]
        %v5614 = vld [vmem:[%s5 + $0x6c] sm:$0xf]
        %v5615 = vld [vmem:[%s5 + $0x70] sm:$0xf]
        %v5616 = vld [vmem:[%s5 + $0x74] sm:$0xf]
        %v5617 = vld [vmem:[%s5 + $0x78] sm:$0xf]
        %v5618 = vld [vmem:[%s5 + $0x7c] sm:$0xf]
        %v5619 = vld [vmem:[%s5 + $0x80] sm:$0xf]
        %v5620 = vld [vmem:[%s5 + $0x84] sm:$0xf]
        %v5621 = vld [vmem:[%s5 + $0x88] sm:$0xf]
        %v5622 = vld [vmem:[%s5 + $0x8c] sm:$0xf]
        %v5623 = vld [vmem:[%s5 + $0x90] sm:$0xf]
        %v5624 = vld [vmem:[%s5 + $0x94] sm:$0xf]
        %v5625 = vld [vmem:[%s5 + $0x98] sm:$0xf]
        %v5626 = vld [vmem:[%s5 + $0x9c] sm:$0xf]
        %v5627 = vld [vmem:[%s5 + $0xa0] sm:$0xf]
        %v5628 = vld [vmem:[%s5 + $0xa4] sm:$0xf]
        %v5629 = vld [vmem:[%s5 + $0xa8] sm:$0xf]
        %v5630 = vld [vmem:[%s5 + $0xac] sm:$0xf]
        %v5631 = vld [vmem:[%s5 + $0xb0] sm:$0xf]
        %v5632 = vld [vmem:[%s5 + $0xb4] sm:$0xf]
        %v5633 = vld [vmem:[%s5 + $0xb8] sm:$0xf]
        %v5634 = vld [vmem:[%s5 + $0xbc] sm:$0xf]
        %v5635 = vld [vmem:[%s5 + $0xc0] sm:$0xf]
        %v5636 = vld [vmem:[%s5 + $0xc4] sm:$0xf]
        %v5637 = vld [vmem:[%s5 + $0xc8] sm:$0xf]
        %v5638 = vld [vmem:[%s5 + $0xcc] sm:$0xf]
        %v5639 = vld [vmem:[%s5 + $0xd0] sm:$0xf]
        %v5640 = vld [vmem:[%s5 + $0xd4] sm:$0xf]
        %v5641 = vld [vmem:[%s5 + $0xd8] sm:$0xf]
        %v5642 = vld [vmem:[%s5 + $0xdc] sm:$0xf]
        %v5643 = vld [vmem:[%s5 + $0xe0] sm:$0xf]
        %v5644 = vld [vmem:[%s5 + $0xe4] sm:$0xf]
        %v5645 = vld [vmem:[%s5 + $0xe8] sm:$0xf]
        %v5646 = vld [vmem:[%s5 + $0xec] sm:$0xf]
        %v5647 = vld [vmem:[%s5 + $0xf0] sm:$0xf]
        %v5648 = vld [vmem:[%s5 + $0xf4] sm:$0xf]
        %v5649 = vld [vmem:[%s5 + $0xf8] sm:$0xf]
        %v5650 = vld [vmem:[%s5 + $0xfc] sm:$0xf]
        %v5651 = vld [vmem:[%s5 + $0x100] sm:$0xf]
        %v5652 = vld [vmem:[%s5 + $0x104] sm:$0xf]
        %v5653 = vld [vmem:[%s5 + $0x108] sm:$0xf]
        %v5654 = vld [vmem:[%s5 + $0x10c] sm:$0xf]
        %v5655 = vld [vmem:[%s5 + $0x110] sm:$0xf]
        %v5656 = vld [vmem:[%s5 + $0x114] sm:$0xf]
        %v5657 = vld [vmem:[%s5 + $0x118] sm:$0xf]
        %v5658 = vld [vmem:[%s5 + $0x11c] sm:$0xf]
        %v5659 = vld [vmem:[%s5 + $0x120] sm:$0xf]
        %v5660 = vld [vmem:[%s5 + $0x124] sm:$0xf]
        %v5661 = vld [vmem:[%s5 + $0x128] sm:$0xf]
        %v5662 = vld [vmem:[%s5 + $0x12c] sm:$0xf]
        %v5663 = vld [vmem:[%s5 + $0x130] sm:$0xf]
        %v5664 = vld [vmem:[%s5 + $0x134] sm:$0xf]
        %v5665 = vld [vmem:[%s5 + $0x138] sm:$0xf]
        %v5666 = vld [vmem:[%s5 + $0x13c] sm:$0xf]
        %v5667 = vld [vmem:[%s5 + $0x140] sm:$0xf]
        %v5668 = vld [vmem:[%s5 + $0x144] sm:$0xf]
        %v5669 = vld [vmem:[%s5 + $0x148] sm:$0xf]
        %v5670 = vld [vmem:[%s5 + $0x14c] sm:$0xf]
        %v5671 = vld [vmem:[%s5 + $0x150] sm:$0xf]
        %v5672 = vld [vmem:[%s5 + $0x154] sm:$0xf]
        %v5673 = vld [vmem:[%s5 + $0x158] sm:$0xf]
        %v5674 = vld [vmem:[%s5 + $0x15c] sm:$0xf]
        %v5675 = vld [vmem:[%s5 + $0x160] sm:$0xf]
        %v5676 = vld [vmem:[%s5 + $0x164] sm:$0xf]
        %v5677 = vld [vmem:[%s5 + $0x168] sm:$0xf]
        %v5678 = vld [vmem:[%s5 + $0x16c] sm:$0xf]
        %v5679 = vld [vmem:[%s5 + $0x170] sm:$0xf]
        %v5680 = vld [vmem:[%s5 + $0x174] sm:$0xf]
        %v5681 = vld [vmem:[%s5 + $0x178] sm:$0xf]
        %v5682 = vld [vmem:[%s5 + $0x17c] sm:$0xf]
        %v5683 = vld [vmem:[%s5 + $0x180] sm:$0xf]
        %v5684 = vld [vmem:[%s5 + $0x184] sm:$0xf]
        %v5685 = vld [vmem:[%s5 + $0x188] sm:$0xf]
        %v5686 = vld [vmem:[%s5 + $0x18c] sm:$0xf]
        %v5687 = vld [vmem:[%s5 + $0x190] sm:$0xf]
        %v5688 = vld [vmem:[%s5 + $0x194] sm:$0xf]
        %v5689 = vld [vmem:[%s5 + $0x198] sm:$0xf]
        %v5690 = vld [vmem:[%s5 + $0x19c] sm:$0xf]
        %v5691 = vld [vmem:[%s5 + $0x1a0] sm:$0xf]
        %v5692 = vld [vmem:[%s5 + $0x1a4] sm:$0xf]
        %v5693 = vld [vmem:[%s5 + $0x1a8] sm:$0xf]
        %v5694 = vld [vmem:[%s5 + $0x1ac] sm:$0xf]
        %v5695 = vld [vmem:[%s5 + $0x1b0] sm:$0xf]
        %v5696 = vld [vmem:[%s5 + $0x1b4] sm:$0xf]
        %v5697 = vld [vmem:[%s5 + $0x1b8] sm:$0xf]
        %v5698 = vld [vmem:[%s5 + $0x1bc] sm:$0xf]
        %v5699 = vld [vmem:[%s5 + $0x1c0] sm:$0xf]
        %v5700 = vld [vmem:[%s5 + $0x1c4] sm:$0xf]
        %v5701 = vld [vmem:[%s5 + $0x1c8] sm:$0xf]
        %v5702 = vld [vmem:[%s5 + $0x1cc] sm:$0xf]
        %v5703 = vld [vmem:[%s5 + $0x1d0] sm:$0xf]
        %v5704 = vld [vmem:[%s5 + $0x1d4] sm:$0xf]
        %v5705 = vld [vmem:[%s5 + $0x1d8] sm:$0xf]
        %v5706 = vld [vmem:[%s5 + $0x1dc] sm:$0xf]
        %v5707 = vld [vmem:[%s5 + $0x1e0] sm:$0xf]
        %v5708 = vld [vmem:[%s5 + $0x1e4] sm:$0xf]
        %v5709 = vld [vmem:[%s5 + $0x1e8] sm:$0xf]
        %v5710 = vld [vmem:[%s5 + $0x1ec] sm:$0xf]
        %v5711 = vld [vmem:[%s5 + $0x1f0] sm:$0xf]
        %v5712 = vld [vmem:[%s5 + $0x1f4] sm:$0xf]
        %v5713 = vld [vmem:[%s5 + $0x1f8] sm:$0xf]
        %v5714 = vld [vmem:[%s5 + $0x1fc] sm:$0xf]
        %v5715 = vld [vmem:[%s5 + $0x200] sm:$0xf]
        %v5716 = vld [vmem:[%s5 + $0x204] sm:$0xf]
        %v5717 = vld [vmem:[%s5 + $0x208] sm:$0xf]
        %v5718 = vld [vmem:[%s5 + $0x20c] sm:$0xf]
        %v5719 = vld [vmem:[%s5 + $0x210] sm:$0xf]
        %v5720 = vld [vmem:[%s5 + $0x214] sm:$0xf]
        %v5721 = vld [vmem:[%s5 + $0x218] sm:$0xf]
        %v5722 = vld [vmem:[%s5 + $0x21c] sm:$0xf]
        %v5723 = vld [vmem:[%s5 + $0x220] sm:$0xf]
        %v5724 = vld [vmem:[%s5 + $0x224] sm:$0xf]
        %v5725 = vld [vmem:[%s5 + $0x228] sm:$0xf]
        %v5726 = vld [vmem:[%s5 + $0x22c] sm:$0xf]
        %v5727 = vld [vmem:[%s5 + $0x230] sm:$0xf]
        %v5728 = vld [vmem:[%s5 + $0x234] sm:$0xf]
        %v5729 = vld [vmem:[%s5 + $0x238] sm:$0xf]
        %v5730 = vld [vmem:[%s5 + $0x23c] sm:$0xf]
        %v5731 = vld [vmem:[%s5 + $0x240] sm:$0xf]
        %v5732 = vld [vmem:[%s5 + $0x244] sm:$0xf]
        %v5733 = vld [vmem:[%s5 + $0x248] sm:$0xf]
        %v5734 = vld [vmem:[%s5 + $0x24c] sm:$0xf]
        %v5735 = vld [vmem:[%s5 + $0x250] sm:$0xf]
        %v5736 = vld [vmem:[%s5 + $0x254] sm:$0xf]
        %v5737 = vld [vmem:[%s5 + $0x258] sm:$0xf]
        %v5738 = vld [vmem:[%s5 + $0x25c] sm:$0xf]
        %v5739 = vld [vmem:[%s5 + $0x260] sm:$0xf]
        %v5740 = vld [vmem:[%s5 + $0x264] sm:$0xf]
        %v5741 = vld [vmem:[%s5 + $0x268] sm:$0xf]
        %v5742 = vld [vmem:[%s5 + $0x26c] sm:$0xf]
        %v5743 = vld [vmem:[%s5 + $0x270] sm:$0xf]
        %v5744 = vld [vmem:[%s5 + $0x274] sm:$0xf]
        %v5745 = vld [vmem:[%s5 + $0x278] sm:$0xf]
        %v5746 = vld [vmem:[%s5 + $0x27c] sm:$0xf]
        %v5747 = vld [vmem:[%s5 + $0x280] sm:$0xf]
        %v5748 = vld [vmem:[%s5 + $0x284] sm:$0xf]
        %v5749 = vld [vmem:[%s5 + $0x288] sm:$0xf]
        %v5750 = vld [vmem:[%s5 + $0x28c] sm:$0xf]
        %v5751 = vld [vmem:[%s5 + $0x290] sm:$0xf]
        %v5752 = vld [vmem:[%s5 + $0x294] sm:$0xf]
        %v5753 = vld [vmem:[%s5 + $0x298] sm:$0xf]
        %v5754 = vld [vmem:[%s5 + $0x29c] sm:$0xf]
        %v5755 = vld [vmem:[%s5 + $0x2a0] sm:$0xf]
        %v5756 = vld [vmem:[%s5 + $0x2a4] sm:$0xf]
        %v5757 = vld [vmem:[%s5 + $0x2a8] sm:$0xf]
        %v5758 = vld [vmem:[%s5 + $0x2ac] sm:$0xf]
        %v5759 = vld [vmem:[%s5 + $0x2b0] sm:$0xf]
        %v5760 = vld [vmem:[%s5 + $0x2b4] sm:$0xf]
        %v5761 = vld [vmem:[%s5 + $0x2b8] sm:$0xf]
        %v5762 = vld [vmem:[%s5 + $0x2bc] sm:$0xf]
        %v5763 = vld [vmem:[%s5 + $0x2c0] sm:$0xf]
        %v5764 = vld [vmem:[%s5 + $0x2c4] sm:$0xf]
        %v5765 = vld [vmem:[%s5 + $0x2c8] sm:$0xf]
        %v5766 = vld [vmem:[%s5 + $0x2cc] sm:$0xf]
        %v5767 = vld [vmem:[%s5 + $0x2d0] sm:$0xf]
        %v5768 = vld [vmem:[%s5 + $0x2d4] sm:$0xf]
        %v5769 = vld [vmem:[%s5 + $0x2d8] sm:$0xf]
        %v5770 = vld [vmem:[%s5 + $0x2dc] sm:$0xf]
        %v5771 = vld [vmem:[%s5 + $0x2e0] sm:$0xf]
        %v5772 = vld [vmem:[%s5 + $0x2e4] sm:$0xf]
        %v5773 = vld [vmem:[%s5 + $0x2e8] sm:$0xf]
        %v5774 = vld [vmem:[%s5 + $0x2ec] sm:$0xf]
        %v5775 = vld [vmem:[%s5 + $0x2f0] sm:$0xf]
        %v5776 = vld [vmem:[%s5 + $0x2f4] sm:$0xf]
        %v5777 = vld [vmem:[%s5 + $0x2f8] sm:$0xf]
        %v5778 = vld [vmem:[%s5 + $0x2fc] sm:$0xf]
        %v5779 = vld [vmem:[%s5 + $0x300] sm:$0xf]
        %v5780 = vld [vmem:[%s5 + $0x304] sm:$0xf]
        %v5781 = vld [vmem:[%s5 + $0x308] sm:$0xf]
        %v5782 = vld [vmem:[%s5 + $0x30c] sm:$0xf]
        %v5783 = vld [vmem:[%s5 + $0x310] sm:$0xf]
        %v5784 = vld [vmem:[%s5 + $0x314] sm:$0xf]
        %v5785 = vld [vmem:[%s5 + $0x318] sm:$0xf]
        %v5786 = vld [vmem:[%s5 + $0x31c] sm:$0xf]
        %v5787 = vld [vmem:[%s5 + $0x320] sm:$0xf]
        %v5788 = vld [vmem:[%s5 + $0x324] sm:$0xf]
        %v5789 = vld [vmem:[%s5 + $0x328] sm:$0xf]
        %v5790 = vld [vmem:[%s5 + $0x32c] sm:$0xf]
        %v5791 = vld [vmem:[%s5 + $0x330] sm:$0xf]
        %v5792 = vld [vmem:[%s5 + $0x334] sm:$0xf]
        %v5793 = vld [vmem:[%s5 + $0x338] sm:$0xf]
        %v5794 = vld [vmem:[%s5 + $0x33c] sm:$0xf]
        %v5795 = vld [vmem:[%s5 + $0x340] sm:$0xf]
        %v5796 = vld [vmem:[%s5 + $0x344] sm:$0xf]
        %v5797 = vld [vmem:[%s5 + $0x348] sm:$0xf]
        %v5798 = vld [vmem:[%s5 + $0x34c] sm:$0xf]
        %v5799 = vld [vmem:[%s5 + $0x350] sm:$0xf]
        %v5800 = vld [vmem:[%s5 + $0x354] sm:$0xf]
        %v5801 = vld [vmem:[%s5 + $0x358] sm:$0xf]
        %v5802 = vld [vmem:[%s5 + $0x35c] sm:$0xf]
        %v5803 = vld [vmem:[%s5 + $0x360] sm:$0xf]
        %v5804 = vld [vmem:[%s5 + $0x364] sm:$0xf]
        %v5805 = vld [vmem:[%s5 + $0x368] sm:$0xf]
        %v5806 = vld [vmem:[%s5 + $0x36c] sm:$0xf]
        %v5807 = vld [vmem:[%s5 + $0x370] sm:$0xf]
        %v5808 = vld [vmem:[%s5 + $0x374] sm:$0xf]
        %v5809 = vld [vmem:[%s5 + $0x378] sm:$0xf]
        %v5810 = vld [vmem:[%s5 + $0x37c] sm:$0xf]
        %v5811 = vld [vmem:[%s5 + $0x380] sm:$0xf]
        %v5812 = vld [vmem:[%s5 + $0x384] sm:$0xf]
        %v5813 = vld [vmem:[%s5 + $0x388] sm:$0xf]
        %v5814 = vld [vmem:[%s5 + $0x38c] sm:$0xf]
        %v5815 = vld [vmem:[%s5 + $0x390] sm:$0xf]
        %v5816 = vld [vmem:[%s5 + $0x394] sm:$0xf]
        %v5817 = vld [vmem:[%s5 + $0x398] sm:$0xf]
        %v5818 = vld [vmem:[%s5 + $0x39c] sm:$0xf]
        %v5819 = vld [vmem:[%s5 + $0x3a0] sm:$0xf]
        %v5820 = vld [vmem:[%s5 + $0x3a4] sm:$0xf]
        %v5821 = vld [vmem:[%s5 + $0x3a8] sm:$0xf]
        %v5822 = vld [vmem:[%s5 + $0x3ac] sm:$0xf]
        %v5823 = vld [vmem:[%s5 + $0x3b0] sm:$0xf]
        %v5824 = vld [vmem:[%s5 + $0x3b4] sm:$0xf]
        %v5825 = vld [vmem:[%s5 + $0x3b8] sm:$0xf]
        %v5826 = vld [vmem:[%s5 + $0x3bc] sm:$0xf]
        %v5827 = vld [vmem:[%s5 + $0x3c0] sm:$0xf]
        %v5828 = vld [vmem:[%s5 + $0x3c4] sm:$0xf]
        %v5829 = vld [vmem:[%s5 + $0x3c8] sm:$0xf]
        %v5830 = vld [vmem:[%s5 + $0x3cc] sm:$0xf]
        %v5831 = vld [vmem:[%s5 + $0x3d0] sm:$0xf]
        %v5832 = vld [vmem:[%s5 + $0x3d4] sm:$0xf]
        %v5833 = vld [vmem:[%s5 + $0x3d8] sm:$0xf]
        %v5834 = vld [vmem:[%s5 + $0x3dc] sm:$0xf]
        %v5835 = vld [vmem:[%s5 + $0x3e0] sm:$0xf]
        %v5836 = vld [vmem:[%s5 + $0x3e4] sm:$0xf]
        %v5837 = vld [vmem:[%s5 + $0x3e8] sm:$0xf]
        %v5838 = vld [vmem:[%s5 + $0x3ec] sm:$0xf]
        %v5839 = vld [vmem:[%s5 + $0x3f0] sm:$0xf]
        %v5840 = vld [vmem:[%s5 + $0x3f4] sm:$0xf]
        %v5841 = vld [vmem:[%s5 + $0x3f8] sm:$0xf]
        %v5842 = vld [vmem:[%s5 + $0x3fc] sm:$0xf]
        %v5843 = vld [vmem:[%s5 + $0x400] sm:$0xf]
        %v5844 = vld [vmem:[%s5 + $0x404] sm:$0xf]
        %v5845 = vld [vmem:[%s5 + $0x408] sm:$0xf]
        %v5846 = vld [vmem:[%s5 + $0x40c] sm:$0xf]
        %v5847 = vld [vmem:[%s5 + $0x410] sm:$0xf]
        %v5848 = vld [vmem:[%s5 + $0x414] sm:$0xf]
        %v5849 = vld [vmem:[%s5 + $0x418] sm:$0xf]
        %v5850 = vld [vmem:[%s5 + $0x41c] sm:$0xf]
        %v5851 = vld [vmem:[%s5 + $0x420] sm:$0xf]
        %v5852 = vld [vmem:[%s5 + $0x424] sm:$0xf]
        %v5853 = vld [vmem:[%s5 + $0x428] sm:$0xf]
        %v5854 = vld [vmem:[%s5 + $0x42c] sm:$0xf]
        %v5855 = vld [vmem:[%s5 + $0x430] sm:$0xf]
        %v5856 = vld [vmem:[%s5 + $0x434] sm:$0xf]
        %v5857 = vld [vmem:[%s5 + $0x438] sm:$0xf]
        %v5858 = vld [vmem:[%s5 + $0x43c] sm:$0xf]
        %v5859 = vld [vmem:[%s5 + $0x440] sm:$0xf]
        %v5860 = vld [vmem:[%s5 + $0x444] sm:$0xf]
        %v5861 = vld [vmem:[%s5 + $0x448] sm:$0xf]
        %v5862 = vld [vmem:[%s5 + $0x44c] sm:$0xf]
        %v5863 = vld [vmem:[%s5 + $0x450] sm:$0xf]
        %v5864 = vld [vmem:[%s5 + $0x454] sm:$0xf]
        %v5865 = vld [vmem:[%s5 + $0x458] sm:$0xf]
        %v5866 = vld [vmem:[%s5 + $0x45c] sm:$0xf]
        %v5867 = vld [vmem:[%s5 + $0x460] sm:$0xf]
        %v5868 = vld [vmem:[%s5 + $0x464] sm:$0xf]
        %v5869 = vld [vmem:[%s5 + $0x468] sm:$0xf]
        %v5870 = vld [vmem:[%s5 + $0x46c] sm:$0xf]
        %v5871 = vld [vmem:[%s5 + $0x470] sm:$0xf]
        %v5872 = vld [vmem:[%s5 + $0x474] sm:$0xf]
        %v5873 = vld [vmem:[%s5 + $0x478] sm:$0xf]
        %v5874 = vld [vmem:[%s5 + $0x47c] sm:$0xf]
        %v5875 = vld [vmem:[%s5 + $0x480] sm:$0xf]
        %v5876 = vld [vmem:[%s5 + $0x484] sm:$0xf]
        %v5877 = vld [vmem:[%s5 + $0x488] sm:$0xf]
        %v5878 = vld [vmem:[%s5 + $0x48c] sm:$0xf]
        %v5879 = vld [vmem:[%s5 + $0x490] sm:$0xf]
        %v5880 = vld [vmem:[%s5 + $0x494] sm:$0xf]
        %v5881 = vld [vmem:[%s5 + $0x498] sm:$0xf]
        %v5882 = vld [vmem:[%s5 + $0x49c] sm:$0xf]
        %v5883 = vld [vmem:[%s5 + $0x4a0] sm:$0xf]
        %v5884 = vld [vmem:[%s5 + $0x4a4] sm:$0xf]
        %v5885 = vld [vmem:[%s5 + $0x4a8] sm:$0xf]
        %v5886 = vld [vmem:[%s5 + $0x4ac] sm:$0xf]
        %v5887 = vld [vmem:[%s5 + $0x4b0] sm:$0xf]
        %v5888 = vld [vmem:[%s5 + $0x4b4] sm:$0xf]
        %v5889 = vld [vmem:[%s5 + $0x4b8] sm:$0xf]
        %v5890 = vld [vmem:[%s5 + $0x4bc] sm:$0xf]
        %v5891 = vld [vmem:[%s5 + $0x4c0] sm:$0xf]
        %v5892 = vld [vmem:[%s5 + $0x4c4] sm:$0xf]
        %v5893 = vld [vmem:[%s5 + $0x4c8] sm:$0xf]
        %v5894 = vld [vmem:[%s5 + $0x4cc] sm:$0xf]
        %v5895 = vld [vmem:[%s5 + $0x4d0] sm:$0xf]
        %v5896 = vld [vmem:[%s5 + $0x4d4] sm:$0xf]
        %v5897 = vld [vmem:[%s5 + $0x4d8] sm:$0xf]
        %v5898 = vld [vmem:[%s5 + $0x4dc] sm:$0xf]
        %v5899 = vld [vmem:[%s5 + $0x4e0] sm:$0xf]
        %v5900 = vld [vmem:[%s5 + $0x4e4] sm:$0xf]
        %v5901 = vld [vmem:[%s5 + $0x4e8] sm:$0xf]
        %v5902 = vld [vmem:[%s5 + $0x4ec] sm:$0xf]
        %v5903 = vld [vmem:[%s5 + $0x4f0] sm:$0xf]
        %v5904 = vld [vmem:[%s5 + $0x4f4] sm:$0xf]
        %v5905 = vld [vmem:[%s5 + $0x4f8] sm:$0xf]
        %v5906 = vld [vmem:[%s5 + $0x4fc] sm:$0xf]
        %v5907 = vld [vmem:[%s5 + $0x500] sm:$0xf]
        %v5908 = vld [vmem:[%s5 + $0x504] sm:$0xf]
        %v5909 = vld [vmem:[%s5 + $0x508] sm:$0xf]
        %v5910 = vld [vmem:[%s5 + $0x50c] sm:$0xf]
        %v5911 = vld [vmem:[%s5 + $0x510] sm:$0xf]
        %v5912 = vld [vmem:[%s5 + $0x514] sm:$0xf]
        %v5913 = vld [vmem:[%s5 + $0x518] sm:$0xf]
        %v5914 = vld [vmem:[%s5 + $0x51c] sm:$0xf]
        %v5915 = vld [vmem:[%s5 + $0x520] sm:$0xf]
        %v5916 = vld [vmem:[%s5 + $0x524] sm:$0xf]
        %v5917 = vld [vmem:[%s5 + $0x528] sm:$0xf]
        %v5918 = vld [vmem:[%s5 + $0x52c] sm:$0xf]
        %v5919 = vld [vmem:[%s5 + $0x530] sm:$0xf]
        %v5920 = vld [vmem:[%s5 + $0x534] sm:$0xf]
        %v5921 = vld [vmem:[%s5 + $0x538] sm:$0xf]
        %v5922 = vld [vmem:[%s5 + $0x53c] sm:$0xf]
        %v5923 = vld [vmem:[%s5 + $0x540] sm:$0xf]
        %v5924 = vld [vmem:[%s5 + $0x544] sm:$0xf]
        %v5925 = vld [vmem:[%s5 + $0x548] sm:$0xf]
        %v5926 = vld [vmem:[%s5 + $0x54c] sm:$0xf]
        %v5927 = vld [vmem:[%s5 + $0x550] sm:$0xf]
        %v5928 = vld [vmem:[%s5 + $0x554] sm:$0xf]
        %v5929 = vld [vmem:[%s5 + $0x558] sm:$0xf]
        %v5930 = vld [vmem:[%s5 + $0x55c] sm:$0xf]
        %v5931 = vld [vmem:[%s5 + $0x560] sm:$0xf]
        %v5932 = vld [vmem:[%s5 + $0x564] sm:$0xf]
        %v5933 = vld [vmem:[%s5 + $0x568] sm:$0xf]
        %v5934 = vld [vmem:[%s5 + $0x56c] sm:$0xf]
        %v5935 = vld [vmem:[%s5 + $0x570] sm:$0xf]
        %v5936 = vld [vmem:[%s5 + $0x574] sm:$0xf]
        %v5937 = vld [vmem:[%s5 + $0x578] sm:$0xf]
        %v5938 = vld [vmem:[%s5 + $0x57c] sm:$0xf]
        %v5939 = vld [vmem:[%s5 + $0x580] sm:$0xf]
        %v5940 = vld [vmem:[%s5 + $0x584] sm:$0xf]
        %v5941 = vld [vmem:[%s5 + $0x588] sm:$0xf]
        %v5942 = vld [vmem:[%s5 + $0x58c] sm:$0xf]
        %v5943 = vld [vmem:[%s5 + $0x590] sm:$0xf]
        %v5944 = vld [vmem:[%s5 + $0x594] sm:$0xf]
        %v5945 = vld [vmem:[%s5 + $0x598] sm:$0xf]
        %v5946 = vld [vmem:[%s5 + $0x59c] sm:$0xf]
        %v5947 = vld [vmem:[%s5 + $0x5a0] sm:$0xf]
        %v5948 = vld [vmem:[%s5 + $0x5a4] sm:$0xf]
        %v5949 = vld [vmem:[%s5 + $0x5a8] sm:$0xf]
        %v5950 = vld [vmem:[%s5 + $0x5ac] sm:$0xf]
        %v5951 = vld [vmem:[%s5 + $0x5b0] sm:$0xf]
        %v5952 = vld [vmem:[%s5 + $0x5b4] sm:$0xf]
        %v5953 = vld [vmem:[%s5 + $0x5b8] sm:$0xf]
        %v5954 = vld [vmem:[%s5 + $0x5bc] sm:$0xf]
        %v5955 = vld [vmem:[%s5 + $0x5c0] sm:$0xf]
        %v5956 = vld [vmem:[%s5 + $0x5c4] sm:$0xf]
        %v5957 = vld [vmem:[%s5 + $0x5c8] sm:$0xf]
        %v5958 = vld [vmem:[%s5 + $0x5cc] sm:$0xf]
        %v5959 = vld [vmem:[%s5 + $0x5d0] sm:$0xf]
        %v5960 = vld [vmem:[%s5 + $0x5d4] sm:$0xf]
        %v5961 = vld [vmem:[%s5 + $0x5d8] sm:$0xf]
        %v5962 = vld [vmem:[%s5 + $0x5dc] sm:$0xf]
        %v5963 = vld [vmem:[%s5 + $0x5e0] sm:$0xf]
        %v5964 = vld [vmem:[%s5 + $0x5e4] sm:$0xf]
        %v5965 = vld [vmem:[%s5 + $0x5e8] sm:$0xf]
        %v5966 = vld [vmem:[%s5 + $0x5ec] sm:$0xf]
        %v5967 = vld [vmem:[%s5 + $0x5f0] sm:$0xf]
        %v5968 = vld [vmem:[%s5 + $0x5f4] sm:$0xf]
        %v5969 = vld [vmem:[%s5 + $0x5f8] sm:$0xf]
        %v5970 = vld [vmem:[%s5 + $0x5fc] sm:$0xf]
        %v5971 = vld [vmem:[%s5 + $0x600] sm:$0xf]
        %v5972 = vld [vmem:[%s5 + $0x604] sm:$0xf]
        %v5973 = vld [vmem:[%s5 + $0x608] sm:$0xf]
        %v5974 = vld [vmem:[%s5 + $0x60c] sm:$0xf]
        %v5975 = vld [vmem:[%s5 + $0x610] sm:$0xf]
        %v5976 = vld [vmem:[%s5 + $0x614] sm:$0xf]
        %v5977 = vld [vmem:[%s5 + $0x618] sm:$0xf]
        %v5978 = vld [vmem:[%s5 + $0x61c] sm:$0xf]
        %v5979 = vld [vmem:[%s5 + $0x620] sm:$0xf]
        %v5980 = vld [vmem:[%s5 + $0x624] sm:$0xf]
        %v5981 = vld [vmem:[%s5 + $0x628] sm:$0xf]
        %v5982 = vld [vmem:[%s5 + $0x62c] sm:$0xf]
        %v5983 = vld [vmem:[%s5 + $0x630] sm:$0xf]
        %v5984 = vld [vmem:[%s5 + $0x634] sm:$0xf]
        %v5985 = vld [vmem:[%s5 + $0x638] sm:$0xf]
        %v5986 = vld [vmem:[%s5 + $0x63c] sm:$0xf]
        %v5987 = vld [vmem:[%s5 + $0x640] sm:$0xf]
        %v5988 = vld [vmem:[%s5 + $0x644] sm:$0xf]
        %v5989 = vld [vmem:[%s5 + $0x648] sm:$0xf]
        %v5990 = vld [vmem:[%s5 + $0x64c] sm:$0xf]
        %v5991 = vld [vmem:[%s5 + $0x650] sm:$0xf]
        %v5992 = vld [vmem:[%s5 + $0x654] sm:$0xf]
        %v5993 = vld [vmem:[%s5 + $0x658] sm:$0xf]
        %v5994 = vld [vmem:[%s5 + $0x65c] sm:$0xf]
        %v5995 = vld [vmem:[%s5 + $0x660] sm:$0xf]
        %v5996 = vld [vmem:[%s5 + $0x664] sm:$0xf]
        %v5997 = vld [vmem:[%s5 + $0x668] sm:$0xf]
        %v5998 = vld [vmem:[%s5 + $0x66c] sm:$0xf]
        %v5999 = vld [vmem:[%s5 + $0x670] sm:$0xf]
        %v6000 = vld [vmem:[%s5 + $0x674] sm:$0xf]
        %v6001 = vld [vmem:[%s5 + $0x678] sm:$0xf]
        %v6002 = vld [vmem:[%s5 + $0x67c] sm:$0xf]
        %v6003 = vld [vmem:[%s5 + $0x680] sm:$0xf]
        %v6004 = vld [vmem:[%s5 + $0x684] sm:$0xf]
        %v6005 = vld [vmem:[%s5 + $0x688] sm:$0xf]
        %v6006 = vld [vmem:[%s5 + $0x68c] sm:$0xf]
        %v6007 = vld [vmem:[%s5 + $0x690] sm:$0xf]
        %v6008 = vld [vmem:[%s5 + $0x694] sm:$0xf]
        %v6009 = vld [vmem:[%s5 + $0x698] sm:$0xf]
        %v6010 = vld [vmem:[%s5 + $0x69c] sm:$0xf]
        %v6011 = vld [vmem:[%s5 + $0x6a0] sm:$0xf]
        %v6012 = vld [vmem:[%s5 + $0x6a4] sm:$0xf]
        %v6013 = vld [vmem:[%s5 + $0x6a8] sm:$0xf]
        %v6014 = vld [vmem:[%s5 + $0x6ac] sm:$0xf]
        %v6015 = vld [vmem:[%s5 + $0x6b0] sm:$0xf]
        %v6016 = vld [vmem:[%s5 + $0x6b4] sm:$0xf]
        %v6017 = vld [vmem:[%s5 + $0x6b8] sm:$0xf]
        %v6018 = vld [vmem:[%s5 + $0x6bc] sm:$0xf]
        %v6019 = vld [vmem:[%s5 + $0x6c0] sm:$0xf]
        %v6020 = vld [vmem:[%s5 + $0x6c4] sm:$0xf]
        %v6021 = vld [vmem:[%s5 + $0x6c8] sm:$0xf]
        %v6022 = vld [vmem:[%s5 + $0x6cc] sm:$0xf]
        %v6023 = vld [vmem:[%s5 + $0x6d0] sm:$0xf]
        %v6024 = vld [vmem:[%s5 + $0x6d4] sm:$0xf]
        %v6025 = vld [vmem:[%s5 + $0x6d8] sm:$0xf]
        %v6026 = vld [vmem:[%s5 + $0x6dc] sm:$0xf]
        %v6027 = vld [vmem:[%s5 + $0x6e0] sm:$0xf]
        %v6028 = vld [vmem:[%s5 + $0x6e4] sm:$0xf]
        %v6029 = vld [vmem:[%s5 + $0x6e8] sm:$0xf]
        %v6030 = vld [vmem:[%s5 + $0x6ec] sm:$0xf]
        %v6031 = vld [vmem:[%s5 + $0x6f0] sm:$0xf]
        %v6032 = vld [vmem:[%s5 + $0x6f4] sm:$0xf]
        %v6033 = vld [vmem:[%s5 + $0x6f8] sm:$0xf]
        %v6034 = vld [vmem:[%s5 + $0x6fc] sm:$0xf]
        %v6035 = vld [vmem:[%s5 + $0x700] sm:$0xf]
        %v6036 = vld [vmem:[%s5 + $0x704] sm:$0xf]
        %v6037 = vld [vmem:[%s5 + $0x708] sm:$0xf]
        %v6038 = vld [vmem:[%s5 + $0x70c] sm:$0xf]
        %v6039 = vld [vmem:[%s5 + $0x710] sm:$0xf]
        %v6040 = vld [vmem:[%s5 + $0x714] sm:$0xf]
        %v6041 = vld [vmem:[%s5 + $0x718] sm:$0xf]
        %v6042 = vld [vmem:[%s5 + $0x71c] sm:$0xf]
        %v6043 = vld [vmem:[%s5 + $0x720] sm:$0xf]
        %v6044 = vld [vmem:[%s5 + $0x724] sm:$0xf]
        %v6045 = vld [vmem:[%s5 + $0x728] sm:$0xf]
        %v6046 = vld [vmem:[%s5 + $0x72c] sm:$0xf]
        %v6047 = vld [vmem:[%s5 + $0x730] sm:$0xf]
        %v6048 = vld [vmem:[%s5 + $0x734] sm:$0xf]
        %v6049 = vld [vmem:[%s5 + $0x738] sm:$0xf]
        %v6050 = vld [vmem:[%s5 + $0x73c] sm:$0xf]
        %v6051 = vld [vmem:[%s5 + $0x740] sm:$0xf]
        %v6052 = vld [vmem:[%s5 + $0x744] sm:$0xf]
        %v6053 = vld [vmem:[%s5 + $0x748] sm:$0xf]
        %v6054 = vld [vmem:[%s5 + $0x74c] sm:$0xf]
        %v6055 = vld [vmem:[%s5 + $0x750] sm:$0xf]
        %v6056 = vld [vmem:[%s5 + $0x754] sm:$0xf]
        %v6057 = vld [vmem:[%s5 + $0x758] sm:$0xf]
        %v6058 = vld [vmem:[%s5 + $0x75c] sm:$0xf]
        %v6059 = vld [vmem:[%s5 + $0x760] sm:$0xf]
        %v6060 = vld [vmem:[%s5 + $0x764] sm:$0xf]
        %v6061 = vld [vmem:[%s5 + $0x768] sm:$0xf]
        %v6062 = vld [vmem:[%s5 + $0x76c] sm:$0xf]
        %v6063 = vld [vmem:[%s5 + $0x770] sm:$0xf]
        %v6064 = vld [vmem:[%s5 + $0x774] sm:$0xf]
        %v6065 = vld [vmem:[%s5 + $0x778] sm:$0xf]
        %v6066 = vld [vmem:[%s5 + $0x77c] sm:$0xf]
        %v6067 = vld [vmem:[%s5 + $0x780] sm:$0xf]
        %v6068 = vld [vmem:[%s5 + $0x784] sm:$0xf]
        %v6069 = vld [vmem:[%s5 + $0x788] sm:$0xf]
        %v6070 = vld [vmem:[%s5 + $0x78c] sm:$0xf]
        %v6071 = vld [vmem:[%s5 + $0x790] sm:$0xf]
        %v6072 = vld [vmem:[%s5 + $0x794] sm:$0xf]
        %v6073 = vld [vmem:[%s5 + $0x798] sm:$0xf]
        %v6074 = vld [vmem:[%s5 + $0x79c] sm:$0xf]
        %v6075 = vld [vmem:[%s5 + $0x7a0] sm:$0xf]
        %v6076 = vld [vmem:[%s5 + $0x7a4] sm:$0xf]
        %v6077 = vld [vmem:[%s5 + $0x7a8] sm:$0xf]
        %v6078 = vld [vmem:[%s5 + $0x7ac] sm:$0xf]
        %v6079 = vld [vmem:[%s5 + $0x7b0] sm:$0xf]
        %v6080 = vld [vmem:[%s5 + $0x7b4] sm:$0xf]
        %v6081 = vld [vmem:[%s5 + $0x7b8] sm:$0xf]
        %v6082 = vld [vmem:[%s5 + $0x7bc] sm:$0xf]
        %v6083 = vld [vmem:[%s5 + $0x7c0] sm:$0xf]
        %v6084 = vld [vmem:[%s5 + $0x7c4] sm:$0xf]
        %v6085 = vld [vmem:[%s5 + $0x7c8] sm:$0xf]
        %v6086 = vld [vmem:[%s5 + $0x7cc] sm:$0xf]
        %v6087 = vld [vmem:[%s5 + $0x7d0] sm:$0xf]
        %v6088 = vld [vmem:[%s5 + $0x7d4] sm:$0xf]
        %v6089 = vld [vmem:[%s5 + $0x7d8] sm:$0xf]
        %v6090 = vld [vmem:[%s5 + $0x7dc] sm:$0xf]
        %v6091 = vld [vmem:[%s5 + $0x7e0] sm:$0xf]
        %v6092 = vld [vmem:[%s5 + $0x7e4] sm:$0xf]
        %v6093 = vld [vmem:[%s5 + $0x7e8] sm:$0xf]
        %v6094 = vld [vmem:[%s5 + $0x7ec] sm:$0xf]
        %v6095 = vld [vmem:[%s5 + $0x7f0] sm:$0xf]
        %v6096 = vld [vmem:[%s5 + $0x7f4] sm:$0xf]
        %v6097 = vld [vmem:[%s5 + $0x7f8] sm:$0xf]
        %v6098 = vld [vmem:[%s5 + $0x7fc] sm:$0xf]
        %v6099 = vld [vmem:[%s5 + $0x800] sm:$0xf]
        %v6100 = vld [vmem:[%s5 + $0x804] sm:$0xf]
        %v6101 = vld [vmem:[%s5 + $0x808] sm:$0xf]
        %v6102 = vld [vmem:[%s5 + $0x80c] sm:$0xf]
        %v6103 = vld [vmem:[%s5 + $0x810] sm:$0xf]
        %v6104 = vld [vmem:[%s5 + $0x814] sm:$0xf]
        %v6105 = vld [vmem:[%s5 + $0x818] sm:$0xf]
        %v6106 = vld [vmem:[%s5 + $0x81c] sm:$0xf]
        %v6107 = vld [vmem:[%s5 + $0x820] sm:$0xf]
        %v6108 = vld [vmem:[%s5 + $0x824] sm:$0xf]
        %v6109 = vld [vmem:[%s5 + $0x828] sm:$0xf]
        %v6110 = vld [vmem:[%s5 + $0x82c] sm:$0xf]
        %v6111 = vld [vmem:[%s5 + $0x830] sm:$0xf]
        %v6112 = vld [vmem:[%s5 + $0x834] sm:$0xf]
        %v6113 = vld [vmem:[%s5 + $0x838] sm:$0xf]
        %v6114 = vld [vmem:[%s5 + $0x83c] sm:$0xf]
        %v6115 = vld [vmem:[%s5 + $0x840] sm:$0xf]
        %v6116 = vld [vmem:[%s5 + $0x844] sm:$0xf]
        %v6117 = vld [vmem:[%s5 + $0x848] sm:$0xf]
        %v6118 = vld [vmem:[%s5 + $0x84c] sm:$0xf]
        %v6119 = vld [vmem:[%s5 + $0x850] sm:$0xf]
        %v6120 = vld [vmem:[%s5 + $0x854] sm:$0xf]
        %v6121 = vld [vmem:[%s5 + $0x858] sm:$0xf]
        %v6122 = vld [vmem:[%s5 + $0x85c] sm:$0xf]
        %v6123 = vld [vmem:[%s5 + $0x860] sm:$0xf]
        %v6124 = vld [vmem:[%s5 + $0x864] sm:$0xf]
        %v6125 = vld [vmem:[%s5 + $0x868] sm:$0xf]
        %v6126 = vld [vmem:[%s5 + $0x86c] sm:$0xf]
        %v6127 = vld [vmem:[%s5 + $0x870] sm:$0xf]
        %v6128 = vld [vmem:[%s5 + $0x874] sm:$0xf]
        %v6129 = vld [vmem:[%s5 + $0x878] sm:$0xf]
        %v6130 = vld [vmem:[%s5 + $0x87c] sm:$0xf]
        %v6131 = vld [vmem:[%s5 + $0x880] sm:$0xf]
        %v6132 = vld [vmem:[%s5 + $0x884] sm:$0xf]
        %v6133 = vld [vmem:[%s5 + $0x888] sm:$0xf]
        %v6134 = vld [vmem:[%s5 + $0x88c] sm:$0xf]
        %v6135 = vld [vmem:[%s5 + $0x890] sm:$0xf]
        %v6136 = vld [vmem:[%s5 + $0x894] sm:$0xf]
        %v6137 = vld [vmem:[%s5 + $0x898] sm:$0xf]
        %v6138 = vld [vmem:[%s5 + $0x89c] sm:$0xf]
        %v6139 = vld [vmem:[%s5 + $0x8a0] sm:$0xf]
        %v6140 = vld [vmem:[%s5 + $0x8a4] sm:$0xf]
        %v6141 = vld [vmem:[%s5 + $0x8a8] sm:$0xf]
        %v6142 = vld [vmem:[%s5 + $0x8ac] sm:$0xf]
        %v6143 = vld [vmem:[%s5 + $0x8b0] sm:$0xf]
        %v6144 = vld [vmem:[%s5 + $0x8b4] sm:$0xf]
        %v6145 = vld [vmem:[%s5 + $0x8b8] sm:$0xf]
        %v6146 = vld [vmem:[%s5 + $0x8bc] sm:$0xf]
        %v6147 = vld [vmem:[%s5 + $0x8c0] sm:$0xf]
        %v6148 = vld [vmem:[%s5 + $0x8c4] sm:$0xf]
        %v6149 = vld [vmem:[%s5 + $0x8c8] sm:$0xf]
        %v6150 = vld [vmem:[%s5 + $0x8cc] sm:$0xf]
        %v6151 = vld [vmem:[%s5 + $0x8d0] sm:$0xf]
        %v6152 = vld [vmem:[%s5 + $0x8d4] sm:$0xf]
        %v6153 = vld [vmem:[%s5 + $0x8d8] sm:$0xf]
        %v6154 = vld [vmem:[%s5 + $0x8dc] sm:$0xf]
        %v6155 = vld [vmem:[%s5 + $0x8e0] sm:$0xf]
        %v6156 = vld [vmem:[%s5 + $0x8e4] sm:$0xf]
        %v6157 = vld [vmem:[%s5 + $0x8e8] sm:$0xf]
        %v6158 = vld [vmem:[%s5 + $0x8ec] sm:$0xf]
        %v6159 = vld [vmem:[%s5 + $0x8f0] sm:$0xf]
        %v6160 = vld [vmem:[%s5 + $0x8f4] sm:$0xf]
        %v6161 = vld [vmem:[%s5 + $0x8f8] sm:$0xf]
        %v6162 = vld [vmem:[%s5 + $0x8fc] sm:$0xf]
        %v6163 = vld [vmem:[%s5 + $0x900] sm:$0xf]
        %v6164 = vld [vmem:[%s5 + $0x904] sm:$0xf]
        %v6165 = vld [vmem:[%s5 + $0x908] sm:$0xf]
        %v6166 = vld [vmem:[%s5 + $0x90c] sm:$0xf]
        %v6167 = vld [vmem:[%s5 + $0x910] sm:$0xf]
        %v6168 = vld [vmem:[%s5 + $0x914] sm:$0xf]
        %v6169 = vld [vmem:[%s5 + $0x918] sm:$0xf]
        %v6170 = vld [vmem:[%s5 + $0x91c] sm:$0xf]
        %v6171 = vld [vmem:[%s5 + $0x920] sm:$0xf]
        %v6172 = vld [vmem:[%s5 + $0x924] sm:$0xf]
        %v6173 = vld [vmem:[%s5 + $0x928] sm:$0xf]
        %v6174 = vld [vmem:[%s5 + $0x92c] sm:$0xf]
        %v6175 = vld [vmem:[%s5 + $0x930] sm:$0xf]
        %v6176 = vld [vmem:[%s5 + $0x934] sm:$0xf]
        %v6177 = vld [vmem:[%s5 + $0x938] sm:$0xf]
        %v6178 = vld [vmem:[%s5 + $0x93c] sm:$0xf]
        %v6179 = vld [vmem:[%s5 + $0x940] sm:$0xf]
        %v6180 = vld [vmem:[%s5 + $0x944] sm:$0xf]
        %v6181 = vld [vmem:[%s5 + $0x948] sm:$0xf]
        %v6182 = vld [vmem:[%s5 + $0x94c] sm:$0xf]
        %v6183 = vld [vmem:[%s5 + $0x950] sm:$0xf]
        %v6184 = vld [vmem:[%s5 + $0x954] sm:$0xf]
        %v6185 = vld [vmem:[%s5 + $0x958] sm:$0xf]
        %v6186 = vld [vmem:[%s5 + $0x95c] sm:$0xf]
        %v6187 = vld [vmem:[%s5 + $0x960] sm:$0xf]
        %v6188 = vld [vmem:[%s5 + $0x964] sm:$0xf]
        %v6189 = vld [vmem:[%s5 + $0x968] sm:$0xf]
        %v6190 = vld [vmem:[%s5 + $0x96c] sm:$0xf]
        %v6191 = vld [vmem:[%s5 + $0x970] sm:$0xf]
        %v6192 = vld [vmem:[%s5 + $0x974] sm:$0xf]
        %v6193 = vld [vmem:[%s5 + $0x978] sm:$0xf]
        %v6194 = vld [vmem:[%s5 + $0x97c] sm:$0xf]
        %v6195 = vld [vmem:[%s5 + $0x980] sm:$0xf]
        %v6196 = vld [vmem:[%s5 + $0x984] sm:$0xf]
        %v6197 = vld [vmem:[%s5 + $0x988] sm:$0xf]
        %v6198 = vld [vmem:[%s5 + $0x98c] sm:$0xf]
        %v6199 = vld [vmem:[%s5 + $0x990] sm:$0xf]
        %v6200 = vld [vmem:[%s5 + $0x994] sm:$0xf]
        %v6201 = vld [vmem:[%s5 + $0x998] sm:$0xf]
        %v6202 = vld [vmem:[%s5 + $0x99c] sm:$0xf]
        %v6203 = vld [vmem:[%s5 + $0x9a0] sm:$0xf]
        %v6204 = vld [vmem:[%s5 + $0x9a4] sm:$0xf]
        %v6205 = vld [vmem:[%s5 + $0x9a8] sm:$0xf]
        %v6206 = vld [vmem:[%s5 + $0x9ac] sm:$0xf]
        %v6207 = vld [vmem:[%s5 + $0x9b0] sm:$0xf]
        %v6208 = vld [vmem:[%s5 + $0x9b4] sm:$0xf]
        %v6209 = vld [vmem:[%s5 + $0x9b8] sm:$0xf]
        %v6210 = vld [vmem:[%s5 + $0x9bc] sm:$0xf]
        %v6211 = vld [vmem:[%s5 + $0x9c0] sm:$0xf]
        %v6212 = vld [vmem:[%s5 + $0x9c4] sm:$0xf]
        %v6213 = vld [vmem:[%s5 + $0x9c8] sm:$0xf]
        %v6214 = vld [vmem:[%s5 + $0x9cc] sm:$0xf]
        %v6215 = vld [vmem:[%s5 + $0x9d0] sm:$0xf]
        %v6216 = vld [vmem:[%s5 + $0x9d4] sm:$0xf]
        %v6217 = vld [vmem:[%s5 + $0x9d8] sm:$0xf]
        %v6218 = vld [vmem:[%s5 + $0x9dc] sm:$0xf]
        %v6219 = vld [vmem:[%s5 + $0x9e0] sm:$0xf]
        %v6220 = vld [vmem:[%s5 + $0x9e4] sm:$0xf]
        %v6221 = vld [vmem:[%s5 + $0x9e8] sm:$0xf]
        %v6222 = vld [vmem:[%s5 + $0x9ec] sm:$0xf]
        %v6223 = vld [vmem:[%s5 + $0x9f0] sm:$0xf]
        %v6224 = vld [vmem:[%s5 + $0x9f4] sm:$0xf]
        %v6225 = vld [vmem:[%s5 + $0x9f8] sm:$0xf]
        %v6226 = vld [vmem:[%s5 + $0x9fc] sm:$0xf]
        %v6227 = vld [vmem:[%s5 + $0xa00] sm:$0xf]
        %v6228 = vld [vmem:[%s5 + $0xa04] sm:$0xf]
        %v6229 = vld [vmem:[%s5 + $0xa08] sm:$0xf]
        %v6230 = vld [vmem:[%s5 + $0xa0c] sm:$0xf]
        %v6231 = vld [vmem:[%s5 + $0xa10] sm:$0xf]
        %v6232 = vld [vmem:[%s5 + $0xa14] sm:$0xf]
        %v6233 = vld [vmem:[%s5 + $0xa18] sm:$0xf]
        %v6234 = vld [vmem:[%s5 + $0xa1c] sm:$0xf]
        %v6235 = vld [vmem:[%s5 + $0xa20] sm:$0xf]
        %v6236 = vld [vmem:[%s5 + $0xa24] sm:$0xf]
        %v6237 = vld [vmem:[%s5 + $0xa28] sm:$0xf]
        %v6238 = vld [vmem:[%s5 + $0xa2c] sm:$0xf]
        %v6239 = vld [vmem:[%s5 + $0xa30] sm:$0xf]
        %v6240 = vld [vmem:[%s5 + $0xa34] sm:$0xf]
        %v6241 = vld [vmem:[%s5 + $0xa38] sm:$0xf]
        %v6242 = vld [vmem:[%s5 + $0xa3c] sm:$0xf]
        %v6243 = vld [vmem:[%s5 + $0xa40] sm:$0xf]
        %v6244 = vld [vmem:[%s5 + $0xa44] sm:$0xf]
        %v6245 = vld [vmem:[%s5 + $0xa48] sm:$0xf]
        %v6246 = vld [vmem:[%s5 + $0xa4c] sm:$0xf]
        %v6247 = vld [vmem:[%s5 + $0xa50] sm:$0xf]
        %v6248 = vld [vmem:[%s5 + $0xa54] sm:$0xf]
        %v6249 = vld [vmem:[%s5 + $0xa58] sm:$0xf]
        %v6250 = vld [vmem:[%s5 + $0xa5c] sm:$0xf]
        %v6251 = vld [vmem:[%s5 + $0xa60] sm:$0xf]
        %v6252 = vld [vmem:[%s5 + $0xa64] sm:$0xf]
        %v6253 = vld [vmem:[%s5 + $0xa68] sm:$0xf]
        %v6254 = vld [vmem:[%s5 + $0xa6c] sm:$0xf]
        %v6255 = vld [vmem:[%s5 + $0xa70] sm:$0xf]
        %v6256 = vld [vmem:[%s5 + $0xa74] sm:$0xf]
        %v6257 = vld [vmem:[%s5 + $0xa78] sm:$0xf]
        %v6258 = vld [vmem:[%s5 + $0xa7c] sm:$0xf]
        %v6259 = vld [vmem:[%s5 + $0xa80] sm:$0xf]
        %v6260 = vld [vmem:[%s5 + $0xa84] sm:$0xf]
        %v6261 = vld [vmem:[%s5 + $0xa88] sm:$0xf]
        %v6262 = vld [vmem:[%s5 + $0xa8c] sm:$0xf]
        %v6263 = vld [vmem:[%s5 + $0xa90] sm:$0xf]
        %v6264 = vld [vmem:[%s5 + $0xa94] sm:$0xf]
        %v6265 = vld [vmem:[%s5 + $0xa98] sm:$0xf]
        %v6266 = vld [vmem:[%s5 + $0xa9c] sm:$0xf]
        %v6267 = vld [vmem:[%s5 + $0xaa0] sm:$0xf]
        %v6268 = vld [vmem:[%s5 + $0xaa4] sm:$0xf]
        %v6269 = vld [vmem:[%s5 + $0xaa8] sm:$0xf]
        %v6270 = vld [vmem:[%s5 + $0xaac] sm:$0xf]
        %v6271 = vld [vmem:[%s5 + $0xab0] sm:$0xf]
        %v6272 = vld [vmem:[%s5 + $0xab4] sm:$0xf]
        %v6273 = vld [vmem:[%s5 + $0xab8] sm:$0xf]
        %v6274 = vld [vmem:[%s5 + $0xabc] sm:$0xf]
        %v6275 = vld [vmem:[%s5 + $0xac0] sm:$0xf]
        %v6276 = vld [vmem:[%s5 + $0xac4] sm:$0xf]
        %v6277 = vld [vmem:[%s5 + $0xac8] sm:$0xf]
        %v6278 = vld [vmem:[%s5 + $0xacc] sm:$0xf]
        %v6279 = vld [vmem:[%s5 + $0xad0] sm:$0xf]
        %v6280 = vld [vmem:[%s5 + $0xad4] sm:$0xf]
        %v6281 = vld [vmem:[%s5 + $0xad8] sm:$0xf]
        %v6282 = vld [vmem:[%s5 + $0xadc] sm:$0xf]
        %v6283 = vld [vmem:[%s5 + $0xae0] sm:$0xf]
        %v6284 = vld [vmem:[%s5 + $0xae4] sm:$0xf]
        %v6285 = vld [vmem:[%s5 + $0xae8] sm:$0xf]
        %v6286 = vld [vmem:[%s5 + $0xaec] sm:$0xf]
        %v6287 = vld [vmem:[%s5 + $0xaf0] sm:$0xf]
        %v6288 = vld [vmem:[%s5 + $0xaf4] sm:$0xf]
        %v6289 = vld [vmem:[%s5 + $0xaf8] sm:$0xf]
        %v6290 = vld [vmem:[%s5 + $0xafc] sm:$0xf]
        %v6291 = vld [vmem:[%s5 + $0xb00] sm:$0xf]
        %v6292 = vld [vmem:[%s5 + $0xb04] sm:$0xf]
        %v6293 = vld [vmem:[%s5 + $0xb08] sm:$0xf]
        %v6294 = vld [vmem:[%s5 + $0xb0c] sm:$0xf]
        %v6295 = vld [vmem:[%s5 + $0xb10] sm:$0xf]
        %v6296 = vld [vmem:[%s5 + $0xb14] sm:$0xf]
        %v6297 = vld [vmem:[%s5 + $0xb18] sm:$0xf]
        %v6298 = vld [vmem:[%s5 + $0xb1c] sm:$0xf]
        %v6299 = vld [vmem:[%s5 + $0xb20] sm:$0xf]
        %v6300 = vld [vmem:[%s5 + $0xb24] sm:$0xf]
        %v6301 = vld [vmem:[%s5 + $0xb28] sm:$0xf]
        %v6302 = vld [vmem:[%s5 + $0xb2c] sm:$0xf]
        %v6303 = vld [vmem:[%s5 + $0xb30] sm:$0xf]
        %v6304 = vld [vmem:[%s5 + $0xb34] sm:$0xf]
        %v6305 = vld [vmem:[%s5 + $0xb38] sm:$0xf]
        %v6306 = vld [vmem:[%s5 + $0xb3c] sm:$0xf]
        %v6307 = vld [vmem:[%s5 + $0xb40] sm:$0xf]
        %v6308 = vld [vmem:[%s5 + $0xb44] sm:$0xf]
        %v6309 = vld [vmem:[%s5 + $0xb48] sm:$0xf]
        %v6310 = vld [vmem:[%s5 + $0xb4c] sm:$0xf]
        %v6311 = vld [vmem:[%s5 + $0xb50] sm:$0xf]
        %v6312 = vld [vmem:[%s5 + $0xb54] sm:$0xf]
        %v6313 = vld [vmem:[%s5 + $0xb58] sm:$0xf]
        %v6314 = vld [vmem:[%s5 + $0xb5c] sm:$0xf]
        %v6315 = vld [vmem:[%s5 + $0xb60] sm:$0xf]
        %v6316 = vld [vmem:[%s5 + $0xb64] sm:$0xf]
        %v6317 = vld [vmem:[%s5 + $0xb68] sm:$0xf]
        %v6318 = vld [vmem:[%s5 + $0xb6c] sm:$0xf]
        %v6319 = vld [vmem:[%s5 + $0xb70] sm:$0xf]
        %v6320 = vld [vmem:[%s5 + $0xb74] sm:$0xf]
        %v6321 = vld [vmem:[%s5 + $0xb78] sm:$0xf]
        %v6322 = vld [vmem:[%s5 + $0xb7c] sm:$0xf]
        %v6323 = vld [vmem:[%s5 + $0xb80] sm:$0xf]
        %v6324 = vld [vmem:[%s5 + $0xb84] sm:$0xf]
        %v6325 = vld [vmem:[%s5 + $0xb88] sm:$0xf]
        %v6326 = vld [vmem:[%s5 + $0xb8c] sm:$0xf]
        %v6327 = vld [vmem:[%s5 + $0xb90] sm:$0xf]
        %v6328 = vld [vmem:[%s5 + $0xb94] sm:$0xf]
        %v6329 = vld [vmem:[%s5 + $0xb98] sm:$0xf]
        %v6330 = vld [vmem:[%s5 + $0xb9c] sm:$0xf]
        %v6331 = vld [vmem:[%s5 + $0xba0] sm:$0xf]
        %v6332 = vld [vmem:[%s5 + $0xba4] sm:$0xf]
        %v6333 = vld [vmem:[%s5 + $0xba8] sm:$0xf]
        %v6334 = vld [vmem:[%s5 + $0xbac] sm:$0xf]
        %v6335 = vld [vmem:[%s5 + $0xbb0] sm:$0xf]
        %v6336 = vld [vmem:[%s5 + $0xbb4] sm:$0xf]
        %v6337 = vld [vmem:[%s5 + $0xbb8] sm:$0xf]
        %v6338 = vld [vmem:[%s5 + $0xbbc] sm:$0xf]
        %v6339 = vld [vmem:[%s5 + $0xbc0] sm:$0xf]
        %v6340 = vld [vmem:[%s5 + $0xbc4] sm:$0xf]
        %v6341 = vld [vmem:[%s5 + $0xbc8] sm:$0xf]
        %v6342 = vld [vmem:[%s5 + $0xbcc] sm:$0xf]
        %v6343 = vld [vmem:[%s5 + $0xbd0] sm:$0xf]
        %v6344 = vld [vmem:[%s5 + $0xbd4] sm:$0xf]
        %v6345 = vld [vmem:[%s5 + $0xbd8] sm:$0xf]
        %v6346 = vld [vmem:[%s5 + $0xbdc] sm:$0xf]
        %v6347 = vld [vmem:[%s5 + $0xbe0] sm:$0xf]
        %v6348 = vld [vmem:[%s5 + $0xbe4] sm:$0xf]
        %v6349 = vld [vmem:[%s5 + $0xbe8] sm:$0xf]
        %v6350 = vld [vmem:[%s5 + $0xbec] sm:$0xf]
        %v6351 = vld [vmem:[%s5 + $0xbf0] sm:$0xf]
        %v6352 = vld [vmem:[%s5 + $0xbf4] sm:$0xf]
        %v6353 = vld [vmem:[%s5 + $0xbf8] sm:$0xf]
        %v6354 = vld [vmem:[%s5 + $0xbfc] sm:$0xf]
        %v6355 = vld [vmem:[%s6] sm:$0x1]
        %6357 = vst [vmem:[#allocation1] ss:$9 sm:$0xff] %v5581
        %v6358 = vld [vmem:[#allocation1] sm:$0xff]
        %v6359 = vld [vmem:[#allocation1 + $0x9] sm:$0xff]
        %v6360 = vld [vmem:[#allocation1 + $0x12] sm:$0xff]
        %v6361 = vld [vmem:[#allocation1 + $0x1b] sm:$0xff]
        %v6362 = vld [vmem:[#allocation1 + $0x24] sm:$0xff]
        %v6363 = vld [vmem:[#allocation1 + $0x2d] sm:$0xff]
        %v6364 = vld [vmem:[#allocation1 + $0x36] sm:$0xff]
        %v6365 = vld [vmem:[#allocation1 + $0x3f] sm:$0xff]
        %6367 = vst [vmem:[#allocation1] ss:$9 sm:$0xff] %v5582
        %v6368 = vld [vmem:[#allocation1] sm:$0xff]
        %v6369 = vld [vmem:[#allocation1 + $0x9] sm:$0xff]
        %v6370 = vld [vmem:[#allocation1 + $0x12] sm:$0xff]
        %v6371 = vld [vmem:[#allocation1 + $0x1b] sm:$0xff]
        %v6372 = vld [vmem:[#allocation1 + $0x24] sm:$0xff]
        %v6373 = vld [vmem:[#allocation1 + $0x2d] sm:$0xff]
        %v6374 = vld [vmem:[#allocation1 + $0x36] sm:$0xff]
        %v6375 = vld [vmem:[#allocation1 + $0x3f] sm:$0xff]
        %6377 = vst [vmem:[#allocation1] ss:$9 sm:$0xff] %v5583
        %v6378 = vld [vmem:[#allocation1] sm:$0xff]
        %v6379 = vld [vmem:[#allocation1 + $0x9] sm:$0xff]
        %v6380 = vld [vmem:[#allocation1 + $0x12] sm:$0xff]
        %v6381 = vld [vmem:[#allocation1 + $0x1b] sm:$0xff]
        %v6382 = vld [vmem:[#allocation1 + $0x24] sm:$0xff]
        %v6383 = vld [vmem:[#allocation1 + $0x2d] sm:$0xff]
        %v6384 = vld [vmem:[#allocation1 + $0x36] sm:$0xff]
        %v6385 = vld [vmem:[#allocation1 + $0x3f] sm:$0xff]
        %6387 = vst [vmem:[#allocation1] ss:$9 sm:$0xff] %v5584
        %v6388 = vld [vmem:[#allocation1] sm:$0xff]
        %v6389 = vld [vmem:[#allocation1 + $0x9] sm:$0xff]
        %v6390 = vld [vmem:[#allocation1 + $0x12] sm:$0xff]
        %v6391 = vld [vmem:[#allocation1 + $0x1b] sm:$0xff]
        %v6392 = vld [vmem:[#allocation1 + $0x24] sm:$0xff]
        %v6393 = vld [vmem:[#allocation1 + $0x2d] sm:$0xff]
        %v6394 = vld [vmem:[#allocation1 + $0x36] sm:$0xff]
        %v6395 = vld [vmem:[#allocation1 + $0x3f] sm:$0xff]
        %6397 = vst [vmem:[#allocation1] ss:$9 sm:$0xff] %v5585
        %v6398 = vld [vmem:[#allocation1] sm:$0xff]
        %v6399 = vld [vmem:[#allocation1 + $0x9] sm:$0xff]
        %v6400 = vld [vmem:[#allocation1 + $0x12] sm:$0xff]
        %v6401 = vld [vmem:[#allocation1 + $0x1b] sm:$0xff]
        %v6402 = vld [vmem:[#allocation1 + $0x24] sm:$0xff]
        %v6403 = vld [vmem:[#allocation1 + $0x2d] sm:$0xff]
        %v6404 = vld [vmem:[#allocation1 + $0x36] sm:$0xff]
        %v6405 = vld [vmem:[#allocation1 + $0x3f] sm:$0xff]
        %6407 = vst [vmem:[#allocation1] ss:$9 sm:$0xff] %v5586
        %v6408 = vld [vmem:[#allocation1] sm:$0xff]
        %v6409 = vld [vmem:[#allocation1 + $0x9] sm:$0xff]
        %v6410 = vld [vmem:[#allocation1 + $0x12] sm:$0xff]
        %v6411 = vld [vmem:[#allocation1 + $0x1b] sm:$0xff]
        %v6412 = vld [vmem:[#allocation1 + $0x24] sm:$0xff]
        %v6413 = vld [vmem:[#allocation1 + $0x2d] sm:$0xff]
        %v6414 = vld [vmem:[#allocation1 + $0x36] sm:$0xff]
        %v6415 = vld [vmem:[#allocation1 + $0x3f] sm:$0xff]
        %v7232 = vunpack.c.l.b16 %v5587
        %v7233 = vunpack.c.l.b16 %v5588
        %v7234 = vunpack.c.l.b16 %v5589
        %v7235 = vunpack.c.l.b16 %v5590
        %v7236 = vunpack.c.l.b16 %v5591
        %v7237 = vunpack.c.l.b16 %v5592
        %v7238 = vunpack.c.l.b16 %v5593
        %v7239 = vunpack.c.l.b16 %v5594
        %v7240 = vunpack.c.l.b16 %v5595
        %v7241 = vunpack.c.l.b16 %v5596
        %v7242 = vunpack.c.l.b16 %v5597
        %v7243 = vunpack.c.l.b16 %v5598
        %v7244 = vunpack.c.l.b16 %v5599
        %v7245 = vunpack.c.l.b16 %v5600
        %v7246 = vunpack.c.l.b16 %v5601
        %v7247 = vunpack.c.l.b16 %v5602
        %v7248 = vunpack.c.l.b16 %v5603
        %v7249 = vunpack.c.l.b16 %v5604
        %v7250 = vunpack.c.l.b16 %v5605
        %v7251 = vunpack.c.l.b16 %v5606
        %v7252 = vunpack.c.l.b16 %v5607
        %v7253 = vunpack.c.l.b16 %v5608
        %v7254 = vunpack.c.l.b16 %v5609
        %v7255 = vunpack.c.l.b16 %v5610
        %v7256 = vunpack.c.l.b16 %v5611
        %v7257 = vunpack.c.l.b16 %v5612
        %v7258 = vunpack.c.l.b16 %v5613
        %v7259 = vunpack.c.l.b16 %v5614
        %v7260 = vunpack.c.l.b16 %v5615
        %v7261 = vunpack.c.l.b16 %v5616
        %v7262 = vunpack.c.l.b16 %v5617
        %v7263 = vunpack.c.l.b16 %v5618
        %v7264 = vunpack.c.l.b16 %v5619
        %v7265 = vunpack.c.l.b16 %v5620
        %v7266 = vunpack.c.l.b16 %v5621
        %v7267 = vunpack.c.l.b16 %v5622
        %v7268 = vunpack.c.l.b16 %v5623
        %v7269 = vunpack.c.l.b16 %v5624
        %v7270 = vunpack.c.l.b16 %v5625
        %v7271 = vunpack.c.l.b16 %v5626
        %v7272 = vunpack.c.l.b16 %v5627
        %v7273 = vunpack.c.l.b16 %v5628
        %v7274 = vunpack.c.l.b16 %v5629
        %v7275 = vunpack.c.l.b16 %v5630
        %v7276 = vunpack.c.l.b16 %v5631
        %v7277 = vunpack.c.l.b16 %v5632
        %v7278 = vunpack.c.l.b16 %v5633
        %v7279 = vunpack.c.l.b16 %v5634
        %v7280 = vunpack.c.l.b16 %v5635
        %v7281 = vunpack.c.l.b16 %v5636
        %v7282 = vunpack.c.l.b16 %v5637
        %v7283 = vunpack.c.l.b16 %v5638
        %v7284 = vunpack.c.l.b16 %v5639
        %v7285 = vunpack.c.l.b16 %v5640
        %v7286 = vunpack.c.l.b16 %v5641
        %v7287 = vunpack.c.l.b16 %v5642
        %v7288 = vunpack.c.l.b16 %v5643
        %v7289 = vunpack.c.l.b16 %v5644
        %v7290 = vunpack.c.l.b16 %v5645
        %v7291 = vunpack.c.l.b16 %v5646
        %v7292 = vunpack.c.l.b16 %v5647
        %v7293 = vunpack.c.l.b16 %v5648
        %v7294 = vunpack.c.l.b16 %v5649
        %v7295 = vunpack.c.l.b16 %v5650
        %v7296 = vunpack.c.l.b16 %v5651
        %v7297 = vunpack.c.l.b16 %v5652
        %v7298 = vunpack.c.l.b16 %v5653
        %v7299 = vunpack.c.l.b16 %v5654
        %v7300 = vunpack.c.l.b16 %v5655
        %v7301 = vunpack.c.l.b16 %v5656
        %v7302 = vunpack.c.l.b16 %v5657
        %v7303 = vunpack.c.l.b16 %v5658
        %v7304 = vunpack.c.l.b16 %v5659
        %v7305 = vunpack.c.l.b16 %v5660
        %v7306 = vunpack.c.l.b16 %v5661
        %v7307 = vunpack.c.l.b16 %v5662
        %v7308 = vunpack.c.l.b16 %v5663
        %v7309 = vunpack.c.l.b16 %v5664
        %v7310 = vunpack.c.l.b16 %v5665
        %v7311 = vunpack.c.l.b16 %v5666
        %v7312 = vunpack.c.l.b16 %v5667
        %v7313 = vunpack.c.l.b16 %v5668
        %v7314 = vunpack.c.l.b16 %v5669
        %v7315 = vunpack.c.l.b16 %v5670
        %v7316 = vunpack.c.l.b16 %v5671
        %v7317 = vunpack.c.l.b16 %v5672
        %v7318 = vunpack.c.l.b16 %v5673
        %v7319 = vunpack.c.l.b16 %v5674
        %v7320 = vunpack.c.l.b16 %v5675
        %v7321 = vunpack.c.l.b16 %v5676
        %v7322 = vunpack.c.l.b16 %v5677
        %v7323 = vunpack.c.l.b16 %v5678
        %v7324 = vunpack.c.l.b16 %v5679
        %v7325 = vunpack.c.l.b16 %v5680
        %v7326 = vunpack.c.l.b16 %v5681
        %v7327 = vunpack.c.l.b16 %v5682
        %v7328 = vunpack.c.l.b16 %v5683
        %v7329 = vunpack.c.l.b16 %v5684
        %v7330 = vunpack.c.l.b16 %v5685
        %v7331 = vunpack.c.l.b16 %v5686
        %v7332 = vunpack.c.l.b16 %v5687
        %v7333 = vunpack.c.l.b16 %v5688
        %v7334 = vunpack.c.l.b16 %v5689
        %v7335 = vunpack.c.l.b16 %v5690
        %v7336 = vunpack.c.l.b16 %v5691
        %v7337 = vunpack.c.l.b16 %v5692
        %v7338 = vunpack.c.l.b16 %v5693
        %v7339 = vunpack.c.l.b16 %v5694
        %v7340 = vunpack.c.l.b16 %v5695
        %v7341 = vunpack.c.l.b16 %v5696
        %v7342 = vunpack.c.l.b16 %v5697
        %v7343 = vunpack.c.l.b16 %v5698
        %v7344 = vunpack.c.l.b16 %v5699
        %v7345 = vunpack.c.l.b16 %v5700
        %v7346 = vunpack.c.l.b16 %v5701
        %v7347 = vunpack.c.l.b16 %v5702
        %v7348 = vunpack.c.l.b16 %v5703
        %v7349 = vunpack.c.l.b16 %v5704
        %v7350 = vunpack.c.l.b16 %v5705
        %v7351 = vunpack.c.l.b16 %v5706
        %v7352 = vunpack.c.l.b16 %v5707
        %v7353 = vunpack.c.l.b16 %v5708
        %v7354 = vunpack.c.l.b16 %v5709
        %v7355 = vunpack.c.l.b16 %v5710
        %v7356 = vunpack.c.l.b16 %v5711
        %v7357 = vunpack.c.l.b16 %v5712
        %v7358 = vunpack.c.l.b16 %v5713
        %v7359 = vunpack.c.l.b16 %v5714
        %v7360 = vunpack.c.l.b16 %v5715
        %v7361 = vunpack.c.l.b16 %v5716
        %v7362 = vunpack.c.l.b16 %v5717
        %v7363 = vunpack.c.l.b16 %v5718
        %v7364 = vunpack.c.l.b16 %v5719
        %v7365 = vunpack.c.l.b16 %v5720
        %v7366 = vunpack.c.l.b16 %v5721
        %v7367 = vunpack.c.l.b16 %v5722
        %v7368 = vunpack.c.l.b16 %v5723
        %v7369 = vunpack.c.l.b16 %v5724
        %v7370 = vunpack.c.l.b16 %v5725
        %v7371 = vunpack.c.l.b16 %v5726
        %v7372 = vunpack.c.l.b16 %v5727
        %v7373 = vunpack.c.l.b16 %v5728
        %v7374 = vunpack.c.l.b16 %v5729
        %v7375 = vunpack.c.l.b16 %v5730
        %v7376 = vunpack.c.l.b16 %v5731
        %v7377 = vunpack.c.l.b16 %v5732
        %v7378 = vunpack.c.l.b16 %v5733
        %v7379 = vunpack.c.l.b16 %v5734
        %v7380 = vunpack.c.l.b16 %v5735
        %v7381 = vunpack.c.l.b16 %v5736
        %v7382 = vunpack.c.l.b16 %v5737
        %v7383 = vunpack.c.l.b16 %v5738
        %v7384 = vunpack.c.l.b16 %v5739
        %v7385 = vunpack.c.l.b16 %v5740
        %v7386 = vunpack.c.l.b16 %v5741
        %v7387 = vunpack.c.l.b16 %v5742
        %v7388 = vunpack.c.l.b16 %v5743
        %v7389 = vunpack.c.l.b16 %v5744
        %v7390 = vunpack.c.l.b16 %v5745
        %v7391 = vunpack.c.l.b16 %v5746
        %v7392 = vunpack.c.l.b16 %v5747
        %v7393 = vunpack.c.l.b16 %v5748
        %v7394 = vunpack.c.l.b16 %v5749
        %v7395 = vunpack.c.l.b16 %v5750
        %v7396 = vunpack.c.l.b16 %v5751
        %v7397 = vunpack.c.l.b16 %v5752
        %v7398 = vunpack.c.l.b16 %v5753
        %v7399 = vunpack.c.l.b16 %v5754
        %v7400 = vunpack.c.l.b16 %v5755
        %v7401 = vunpack.c.l.b16 %v5756
        %v7402 = vunpack.c.l.b16 %v5757
        %v7403 = vunpack.c.l.b16 %v5758
        %v7404 = vunpack.c.l.b16 %v5759
        %v7405 = vunpack.c.l.b16 %v5760
        %v7406 = vunpack.c.l.b16 %v5761
        %v7407 = vunpack.c.l.b16 %v5762
        %v7408 = vunpack.c.l.b16 %v5763
        %v7409 = vunpack.c.l.b16 %v5764
        %v7410 = vunpack.c.l.b16 %v5765
        %v7411 = vunpack.c.l.b16 %v5766
        %v7412 = vunpack.c.l.b16 %v5767
        %v7413 = vunpack.c.l.b16 %v5768
        %v7414 = vunpack.c.l.b16 %v5769
        %v7415 = vunpack.c.l.b16 %v5770
        %v7416 = vunpack.c.l.b16 %v5771
        %v7417 = vunpack.c.l.b16 %v5772
        %v7418 = vunpack.c.l.b16 %v5773
        %v7419 = vunpack.c.l.b16 %v5774
        %v7420 = vunpack.c.l.b16 %v5775
        %v7421 = vunpack.c.l.b16 %v5776
        %v7422 = vunpack.c.l.b16 %v5777
        %v7423 = vunpack.c.l.b16 %v5778
        %v7424 = vunpack.c.l.b16 %v5779
        %v7425 = vunpack.c.l.b16 %v5780
        %v7426 = vunpack.c.l.b16 %v5781
        %v7427 = vunpack.c.l.b16 %v5782
        %v7428 = vunpack.c.l.b16 %v5783
        %v7429 = vunpack.c.l.b16 %v5784
        %v7430 = vunpack.c.l.b16 %v5785
        %v7431 = vunpack.c.l.b16 %v5786
        %v7432 = vunpack.c.l.b16 %v5787
        %v7433 = vunpack.c.l.b16 %v5788
        %v7434 = vunpack.c.l.b16 %v5789
        %v7435 = vunpack.c.l.b16 %v5790
        %v7436 = vunpack.c.l.b16 %v5791
        %v7437 = vunpack.c.l.b16 %v5792
        %v7438 = vunpack.c.l.b16 %v5793
        %v7439 = vunpack.c.l.b16 %v5794
        %v7440 = vunpack.c.l.b16 %v5795
        %v7441 = vunpack.c.l.b16 %v5796
        %v7442 = vunpack.c.l.b16 %v5797
        %v7443 = vunpack.c.l.b16 %v5798
        %v7444 = vunpack.c.l.b16 %v5799
        %v7445 = vunpack.c.l.b16 %v5800
        %v7446 = vunpack.c.l.b16 %v5801
        %v7447 = vunpack.c.l.b16 %v5802
        %v7448 = vunpack.c.l.b16 %v5803
        %v7449 = vunpack.c.l.b16 %v5804
        %v7450 = vunpack.c.l.b16 %v5805
        %v7451 = vunpack.c.l.b16 %v5806
        %v7452 = vunpack.c.l.b16 %v5807
        %v7453 = vunpack.c.l.b16 %v5808
        %v7454 = vunpack.c.l.b16 %v5809
        %v7455 = vunpack.c.l.b16 %v5810
        %v7456 = vunpack.c.l.b16 %v5811
        %v7457 = vunpack.c.l.b16 %v5812
        %v7458 = vunpack.c.l.b16 %v5813
        %v7459 = vunpack.c.l.b16 %v5814
        %v7460 = vunpack.c.l.b16 %v5815
        %v7461 = vunpack.c.l.b16 %v5816
        %v7462 = vunpack.c.l.b16 %v5817
        %v7463 = vunpack.c.l.b16 %v5818
        %v7464 = vunpack.c.l.b16 %v5819
        %v7465 = vunpack.c.l.b16 %v5820
        %v7466 = vunpack.c.l.b16 %v5821
        %v7467 = vunpack.c.l.b16 %v5822
        %v7468 = vunpack.c.l.b16 %v5823
        %v7469 = vunpack.c.l.b16 %v5824
        %v7470 = vunpack.c.l.b16 %v5825
        %v7471 = vunpack.c.l.b16 %v5826
        %v7472 = vunpack.c.l.b16 %v5827
        %v7473 = vunpack.c.l.b16 %v5828
        %v7474 = vunpack.c.l.b16 %v5829
        %v7475 = vunpack.c.l.b16 %v5830
        %v7476 = vunpack.c.l.b16 %v5831
        %v7477 = vunpack.c.l.b16 %v5832
        %v7478 = vunpack.c.l.b16 %v5833
        %v7479 = vunpack.c.l.b16 %v5834
        %v7480 = vunpack.c.l.b16 %v5835
        %v7481 = vunpack.c.l.b16 %v5836
        %v7482 = vunpack.c.l.b16 %v5837
        %v7483 = vunpack.c.l.b16 %v5838
        %v7484 = vunpack.c.l.b16 %v5839
        %v7485 = vunpack.c.l.b16 %v5840
        %v7486 = vunpack.c.l.b16 %v5841
        %v7487 = vunpack.c.l.b16 %v5842
        %v7488 = vunpack.c.l.b16 %v5843
        %v7489 = vunpack.c.l.b16 %v5844
        %v7490 = vunpack.c.l.b16 %v5845
        %v7491 = vunpack.c.l.b16 %v5846
        %v7492 = vunpack.c.l.b16 %v5847
        %v7493 = vunpack.c.l.b16 %v5848
        %v7494 = vunpack.c.l.b16 %v5849
        %v7495 = vunpack.c.l.b16 %v5850
        %v7496 = vunpack.c.l.b16 %v5851
        %v7497 = vunpack.c.l.b16 %v5852
        %v7498 = vunpack.c.l.b16 %v5853
        %v7499 = vunpack.c.l.b16 %v5854
        %v7500 = vunpack.c.l.b16 %v5855
        %v7501 = vunpack.c.l.b16 %v5856
        %v7502 = vunpack.c.l.b16 %v5857
        %v7503 = vunpack.c.l.b16 %v5858
        %v7504 = vunpack.c.l.b16 %v5859
        %v7505 = vunpack.c.l.b16 %v5860
        %v7506 = vunpack.c.l.b16 %v5861
        %v7507 = vunpack.c.l.b16 %v5862
        %v7508 = vunpack.c.l.b16 %v5863
        %v7509 = vunpack.c.l.b16 %v5864
        %v7510 = vunpack.c.l.b16 %v5865
        %v7511 = vunpack.c.l.b16 %v5866
        %v7512 = vunpack.c.l.b16 %v5867
        %v7513 = vunpack.c.l.b16 %v5868
        %v7514 = vunpack.c.l.b16 %v5869
        %v7515 = vunpack.c.l.b16 %v5870
        %v7516 = vunpack.c.l.b16 %v5871
        %v7517 = vunpack.c.l.b16 %v5872
        %v7518 = vunpack.c.l.b16 %v5873
        %v7519 = vunpack.c.l.b16 %v5874
        %v7520 = vunpack.c.l.b16 %v5875
        %v7521 = vunpack.c.l.b16 %v5876
        %v7522 = vunpack.c.l.b16 %v5877
        %v7523 = vunpack.c.l.b16 %v5878
        %v7524 = vunpack.c.l.b16 %v5879
        %v7525 = vunpack.c.l.b16 %v5880
        %v7526 = vunpack.c.l.b16 %v5881
        %v7527 = vunpack.c.l.b16 %v5882
        %v7528 = vunpack.c.l.b16 %v5883
        %v7529 = vunpack.c.l.b16 %v5884
        %v7530 = vunpack.c.l.b16 %v5885
        %v7531 = vunpack.c.l.b16 %v5886
        %v7532 = vunpack.c.l.b16 %v5887
        %v7533 = vunpack.c.l.b16 %v5888
        %v7534 = vunpack.c.l.b16 %v5889
        %v7535 = vunpack.c.l.b16 %v5890
        %v7536 = vunpack.c.l.b16 %v5891
        %v7537 = vunpack.c.l.b16 %v5892
        %v7538 = vunpack.c.l.b16 %v5893
        %v7539 = vunpack.c.l.b16 %v5894
        %v7540 = vunpack.c.l.b16 %v5895
        %v7541 = vunpack.c.l.b16 %v5896
        %v7542 = vunpack.c.l.b16 %v5897
        %v7543 = vunpack.c.l.b16 %v5898
        %v7544 = vunpack.c.l.b16 %v5899
        %v7545 = vunpack.c.l.b16 %v5900
        %v7546 = vunpack.c.l.b16 %v5901
        %v7547 = vunpack.c.l.b16 %v5902
        %v7548 = vunpack.c.l.b16 %v5903
        %v7549 = vunpack.c.l.b16 %v5904
        %v7550 = vunpack.c.l.b16 %v5905
        %v7551 = vunpack.c.l.b16 %v5906
        %v7552 = vunpack.c.l.b16 %v5907
        %v7553 = vunpack.c.l.b16 %v5908
        %v7554 = vunpack.c.l.b16 %v5909
        %v7555 = vunpack.c.l.b16 %v5910
        %v7556 = vunpack.c.l.b16 %v5911
        %v7557 = vunpack.c.l.b16 %v5912
        %v7558 = vunpack.c.l.b16 %v5913
        %v7559 = vunpack.c.l.b16 %v5914
        %v7560 = vunpack.c.l.b16 %v5915
        %v7561 = vunpack.c.l.b16 %v5916
        %v7562 = vunpack.c.l.b16 %v5917
        %v7563 = vunpack.c.l.b16 %v5918
        %v7564 = vunpack.c.l.b16 %v5919
        %v7565 = vunpack.c.l.b16 %v5920
        %v7566 = vunpack.c.l.b16 %v5921
        %v7567 = vunpack.c.l.b16 %v5922
        %v7568 = vunpack.c.l.b16 %v5923
        %v7569 = vunpack.c.l.b16 %v5924
        %v7570 = vunpack.c.l.b16 %v5925
        %v7571 = vunpack.c.l.b16 %v5926
        %v7572 = vunpack.c.l.b16 %v5927
        %v7573 = vunpack.c.l.b16 %v5928
        %v7574 = vunpack.c.l.b16 %v5929
        %v7575 = vunpack.c.l.b16 %v5930
        %v7576 = vunpack.c.l.b16 %v5931
        %v7577 = vunpack.c.l.b16 %v5932
        %v7578 = vunpack.c.l.b16 %v5933
        %v7579 = vunpack.c.l.b16 %v5934
        %v7580 = vunpack.c.l.b16 %v5935
        %v7581 = vunpack.c.l.b16 %v5936
        %v7582 = vunpack.c.l.b16 %v5937
        %v7583 = vunpack.c.l.b16 %v5938
        %v7584 = vunpack.c.l.b16 %v5939
        %v7585 = vunpack.c.l.b16 %v5940
        %v7586 = vunpack.c.l.b16 %v5941
        %v7587 = vunpack.c.l.b16 %v5942
        %v7588 = vunpack.c.l.b16 %v5943
        %v7589 = vunpack.c.l.b16 %v5944
        %v7590 = vunpack.c.l.b16 %v5945
        %v7591 = vunpack.c.l.b16 %v5946
        %v7592 = vunpack.c.l.b16 %v5947
        %v7593 = vunpack.c.l.b16 %v5948
        %v7594 = vunpack.c.l.b16 %v5949
        %v7595 = vunpack.c.l.b16 %v5950
        %v7596 = vunpack.c.l.b16 %v5951
        %v7597 = vunpack.c.l.b16 %v5952
        %v7598 = vunpack.c.l.b16 %v5953
        %v7599 = vunpack.c.l.b16 %v5954
        %v7600 = vunpack.c.l.b16 %v5955
        %v7601 = vunpack.c.l.b16 %v5956
        %v7602 = vunpack.c.l.b16 %v5957
        %v7603 = vunpack.c.l.b16 %v5958
        %v7604 = vunpack.c.l.b16 %v5959
        %v7605 = vunpack.c.l.b16 %v5960
        %v7606 = vunpack.c.l.b16 %v5961
        %v7607 = vunpack.c.l.b16 %v5962
        %v7608 = vunpack.c.l.b16 %v5963
        %v7609 = vunpack.c.l.b16 %v5964
        %v7610 = vunpack.c.l.b16 %v5965
        %v7611 = vunpack.c.l.b16 %v5966
        %v7612 = vunpack.c.l.b16 %v5967
        %v7613 = vunpack.c.l.b16 %v5968
        %v7614 = vunpack.c.l.b16 %v5969
        %v7615 = vunpack.c.l.b16 %v5970
        %v7616 = vunpack.c.l.b16 %v5971
        %v7617 = vunpack.c.l.b16 %v5972
        %v7618 = vunpack.c.l.b16 %v5973
        %v7619 = vunpack.c.l.b16 %v5974
        %v7620 = vunpack.c.l.b16 %v5975
        %v7621 = vunpack.c.l.b16 %v5976
        %v7622 = vunpack.c.l.b16 %v5977
        %v7623 = vunpack.c.l.b16 %v5978
        %v7624 = vunpack.c.l.b16 %v5979
        %v7625 = vunpack.c.l.b16 %v5980
        %v7626 = vunpack.c.l.b16 %v5981
        %v7627 = vunpack.c.l.b16 %v5982
        %v7628 = vunpack.c.l.b16 %v5983
        %v7629 = vunpack.c.l.b16 %v5984
        %v7630 = vunpack.c.l.b16 %v5985
        %v7631 = vunpack.c.l.b16 %v5986
        %v7632 = vunpack.c.l.b16 %v5987
        %v7633 = vunpack.c.l.b16 %v5988
        %v7634 = vunpack.c.l.b16 %v5989
        %v7635 = vunpack.c.l.b16 %v5990
        %v7636 = vunpack.c.l.b16 %v5991
        %v7637 = vunpack.c.l.b16 %v5992
        %v7638 = vunpack.c.l.b16 %v5993
        %v7639 = vunpack.c.l.b16 %v5994
        %v7640 = vunpack.c.l.b16 %v5995
        %v7641 = vunpack.c.l.b16 %v5996
        %v7642 = vunpack.c.l.b16 %v5997
        %v7643 = vunpack.c.l.b16 %v5998
        %v7644 = vunpack.c.l.b16 %v5999
        %v7645 = vunpack.c.l.b16 %v6000
        %v7646 = vunpack.c.l.b16 %v6001
        %v7647 = vunpack.c.l.b16 %v6002
        %v7648 = vunpack.c.l.b16 %v6003
        %v7649 = vunpack.c.l.b16 %v6004
        %v7650 = vunpack.c.l.b16 %v6005
        %v7651 = vunpack.c.l.b16 %v6006
        %v7652 = vunpack.c.l.b16 %v6007
        %v7653 = vunpack.c.l.b16 %v6008
        %v7654 = vunpack.c.l.b16 %v6009
        %v7655 = vunpack.c.l.b16 %v6010
        %v7656 = vunpack.c.l.b16 %v6011
        %v7657 = vunpack.c.l.b16 %v6012
        %v7658 = vunpack.c.l.b16 %v6013
        %v7659 = vunpack.c.l.b16 %v6014
        %v7660 = vunpack.c.l.b16 %v6015
        %v7661 = vunpack.c.l.b16 %v6016
        %v7662 = vunpack.c.l.b16 %v6017
        %v7663 = vunpack.c.l.b16 %v6018
        %v7664 = vunpack.c.l.b16 %v6019
        %v7665 = vunpack.c.l.b16 %v6020
        %v7666 = vunpack.c.l.b16 %v6021
        %v7667 = vunpack.c.l.b16 %v6022
        %v7668 = vunpack.c.l.b16 %v6023
        %v7669 = vunpack.c.l.b16 %v6024
        %v7670 = vunpack.c.l.b16 %v6025
        %v7671 = vunpack.c.l.b16 %v6026
        %v7672 = vunpack.c.l.b16 %v6027
        %v7673 = vunpack.c.l.b16 %v6028
        %v7674 = vunpack.c.l.b16 %v6029
        %v7675 = vunpack.c.l.b16 %v6030
        %v7676 = vunpack.c.l.b16 %v6031
        %v7677 = vunpack.c.l.b16 %v6032
        %v7678 = vunpack.c.l.b16 %v6033
        %v7679 = vunpack.c.l.b16 %v6034
        %v7680 = vunpack.c.l.b16 %v6035
        %v7681 = vunpack.c.l.b16 %v6036
        %v7682 = vunpack.c.l.b16 %v6037
        %v7683 = vunpack.c.l.b16 %v6038
        %v7684 = vunpack.c.l.b16 %v6039
        %v7685 = vunpack.c.l.b16 %v6040
        %v7686 = vunpack.c.l.b16 %v6041
        %v7687 = vunpack.c.l.b16 %v6042
        %v7688 = vunpack.c.l.b16 %v6043
        %v7689 = vunpack.c.l.b16 %v6044
        %v7690 = vunpack.c.l.b16 %v6045
        %v7691 = vunpack.c.l.b16 %v6046
        %v7692 = vunpack.c.l.b16 %v6047
        %v7693 = vunpack.c.l.b16 %v6048
        %v7694 = vunpack.c.l.b16 %v6049
        %v7695 = vunpack.c.l.b16 %v6050
        %v7696 = vunpack.c.l.b16 %v6051
        %v7697 = vunpack.c.l.b16 %v6052
        %v7698 = vunpack.c.l.b16 %v6053
        %v7699 = vunpack.c.l.b16 %v6054
        %v7700 = vunpack.c.l.b16 %v6055
        %v7701 = vunpack.c.l.b16 %v6056
        %v7702 = vunpack.c.l.b16 %v6057
        %v7703 = vunpack.c.l.b16 %v6058
        %v7704 = vunpack.c.l.b16 %v6059
        %v7705 = vunpack.c.l.b16 %v6060
        %v7706 = vunpack.c.l.b16 %v6061
        %v7707 = vunpack.c.l.b16 %v6062
        %v7708 = vunpack.c.l.b16 %v6063
        %v7709 = vunpack.c.l.b16 %v6064
        %v7710 = vunpack.c.l.b16 %v6065
        %v7711 = vunpack.c.l.b16 %v6066
        %v7712 = vunpack.c.l.b16 %v6067
        %v7713 = vunpack.c.l.b16 %v6068
        %v7714 = vunpack.c.l.b16 %v6069
        %v7715 = vunpack.c.l.b16 %v6070
        %v7716 = vunpack.c.l.b16 %v6071
        %v7717 = vunpack.c.l.b16 %v6072
        %v7718 = vunpack.c.l.b16 %v6073
        %v7719 = vunpack.c.l.b16 %v6074
        %v7720 = vunpack.c.l.b16 %v6075
        %v7721 = vunpack.c.l.b16 %v6076
        %v7722 = vunpack.c.l.b16 %v6077
        %v7723 = vunpack.c.l.b16 %v6078
        %v7724 = vunpack.c.l.b16 %v6079
        %v7725 = vunpack.c.l.b16 %v6080
        %v7726 = vunpack.c.l.b16 %v6081
        %v7727 = vunpack.c.l.b16 %v6082
        %v7728 = vunpack.c.l.b16 %v6083
        %v7729 = vunpack.c.l.b16 %v6084
        %v7730 = vunpack.c.l.b16 %v6085
        %v7731 = vunpack.c.l.b16 %v6086
        %v7732 = vunpack.c.l.b16 %v6087
        %v7733 = vunpack.c.l.b16 %v6088
        %v7734 = vunpack.c.l.b16 %v6089
        %v7735 = vunpack.c.l.b16 %v6090
        %v7736 = vunpack.c.l.b16 %v6091
        %v7737 = vunpack.c.l.b16 %v6092
        %v7738 = vunpack.c.l.b16 %v6093
        %v7739 = vunpack.c.l.b16 %v6094
        %v7740 = vunpack.c.l.b16 %v6095
        %v7741 = vunpack.c.l.b16 %v6096
        %v7742 = vunpack.c.l.b16 %v6097
        %v7743 = vunpack.c.l.b16 %v6098
        %v7744 = vunpack.c.l.b16 %v6099
        %v7745 = vunpack.c.l.b16 %v6100
        %v7746 = vunpack.c.l.b16 %v6101
        %v7747 = vunpack.c.l.b16 %v6102
        %v7748 = vunpack.c.l.b16 %v6103
        %v7749 = vunpack.c.l.b16 %v6104
        %v7750 = vunpack.c.l.b16 %v6105
        %v7751 = vunpack.c.l.b16 %v6106
        %v7752 = vunpack.c.l.b16 %v6107
        %v7753 = vunpack.c.l.b16 %v6108
        %v7754 = vunpack.c.l.b16 %v6109
        %v7755 = vunpack.c.l.b16 %v6110
        %v7756 = vunpack.c.l.b16 %v6111
        %v7757 = vunpack.c.l.b16 %v6112
        %v7758 = vunpack.c.l.b16 %v6113
        %v7759 = vunpack.c.l.b16 %v6114
        %v7760 = vunpack.c.l.b16 %v6115
        %v7761 = vunpack.c.l.b16 %v6116
        %v7762 = vunpack.c.l.b16 %v6117
        %v7763 = vunpack.c.l.b16 %v6118
        %v7764 = vunpack.c.l.b16 %v6119
        %v7765 = vunpack.c.l.b16 %v6120
        %v7766 = vunpack.c.l.b16 %v6121
        %v7767 = vunpack.c.l.b16 %v6122
        %v7768 = vunpack.c.l.b16 %v6123
        %v7769 = vunpack.c.l.b16 %v6124
        %v7770 = vunpack.c.l.b16 %v6125
        %v7771 = vunpack.c.l.b16 %v6126
        %v7772 = vunpack.c.l.b16 %v6127
        %v7773 = vunpack.c.l.b16 %v6128
        %v7774 = vunpack.c.l.b16 %v6129
        %v7775 = vunpack.c.l.b16 %v6130
        %v7776 = vunpack.c.l.b16 %v6131
        %v7777 = vunpack.c.l.b16 %v6132
        %v7778 = vunpack.c.l.b16 %v6133
        %v7779 = vunpack.c.l.b16 %v6134
        %v7780 = vunpack.c.l.b16 %v6135
        %v7781 = vunpack.c.l.b16 %v6136
        %v7782 = vunpack.c.l.b16 %v6137
        %v7783 = vunpack.c.l.b16 %v6138
        %v7784 = vunpack.c.l.b16 %v6139
        %v7785 = vunpack.c.l.b16 %v6140
        %v7786 = vunpack.c.l.b16 %v6141
        %v7787 = vunpack.c.l.b16 %v6142
        %v7788 = vunpack.c.l.b16 %v6143
        %v7789 = vunpack.c.l.b16 %v6144
        %v7790 = vunpack.c.l.b16 %v6145
        %v7791 = vunpack.c.l.b16 %v6146
        %v7792 = vunpack.c.l.b16 %v6147
        %v7793 = vunpack.c.l.b16 %v6148
        %v7794 = vunpack.c.l.b16 %v6149
        %v7795 = vunpack.c.l.b16 %v6150
        %v7796 = vunpack.c.l.b16 %v6151
        %v7797 = vunpack.c.l.b16 %v6152
        %v7798 = vunpack.c.l.b16 %v6153
        %v7799 = vunpack.c.l.b16 %v6154
        %v7800 = vunpack.c.l.b16 %v6155
        %v7801 = vunpack.c.l.b16 %v6156
        %v7802 = vunpack.c.l.b16 %v6157
        %v7803 = vunpack.c.l.b16 %v6158
        %v7804 = vunpack.c.l.b16 %v6159
        %v7805 = vunpack.c.l.b16 %v6160
        %v7806 = vunpack.c.l.b16 %v6161
        %v7807 = vunpack.c.l.b16 %v6162
        %v7808 = vunpack.c.l.b16 %v6163
        %v7809 = vunpack.c.l.b16 %v6164
        %v7810 = vunpack.c.l.b16 %v6165
        %v7811 = vunpack.c.l.b16 %v6166
        %v7812 = vunpack.c.l.b16 %v6167
        %v7813 = vunpack.c.l.b16 %v6168
        %v7814 = vunpack.c.l.b16 %v6169
        %v7815 = vunpack.c.l.b16 %v6170
        %v7816 = vunpack.c.l.b16 %v6171
        %v7817 = vunpack.c.l.b16 %v6172
        %v7818 = vunpack.c.l.b16 %v6173
        %v7819 = vunpack.c.l.b16 %v6174
        %v7820 = vunpack.c.l.b16 %v6175
        %v7821 = vunpack.c.l.b16 %v6176
        %v7822 = vunpack.c.l.b16 %v6177
        %v7823 = vunpack.c.l.b16 %v6178
        %v7824 = vunpack.c.l.b16 %v6179
        %v7825 = vunpack.c.l.b16 %v6180
        %v7826 = vunpack.c.l.b16 %v6181
        %v7827 = vunpack.c.l.b16 %v6182
        %v7828 = vunpack.c.l.b16 %v6183
        %v7829 = vunpack.c.l.b16 %v6184
        %v7830 = vunpack.c.l.b16 %v6185
        %v7831 = vunpack.c.l.b16 %v6186
        %v7832 = vunpack.c.l.b16 %v6187
        %v7833 = vunpack.c.l.b16 %v6188
        %v7834 = vunpack.c.l.b16 %v6189
        %v7835 = vunpack.c.l.b16 %v6190
        %v7836 = vunpack.c.l.b16 %v6191
        %v7837 = vunpack.c.l.b16 %v6192
        %v7838 = vunpack.c.l.b16 %v6193
        %v7839 = vunpack.c.l.b16 %v6194
        %v7840 = vunpack.c.l.b16 %v6195
        %v7841 = vunpack.c.l.b16 %v6196
        %v7842 = vunpack.c.l.b16 %v6197
        %v7843 = vunpack.c.l.b16 %v6198
        %v7844 = vunpack.c.l.b16 %v6199
        %v7845 = vunpack.c.l.b16 %v6200
        %v7846 = vunpack.c.l.b16 %v6201
        %v7847 = vunpack.c.l.b16 %v6202
        %v7848 = vunpack.c.l.b16 %v6203
        %v7849 = vunpack.c.l.b16 %v6204
        %v7850 = vunpack.c.l.b16 %v6205
        %v7851 = vunpack.c.l.b16 %v6206
        %v7852 = vunpack.c.l.b16 %v6207
        %v7853 = vunpack.c.l.b16 %v6208
        %v7854 = vunpack.c.l.b16 %v6209
        %v7855 = vunpack.c.l.b16 %v6210
        %v7856 = vunpack.c.l.b16 %v6211
        %v7857 = vunpack.c.l.b16 %v6212
        %v7858 = vunpack.c.l.b16 %v6213
        %v7859 = vunpack.c.l.b16 %v6214
        %v7860 = vunpack.c.l.b16 %v6215
        %v7861 = vunpack.c.l.b16 %v6216
        %v7862 = vunpack.c.l.b16 %v6217
        %v7863 = vunpack.c.l.b16 %v6218
        %v7864 = vunpack.c.l.b16 %v6219
        %v7865 = vunpack.c.l.b16 %v6220
        %v7866 = vunpack.c.l.b16 %v6221
        %v7867 = vunpack.c.l.b16 %v6222
        %v7868 = vunpack.c.l.b16 %v6223
        %v7869 = vunpack.c.l.b16 %v6224
        %v7870 = vunpack.c.l.b16 %v6225
        %v7871 = vunpack.c.l.b16 %v6226
        %v7872 = vunpack.c.l.b16 %v6227
        %v7873 = vunpack.c.l.b16 %v6228
        %v7874 = vunpack.c.l.b16 %v6229
        %v7875 = vunpack.c.l.b16 %v6230
        %v7876 = vunpack.c.l.b16 %v6231
        %v7877 = vunpack.c.l.b16 %v6232
        %v7878 = vunpack.c.l.b16 %v6233
        %v7879 = vunpack.c.l.b16 %v6234
        %v7880 = vunpack.c.l.b16 %v6235
        %v7881 = vunpack.c.l.b16 %v6236
        %v7882 = vunpack.c.l.b16 %v6237
        %v7883 = vunpack.c.l.b16 %v6238
        %v7884 = vunpack.c.l.b16 %v6239
        %v7885 = vunpack.c.l.b16 %v6240
        %v7886 = vunpack.c.l.b16 %v6241
        %v7887 = vunpack.c.l.b16 %v6242
        %v7888 = vunpack.c.l.b16 %v6243
        %v7889 = vunpack.c.l.b16 %v6244
        %v7890 = vunpack.c.l.b16 %v6245
        %v7891 = vunpack.c.l.b16 %v6246
        %v7892 = vunpack.c.l.b16 %v6247
        %v7893 = vunpack.c.l.b16 %v6248
        %v7894 = vunpack.c.l.b16 %v6249
        %v7895 = vunpack.c.l.b16 %v6250
        %v7896 = vunpack.c.l.b16 %v6251
        %v7897 = vunpack.c.l.b16 %v6252
        %v7898 = vunpack.c.l.b16 %v6253
        %v7899 = vunpack.c.l.b16 %v6254
        %v7900 = vunpack.c.l.b16 %v6255
        %v7901 = vunpack.c.l.b16 %v6256
        %v7902 = vunpack.c.l.b16 %v6257
        %v7903 = vunpack.c.l.b16 %v6258
        %v7904 = vunpack.c.l.b16 %v6259
        %v7905 = vunpack.c.l.b16 %v6260
        %v7906 = vunpack.c.l.b16 %v6261
        %v7907 = vunpack.c.l.b16 %v6262
        %v7908 = vunpack.c.l.b16 %v6263
        %v7909 = vunpack.c.l.b16 %v6264
        %v7910 = vunpack.c.l.b16 %v6265
        %v7911 = vunpack.c.l.b16 %v6266
        %v7912 = vunpack.c.l.b16 %v6267
        %v7913 = vunpack.c.l.b16 %v6268
        %v7914 = vunpack.c.l.b16 %v6269
        %v7915 = vunpack.c.l.b16 %v6270
        %v7916 = vunpack.c.l.b16 %v6271
        %v7917 = vunpack.c.l.b16 %v6272
        %v7918 = vunpack.c.l.b16 %v6273
        %v7919 = vunpack.c.l.b16 %v6274
        %v7920 = vunpack.c.l.b16 %v6275
        %v7921 = vunpack.c.l.b16 %v6276
        %v7922 = vunpack.c.l.b16 %v6277
        %v7923 = vunpack.c.l.b16 %v6278
        %v7924 = vunpack.c.l.b16 %v6279
        %v7925 = vunpack.c.l.b16 %v6280
        %v7926 = vunpack.c.l.b16 %v6281
        %v7927 = vunpack.c.l.b16 %v6282
        %v7928 = vunpack.c.l.b16 %v6283
        %v7929 = vunpack.c.l.b16 %v6284
        %v7930 = vunpack.c.l.b16 %v6285
        %v7931 = vunpack.c.l.b16 %v6286
        %v7932 = vunpack.c.l.b16 %v6287
        %v7933 = vunpack.c.l.b16 %v6288
        %v7934 = vunpack.c.l.b16 %v6289
        %v7935 = vunpack.c.l.b16 %v6290
        %v7936 = vunpack.c.l.b16 %v6291
        %v7937 = vunpack.c.l.b16 %v6292
        %v7938 = vunpack.c.l.b16 %v6293
        %v7939 = vunpack.c.l.b16 %v6294
        %v7940 = vunpack.c.l.b16 %v6295
        %v7941 = vunpack.c.l.b16 %v6296
        %v7942 = vunpack.c.l.b16 %v6297
        %v7943 = vunpack.c.l.b16 %v6298
        %v7944 = vunpack.c.l.b16 %v6299
        %v7945 = vunpack.c.l.b16 %v6300
        %v7946 = vunpack.c.l.b16 %v6301
        %v7947 = vunpack.c.l.b16 %v6302
        %v7948 = vunpack.c.l.b16 %v6303
        %v7949 = vunpack.c.l.b16 %v6304
        %v7950 = vunpack.c.l.b16 %v6305
        %v7951 = vunpack.c.l.b16 %v6306
        %v7952 = vunpack.c.l.b16 %v6307
        %v7953 = vunpack.c.l.b16 %v6308
        %v7954 = vunpack.c.l.b16 %v6309
        %v7955 = vunpack.c.l.b16 %v6310
        %v7956 = vunpack.c.l.b16 %v6311
        %v7957 = vunpack.c.l.b16 %v6312
        %v7958 = vunpack.c.l.b16 %v6313
        %v7959 = vunpack.c.l.b16 %v6314
        %v7960 = vunpack.c.l.b16 %v6315
        %v7961 = vunpack.c.l.b16 %v6316
        %v7962 = vunpack.c.l.b16 %v6317
        %v7963 = vunpack.c.l.b16 %v6318
        %v7964 = vunpack.c.l.b16 %v6319
        %v7965 = vunpack.c.l.b16 %v6320
        %v7966 = vunpack.c.l.b16 %v6321
        %v7967 = vunpack.c.l.b16 %v6322
        %v7968 = vunpack.c.l.b16 %v6323
        %v7969 = vunpack.c.l.b16 %v6324
        %v7970 = vunpack.c.l.b16 %v6325
        %v7971 = vunpack.c.l.b16 %v6326
        %v7972 = vunpack.c.l.b16 %v6327
        %v7973 = vunpack.c.l.b16 %v6328
        %v7974 = vunpack.c.l.b16 %v6329
        %v7975 = vunpack.c.l.b16 %v6330
        %v7976 = vunpack.c.l.b16 %v6331
        %v7977 = vunpack.c.l.b16 %v6332
        %v7978 = vunpack.c.l.b16 %v6333
        %v7979 = vunpack.c.l.b16 %v6334
        %v7980 = vunpack.c.l.b16 %v6335
        %v7981 = vunpack.c.l.b16 %v6336
        %v7982 = vunpack.c.l.b16 %v6337
        %v7983 = vunpack.c.l.b16 %v6338
        %v7984 = vunpack.c.l.b16 %v6339
        %v7985 = vunpack.c.l.b16 %v6340
        %v7986 = vunpack.c.l.b16 %v6341
        %v7987 = vunpack.c.l.b16 %v6342
        %v7988 = vunpack.c.l.b16 %v6343
        %v7989 = vunpack.c.l.b16 %v6344
        %v7990 = vunpack.c.l.b16 %v6345
        %v7991 = vunpack.c.l.b16 %v6346
        %v7992 = vunpack.c.l.b16 %v6347
        %v7993 = vunpack.c.l.b16 %v6348
        %v7994 = vunpack.c.l.b16 %v6349
        %v7995 = vunpack.c.l.b16 %v6350
        %v7996 = vunpack.c.l.b16 %v6351
        %v7997 = vunpack.c.l.b16 %v6352
        %v7998 = vunpack.c.l.b16 %v6353
        %v7999 = vunpack.c.l.b16 %v6354
        %v8000 = vpack.c.b16 %v7233, %v7232
        %v8001 = vpack.c.b16 %v7235, %v7234
        %v8002 = vpack.c.b16 %v7237, %v7236
        %v8003 = vpack.c.b16 %v7239, %v7238
        %v8004 = vpack.c.b16 %v7241, %v7240
        %v8005 = vpack.c.b16 %v7243, %v7242
        %v8006 = vpack.c.b16 %v7245, %v7244
        %v8007 = vpack.c.b16 %v7247, %v7246
        %v8008 = vpack.c.b16 %v7249, %v7248
        %v8009 = vpack.c.b16 %v7251, %v7250
        %v8010 = vpack.c.b16 %v7253, %v7252
        %v8011 = vpack.c.b16 %v7255, %v7254
        %v8012 = vpack.c.b16 %v7257, %v7256
        %v8013 = vpack.c.b16 %v7259, %v7258
        %v8014 = vpack.c.b16 %v7261, %v7260
        %v8015 = vpack.c.b16 %v7263, %v7262
        %v8016 = vpack.c.b16 %v7265, %v7264
        %v8017 = vpack.c.b16 %v7267, %v7266
        %v8018 = vpack.c.b16 %v7269, %v7268
        %v8019 = vpack.c.b16 %v7271, %v7270
        %v8020 = vpack.c.b16 %v7273, %v7272
        %v8021 = vpack.c.b16 %v7275, %v7274
        %v8022 = vpack.c.b16 %v7277, %v7276
        %v8023 = vpack.c.b16 %v7279, %v7278
        %v8024 = vpack.c.b16 %v7281, %v7280
        %v8025 = vpack.c.b16 %v7283, %v7282
        %v8026 = vpack.c.b16 %v7285, %v7284
        %v8027 = vpack.c.b16 %v7287, %v7286
        %v8028 = vpack.c.b16 %v7289, %v7288
        %v8029 = vpack.c.b16 %v7291, %v7290
        %v8030 = vpack.c.b16 %v7293, %v7292
        %v8031 = vpack.c.b16 %v7295, %v7294
        %v8032 = vpack.c.b16 %v7297, %v7296
        %v8033 = vpack.c.b16 %v7299, %v7298
        %v8034 = vpack.c.b16 %v7301, %v7300
        %v8035 = vpack.c.b16 %v7303, %v7302
        %v8036 = vpack.c.b16 %v7305, %v7304
        %v8037 = vpack.c.b16 %v7307, %v7306
        %v8038 = vpack.c.b16 %v7309, %v7308
        %v8039 = vpack.c.b16 %v7311, %v7310
        %v8040 = vpack.c.b16 %v7313, %v7312
        %v8041 = vpack.c.b16 %v7315, %v7314
        %v8042 = vpack.c.b16 %v7317, %v7316
        %v8043 = vpack.c.b16 %v7319, %v7318
        %v8044 = vpack.c.b16 %v7321, %v7320
        %v8045 = vpack.c.b16 %v7323, %v7322
        %v8046 = vpack.c.b16 %v7325, %v7324
        %v8047 = vpack.c.b16 %v7327, %v7326
        %v8048 = vpack.c.b16 %v7329, %v7328
        %v8049 = vpack.c.b16 %v7331, %v7330
        %v8050 = vpack.c.b16 %v7333, %v7332
        %v8051 = vpack.c.b16 %v7335, %v7334
        %v8052 = vpack.c.b16 %v7337, %v7336
        %v8053 = vpack.c.b16 %v7339, %v7338
        %v8054 = vpack.c.b16 %v7341, %v7340
        %v8055 = vpack.c.b16 %v7343, %v7342
        %v8056 = vpack.c.b16 %v7345, %v7344
        %v8057 = vpack.c.b16 %v7347, %v7346
        %v8058 = vpack.c.b16 %v7349, %v7348
        %v8059 = vpack.c.b16 %v7351, %v7350
        %v8060 = vpack.c.b16 %v7353, %v7352
        %v8061 = vpack.c.b16 %v7355, %v7354
        %v8062 = vpack.c.b16 %v7357, %v7356
        %v8063 = vpack.c.b16 %v7359, %v7358
        %v8064 = vpack.c.b16 %v7361, %v7360
        %v8065 = vpack.c.b16 %v7363, %v7362
        %v8066 = vpack.c.b16 %v7365, %v7364
        %v8067 = vpack.c.b16 %v7367, %v7366
        %v8068 = vpack.c.b16 %v7369, %v7368
        %v8069 = vpack.c.b16 %v7371, %v7370
        %v8070 = vpack.c.b16 %v7373, %v7372
        %v8071 = vpack.c.b16 %v7375, %v7374
        %v8072 = vpack.c.b16 %v7377, %v7376
        %v8073 = vpack.c.b16 %v7379, %v7378
        %v8074 = vpack.c.b16 %v7381, %v7380
        %v8075 = vpack.c.b16 %v7383, %v7382
        %v8076 = vpack.c.b16 %v7385, %v7384
        %v8077 = vpack.c.b16 %v7387, %v7386
        %v8078 = vpack.c.b16 %v7389, %v7388
        %v8079 = vpack.c.b16 %v7391, %v7390
        %v8080 = vpack.c.b16 %v7393, %v7392
        %v8081 = vpack.c.b16 %v7395, %v7394
        %v8082 = vpack.c.b16 %v7397, %v7396
        %v8083 = vpack.c.b16 %v7399, %v7398
        %v8084 = vpack.c.b16 %v7401, %v7400
        %v8085 = vpack.c.b16 %v7403, %v7402
        %v8086 = vpack.c.b16 %v7405, %v7404
        %v8087 = vpack.c.b16 %v7407, %v7406
        %v8088 = vpack.c.b16 %v7409, %v7408
        %v8089 = vpack.c.b16 %v7411, %v7410
        %v8090 = vpack.c.b16 %v7413, %v7412
        %v8091 = vpack.c.b16 %v7415, %v7414
        %v8092 = vpack.c.b16 %v7417, %v7416
        %v8093 = vpack.c.b16 %v7419, %v7418
        %v8094 = vpack.c.b16 %v7421, %v7420
        %v8095 = vpack.c.b16 %v7423, %v7422
        %v8096 = vpack.c.b16 %v7425, %v7424
        %v8097 = vpack.c.b16 %v7427, %v7426
        %v8098 = vpack.c.b16 %v7429, %v7428
        %v8099 = vpack.c.b16 %v7431, %v7430
        %v8100 = vpack.c.b16 %v7433, %v7432
        %v8101 = vpack.c.b16 %v7435, %v7434
        %v8102 = vpack.c.b16 %v7437, %v7436
        %v8103 = vpack.c.b16 %v7439, %v7438
        %v8104 = vpack.c.b16 %v7441, %v7440
        %v8105 = vpack.c.b16 %v7443, %v7442
        %v8106 = vpack.c.b16 %v7445, %v7444
        %v8107 = vpack.c.b16 %v7447, %v7446
        %v8108 = vpack.c.b16 %v7449, %v7448
        %v8109 = vpack.c.b16 %v7451, %v7450
        %v8110 = vpack.c.b16 %v7453, %v7452
        %v8111 = vpack.c.b16 %v7455, %v7454
        %v8112 = vpack.c.b16 %v7457, %v7456
        %v8113 = vpack.c.b16 %v7459, %v7458
        %v8114 = vpack.c.b16 %v7461, %v7460
        %v8115 = vpack.c.b16 %v7463, %v7462
        %v8116 = vpack.c.b16 %v7465, %v7464
        %v8117 = vpack.c.b16 %v7467, %v7466
        %v8118 = vpack.c.b16 %v7469, %v7468
        %v8119 = vpack.c.b16 %v7471, %v7470
        %v8120 = vpack.c.b16 %v7473, %v7472
        %v8121 = vpack.c.b16 %v7475, %v7474
        %v8122 = vpack.c.b16 %v7477, %v7476
        %v8123 = vpack.c.b16 %v7479, %v7478
        %v8124 = vpack.c.b16 %v7481, %v7480
        %v8125 = vpack.c.b16 %v7483, %v7482
        %v8126 = vpack.c.b16 %v7485, %v7484
        %v8127 = vpack.c.b16 %v7487, %v7486
        %v8128 = vpack.c.b16 %v7489, %v7488
        %v8129 = vpack.c.b16 %v7491, %v7490
        %v8130 = vpack.c.b16 %v7493, %v7492
        %v8131 = vpack.c.b16 %v7495, %v7494
        %v8132 = vpack.c.b16 %v7497, %v7496
        %v8133 = vpack.c.b16 %v7499, %v7498
        %v8134 = vpack.c.b16 %v7501, %v7500
        %v8135 = vpack.c.b16 %v7503, %v7502
        %v8136 = vpack.c.b16 %v7505, %v7504
        %v8137 = vpack.c.b16 %v7507, %v7506
        %v8138 = vpack.c.b16 %v7509, %v7508
        %v8139 = vpack.c.b16 %v7511, %v7510
        %v8140 = vpack.c.b16 %v7513, %v7512
        %v8141 = vpack.c.b16 %v7515, %v7514
        %v8142 = vpack.c.b16 %v7517, %v7516
        %v8143 = vpack.c.b16 %v7519, %v7518
        %v8144 = vpack.c.b16 %v7521, %v7520
        %v8145 = vpack.c.b16 %v7523, %v7522
        %v8146 = vpack.c.b16 %v7525, %v7524
        %v8147 = vpack.c.b16 %v7527, %v7526
        %v8148 = vpack.c.b16 %v7529, %v7528
        %v8149 = vpack.c.b16 %v7531, %v7530
        %v8150 = vpack.c.b16 %v7533, %v7532
        %v8151 = vpack.c.b16 %v7535, %v7534
        %v8152 = vpack.c.b16 %v7537, %v7536
        %v8153 = vpack.c.b16 %v7539, %v7538
        %v8154 = vpack.c.b16 %v7541, %v7540
        %v8155 = vpack.c.b16 %v7543, %v7542
        %v8156 = vpack.c.b16 %v7545, %v7544
        %v8157 = vpack.c.b16 %v7547, %v7546
        %v8158 = vpack.c.b16 %v7549, %v7548
        %v8159 = vpack.c.b16 %v7551, %v7550
        %v8160 = vpack.c.b16 %v7553, %v7552
        %v8161 = vpack.c.b16 %v7555, %v7554
        %v8162 = vpack.c.b16 %v7557, %v7556
        %v8163 = vpack.c.b16 %v7559, %v7558
        %v8164 = vpack.c.b16 %v7561, %v7560
        %v8165 = vpack.c.b16 %v7563, %v7562
        %v8166 = vpack.c.b16 %v7565, %v7564
        %v8167 = vpack.c.b16 %v7567, %v7566
        %v8168 = vpack.c.b16 %v7569, %v7568
        %v8169 = vpack.c.b16 %v7571, %v7570
        %v8170 = vpack.c.b16 %v7573, %v7572
        %v8171 = vpack.c.b16 %v7575, %v7574
        %v8172 = vpack.c.b16 %v7577, %v7576
        %v8173 = vpack.c.b16 %v7579, %v7578
        %v8174 = vpack.c.b16 %v7581, %v7580
        %v8175 = vpack.c.b16 %v7583, %v7582
        %v8176 = vpack.c.b16 %v7585, %v7584
        %v8177 = vpack.c.b16 %v7587, %v7586
        %v8178 = vpack.c.b16 %v7589, %v7588
        %v8179 = vpack.c.b16 %v7591, %v7590
        %v8180 = vpack.c.b16 %v7593, %v7592
        %v8181 = vpack.c.b16 %v7595, %v7594
        %v8182 = vpack.c.b16 %v7597, %v7596
        %v8183 = vpack.c.b16 %v7599, %v7598
        %v8184 = vpack.c.b16 %v7601, %v7600
        %v8185 = vpack.c.b16 %v7603, %v7602
        %v8186 = vpack.c.b16 %v7605, %v7604
        %v8187 = vpack.c.b16 %v7607, %v7606
        %v8188 = vpack.c.b16 %v7609, %v7608
        %v8189 = vpack.c.b16 %v7611, %v7610
        %v8190 = vpack.c.b16 %v7613, %v7612
        %v8191 = vpack.c.b16 %v7615, %v7614
        %v8192 = vpack.c.b16 %v7617, %v7616
        %v8193 = vpack.c.b16 %v7619, %v7618
        %v8194 = vpack.c.b16 %v7621, %v7620
        %v8195 = vpack.c.b16 %v7623, %v7622
        %v8196 = vpack.c.b16 %v7625, %v7624
        %v8197 = vpack.c.b16 %v7627, %v7626
        %v8198 = vpack.c.b16 %v7629, %v7628
        %v8199 = vpack.c.b16 %v7631, %v7630
        %v8200 = vpack.c.b16 %v7633, %v7632
        %v8201 = vpack.c.b16 %v7635, %v7634
        %v8202 = vpack.c.b16 %v7637, %v7636
        %v8203 = vpack.c.b16 %v7639, %v7638
        %v8204 = vpack.c.b16 %v7641, %v7640
        %v8205 = vpack.c.b16 %v7643, %v7642
        %v8206 = vpack.c.b16 %v7645, %v7644
        %v8207 = vpack.c.b16 %v7647, %v7646
        %v8208 = vpack.c.b16 %v7649, %v7648
        %v8209 = vpack.c.b16 %v7651, %v7650
        %v8210 = vpack.c.b16 %v7653, %v7652
        %v8211 = vpack.c.b16 %v7655, %v7654
        %v8212 = vpack.c.b16 %v7657, %v7656
        %v8213 = vpack.c.b16 %v7659, %v7658
        %v8214 = vpack.c.b16 %v7661, %v7660
        %v8215 = vpack.c.b16 %v7663, %v7662
        %v8216 = vpack.c.b16 %v7665, %v7664
        %v8217 = vpack.c.b16 %v7667, %v7666
        %v8218 = vpack.c.b16 %v7669, %v7668
        %v8219 = vpack.c.b16 %v7671, %v7670
        %v8220 = vpack.c.b16 %v7673, %v7672
        %v8221 = vpack.c.b16 %v7675, %v7674
        %v8222 = vpack.c.b16 %v7677, %v7676
        %v8223 = vpack.c.b16 %v7679, %v7678
        %v8224 = vpack.c.b16 %v7681, %v7680
        %v8225 = vpack.c.b16 %v7683, %v7682
        %v8226 = vpack.c.b16 %v7685, %v7684
        %v8227 = vpack.c.b16 %v7687, %v7686
        %v8228 = vpack.c.b16 %v7689, %v7688
        %v8229 = vpack.c.b16 %v7691, %v7690
        %v8230 = vpack.c.b16 %v7693, %v7692
        %v8231 = vpack.c.b16 %v7695, %v7694
        %v8232 = vpack.c.b16 %v7697, %v7696
        %v8233 = vpack.c.b16 %v7699, %v7698
        %v8234 = vpack.c.b16 %v7701, %v7700
        %v8235 = vpack.c.b16 %v7703, %v7702
        %v8236 = vpack.c.b16 %v7705, %v7704
        %v8237 = vpack.c.b16 %v7707, %v7706
        %v8238 = vpack.c.b16 %v7709, %v7708
        %v8239 = vpack.c.b16 %v7711, %v7710
        %v8240 = vpack.c.b16 %v7713, %v7712
        %v8241 = vpack.c.b16 %v7715, %v7714
        %v8242 = vpack.c.b16 %v7717, %v7716
        %v8243 = vpack.c.b16 %v7719, %v7718
        %v8244 = vpack.c.b16 %v7721, %v7720
        %v8245 = vpack.c.b16 %v7723, %v7722
        %v8246 = vpack.c.b16 %v7725, %v7724
        %v8247 = vpack.c.b16 %v7727, %v7726
        %v8248 = vpack.c.b16 %v7729, %v7728
        %v8249 = vpack.c.b16 %v7731, %v7730
        %v8250 = vpack.c.b16 %v7733, %v7732
        %v8251 = vpack.c.b16 %v7735, %v7734
        %v8252 = vpack.c.b16 %v7737, %v7736
        %v8253 = vpack.c.b16 %v7739, %v7738
        %v8254 = vpack.c.b16 %v7741, %v7740
        %v8255 = vpack.c.b16 %v7743, %v7742
        %v8256 = vpack.c.b16 %v7745, %v7744
        %v8257 = vpack.c.b16 %v7747, %v7746
        %v8258 = vpack.c.b16 %v7749, %v7748
        %v8259 = vpack.c.b16 %v7751, %v7750
        %v8260 = vpack.c.b16 %v7753, %v7752
        %v8261 = vpack.c.b16 %v7755, %v7754
        %v8262 = vpack.c.b16 %v7757, %v7756
        %v8263 = vpack.c.b16 %v7759, %v7758
        %v8264 = vpack.c.b16 %v7761, %v7760
        %v8265 = vpack.c.b16 %v7763, %v7762
        %v8266 = vpack.c.b16 %v7765, %v7764
        %v8267 = vpack.c.b16 %v7767, %v7766
        %v8268 = vpack.c.b16 %v7769, %v7768
        %v8269 = vpack.c.b16 %v7771, %v7770
        %v8270 = vpack.c.b16 %v7773, %v7772
        %v8271 = vpack.c.b16 %v7775, %v7774
        %v8272 = vpack.c.b16 %v7777, %v7776
        %v8273 = vpack.c.b16 %v7779, %v7778
        %v8274 = vpack.c.b16 %v7781, %v7780
        %v8275 = vpack.c.b16 %v7783, %v7782
        %v8276 = vpack.c.b16 %v7785, %v7784
        %v8277 = vpack.c.b16 %v7787, %v7786
        %v8278 = vpack.c.b16 %v7789, %v7788
        %v8279 = vpack.c.b16 %v7791, %v7790
        %v8280 = vpack.c.b16 %v7793, %v7792
        %v8281 = vpack.c.b16 %v7795, %v7794
        %v8282 = vpack.c.b16 %v7797, %v7796
        %v8283 = vpack.c.b16 %v7799, %v7798
        %v8284 = vpack.c.b16 %v7801, %v7800
        %v8285 = vpack.c.b16 %v7803, %v7802
        %v8286 = vpack.c.b16 %v7805, %v7804
        %v8287 = vpack.c.b16 %v7807, %v7806
        %v8288 = vpack.c.b16 %v7809, %v7808
        %v8289 = vpack.c.b16 %v7811, %v7810
        %v8290 = vpack.c.b16 %v7813, %v7812
        %v8291 = vpack.c.b16 %v7815, %v7814
        %v8292 = vpack.c.b16 %v7817, %v7816
        %v8293 = vpack.c.b16 %v7819, %v7818
        %v8294 = vpack.c.b16 %v7821, %v7820
        %v8295 = vpack.c.b16 %v7823, %v7822
        %v8296 = vpack.c.b16 %v7825, %v7824
        %v8297 = vpack.c.b16 %v7827, %v7826
        %v8298 = vpack.c.b16 %v7829, %v7828
        %v8299 = vpack.c.b16 %v7831, %v7830
        %v8300 = vpack.c.b16 %v7833, %v7832
        %v8301 = vpack.c.b16 %v7835, %v7834
        %v8302 = vpack.c.b16 %v7837, %v7836
        %v8303 = vpack.c.b16 %v7839, %v7838
        %v8304 = vpack.c.b16 %v7841, %v7840
        %v8305 = vpack.c.b16 %v7843, %v7842
        %v8306 = vpack.c.b16 %v7845, %v7844
        %v8307 = vpack.c.b16 %v7847, %v7846
        %v8308 = vpack.c.b16 %v7849, %v7848
        %v8309 = vpack.c.b16 %v7851, %v7850
        %v8310 = vpack.c.b16 %v7853, %v7852
        %v8311 = vpack.c.b16 %v7855, %v7854
        %v8312 = vpack.c.b16 %v7857, %v7856
        %v8313 = vpack.c.b16 %v7859, %v7858
        %v8314 = vpack.c.b16 %v7861, %v7860
        %v8315 = vpack.c.b16 %v7863, %v7862
        %v8316 = vpack.c.b16 %v7865, %v7864
        %v8317 = vpack.c.b16 %v7867, %v7866
        %v8318 = vpack.c.b16 %v7869, %v7868
        %v8319 = vpack.c.b16 %v7871, %v7870
        %v8320 = vpack.c.b16 %v7873, %v7872
        %v8321 = vpack.c.b16 %v7875, %v7874
        %v8322 = vpack.c.b16 %v7877, %v7876
        %v8323 = vpack.c.b16 %v7879, %v7878
        %v8324 = vpack.c.b16 %v7881, %v7880
        %v8325 = vpack.c.b16 %v7883, %v7882
        %v8326 = vpack.c.b16 %v7885, %v7884
        %v8327 = vpack.c.b16 %v7887, %v7886
        %v8328 = vpack.c.b16 %v7889, %v7888
        %v8329 = vpack.c.b16 %v7891, %v7890
        %v8330 = vpack.c.b16 %v7893, %v7892
        %v8331 = vpack.c.b16 %v7895, %v7894
        %v8332 = vpack.c.b16 %v7897, %v7896
        %v8333 = vpack.c.b16 %v7899, %v7898
        %v8334 = vpack.c.b16 %v7901, %v7900
        %v8335 = vpack.c.b16 %v7903, %v7902
        %v8336 = vpack.c.b16 %v7905, %v7904
        %v8337 = vpack.c.b16 %v7907, %v7906
        %v8338 = vpack.c.b16 %v7909, %v7908
        %v8339 = vpack.c.b16 %v7911, %v7910
        %v8340 = vpack.c.b16 %v7913, %v7912
        %v8341 = vpack.c.b16 %v7915, %v7914
        %v8342 = vpack.c.b16 %v7917, %v7916
        %v8343 = vpack.c.b16 %v7919, %v7918
        %v8344 = vpack.c.b16 %v7921, %v7920
        %v8345 = vpack.c.b16 %v7923, %v7922
        %v8346 = vpack.c.b16 %v7925, %v7924
        %v8347 = vpack.c.b16 %v7927, %v7926
        %v8348 = vpack.c.b16 %v7929, %v7928
        %v8349 = vpack.c.b16 %v7931, %v7930
        %v8350 = vpack.c.b16 %v7933, %v7932
        %v8351 = vpack.c.b16 %v7935, %v7934
        %v8352 = vpack.c.b16 %v7937, %v7936
        %v8353 = vpack.c.b16 %v7939, %v7938
        %v8354 = vpack.c.b16 %v7941, %v7940
        %v8355 = vpack.c.b16 %v7943, %v7942
        %v8356 = vpack.c.b16 %v7945, %v7944
        %v8357 = vpack.c.b16 %v7947, %v7946
        %v8358 = vpack.c.b16 %v7949, %v7948
        %v8359 = vpack.c.b16 %v7951, %v7950
        %v8360 = vpack.c.b16 %v7953, %v7952
        %v8361 = vpack.c.b16 %v7955, %v7954
        %v8362 = vpack.c.b16 %v7957, %v7956
        %v8363 = vpack.c.b16 %v7959, %v7958
        %v8364 = vpack.c.b16 %v7961, %v7960
        %v8365 = vpack.c.b16 %v7963, %v7962
        %v8366 = vpack.c.b16 %v7965, %v7964
        %v8367 = vpack.c.b16 %v7967, %v7966
        %v8368 = vpack.c.b16 %v7969, %v7968
        %v8369 = vpack.c.b16 %v7971, %v7970
        %v8370 = vpack.c.b16 %v7973, %v7972
        %v8371 = vpack.c.b16 %v7975, %v7974
        %v8372 = vpack.c.b16 %v7977, %v7976
        %v8373 = vpack.c.b16 %v7979, %v7978
        %v8374 = vpack.c.b16 %v7981, %v7980
        %v8375 = vpack.c.b16 %v7983, %v7982
        %v8376 = vpack.c.b16 %v7985, %v7984
        %v8377 = vpack.c.b16 %v7987, %v7986
        %v8378 = vpack.c.b16 %v7989, %v7988
        %v8379 = vpack.c.b16 %v7991, %v7990
        %v8380 = vpack.c.b16 %v7993, %v7992
        %v8381 = vpack.c.b16 %v7995, %v7994
        %v8382 = vpack.c.b16 %v7997, %v7996
        %v8383 = vpack.c.b16 %v7999, %v7998
        %8768 = vmatpush.bf16.msra.mxu0 %v8007
        %8769 = vmatpush.bf16.msra.mxu0 %v8006
        %8770 = vmatpush.bf16.msra.mxu0 %v8005
        %8771 = vmatpush.bf16.msra.mxu0 %v8004
        %8772 = vmatpush.bf16.msra.mxu0 %v8003
        %8773 = vmatpush.bf16.msra.mxu0 %v8002
        %8774 = vmatpush.bf16.msra.mxu0 %v8001
        %8775 = vmatpush.bf16.msra.mxu0 %v8000
        %8776 = vmatmul.bf16.gmra.mxu0 %v6358
        %v8777 = vpop.f32.mrf.mxu0
        %v8778 = vadd.f32 %v6355, %v8777
        %v8779 = vpop.f32.mrf.mxu0
        %8780 = vdwg.mxu0
        %8781 = vmatpush.bf16.msra.mxu0 %v8015
        %8782 = vmatpush.bf16.msra.mxu0 %v8014
        %8783 = vmatpush.bf16.msra.mxu0 %v8013
        %8784 = vmatpush.bf16.msra.mxu0 %v8012
        %8785 = vmatpush.bf16.msra.mxu0 %v8011
        %8786 = vmatpush.bf16.msra.mxu0 %v8010
        %8787 = vmatpush.bf16.msra.mxu0 %v8009
        %8788 = vmatpush.bf16.msra.mxu0 %v8008
        %8789 = vmatmul.bf16.gmra.mxu0 %v6359
        %v8790 = vpop.f32.mrf.mxu0
        %v8791 = vadd.f32 %v8778, %v8790
        %v8792 = vpop.f32.mrf.mxu0
        %8793 = vdwg.mxu0
        %8794 = vmatpush.bf16.msra.mxu0 %v8023
        %8795 = vmatpush.bf16.msra.mxu0 %v8022
        %8796 = vmatpush.bf16.msra.mxu0 %v8021
        %8797 = vmatpush.bf16.msra.mxu0 %v8020
        %8798 = vmatpush.bf16.msra.mxu0 %v8019
        %8799 = vmatpush.bf16.msra.mxu0 %v8018
        %8800 = vmatpush.bf16.msra.mxu0 %v8017
        %8801 = vmatpush.bf16.msra.mxu0 %v8016
        %8802 = vmatmul.bf16.gmra.mxu0 %v6360
        %v8803 = vpop.f32.mrf.mxu0
        %v8804 = vadd.f32 %v8791, %v8803
        %v8805 = vpop.f32.mrf.mxu0
        %8806 = vdwg.mxu0
        %8807 = vmatpush.bf16.msra.mxu0 %v8031
        %8808 = vmatpush.bf16.msra.mxu0 %v8030
        %8809 = vmatpush.bf16.msra.mxu0 %v8029
        %8810 = vmatpush.bf16.msra.mxu0 %v8028
        %8811 = vmatpush.bf16.msra.mxu0 %v8027
        %8812 = vmatpush.bf16.msra.mxu0 %v8026
        %8813 = vmatpush.bf16.msra.mxu0 %v8025
        %8814 = vmatpush.bf16.msra.mxu0 %v8024
        %8815 = vmatmul.bf16.gmra.mxu0 %v6361
        %v8816 = vpop.f32.mrf.mxu0
        %v8817 = vadd.f32 %v8804, %v8816
        %v8818 = vpop.f32.mrf.mxu0
        %8819 = vdwg.mxu0
        %8820 = vmatpush.bf16.msra.mxu0 %v8039
        %8821 = vmatpush.bf16.msra.mxu0 %v8038
        %8822 = vmatpush.bf16.msra.mxu0 %v8037
        %8823 = vmatpush.bf16.msra.mxu0 %v8036
        %8824 = vmatpush.bf16.msra.mxu0 %v8035
        %8825 = vmatpush.bf16.msra.mxu0 %v8034
        %8826 = vmatpush.bf16.msra.mxu0 %v8033
        %8827 = vmatpush.bf16.msra.mxu0 %v8032
        %8828 = vmatmul.bf16.gmra.mxu0 %v6362
        %v8829 = vpop.f32.mrf.mxu0
        %v8830 = vadd.f32 %v8817, %v8829
        %v8831 = vpop.f32.mrf.mxu0
        %8832 = vdwg.mxu0
        %8833 = vmatpush.bf16.msra.mxu0 %v8047
        %8834 = vmatpush.bf16.msra.mxu0 %v8046
        %8835 = vmatpush.bf16.msra.mxu0 %v8045
        %8836 = vmatpush.bf16.msra.mxu0 %v8044
        %8837 = vmatpush.bf16.msra.mxu0 %v8043
        %8838 = vmatpush.bf16.msra.mxu0 %v8042
        %8839 = vmatpush.bf16.msra.mxu0 %v8041
        %8840 = vmatpush.bf16.msra.mxu0 %v8040
        %8841 = vmatmul.bf16.gmra.mxu0 %v6363
        %v8842 = vpop.f32.mrf.mxu0
        %v8843 = vadd.f32 %v8830, %v8842
        %v8844 = vpop.f32.mrf.mxu0
        %8845 = vdwg.mxu0
        %8846 = vmatpush.bf16.msra.mxu0 %v8055
        %8847 = vmatpush.bf16.msra.mxu0 %v8054
        %8848 = vmatpush.bf16.msra.mxu0 %v8053
        %8849 = vmatpush.bf16.msra.mxu0 %v8052
        %8850 = vmatpush.bf16.msra.mxu0 %v8051
        %8851 = vmatpush.bf16.msra.mxu0 %v8050
        %8852 = vmatpush.bf16.msra.mxu0 %v8049
        %8853 = vmatpush.bf16.msra.mxu0 %v8048
        %8854 = vmatmul.bf16.gmra.mxu0 %v6364
        %v8855 = vpop.f32.mrf.mxu0
        %v8856 = vadd.f32 %v8843, %v8855
        %v8857 = vpop.f32.mrf.mxu0
        %8858 = vdwg.mxu0
        %8859 = vmatpush.bf16.msra.mxu0 %v8063
        %8860 = vmatpush.bf16.msra.mxu0 %v8062
        %8861 = vmatpush.bf16.msra.mxu0 %v8061
        %8862 = vmatpush.bf16.msra.mxu0 %v8060
        %8863 = vmatpush.bf16.msra.mxu0 %v8059
        %8864 = vmatpush.bf16.msra.mxu0 %v8058
        %8865 = vmatpush.bf16.msra.mxu0 %v8057
        %8866 = vmatpush.bf16.msra.mxu0 %v8056
        %8867 = vmatmul.bf16.gmra.mxu0 %v6365
        %v8868 = vpop.f32.mrf.mxu0
        %v8869 = vadd.f32 %v8856, %v8868
        %v8870 = vpop.f32.mrf.mxu0
        %8871 = vdwg.mxu0
        %8872 = vmatpush.bf16.msra.mxu0 %v8071
        %8873 = vmatpush.bf16.msra.mxu0 %v8070
        %8874 = vmatpush.bf16.msra.mxu0 %v8069
        %8875 = vmatpush.bf16.msra.mxu0 %v8068
        %8876 = vmatpush.bf16.msra.mxu0 %v8067
        %8877 = vmatpush.bf16.msra.mxu0 %v8066
        %8878 = vmatpush.bf16.msra.mxu0 %v8065
        %8879 = vmatpush.bf16.msra.mxu0 %v8064
        %8880 = vmatmul.bf16.gmra.mxu0 %v6368
        %v8881 = vpop.f32.mrf.mxu0
        %v8882 = vadd.f32 %v8869, %v8881
        %v8883 = vpop.f32.mrf.mxu0
        %8884 = vdwg.mxu0
        %8885 = vmatpush.bf16.msra.mxu0 %v8079
        %8886 = vmatpush.bf16.msra.mxu0 %v8078
        %8887 = vmatpush.bf16.msra.mxu0 %v8077
        %8888 = vmatpush.bf16.msra.mxu0 %v8076
        %8889 = vmatpush.bf16.msra.mxu0 %v8075
        %8890 = vmatpush.bf16.msra.mxu0 %v8074
        %8891 = vmatpush.bf16.msra.mxu0 %v8073
        %8892 = vmatpush.bf16.msra.mxu0 %v8072
        %8893 = vmatmul.bf16.gmra.mxu0 %v6369
        %v8894 = vpop.f32.mrf.mxu0
        %v8895 = vadd.f32 %v8882, %v8894
        %v8896 = vpop.f32.mrf.mxu0
        %8897 = vdwg.mxu0
        %8898 = vmatpush.bf16.msra.mxu0 %v8087
        %8899 = vmatpush.bf16.msra.mxu0 %v8086
        %8900 = vmatpush.bf16.msra.mxu0 %v8085
        %8901 = vmatpush.bf16.msra.mxu0 %v8084
        %8902 = vmatpush.bf16.msra.mxu0 %v8083
        %8903 = vmatpush.bf16.msra.mxu0 %v8082
        %8904 = vmatpush.bf16.msra.mxu0 %v8081
        %8905 = vmatpush.bf16.msra.mxu0 %v8080
        %8906 = vmatmul.bf16.gmra.mxu0 %v6370
        %v8907 = vpop.f32.mrf.mxu0
        %v8908 = vadd.f32 %v8895, %v8907
        %v8909 = vpop.f32.mrf.mxu0
        %8910 = vdwg.mxu0
        %8911 = vmatpush.bf16.msra.mxu0 %v8095
        %8912 = vmatpush.bf16.msra.mxu0 %v8094
        %8913 = vmatpush.bf16.msra.mxu0 %v8093
        %8914 = vmatpush.bf16.msra.mxu0 %v8092
        %8915 = vmatpush.bf16.msra.mxu0 %v8091
        %8916 = vmatpush.bf16.msra.mxu0 %v8090
        %8917 = vmatpush.bf16.msra.mxu0 %v8089
        %8918 = vmatpush.bf16.msra.mxu0 %v8088
        %8919 = vmatmul.bf16.gmra.mxu0 %v6371
        %v8920 = vpop.f32.mrf.mxu0
        %v8921 = vadd.f32 %v8908, %v8920
        %v8922 = vpop.f32.mrf.mxu0
        %8923 = vdwg.mxu0
        %8924 = vmatpush.bf16.msra.mxu0 %v8103
        %8925 = vmatpush.bf16.msra.mxu0 %v8102
        %8926 = vmatpush.bf16.msra.mxu0 %v8101
        %8927 = vmatpush.bf16.msra.mxu0 %v8100
        %8928 = vmatpush.bf16.msra.mxu0 %v8099
        %8929 = vmatpush.bf16.msra.mxu0 %v8098
        %8930 = vmatpush.bf16.msra.mxu0 %v8097
        %8931 = vmatpush.bf16.msra.mxu0 %v8096
        %8932 = vmatmul.bf16.gmra.mxu0 %v6372
        %v8933 = vpop.f32.mrf.mxu0
        %v8934 = vadd.f32 %v8921, %v8933
        %v8935 = vpop.f32.mrf.mxu0
        %8936 = vdwg.mxu0
        %8937 = vmatpush.bf16.msra.mxu0 %v8111
        %8938 = vmatpush.bf16.msra.mxu0 %v8110
        %8939 = vmatpush.bf16.msra.mxu0 %v8109
        %8940 = vmatpush.bf16.msra.mxu0 %v8108
        %8941 = vmatpush.bf16.msra.mxu0 %v8107
        %8942 = vmatpush.bf16.msra.mxu0 %v8106
        %8943 = vmatpush.bf16.msra.mxu0 %v8105
        %8944 = vmatpush.bf16.msra.mxu0 %v8104
        %8945 = vmatmul.bf16.gmra.mxu0 %v6373
        %v8946 = vpop.f32.mrf.mxu0
        %v8947 = vadd.f32 %v8934, %v8946
        %v8948 = vpop.f32.mrf.mxu0
        %8949 = vdwg.mxu0
        %8950 = vmatpush.bf16.msra.mxu0 %v8119
        %8951 = vmatpush.bf16.msra.mxu0 %v8118
        %8952 = vmatpush.bf16.msra.mxu0 %v8117
        %8953 = vmatpush.bf16.msra.mxu0 %v8116
        %8954 = vmatpush.bf16.msra.mxu0 %v8115
        %8955 = vmatpush.bf16.msra.mxu0 %v8114
        %8956 = vmatpush.bf16.msra.mxu0 %v8113
        %8957 = vmatpush.bf16.msra.mxu0 %v8112
        %8958 = vmatmul.bf16.gmra.mxu0 %v6374
        %v8959 = vpop.f32.mrf.mxu0
        %v8960 = vadd.f32 %v8947, %v8959
        %v8961 = vpop.f32.mrf.mxu0
        %8962 = vdwg.mxu0
        %8963 = vmatpush.bf16.msra.mxu0 %v8127
        %8964 = vmatpush.bf16.msra.mxu0 %v8126
        %8965 = vmatpush.bf16.msra.mxu0 %v8125
        %8966 = vmatpush.bf16.msra.mxu0 %v8124
        %8967 = vmatpush.bf16.msra.mxu0 %v8123
        %8968 = vmatpush.bf16.msra.mxu0 %v8122
        %8969 = vmatpush.bf16.msra.mxu0 %v8121
        %8970 = vmatpush.bf16.msra.mxu0 %v8120
        %8971 = vmatmul.bf16.gmra.mxu0 %v6375
        %v8972 = vpop.f32.mrf.mxu0
        %v8973 = vadd.f32 %v8960, %v8972
        %v8974 = vpop.f32.mrf.mxu0
        %8975 = vdwg.mxu0
        %8976 = vmatpush.bf16.msra.mxu0 %v8135
        %8977 = vmatpush.bf16.msra.mxu0 %v8134
        %8978 = vmatpush.bf16.msra.mxu0 %v8133
        %8979 = vmatpush.bf16.msra.mxu0 %v8132
        %8980 = vmatpush.bf16.msra.mxu0 %v8131
        %8981 = vmatpush.bf16.msra.mxu0 %v8130
        %8982 = vmatpush.bf16.msra.mxu0 %v8129
        %8983 = vmatpush.bf16.msra.mxu0 %v8128
        %8984 = vmatmul.bf16.gmra.mxu0 %v6378
        %v8985 = vpop.f32.mrf.mxu0
        %v8986 = vadd.f32 %v8973, %v8985
        %v8987 = vpop.f32.mrf.mxu0
        %8988 = vdwg.mxu0
        %8989 = vmatpush.bf16.msra.mxu0 %v8143
        %8990 = vmatpush.bf16.msra.mxu0 %v8142
        %8991 = vmatpush.bf16.msra.mxu0 %v8141
        %8992 = vmatpush.bf16.msra.mxu0 %v8140
        %8993 = vmatpush.bf16.msra.mxu0 %v8139
        %8994 = vmatpush.bf16.msra.mxu0 %v8138
        %8995 = vmatpush.bf16.msra.mxu0 %v8137
        %8996 = vmatpush.bf16.msra.mxu0 %v8136
        %8997 = vmatmul.bf16.gmra.mxu0 %v6379
        %v8998 = vpop.f32.mrf.mxu0
        %v8999 = vadd.f32 %v8986, %v8998
        %v9000 = vpop.f32.mrf.mxu0
        %9001 = vdwg.mxu0
        %9002 = vmatpush.bf16.msra.mxu0 %v8151
        %9003 = vmatpush.bf16.msra.mxu0 %v8150
        %9004 = vmatpush.bf16.msra.mxu0 %v8149
        %9005 = vmatpush.bf16.msra.mxu0 %v8148
        %9006 = vmatpush.bf16.msra.mxu0 %v8147
        %9007 = vmatpush.bf16.msra.mxu0 %v8146
        %9008 = vmatpush.bf16.msra.mxu0 %v8145
        %9009 = vmatpush.bf16.msra.mxu0 %v8144
        %9010 = vmatmul.bf16.gmra.mxu0 %v6380
        %v9011 = vpop.f32.mrf.mxu0
        %v9012 = vadd.f32 %v8999, %v9011
        %v9013 = vpop.f32.mrf.mxu0
        %9014 = vdwg.mxu0
        %9015 = vmatpush.bf16.msra.mxu0 %v8159
        %9016 = vmatpush.bf16.msra.mxu0 %v8158
        %9017 = vmatpush.bf16.msra.mxu0 %v8157
        %9018 = vmatpush.bf16.msra.mxu0 %v8156
        %9019 = vmatpush.bf16.msra.mxu0 %v8155
        %9020 = vmatpush.bf16.msra.mxu0 %v8154
        %9021 = vmatpush.bf16.msra.mxu0 %v8153
        %9022 = vmatpush.bf16.msra.mxu0 %v8152
        %9023 = vmatmul.bf16.gmra.mxu0 %v6381
        %v9024 = vpop.f32.mrf.mxu0
        %v9025 = vadd.f32 %v9012, %v9024
        %v9026 = vpop.f32.mrf.mxu0
        %9027 = vdwg.mxu0
        %9028 = vmatpush.bf16.msra.mxu0 %v8167
        %9029 = vmatpush.bf16.msra.mxu0 %v8166
        %9030 = vmatpush.bf16.msra.mxu0 %v8165
        %9031 = vmatpush.bf16.msra.mxu0 %v8164
        %9032 = vmatpush.bf16.msra.mxu0 %v8163
        %9033 = vmatpush.bf16.msra.mxu0 %v8162
        %9034 = vmatpush.bf16.msra.mxu0 %v8161
        %9035 = vmatpush.bf16.msra.mxu0 %v8160
        %9036 = vmatmul.bf16.gmra.mxu0 %v6382
        %v9037 = vpop.f32.mrf.mxu0
        %v9038 = vadd.f32 %v9025, %v9037
        %v9039 = vpop.f32.mrf.mxu0
        %9040 = vdwg.mxu0
        %9041 = vmatpush.bf16.msra.mxu0 %v8175
        %9042 = vmatpush.bf16.msra.mxu0 %v8174
        %9043 = vmatpush.bf16.msra.mxu0 %v8173
        %9044 = vmatpush.bf16.msra.mxu0 %v8172
        %9045 = vmatpush.bf16.msra.mxu0 %v8171
        %9046 = vmatpush.bf16.msra.mxu0 %v8170
        %9047 = vmatpush.bf16.msra.mxu0 %v8169
        %9048 = vmatpush.bf16.msra.mxu0 %v8168
        %9049 = vmatmul.bf16.gmra.mxu0 %v6383
        %v9050 = vpop.f32.mrf.mxu0
        %v9051 = vadd.f32 %v9038, %v9050
        %v9052 = vpop.f32.mrf.mxu0
        %9053 = vdwg.mxu0
        %9054 = vmatpush.bf16.msra.mxu0 %v8183
        %9055 = vmatpush.bf16.msra.mxu0 %v8182
        %9056 = vmatpush.bf16.msra.mxu0 %v8181
        %9057 = vmatpush.bf16.msra.mxu0 %v8180
        %9058 = vmatpush.bf16.msra.mxu0 %v8179
        %9059 = vmatpush.bf16.msra.mxu0 %v8178
        %9060 = vmatpush.bf16.msra.mxu0 %v8177
        %9061 = vmatpush.bf16.msra.mxu0 %v8176
        %9062 = vmatmul.bf16.gmra.mxu0 %v6384
        %v9063 = vpop.f32.mrf.mxu0
        %v9064 = vadd.f32 %v9051, %v9063
        %v9065 = vpop.f32.mrf.mxu0
        %9066 = vdwg.mxu0
        %9067 = vmatpush.bf16.msra.mxu0 %v8191
        %9068 = vmatpush.bf16.msra.mxu0 %v8190
        %9069 = vmatpush.bf16.msra.mxu0 %v8189
        %9070 = vmatpush.bf16.msra.mxu0 %v8188
        %9071 = vmatpush.bf16.msra.mxu0 %v8187
        %9072 = vmatpush.bf16.msra.mxu0 %v8186
        %9073 = vmatpush.bf16.msra.mxu0 %v8185
        %9074 = vmatpush.bf16.msra.mxu0 %v8184
        %9075 = vmatmul.bf16.gmra.mxu0 %v6385
        %v9076 = vpop.f32.mrf.mxu0
        %v9077 = vadd.f32 %v9064, %v9076
        %v9078 = vpop.f32.mrf.mxu0
        %9079 = vdwg.mxu0
        %9080 = vmatpush.bf16.msra.mxu0 %v8199
        %9081 = vmatpush.bf16.msra.mxu0 %v8198
        %9082 = vmatpush.bf16.msra.mxu0 %v8197
        %9083 = vmatpush.bf16.msra.mxu0 %v8196
        %9084 = vmatpush.bf16.msra.mxu0 %v8195
        %9085 = vmatpush.bf16.msra.mxu0 %v8194
        %9086 = vmatpush.bf16.msra.mxu0 %v8193
        %9087 = vmatpush.bf16.msra.mxu0 %v8192
        %9088 = vmatmul.bf16.gmra.mxu0 %v6388
        %v9089 = vpop.f32.mrf.mxu0
        %v9090 = vadd.f32 %v9077, %v9089
        %v9091 = vpop.f32.mrf.mxu0
        %9092 = vdwg.mxu0
        %9093 = vmatpush.bf16.msra.mxu0 %v8207
        %9094 = vmatpush.bf16.msra.mxu0 %v8206
        %9095 = vmatpush.bf16.msra.mxu0 %v8205
        %9096 = vmatpush.bf16.msra.mxu0 %v8204
        %9097 = vmatpush.bf16.msra.mxu0 %v8203
        %9098 = vmatpush.bf16.msra.mxu0 %v8202
        %9099 = vmatpush.bf16.msra.mxu0 %v8201
        %9100 = vmatpush.bf16.msra.mxu0 %v8200
        %9101 = vmatmul.bf16.gmra.mxu0 %v6389
        %v9102 = vpop.f32.mrf.mxu0
        %v9103 = vadd.f32 %v9090, %v9102
        %v9104 = vpop.f32.mrf.mxu0
        %9105 = vdwg.mxu0
        %9106 = vmatpush.bf16.msra.mxu0 %v8215
        %9107 = vmatpush.bf16.msra.mxu0 %v8214
        %9108 = vmatpush.bf16.msra.mxu0 %v8213
        %9109 = vmatpush.bf16.msra.mxu0 %v8212
        %9110 = vmatpush.bf16.msra.mxu0 %v8211
        %9111 = vmatpush.bf16.msra.mxu0 %v8210
        %9112 = vmatpush.bf16.msra.mxu0 %v8209
        %9113 = vmatpush.bf16.msra.mxu0 %v8208
        %9114 = vmatmul.bf16.gmra.mxu0 %v6390
        %v9115 = vpop.f32.mrf.mxu0
        %v9116 = vadd.f32 %v9103, %v9115
        %v9117 = vpop.f32.mrf.mxu0
        %9118 = vdwg.mxu0
        %9119 = vmatpush.bf16.msra.mxu0 %v8223
        %9120 = vmatpush.bf16.msra.mxu0 %v8222
        %9121 = vmatpush.bf16.msra.mxu0 %v8221
        %9122 = vmatpush.bf16.msra.mxu0 %v8220
        %9123 = vmatpush.bf16.msra.mxu0 %v8219
        %9124 = vmatpush.bf16.msra.mxu0 %v8218
        %9125 = vmatpush.bf16.msra.mxu0 %v8217
        %9126 = vmatpush.bf16.msra.mxu0 %v8216
        %9127 = vmatmul.bf16.gmra.mxu0 %v6391
        %v9128 = vpop.f32.mrf.mxu0
        %v9129 = vadd.f32 %v9116, %v9128
        %v9130 = vpop.f32.mrf.mxu0
        %9131 = vdwg.mxu0
        %9132 = vmatpush.bf16.msra.mxu0 %v8231
        %9133 = vmatpush.bf16.msra.mxu0 %v8230
        %9134 = vmatpush.bf16.msra.mxu0 %v8229
        %9135 = vmatpush.bf16.msra.mxu0 %v8228
        %9136 = vmatpush.bf16.msra.mxu0 %v8227
        %9137 = vmatpush.bf16.msra.mxu0 %v8226
        %9138 = vmatpush.bf16.msra.mxu0 %v8225
        %9139 = vmatpush.bf16.msra.mxu0 %v8224
        %9140 = vmatmul.bf16.gmra.mxu0 %v6392
        %v9141 = vpop.f32.mrf.mxu0
        %v9142 = vadd.f32 %v9129, %v9141
        %v9143 = vpop.f32.mrf.mxu0
        %9144 = vdwg.mxu0
        %9145 = vmatpush.bf16.msra.mxu0 %v8239
        %9146 = vmatpush.bf16.msra.mxu0 %v8238
        %9147 = vmatpush.bf16.msra.mxu0 %v8237
        %9148 = vmatpush.bf16.msra.mxu0 %v8236
        %9149 = vmatpush.bf16.msra.mxu0 %v8235
        %9150 = vmatpush.bf16.msra.mxu0 %v8234
        %9151 = vmatpush.bf16.msra.mxu0 %v8233
        %9152 = vmatpush.bf16.msra.mxu0 %v8232
        %9153 = vmatmul.bf16.gmra.mxu0 %v6393
        %v9154 = vpop.f32.mrf.mxu0
        %v9155 = vadd.f32 %v9142, %v9154
        %v9156 = vpop.f32.mrf.mxu0
        %9157 = vdwg.mxu0
        %9158 = vmatpush.bf16.msra.mxu0 %v8247
        %9159 = vmatpush.bf16.msra.mxu0 %v8246
        %9160 = vmatpush.bf16.msra.mxu0 %v8245
        %9161 = vmatpush.bf16.msra.mxu0 %v8244
        %9162 = vmatpush.bf16.msra.mxu0 %v8243
        %9163 = vmatpush.bf16.msra.mxu0 %v8242
        %9164 = vmatpush.bf16.msra.mxu0 %v8241
        %9165 = vmatpush.bf16.msra.mxu0 %v8240
        %9166 = vmatmul.bf16.gmra.mxu0 %v6394
        %v9167 = vpop.f32.mrf.mxu0
        %v9168 = vadd.f32 %v9155, %v9167
        %v9169 = vpop.f32.mrf.mxu0
        %9170 = vdwg.mxu0
        %9171 = vmatpush.bf16.msra.mxu0 %v8255
        %9172 = vmatpush.bf16.msra.mxu0 %v8254
        %9173 = vmatpush.bf16.msra.mxu0 %v8253
        %9174 = vmatpush.bf16.msra.mxu0 %v8252
        %9175 = vmatpush.bf16.msra.mxu0 %v8251
        %9176 = vmatpush.bf16.msra.mxu0 %v8250
        %9177 = vmatpush.bf16.msra.mxu0 %v8249
        %9178 = vmatpush.bf16.msra.mxu0 %v8248
        %9179 = vmatmul.bf16.gmra.mxu0 %v6395
        %v9180 = vpop.f32.mrf.mxu0
        %v9181 = vadd.f32 %v9168, %v9180
        %v9182 = vpop.f32.mrf.mxu0
        %9183 = vdwg.mxu0
        %9184 = vmatpush.bf16.msra.mxu0 %v8263
        %9185 = vmatpush.bf16.msra.mxu0 %v8262
        %9186 = vmatpush.bf16.msra.mxu0 %v8261
        %9187 = vmatpush.bf16.msra.mxu0 %v8260
        %9188 = vmatpush.bf16.msra.mxu0 %v8259
        %9189 = vmatpush.bf16.msra.mxu0 %v8258
        %9190 = vmatpush.bf16.msra.mxu0 %v8257
        %9191 = vmatpush.bf16.msra.mxu0 %v8256
        %9192 = vmatmul.bf16.gmra.mxu0 %v6398
        %v9193 = vpop.f32.mrf.mxu0
        %v9194 = vadd.f32 %v9181, %v9193
        %v9195 = vpop.f32.mrf.mxu0
        %9196 = vdwg.mxu0
        %9197 = vmatpush.bf16.msra.mxu0 %v8271
        %9198 = vmatpush.bf16.msra.mxu0 %v8270
        %9199 = vmatpush.bf16.msra.mxu0 %v8269
        %9200 = vmatpush.bf16.msra.mxu0 %v8268
        %9201 = vmatpush.bf16.msra.mxu0 %v8267
        %9202 = vmatpush.bf16.msra.mxu0 %v8266
        %9203 = vmatpush.bf16.msra.mxu0 %v8265
        %9204 = vmatpush.bf16.msra.mxu0 %v8264
        %9205 = vmatmul.bf16.gmra.mxu0 %v6399
        %v9206 = vpop.f32.mrf.mxu0
        %v9207 = vadd.f32 %v9194, %v9206
        %v9208 = vpop.f32.mrf.mxu0
        %9209 = vdwg.mxu0
        %9210 = vmatpush.bf16.msra.mxu0 %v8279
        %9211 = vmatpush.bf16.msra.mxu0 %v8278
        %9212 = vmatpush.bf16.msra.mxu0 %v8277
        %9213 = vmatpush.bf16.msra.mxu0 %v8276
        %9214 = vmatpush.bf16.msra.mxu0 %v8275
        %9215 = vmatpush.bf16.msra.mxu0 %v8274
        %9216 = vmatpush.bf16.msra.mxu0 %v8273
        %9217 = vmatpush.bf16.msra.mxu0 %v8272
        %9218 = vmatmul.bf16.gmra.mxu0 %v6400
        %v9219 = vpop.f32.mrf.mxu0
        %v9220 = vadd.f32 %v9207, %v9219
        %v9221 = vpop.f32.mrf.mxu0
        %9222 = vdwg.mxu0
        %9223 = vmatpush.bf16.msra.mxu0 %v8287
        %9224 = vmatpush.bf16.msra.mxu0 %v8286
        %9225 = vmatpush.bf16.msra.mxu0 %v8285
        %9226 = vmatpush.bf16.msra.mxu0 %v8284
        %9227 = vmatpush.bf16.msra.mxu0 %v8283
        %9228 = vmatpush.bf16.msra.mxu0 %v8282
        %9229 = vmatpush.bf16.msra.mxu0 %v8281
        %9230 = vmatpush.bf16.msra.mxu0 %v8280
        %9231 = vmatmul.bf16.gmra.mxu0 %v6401
        %v9232 = vpop.f32.mrf.mxu0
        %v9233 = vadd.f32 %v9220, %v9232
        %v9234 = vpop.f32.mrf.mxu0
        %9235 = vdwg.mxu0
        %9236 = vmatpush.bf16.msra.mxu0 %v8295
        %9237 = vmatpush.bf16.msra.mxu0 %v8294
        %9238 = vmatpush.bf16.msra.mxu0 %v8293
        %9239 = vmatpush.bf16.msra.mxu0 %v8292
        %9240 = vmatpush.bf16.msra.mxu0 %v8291
        %9241 = vmatpush.bf16.msra.mxu0 %v8290
        %9242 = vmatpush.bf16.msra.mxu0 %v8289
        %9243 = vmatpush.bf16.msra.mxu0 %v8288
        %9244 = vmatmul.bf16.gmra.mxu0 %v6402
        %v9245 = vpop.f32.mrf.mxu0
        %v9246 = vadd.f32 %v9233, %v9245
        %v9247 = vpop.f32.mrf.mxu0
        %9248 = vdwg.mxu0
        %9249 = vmatpush.bf16.msra.mxu0 %v8303
        %9250 = vmatpush.bf16.msra.mxu0 %v8302
        %9251 = vmatpush.bf16.msra.mxu0 %v8301
        %9252 = vmatpush.bf16.msra.mxu0 %v8300
        %9253 = vmatpush.bf16.msra.mxu0 %v8299
        %9254 = vmatpush.bf16.msra.mxu0 %v8298
        %9255 = vmatpush.bf16.msra.mxu0 %v8297
        %9256 = vmatpush.bf16.msra.mxu0 %v8296
        %9257 = vmatmul.bf16.gmra.mxu0 %v6403
        %v9258 = vpop.f32.mrf.mxu0
        %v9259 = vadd.f32 %v9246, %v9258
        %v9260 = vpop.f32.mrf.mxu0
        %9261 = vdwg.mxu0
        %9262 = vmatpush.bf16.msra.mxu0 %v8311
        %9263 = vmatpush.bf16.msra.mxu0 %v8310
        %9264 = vmatpush.bf16.msra.mxu0 %v8309
        %9265 = vmatpush.bf16.msra.mxu0 %v8308
        %9266 = vmatpush.bf16.msra.mxu0 %v8307
        %9267 = vmatpush.bf16.msra.mxu0 %v8306
        %9268 = vmatpush.bf16.msra.mxu0 %v8305
        %9269 = vmatpush.bf16.msra.mxu0 %v8304
        %9270 = vmatmul.bf16.gmra.mxu0 %v6404
        %v9271 = vpop.f32.mrf.mxu0
        %v9272 = vadd.f32 %v9259, %v9271
        %v9273 = vpop.f32.mrf.mxu0
        %9274 = vdwg.mxu0
        %9275 = vmatpush.bf16.msra.mxu0 %v8319
        %9276 = vmatpush.bf16.msra.mxu0 %v8318
        %9277 = vmatpush.bf16.msra.mxu0 %v8317
        %9278 = vmatpush.bf16.msra.mxu0 %v8316
        %9279 = vmatpush.bf16.msra.mxu0 %v8315
        %9280 = vmatpush.bf16.msra.mxu0 %v8314
        %9281 = vmatpush.bf16.msra.mxu0 %v8313
        %9282 = vmatpush.bf16.msra.mxu0 %v8312
        %9283 = vmatmul.bf16.gmra.mxu0 %v6405
        %v9284 = vpop.f32.mrf.mxu0
        %v9285 = vadd.f32 %v9272, %v9284
        %v9286 = vpop.f32.mrf.mxu0
        %9287 = vdwg.mxu0
        %9288 = vmatpush.bf16.msra.mxu0 %v8327
        %9289 = vmatpush.bf16.msra.mxu0 %v8326
        %9290 = vmatpush.bf16.msra.mxu0 %v8325
        %9291 = vmatpush.bf16.msra.mxu0 %v8324
        %9292 = vmatpush.bf16.msra.mxu0 %v8323
        %9293 = vmatpush.bf16.msra.mxu0 %v8322
        %9294 = vmatpush.bf16.msra.mxu0 %v8321
        %9295 = vmatpush.bf16.msra.mxu0 %v8320
        %9296 = vmatmul.bf16.gmra.mxu0 %v6408
        %v9297 = vpop.f32.mrf.mxu0
        %v9298 = vadd.f32 %v9285, %v9297
        %v9299 = vpop.f32.mrf.mxu0
        %9300 = vdwg.mxu0
        %9301 = vmatpush.bf16.msra.mxu0 %v8335
        %9302 = vmatpush.bf16.msra.mxu0 %v8334
        %9303 = vmatpush.bf16.msra.mxu0 %v8333
        %9304 = vmatpush.bf16.msra.mxu0 %v8332
        %9305 = vmatpush.bf16.msra.mxu0 %v8331
        %9306 = vmatpush.bf16.msra.mxu0 %v8330
        %9307 = vmatpush.bf16.msra.mxu0 %v8329
        %9308 = vmatpush.bf16.msra.mxu0 %v8328
        %9309 = vmatmul.bf16.gmra.mxu0 %v6409
        %v9310 = vpop.f32.mrf.mxu0
        %v9311 = vadd.f32 %v9298, %v9310
        %v9312 = vpop.f32.mrf.mxu0
        %9313 = vdwg.mxu0
        %9314 = vmatpush.bf16.msra.mxu0 %v8343
        %9315 = vmatpush.bf16.msra.mxu0 %v8342
        %9316 = vmatpush.bf16.msra.mxu0 %v8341
        %9317 = vmatpush.bf16.msra.mxu0 %v8340
        %9318 = vmatpush.bf16.msra.mxu0 %v8339
        %9319 = vmatpush.bf16.msra.mxu0 %v8338
        %9320 = vmatpush.bf16.msra.mxu0 %v8337
        %9321 = vmatpush.bf16.msra.mxu0 %v8336
        %9322 = vmatmul.bf16.gmra.mxu0 %v6410
        %v9323 = vpop.f32.mrf.mxu0
        %v9324 = vadd.f32 %v9311, %v9323
        %v9325 = vpop.f32.mrf.mxu0
        %9326 = vdwg.mxu0
        %9327 = vmatpush.bf16.msra.mxu0 %v8351
        %9328 = vmatpush.bf16.msra.mxu0 %v8350
        %9329 = vmatpush.bf16.msra.mxu0 %v8349
        %9330 = vmatpush.bf16.msra.mxu0 %v8348
        %9331 = vmatpush.bf16.msra.mxu0 %v8347
        %9332 = vmatpush.bf16.msra.mxu0 %v8346
        %9333 = vmatpush.bf16.msra.mxu0 %v8345
        %9334 = vmatpush.bf16.msra.mxu0 %v8344
        %9335 = vmatmul.bf16.gmra.mxu0 %v6411
        %v9336 = vpop.f32.mrf.mxu0
        %v9337 = vadd.f32 %v9324, %v9336
        %v9338 = vpop.f32.mrf.mxu0
        %9339 = vdwg.mxu0
        %9340 = vmatpush.bf16.msra.mxu0 %v8359
        %9341 = vmatpush.bf16.msra.mxu0 %v8358
        %9342 = vmatpush.bf16.msra.mxu0 %v8357
        %9343 = vmatpush.bf16.msra.mxu0 %v8356
        %9344 = vmatpush.bf16.msra.mxu0 %v8355
        %9345 = vmatpush.bf16.msra.mxu0 %v8354
        %9346 = vmatpush.bf16.msra.mxu0 %v8353
        %9347 = vmatpush.bf16.msra.mxu0 %v8352
        %9348 = vmatmul.bf16.gmra.mxu0 %v6412
        %v9349 = vpop.f32.mrf.mxu0
        %v9350 = vadd.f32 %v9337, %v9349
        %v9351 = vpop.f32.mrf.mxu0
        %9352 = vdwg.mxu0
        %9353 = vmatpush.bf16.msra.mxu0 %v8367
        %9354 = vmatpush.bf16.msra.mxu0 %v8366
        %9355 = vmatpush.bf16.msra.mxu0 %v8365
        %9356 = vmatpush.bf16.msra.mxu0 %v8364
        %9357 = vmatpush.bf16.msra.mxu0 %v8363
        %9358 = vmatpush.bf16.msra.mxu0 %v8362
        %9359 = vmatpush.bf16.msra.mxu0 %v8361
        %9360 = vmatpush.bf16.msra.mxu0 %v8360
        %9361 = vmatmul.bf16.gmra.mxu0 %v6413
        %v9362 = vpop.f32.mrf.mxu0
        %v9363 = vadd.f32 %v9350, %v9362
        %v9364 = vpop.f32.mrf.mxu0
        %9365 = vdwg.mxu0
        %9366 = vmatpush.bf16.msra.mxu0 %v8375
        %9367 = vmatpush.bf16.msra.mxu0 %v8374
        %9368 = vmatpush.bf16.msra.mxu0 %v8373
        %9369 = vmatpush.bf16.msra.mxu0 %v8372
        %9370 = vmatpush.bf16.msra.mxu0 %v8371
        %9371 = vmatpush.bf16.msra.mxu0 %v8370
        %9372 = vmatpush.bf16.msra.mxu0 %v8369
        %9373 = vmatpush.bf16.msra.mxu0 %v8368
        %9374 = vmatmul.bf16.gmra.mxu0 %v6414
        %v9375 = vpop.f32.mrf.mxu0
        %v9376 = vadd.f32 %v9363, %v9375
        %v9377 = vpop.f32.mrf.mxu0
        %9378 = vdwg.mxu0
        %9379 = vmatpush.bf16.msra.mxu0 %v8383
        %9380 = vmatpush.bf16.msra.mxu0 %v8382
        %9381 = vmatpush.bf16.msra.mxu0 %v8381
        %9382 = vmatpush.bf16.msra.mxu0 %v8380
        %9383 = vmatpush.bf16.msra.mxu0 %v8379
        %9384 = vmatpush.bf16.msra.mxu0 %v8378
        %9385 = vmatpush.bf16.msra.mxu0 %v8377
        %9386 = vmatpush.bf16.msra.mxu0 %v8376
        %9387 = vmatmul.bf16.gmra.mxu0 %v6415
        %v9388 = vpop.f32.mrf.mxu0
        %v9389 = vadd.f32 %v9376, %v9388
        %v9390 = vpop.f32.mrf.mxu0
        %9391 = vdwg.mxu0
        %vm9392 = vcmask 253952
        %9393 = vst.msk [vmem:[%s270] sm:$0x1] %vm9392, %v9389
        %s9394 = sand.u32 %s181, 1
        %s9395 = scalar_lea.sflag [#allocation6], %s9394
        %s9396 = sand.u32 %s181, 1
        %s9397 = scalar_lea.vmem [#allocation5], %s9396
        // Predicated region
        $region49: #{css_encoder_short_forward.1} parent=47 // pred_check
          %p9398 = pneg %p191
        $region50: #{css_encoder_short_forward.1} parent=47 // pred_check_branch
          %9400 = sbr.rel (%p9398) target = $region52
        $region51: #{css_encoder_short_forward.1} parent=47 // pred_region
          %9402 = vsyncadd %s9395, 0
          %s9403 = scalar_lea.hbm %s7, %s21
          %s9405 = sshll.u32 %s9397, 4
          %s9406 = int_to_ptr.vmem [resolvable:$true] %s9405
          %s9407 = sshll.u32 %s9403, 4
          %s9408 = int_to_ptr.hbm [resolvable:$true] %s9407
          %9410 = dma.vmem_to_hbm [thread:$0]  %s9406, 16, %s9408, %s9395
        $region52: #{css_encoder_short_forward.1} parent=47 // pred_fallthru
          _
      $region48: #{css_encoder_short_forward.1} parent=5 // pred_fallthru
        _
      %p9411 = scmp.le.s32.totalorder 2, %s16
      // Predicated region
      $region53: #{css_encoder_short_forward.1} parent=5 // pred_check
        %p9412 = pneg %p9411
      $region54: #{css_encoder_short_forward.1} parent=5 // pred_check_branch
        %9414 = sbr.rel (%p9412) target = $region56
      $region55: #{css_encoder_short_forward.1} parent=5 // pred_region
        %s9415 = ssub.s32 %s16, 2
        // Predicated region
        $region57: #{css_encoder_short_forward.1} parent=55 // pred_check
          %p9416 = pneg %p197
        $region58: #{css_encoder_short_forward.1} parent=55 // pred_check_branch
          %9418 = sbr.rel (%p9416) target = $region60
        $region59: #{css_encoder_short_forward.1} parent=55 // pred_region
          %s9419 = sand.u32 %s182, 1
          %s9420 = scalar_lea.sflag [#allocation6], %s9419
          %s9421 = sand.u32 %s182, 1
          %s9422 = scalar_lea.vmem [#allocation5], %s9421
          %9424 = dma.done %s9420, 16
        $region60: #{css_encoder_short_forward.1} parent=55 // pred_fallthru
          _
      $region56: #{css_encoder_short_forward.1} parent=5 // pred_fallthru
        _
    $region6: #{css_encoder_short_forward.1} parent=1 // loop_footer
      %s20 = sadd.s32 1, %s16
    $region7: #{css_encoder_short_forward.1} parent=1 // loop_footer_branch
      %15 = sbr.rel target = $region3
    $region8: #{css_encoder_short_forward.1} parent=1 // loop_exit
      _
    %9425 = vsyncpa [#allocation6], 1
    %s9426 = scalar_lea.sflag [#allocation6], 1
    %9427 = vsyncpa %s9426, 1

</llo_original>
